<compile_context>
chip_gen: v7x
topology: tpu7x:2x2x1
jax: 0.10.0
libtpu: 0.0.40
codegen_flags: <defaults>
</compile_context>

<pallas_src>
import functools
import math

import jax
import jax.numpy as jnp
from jax.experimental import pallas as pl
from jax.experimental.pallas import tpu as pltpu


# ----------------------------------------------------------------------------- kernels

def _conv_pool_prelu_kernel(p00_ref, p01_ref, p10_ref, p11_ref, w_ref, b_ref, s_ref, o_ref):
    # w: (Cout, K); p*: (K, M) patch matrices for the 4 pool phases; b: (Cout, 1); s: (1,1)
    # conv -> maxpool(2) -> bias -> PReLU  (== conv -> bias -> PReLU -> maxpool, slope > 0)
    y = jnp.maximum(
        jnp.maximum(jnp.dot(w_ref[...], p00_ref[...], preferred_element_type=jnp.float32),
                    jnp.dot(w_ref[...], p01_ref[...], preferred_element_type=jnp.float32)),
        jnp.maximum(jnp.dot(w_ref[...], p10_ref[...], preferred_element_type=jnp.float32),
                    jnp.dot(w_ref[...], p11_ref[...], preferred_element_type=jnp.float32)))
    y = y + b_ref[...]
    o_ref[...] = jnp.where(y > 0.0, y, s_ref[...] * y)


def _conv_prelu_kernel(p_ref, w_ref, b_ref, s_ref, o_ref):
    # out(Cout, M) = W(Cout,K) @ P(K,M) + b, PReLU
    y = jnp.dot(w_ref[...], p_ref[...], preferred_element_type=jnp.float32) + b_ref[...]
    o_ref[...] = jnp.where(y > 0.0, y, s_ref[...] * y)


def _head_kernel(x_ref, wfc_ref, bfc_ref, wreg_ref, breg_ref, s_ref, o_ref):
    # fc5_1 (240->12) + PReLU + loc_reg_ (12->1); Dropout2d is identity at inference.
    h = jnp.dot(x_ref[...], wfc_ref[...], preferred_element_type=jnp.float32) + bfc_ref[...]
    h = jnp.where(h > 0.0, h, s_ref[...] * h)
    o_ref[...] = jnp.dot(h, wreg_ref[...], preferred_element_type=jnp.float32) + breg_ref[...]


def _bilinear_kernel(ix_ref, iy_ref, v00_ref, v01_ref, v10_ref, v11_ref, o_ref, *, Hin, Win):
    # ix/iy: (1,1,TN) source coords; v**: (1,C,TN) gathered corner values (corner = [y][x]).
    # Bilinear weights + zeros-padding masks computed in-kernel (nothing materialized in HBM).
    ix = ix_ref[...]
    iy = iy_ref[...]
    x0 = jnp.floor(ix)
    y0 = jnp.floor(iy)
    fx = ix - x0
    fy = iy - y0
    mx0 = ((x0 >= 0.0) & (x0 <= Win - 1.0)).astype(jnp.float32)
    mx1 = ((x0 >= -1.0) & (x0 <= Win - 2.0)).astype(jnp.float32)     # x1 = x0+1 in bounds
    my0 = ((y0 >= 0.0) & (y0 <= Hin - 1.0)).astype(jnp.float32)
    my1 = ((y0 >= -1.0) & (y0 <= Hin - 2.0)).astype(jnp.float32)     # y1 = y0+1 in bounds
    w00 = (1.0 - fy) * (1.0 - fx) * my0 * mx0
    w01 = (1.0 - fy) * fx * my0 * mx1
    w10 = fy * (1.0 - fx) * my1 * mx0
    w11 = fy * fx * my1 * mx1
    o_ref[...] = (w00 * v00_ref[...] + w01 * v01_ref[...] +
                  w10 * v10_ref[...] + w11 * v11_ref[...])


# ----------------------------------------------------------------------------- kernel wrappers

def conv_pool_prelu(pats, w_t, b_col, slope):
    # pats: 4 x (K, M) transposed patch matrices; output (Cout, M) with the large M on the lane dim.
    K, M = pats[0].shape
    Cout = w_t.shape[0]
    pspec = pl.BlockSpec((K, M), lambda i: (0, 0))
    return pl.pallas_call(
        _conv_pool_prelu_kernel,
        out_shape=jax.ShapeDtypeStruct((Cout, M), jnp.float32),
        grid=(1,),
        in_specs=[pspec, pspec, pspec, pspec,
                  pl.BlockSpec((Cout, K), lambda i: (0, 0)),
                  pl.BlockSpec((Cout, 1), lambda i: (0, 0)),
                  pl.BlockSpec((1, 1), lambda i: (0, 0))],
        out_specs=pl.BlockSpec((Cout, M), lambda i: (0, 0)),
    )(*pats, w_t, b_col, slope)


def conv_prelu(p_t, w_t, b_col, slope):
    K, M = p_t.shape
    Cout = w_t.shape[0]
    return pl.pallas_call(
        _conv_prelu_kernel,
        out_shape=jax.ShapeDtypeStruct((Cout, M), jnp.float32),
        grid=(1,),
        in_specs=[pl.BlockSpec((K, M), lambda i: (0, 0)),
                  pl.BlockSpec((Cout, K), lambda i: (0, 0)),
                  pl.BlockSpec((Cout, 1), lambda i: (0, 0)),
                  pl.BlockSpec((1, 1), lambda i: (0, 0))],
        out_specs=pl.BlockSpec((Cout, M), lambda i: (0, 0)),
    )(p_t, w_t, b_col, slope)


def head(flat, wfc, bfc, wreg, breg, slope):
    B = flat.shape[0]

    def full(a):
        nd = a.ndim
        return pl.BlockSpec(a.shape, lambda *i: (0,) * nd)

    return pl.pallas_call(
        _head_kernel,
        out_shape=jax.ShapeDtypeStruct((B, 1), jnp.float32),
        grid=(1,),
        in_specs=[full(flat), full(wfc), full(bfc), full(wreg), full(breg), full(slope)],
        out_specs=pl.BlockSpec((B, 1), lambda i: (0, 0)),
    )(flat, wfc, bfc, wreg, breg, slope)


def bilinear_sample(ix, iy, v00, v01, v10, v11, Hin, Win, tn=16384):
    # ix/iy: (B,1,N); v**: (B,C,N). Tiled over (B, N/tn); both axes parallel (megacore on v7x).
    B, C, N = v00.shape
    tn = min(tn, N)
    assert N % tn == 0 and tn % 128 == 0
    vspec = pl.BlockSpec((1, C, tn), lambda b, t: (b, 0, t))
    cspec = pl.BlockSpec((1, 1, tn), lambda b, t: (b, 0, t))
    kern = functools.partial(_bilinear_kernel, Hin=Hin, Win=Win)
    return pl.pallas_call(
        kern,
        out_shape=jax.ShapeDtypeStruct((B, C, N), jnp.float32),
        grid=(B, N // tn),
        in_specs=[cspec, cspec, vspec, vspec, vspec, vspec],
        out_specs=vspec,
        compiler_params=pltpu.CompilerParams(
            dimension_semantics=("parallel", "parallel")),
    )(ix, iy, v00, v01, v10, v11)


# ----------------------------------------------------------------------------- glue

def _im2col(x, k, stride):
    # x: (B, H, W, C) -> (B, OH, OW, k*k*C); patch feature order = (ky, kx, c)
    B, H, W, C = x.shape
    OH = (H - k) // stride + 1
    OW = (W - k) // stride + 1
    cols = []
    for dy in range(k):
        for dx in range(k):
            cols.append(x[:, dy:dy + stride * (OH - 1) + 1:stride,
                          dx:dx + stride * (OW - 1) + 1:stride, :])
    return jnp.concatenate(cols, axis=-1)


def _pooled_patchesT(x, k):
    # 4 transposed patch matrices (K, B*(OH//2)*(OW//2)), one per 2x2-pool phase.
    cols = _im2col(x, k, 1)                               # (B, OH, OW, K)
    B, OH, OW, K = cols.shape
    M = B * (OH // 2) * (OW // 2)
    pats = []
    for py in range(2):
        for px in range(2):
            pats.append(cols[:, py::2, px::2, :].reshape(M, K).T)
    return pats


def _grid_sample_bilinear(inp, theta, Hout, Wout):
    # F.affine_grid + F.grid_sample(bilinear, zeros padding, align_corners=False)
    B, C, Hin, Win = inp.shape
    xs = (2.0 * jnp.arange(Wout, dtype=jnp.float32) + 1.0) / Wout - 1.0
    ys = (2.0 * jnp.arange(Hout, dtype=jnp.float32) + 1.0) / Hout - 1.0
    xt, yt = jnp.meshgrid(xs, ys)                         # (Hout, Wout) each
    base = jnp.stack([xt, yt, jnp.ones_like(xt)], -1)     # (Hout, Wout, 3)
    samp = jnp.einsum('brk,hwk->bhwr', theta, base)       # (B, Hout, Wout, 2)

    N = Hout * Wout
    ix = (((samp[..., 0] + 1.0) * Win - 1.0) / 2.0).reshape(B, N)
    iy = (((samp[..., 1] + 1.0) * Hin - 1.0) / 2.0).reshape(B, N)

    x0 = jnp.floor(ix)
    y0 = jnp.floor(iy)
    x0i = jnp.clip(x0, 0, Win - 1).astype(jnp.int32)
    x1i = jnp.clip(x0 + 1.0, 0, Win - 1).astype(jnp.int32)
    y0i = jnp.clip(y0, 0, Hin - 1).astype(jnp.int32)
    y1i = jnp.clip(y0 + 1.0, 0, Hin - 1).astype(jnp.int32)

    # TODO(synk): the data-dependent per-pixel 2D corner gather has no clean Pallas TPU
    # equivalent (no general in-kernel vector gather), so it stays in XLA; the bilinear
    # weight computation, zero-padding masks and 4-corner combine run fused in the kernel.
    img = inp.reshape(B, C, Hin * Win)

    def gather(im, li):                                    # im: (C, H*W), li: (N,)
        return jnp.take(im, li, axis=1, mode='clip')       # (C, N)

    v00 = jax.vmap(gather)(img, y0i * Win + x0i)
    v01 = jax.vmap(gather)(img, y0i * Win + x1i)
    v10 = jax.vmap(gather)(img, y1i * Win + x0i)
    v11 = jax.vmap(gather)(img, y1i * Win + x1i)

    out = bilinear_sample(ix.reshape(B, 1, N), iy.reshape(B, 1, N),
                          v00, v01, v10, v11, Hin, Win)
    return out.reshape(B, C, Hout, Wout)


# ----------------------------------------------------------------------------- params

def init_params(key):
    ks = jax.random.split(key, 10)

    def u(k, shape, fan_in):
        bound = 1.0 / math.sqrt(fan_in)
        return jax.random.uniform(k, shape, jnp.float32, -bound, bound)

    # PyTorch-shaped parameters (deterministic synthetic init)
    w1 = u(ks[0], (15, 3, 7, 7), 3 * 7 * 7);   b1 = u(ks[1], (15,), 3 * 7 * 7)
    w2 = u(ks[2], (30, 15, 5, 5), 15 * 5 * 5); b2 = u(ks[3], (30,), 15 * 5 * 5)
    w3 = u(ks[4], (60, 30, 3, 3), 30 * 3 * 3); b3 = u(ks[5], (60,), 30 * 3 * 3)
    wfc = u(ks[6], (12, 240), 240);            bfc = u(ks[7], (12,), 240)
    wreg = u(ks[8], (1, 12), 12);              breg = u(ks[9], (1,), 12)

    def conv_to_matT(w):
        # (Cout, Cin, kh, kw) -> (Cout, kh*kw*Cin), matching im2col (ky, kx, c) order
        cout, cin, kh, kw = w.shape
        return jnp.transpose(w, (2, 3, 1, 0)).reshape(kh * kw * cin, cout).T

    return dict(
        w1=conv_to_matT(w1), b1=b1.reshape(15, 1),
        w2=conv_to_matT(w2), b2=b2.reshape(30, 1),
        w3=conv_to_matT(w3), b3=b3.reshape(60, 1),
        wfc=wfc.T, bfc=bfc.reshape(1, 12),
        wreg=wreg.T, breg=breg.reshape(1, 1),
        prelu=jnp.full((1, 1), 0.25, jnp.float32),   # nn.PReLU() shared scalar
    )


# ----------------------------------------------------------------------------- forward

def stn_one_forward(params, inp):
    B = inp.shape[0]
    pad = 60
    x = inp[:, :, pad:-pad, pad:-pad]                                  # (B, 3, 240, 240)

    # downsample = AvgPool2d(8): pure-bandwidth reduction -> reshape + mean in glue
    x = x.reshape(B, 3, 30, 8, 30, 8).mean(axis=(3, 5))                # (B, 3, 30, 30)
    x = jnp.transpose(x, (0, 2, 3, 1))                                 # NHWC (B, 30, 30, 3)

    # net1_conv1 (7x7) + PReLU + MaxPool2d(2), fused, lane-dense (15, B*144)
    pats = _pooled_patchesT(x, 7)
    y = conv_pool_prelu(pats, params['w1'], params['b1'], params['prelu'])
    x = y.T.reshape(B, 12, 12, 15)

    # net1_conv2 (5x5) + PReLU + MaxPool2d(2), fused -> (30, B*16)
    pats = _pooled_patchesT(x, 5)
    y = conv_pool_prelu(pats, params['w2'], params['b2'], params['prelu'])
    x = y.T.reshape(B, 4, 4, 30)

    # net1_conv3 (3x3) + PReLU -> (60, B*4)
    p3 = _im2col(x, 3, 1).reshape(B * 4, 270).T
    y3 = conv_prelu(p3, params['w3'], params['b3'], params['prelu'])

    # flatten in PyTorch's (C, H, W) order -> (B, 240)
    flat = y3.reshape(60, B, 4).transpose(1, 0, 2).reshape(B, 240)

    # net1_fc5_1 + PReLU + loc_reg_ fused in one kernel -> angle (B, 1)
    angle = head(flat, params['wfc'], params['bfc'],
                 params['wreg'], params['breg'], params['prelu'])

    # TODO(synk): cos/sin of the tiny (B,1) angle + theta assembly kept in glue to avoid
    # relying on Mosaic transcendental sin/cos lowering inside the kernel.
    c = jnp.cos(angle)
    s = jnp.sin(angle)
    z = jnp.zeros_like(c)
    theta = jnp.stack([jnp.concatenate([c, -s, z], axis=1),
                       jnp.concatenate([s, c, z], axis=1)], axis=1)    # (B, 2, 3)

    outp = _grid_sample_bilinear(inp, theta, 256, 256)                 # (B, 3, 256, 256)
    return outp, theta


# ----------------------------------------------------------------------------- main

if __name__ == "__main__":
    key = jax.random.PRNGKey(0)
    k_inp, k_par = jax.random.split(key)
    # shape dictated by the module: pad=60 + AvgPool2d(8) + Linear(240, 12) => 360x360 RGB
    inp = jax.random.normal(k_inp, (2, 3, 360, 360), dtype=jnp.float32)
    params = init_params(k_par)

    fwd = jax.jit(functools.partial(stn_one_forward, params))
    outp, theta = fwd(inp)
    jax.block_until_ready((outp, theta))

    assert outp.shape == (2, 3, 256, 256)
    assert theta.shape == (2, 2, 3)
    assert bool(jnp.all(jnp.isfinite(outp))) and bool(jnp.all(jnp.isfinite(theta)))
    print("KERNEL_OK")
</pallas_src>

<mosaic_0001>
module attributes {stable_mosaic.version = 11 : i64} {
  func.func private @main(%arg0: i32) attributes {dimension_semantics = [#tpu.dimension_semantics<core_parallel>], iteration_bounds = array<i64: 2>, tpu.core_type = #tpu.core_type<sc_scalar_subcore>, window_params = []} {
    return
  }
}

module attributes {stable_mosaic.version = 11 : i64} {
  func.func private @main(%arg0: i32) attributes {dimension_semantics = [#tpu.dimension_semantics<core_parallel>], iteration_bounds = array<i64: 2>, tpu.core_type = #tpu.core_type<sc_scalar_subcore>, window_params = []} {
    return
  }
}

module attributes {stable_mosaic.version = 11 : i64} {
  func.func @_conv_pool_prelu_kernel(%arg0: i32, %arg1: memref<147x288xf32, #tpu.memory_space<vmem>>, %arg2: memref<147x288xf32, #tpu.memory_space<vmem>>, %arg3: memref<147x288xf32, #tpu.memory_space<vmem>>, %arg4: memref<147x288xf32, #tpu.memory_space<vmem>>, %arg5: memref<15x147xf32, #tpu.memory_space<vmem>>, %arg6: memref<15x1xf32, #tpu.memory_space<vmem>>, %arg7: memref<1x1xf32, #tpu.memory_space<vmem>>, %arg8: memref<15x288xf32, #tpu.memory_space<vmem>>) attributes {dimension_semantics = [#tpu.dimension_semantics<arbitrary>], iteration_bounds = array<i64: 1>, scalar_prefetch = 0 : i64, scratch_operands = 0 : i64, tpu.core_type = #tpu.core_type<tc>, window_params = [{pipeline_mode = #tpu.pipeline_mode<synchronous>, transform_indices = @transform_0, window_bounds = array<i64: 147, 288>}, {pipeline_mode = #tpu.pipeline_mode<synchronous>, transform_indices = @transform_1, window_bounds = array<i64: 147, 288>}, {pipeline_mode = #tpu.pipeline_mode<synchronous>, transform_indices = @transform_2, window_bounds = array<i64: 147, 288>}, {pipeline_mode = #tpu.pipeline_mode<synchronous>, transform_indices = @transform_3, window_bounds = array<i64: 147, 288>}, {pipeline_mode = #tpu.pipeline_mode<synchronous>, transform_indices = @transform_4, window_bounds = array<i64: 15, 147>}, {pipeline_mode = #tpu.pipeline_mode<synchronous>, transform_indices = @transform_5, window_bounds = array<i64: 15, 1>}, {pipeline_mode = #tpu.pipeline_mode<synchronous>, transform_indices = @transform_6, window_bounds = array<i64: 1, 1>}, {pipeline_mode = #tpu.pipeline_mode<synchronous>, transform_indices = @transform_7, window_bounds = array<i64: 15, 288>}]} {
    %c0 = arith.constant 0 : index
    %c0_0 = arith.constant 0 : index
    %0 = vector.load %arg5[%c0, %c0_0] : memref<15x147xf32, #tpu.memory_space<vmem>>, vector<15x147xf32>
    %c0_1 = arith.constant 0 : index
    %c0_2 = arith.constant 0 : index
    %1 = vector.load %arg1[%c0_1, %c0_2] : memref<147x288xf32, #tpu.memory_space<vmem>>, vector<147x288xf32>
    %cst = arith.constant dense<0.000000e+00> : vector<15x288xf32>
    %2 = tpu.matmul %0, %1, %cst {dimension_numbers = #tpu.dot_dimension_numbers<[1], [0], [0], [1], [0, 0, 1, 1], [], []>} : vector<15x147xf32>, vector<147x288xf32>, vector<15x288xf32> -> vector<15x288xf32>
    %c0_3 = arith.constant 0 : index
    %c0_4 = arith.constant 0 : index
    %3 = vector.load %arg5[%c0_3, %c0_4] : memref<15x147xf32, #tpu.memory_space<vmem>>, vector<15x147xf32>
    %c0_5 = arith.constant 0 : index
    %c0_6 = arith.constant 0 : index
    %4 = vector.load %arg2[%c0_5, %c0_6] : memref<147x288xf32, #tpu.memory_space<vmem>>, vector<147x288xf32>
    %cst_7 = arith.constant dense<0.000000e+00> : vector<15x288xf32>
    %5 = tpu.matmul %3, %4, %cst_7 {dimension_numbers = #tpu.dot_dimension_numbers<[1], [0], [0], [1], [0, 0, 1, 1], [], []>} : vector<15x147xf32>, vector<147x288xf32>, vector<15x288xf32> -> vector<15x288xf32>
    %6 = arith.maximumf %2, %5 : vector<15x288xf32>
    %c0_8 = arith.constant 0 : index
    %c0_9 = arith.constant 0 : index
    %7 = vector.load %arg5[%c0_8, %c0_9] : memref<15x147xf32, #tpu.memory_space<vmem>>, vector<15x147xf32>
    %c0_10 = arith.constant 0 : index
    %c0_11 = arith.constant 0 : index
    %8 = vector.load %arg3[%c0_10, %c0_11] : memref<147x288xf32, #tpu.memory_space<vmem>>, vector<147x288xf32>
    %cst_12 = arith.constant dense<0.000000e+00> : vector<15x288xf32>
    %9 = tpu.matmul %7, %8, %cst_12 {dimension_numbers = #tpu.dot_dimension_numbers<[1], [0], [0], [1], [0, 0, 1, 1], [], []>} : vector<15x147xf32>, vector<147x288xf32>, vector<15x288xf32> -> vector<15x288xf32>
    %c0_13 = arith.constant 0 : index
    %c0_14 = arith.constant 0 : index
    %10 = vector.load %arg5[%c0_13, %c0_14] : memref<15x147xf32, #tpu.memory_space<vmem>>, vector<15x147xf32>
    %c0_15 = arith.constant 0 : index
    %c0_16 = arith.constant 0 : index
    %11 = vector.load %arg4[%c0_15, %c0_16] : memref<147x288xf32, #tpu.memory_space<vmem>>, vector<147x288xf32>
    %cst_17 = arith.constant dense<0.000000e+00> : vector<15x288xf32>
    %12 = tpu.matmul %10, %11, %cst_17 {dimension_numbers = #tpu.dot_dimension_numbers<[1], [0], [0], [1], [0, 0, 1, 1], [], []>} : vector<15x147xf32>, vector<147x288xf32>, vector<15x288xf32> -> vector<15x288xf32>
    %13 = arith.maximumf %9, %12 : vector<15x288xf32>
    %14 = arith.maximumf %6, %13 : vector<15x288xf32>
    %c0_18 = arith.constant 0 : index
    %c0_19 = arith.constant 0 : index
    %15 = vector.load %arg6[%c0_18, %c0_19] : memref<15x1xf32, #tpu.memory_space<vmem>>, vector<15x1xf32>
    %16 = vector.broadcast %15 : vector<15x1xf32> to vector<15x288xf32>
    %17 = arith.addf %14, %16 : vector<15x288xf32>
    %cst_20 = arith.constant 0.000000e+00 : f32
    %18 = vector.broadcast %cst_20 : f32 to vector<15x288xf32>
    %19 = arith.cmpf ogt, %17, %18 : vector<15x288xf32>
    %c0_21 = arith.constant 0 : index
    %c0_22 = arith.constant 0 : index
    %20 = vector.load %arg7[%c0_21, %c0_22] : memref<1x1xf32, #tpu.memory_space<vmem>>, vector<1x1xf32>
    %21 = vector.broadcast %20 : vector<1x1xf32> to vector<15x288xf32>
    %22 = arith.mulf %21, %17 : vector<15x288xf32>
    %23 = arith.select %19, %17, %22 : vector<15x288xi1>, vector<15x288xf32>
    %c0_23 = arith.constant 0 : index
    %c0_24 = arith.constant 0 : index
    %24 = vector.load %arg8[%c0_23, %c0_24] : memref<15x288xf32, #tpu.memory_space<vmem>>, vector<15x288xf32>
    tpu.vector_store %arg8[%c0_23, %c0_24], %23 {strides = array<i32>} : memref<15x288xf32, #tpu.memory_space<vmem>>, vector<15x288xf32>,
    return
  }
  func.func @transform_0(%arg0: i32) -> (i32, i32) {
    %c0_i32 = arith.constant 0 : i32
    %c0_i32_0 = arith.constant 0 : i32
    %c0_i32_1 = arith.constant 0 : i32
    return %c0_i32, %c0_i32_0 : i32, i32
  }
  func.func @transform_1(%arg0: i32) -> (i32, i32) {
    %c0_i32 = arith.constant 0 : i32
    %c0_i32_0 = arith.constant 0 : i32
    %c0_i32_1 = arith.constant 0 : i32
    return %c0_i32, %c0_i32_0 : i32, i32
  }
  func.func @transform_2(%arg0: i32) -> (i32, i32) {
    %c0_i32 = arith.constant 0 : i32
    %c0_i32_0 = arith.constant 0 : i32
    %c0_i32_1 = arith.constant 0 : i32
    return %c0_i32, %c0_i32_0 : i32, i32
  }
  func.func @transform_3(%arg0: i32) -> (i32, i32) {
    %c0_i32 = arith.constant 0 : i32
    %c0_i32_0 = arith.constant 0 : i32
    %c0_i32_1 = arith.constant 0 : i32
    return %c0_i32, %c0_i32_0 : i32, i32
  }
  func.func @transform_4(%arg0: i32) -> (i32, i32) {
    %c0_i32 = arith.constant 0 : i32
    %c0_i32_0 = arith.constant 0 : i32
    %c0_i32_1 = arith.constant 0 : i32
    return %c0_i32, %c0_i32_0 : i32, i32
  }
  func.func @transform_5(%arg0: i32) -> (i32, i32) {
    %c0_i32 = arith.constant 0 : i32
    %c0_i32_0 = arith.constant 0 : i32
    %c0_i32_1 = arith.constant 0 : i32
    return %c0_i32, %c0_i32_0 : i32, i32
  }
  func.func @transform_6(%arg0: i32) -> (i32, i32) {
    %c0_i32 = arith.constant 0 : i32
    %c0_i32_0 = arith.constant 0 : i32
    %c0_i32_1 = arith.constant 0 : i32
    return %c0_i32, %c0_i32_0 : i32, i32
  }
  func.func @transform_7(%arg0: i32) -> (i32, i32) {
    %c0_i32 = arith.constant 0 : i32
    %c0_i32_0 = arith.constant 0 : i32
    %c0_i32_1 = arith.constant 0 : i32
    return %c0_i32, %c0_i32_0 : i32, i32
  }
}

module attributes {stable_mosaic.version = 11 : i64} {
  func.func @_conv_pool_prelu_kernel(%arg0: i32, %arg1: memref<375x32xf32, #tpu.memory_space<vmem>>, %arg2: memref<375x32xf32, #tpu.memory_space<vmem>>, %arg3: memref<375x32xf32, #tpu.memory_space<vmem>>, %arg4: memref<375x32xf32, #tpu.memory_space<vmem>>, %arg5: memref<30x375xf32, #tpu.memory_space<vmem>>, %arg6: memref<30x1xf32, #tpu.memory_space<vmem>>, %arg7: memref<1x1xf32, #tpu.memory_space<vmem>>, %arg8: memref<30x32xf32, #tpu.memory_space<vmem>>) attributes {dimension_semantics = [#tpu.dimension_semantics<arbitrary>], iteration_bounds = array<i64: 1>, scalar_prefetch = 0 : i64, scratch_operands = 0 : i64, tpu.core_type = #tpu.core_type<tc>, window_params = [{pipeline_mode = #tpu.pipeline_mode<synchronous>, transform_indices = @transform_0, window_bounds = array<i64: 375, 32>}, {pipeline_mode = #tpu.pipeline_mode<synchronous>, transform_indices = @transform_1, window_bounds = array<i64: 375, 32>}, {pipeline_mode = #tpu.pipeline_mode<synchronous>, transform_indices = @transform_2, window_bounds = array<i64: 375, 32>}, {pipeline_mode = #tpu.pipeline_mode<synchronous>, transform_indices = @transform_3, window_bounds = array<i64: 375, 32>}, {pipeline_mode = #tpu.pipeline_mode<synchronous>, transform_indices = @transform_4, window_bounds = array<i64: 30, 375>}, {pipeline_mode = #tpu.pipeline_mode<synchronous>, transform_indices = @transform_5, window_bounds = array<i64: 30, 1>}, {pipeline_mode = #tpu.pipeline_mode<synchronous>, transform_indices = @transform_6, window_bounds = array<i64: 1, 1>}, {pipeline_mode = #tpu.pipeline_mode<synchronous>, transform_indices = @transform_7, window_bounds = array<i64: 30, 32>}]} {
    %c0 = arith.constant 0 : index
    %c0_0 = arith.constant 0 : index
    %0 = vector.load %arg5[%c0, %c0_0] : memref<30x375xf32, #tpu.memory_space<vmem>>, vector<30x375xf32>
    %c0_1 = arith.constant 0 : index
    %c0_2 = arith.constant 0 : index
    %1 = vector.load %arg1[%c0_1, %c0_2] : memref<375x32xf32, #tpu.memory_space<vmem>>, vector<375x32xf32>
    %cst = arith.constant dense<0.000000e+00> : vector<30x32xf32>
    %2 = tpu.matmul %0, %1, %cst {dimension_numbers = #tpu.dot_dimension_numbers<[1], [0], [0], [1], [0, 0, 1, 1], [], []>} : vector<30x375xf32>, vector<375x32xf32>, vector<30x32xf32> -> vector<30x32xf32>
    %c0_3 = arith.constant 0 : index
    %c0_4 = arith.constant 0 : index
    %3 = vector.load %arg5[%c0_3, %c0_4] : memref<30x375xf32, #tpu.memory_space<vmem>>, vector<30x375xf32>
    %c0_5 = arith.constant 0 : index
    %c0_6 = arith.constant 0 : index
    %4 = vector.load %arg2[%c0_5, %c0_6] : memref<375x32xf32, #tpu.memory_space<vmem>>, vector<375x32xf32>
    %cst_7 = arith.constant dense<0.000000e+00> : vector<30x32xf32>
    %5 = tpu.matmul %3, %4, %cst_7 {dimension_numbers = #tpu.dot_dimension_numbers<[1], [0], [0], [1], [0, 0, 1, 1], [], []>} : vector<30x375xf32>, vector<375x32xf32>, vector<30x32xf32> -> vector<30x32xf32>
    %6 = arith.maximumf %2, %5 : vector<30x32xf32>
    %c0_8 = arith.constant 0 : index
    %c0_9 = arith.constant 0 : index
    %7 = vector.load %arg5[%c0_8, %c0_9] : memref<30x375xf32, #tpu.memory_space<vmem>>, vector<30x375xf32>
    %c0_10 = arith.constant 0 : index
    %c0_11 = arith.constant 0 : index
    %8 = vector.load %arg3[%c0_10, %c0_11] : memref<375x32xf32, #tpu.memory_space<vmem>>, vector<375x32xf32>
    %cst_12 = arith.constant dense<0.000000e+00> : vector<30x32xf32>
    %9 = tpu.matmul %7, %8, %cst_12 {dimension_numbers = #tpu.dot_dimension_numbers<[1], [0], [0], [1], [0, 0, 1, 1], [], []>} : vector<30x375xf32>, vector<375x32xf32>, vector<30x32xf32> -> vector<30x32xf32>
    %c0_13 = arith.constant 0 : index
    %c0_14 = arith.constant 0 : index
    %10 = vector.load %arg5[%c0_13, %c0_14] : memref<30x375xf32, #tpu.memory_space<vmem>>, vector<30x375xf32>
    %c0_15 = arith.constant 0 : index
    %c0_16 = arith.constant 0 : index
    %11 = vector.load %arg4[%c0_15, %c0_16] : memref<375x32xf32, #tpu.memory_space<vmem>>, vector<375x32xf32>
    %cst_17 = arith.constant dense<0.000000e+00> : vector<30x32xf32>
    %12 = tpu.matmul %10, %11, %cst_17 {dimension_numbers = #tpu.dot_dimension_numbers<[1], [0], [0], [1], [0, 0, 1, 1], [], []>} : vector<30x375xf32>, vector<375x32xf32>, vector<30x32xf32> -> vector<30x32xf32>
    %13 = arith.maximumf %9, %12 : vector<30x32xf32>
    %14 = arith.maximumf %6, %13 : vector<30x32xf32>
    %c0_18 = arith.constant 0 : index
    %c0_19 = arith.constant 0 : index
    %15 = vector.load %arg6[%c0_18, %c0_19] : memref<30x1xf32, #tpu.memory_space<vmem>>, vector<30x1xf32>
    %16 = vector.broadcast %15 : vector<30x1xf32> to vector<30x32xf32>
    %17 = arith.addf %14, %16 : vector<30x32xf32>
    %cst_20 = arith.constant 0.000000e+00 : f32
    %18 = vector.broadcast %cst_20 : f32 to vector<30x32xf32>
    %19 = arith.cmpf ogt, %17, %18 : vector<30x32xf32>
    %c0_21 = arith.constant 0 : index
    %c0_22 = arith.constant 0 : index
    %20 = vector.load %arg7[%c0_21, %c0_22] : memref<1x1xf32, #tpu.memory_space<vmem>>, vector<1x1xf32>
    %21 = vector.broadcast %20 : vector<1x1xf32> to vector<30x32xf32>
    %22 = arith.mulf %21, %17 : vector<30x32xf32>
    %23 = arith.select %19, %17, %22 : vector<30x32xi1>, vector<30x32xf32>
    %c0_23 = arith.constant 0 : index
    %c0_24 = arith.constant 0 : index
    %24 = vector.load %arg8[%c0_23, %c0_24] : memref<30x32xf32, #tpu.memory_space<vmem>>, vector<30x32xf32>
    tpu.vector_store %arg8[%c0_23, %c0_24], %23 {strides = array<i32>} : memref<30x32xf32, #tpu.memory_space<vmem>>, vector<30x32xf32>,
    return
  }
  func.func @transform_0(%arg0: i32) -> (i32, i32) {
    %c0_i32 = arith.constant 0 : i32
    %c0_i32_0 = arith.constant 0 : i32
    %c0_i32_1 = arith.constant 0 : i32
    return %c0_i32, %c0_i32_0 : i32, i32
  }
  func.func @transform_1(%arg0: i32) -> (i32, i32) {
    %c0_i32 = arith.constant 0 : i32
    %c0_i32_0 = arith.constant 0 : i32
    %c0_i32_1 = arith.constant 0 : i32
    return %c0_i32, %c0_i32_0 : i32, i32
  }
  func.func @transform_2(%arg0: i32) -> (i32, i32) {
    %c0_i32 = arith.constant 0 : i32
    %c0_i32_0 = arith.constant 0 : i32
    %c0_i32_1 = arith.constant 0 : i32
    return %c0_i32, %c0_i32_0 : i32, i32
  }
  func.func @transform_3(%arg0: i32) -> (i32, i32) {
    %c0_i32 = arith.constant 0 : i32
    %c0_i32_0 = arith.constant 0 : i32
    %c0_i32_1 = arith.constant 0 : i32
    return %c0_i32, %c0_i32_0 : i32, i32
  }
  func.func @transform_4(%arg0: i32) -> (i32, i32) {
    %c0_i32 = arith.constant 0 : i32
    %c0_i32_0 = arith.constant 0 : i32
    %c0_i32_1 = arith.constant 0 : i32
    return %c0_i32, %c0_i32_0 : i32, i32
  }
  func.func @transform_5(%arg0: i32) -> (i32, i32) {
    %c0_i32 = arith.constant 0 : i32
    %c0_i32_0 = arith.constant 0 : i32
    %c0_i32_1 = arith.constant 0 : i32
    return %c0_i32, %c0_i32_0 : i32, i32
  }
  func.func @transform_6(%arg0: i32) -> (i32, i32) {
    %c0_i32 = arith.constant 0 : i32
    %c0_i32_0 = arith.constant 0 : i32
    %c0_i32_1 = arith.constant 0 : i32
    return %c0_i32, %c0_i32_0 : i32, i32
  }
  func.func @transform_7(%arg0: i32) -> (i32, i32) {
    %c0_i32 = arith.constant 0 : i32
    %c0_i32_0 = arith.constant 0 : i32
    %c0_i32_1 = arith.constant 0 : i32
    return %c0_i32, %c0_i32_0 : i32, i32
  }
}

module attributes {stable_mosaic.version = 11 : i64} {
  func.func @_conv_prelu_kernel(%arg0: i32, %arg1: memref<270x8xf32, #tpu.memory_space<vmem>>, %arg2: memref<60x270xf32, #tpu.memory_space<vmem>>, %arg3: memref<60x1xf32, #tpu.memory_space<vmem>>, %arg4: memref<1x1xf32, #tpu.memory_space<vmem>>, %arg5: memref<60x8xf32, #tpu.memory_space<vmem>>) attributes {dimension_semantics = [#tpu.dimension_semantics<arbitrary>], iteration_bounds = array<i64: 1>, scalar_prefetch = 0 : i64, scratch_operands = 0 : i64, tpu.core_type = #tpu.core_type<tc>, window_params = [{pipeline_mode = #tpu.pipeline_mode<synchronous>, transform_indices = @transform_0, window_bounds = array<i64: 270, 8>}, {pipeline_mode = #tpu.pipeline_mode<synchronous>, transform_indices = @transform_1, window_bounds = array<i64: 60, 270>}, {pipeline_mode = #tpu.pipeline_mode<synchronous>, transform_indices = @transform_2, window_bounds = array<i64: 60, 1>}, {pipeline_mode = #tpu.pipeline_mode<synchronous>, transform_indices = @transform_3, window_bounds = array<i64: 1, 1>}, {pipeline_mode = #tpu.pipeline_mode<synchronous>, transform_indices = @transform_4, window_bounds = array<i64: 60, 8>}]} {
    %c0 = arith.constant 0 : index
    %c0_0 = arith.constant 0 : index
    %0 = vector.load %arg2[%c0, %c0_0] : memref<60x270xf32, #tpu.memory_space<vmem>>, vector<60x270xf32>
    %c0_1 = arith.constant 0 : index
    %c0_2 = arith.constant 0 : index
    %1 = vector.load %arg1[%c0_1, %c0_2] : memref<270x8xf32, #tpu.memory_space<vmem>>, vector<270x8xf32>
    %cst = arith.constant dense<0.000000e+00> : vector<60x8xf32>
    %2 = tpu.matmul %0, %1, %cst {dimension_numbers = #tpu.dot_dimension_numbers<[1], [0], [0], [1], [0, 0, 1, 1], [], []>} : vector<60x270xf32>, vector<270x8xf32>, vector<60x8xf32> -> vector<60x8xf32>
    %c0_3 = arith.constant 0 : index
    %c0_4 = arith.constant 0 : index
    %3 = vector.load %arg3[%c0_3, %c0_4] : memref<60x1xf32, #tpu.memory_space<vmem>>, vector<60x1xf32>
    %4 = vector.broadcast %3 : vector<60x1xf32> to vector<60x8xf32>
    %5 = arith.addf %2, %4 : vector<60x8xf32>
    %cst_5 = arith.constant 0.000000e+00 : f32
    %6 = vector.broadcast %cst_5 : f32 to vector<60x8xf32>
    %7 = arith.cmpf ogt, %5, %6 : vector<60x8xf32>
    %c0_6 = arith.constant 0 : index
    %c0_7 = arith.constant 0 : index
    %8 = vector.load %arg4[%c0_6, %c0_7] : memref<1x1xf32, #tpu.memory_space<vmem>>, vector<1x1xf32>
    %9 = vector.broadcast %8 : vector<1x1xf32> to vector<60x8xf32>
    %10 = arith.mulf %9, %5 : vector<60x8xf32>
    %11 = arith.select %7, %5, %10 : vector<60x8xi1>, vector<60x8xf32>
    %c0_8 = arith.constant 0 : index
    %c0_9 = arith.constant 0 : index
    %12 = vector.load %arg5[%c0_8, %c0_9] : memref<60x8xf32, #tpu.memory_space<vmem>>, vector<60x8xf32>
    tpu.vector_store %arg5[%c0_8, %c0_9], %11 {strides = array<i32>} : memref<60x8xf32, #tpu.memory_space<vmem>>, vector<60x8xf32>,
    return
  }
  func.func @transform_0(%arg0: i32) -> (i32, i32) {
    %c0_i32 = arith.constant 0 : i32
    %c0_i32_0 = arith.constant 0 : i32
    %c0_i32_1 = arith.constant 0 : i32
    return %c0_i32, %c0_i32_0 : i32, i32
  }
  func.func @transform_1(%arg0: i32) -> (i32, i32) {
    %c0_i32 = arith.constant 0 : i32
    %c0_i32_0 = arith.constant 0 : i32
    %c0_i32_1 = arith.constant 0 : i32
    return %c0_i32, %c0_i32_0 : i32, i32
  }
  func.func @transform_2(%arg0: i32) -> (i32, i32) {
    %c0_i32 = arith.constant 0 : i32
    %c0_i32_0 = arith.constant 0 : i32
    %c0_i32_1 = arith.constant 0 : i32
    return %c0_i32, %c0_i32_0 : i32, i32
  }
  func.func @transform_3(%arg0: i32) -> (i32, i32) {
    %c0_i32 = arith.constant 0 : i32
    %c0_i32_0 = arith.constant 0 : i32
    %c0_i32_1 = arith.constant 0 : i32
    return %c0_i32, %c0_i32_0 : i32, i32
  }
  func.func @transform_4(%arg0: i32) -> (i32, i32) {
    %c0_i32 = arith.constant 0 : i32
    %c0_i32_0 = arith.constant 0 : i32
    %c0_i32_1 = arith.constant 0 : i32
    return %c0_i32, %c0_i32_0 : i32, i32
  }
}

module attributes {stable_mosaic.version = 11 : i64} {
  func.func @_head_kernel(%arg0: i32, %arg1: memref<2x240xf32, #tpu.memory_space<vmem>>, %arg2: memref<240x12xf32, #tpu.memory_space<vmem>>, %arg3: memref<1x12xf32, #tpu.memory_space<vmem>>, %arg4: memref<12x1xf32, #tpu.memory_space<vmem>>, %arg5: memref<1x1xf32, #tpu.memory_space<vmem>>, %arg6: memref<1x1xf32, #tpu.memory_space<vmem>>, %arg7: memref<2x1xf32, #tpu.memory_space<vmem>>) attributes {dimension_semantics = [#tpu.dimension_semantics<arbitrary>], iteration_bounds = array<i64: 1>, scalar_prefetch = 0 : i64, scratch_operands = 0 : i64, tpu.core_type = #tpu.core_type<tc>, window_params = [{pipeline_mode = #tpu.pipeline_mode<synchronous>, transform_indices = @transform_0, window_bounds = array<i64: 2, 240>}, {pipeline_mode = #tpu.pipeline_mode<synchronous>, transform_indices = @transform_1, window_bounds = array<i64: 240, 12>}, {pipeline_mode = #tpu.pipeline_mode<synchronous>, transform_indices = @transform_2, window_bounds = array<i64: 1, 12>}, {pipeline_mode = #tpu.pipeline_mode<synchronous>, transform_indices = @transform_3, window_bounds = array<i64: 12, 1>}, {pipeline_mode = #tpu.pipeline_mode<synchronous>, transform_indices = @transform_4, window_bounds = array<i64: 1, 1>}, {pipeline_mode = #tpu.pipeline_mode<synchronous>, transform_indices = @transform_5, window_bounds = array<i64: 1, 1>}, {pipeline_mode = #tpu.pipeline_mode<synchronous>, transform_indices = @transform_6, window_bounds = array<i64: 2, 1>}]} {
    %c0 = arith.constant 0 : index
    %c0_0 = arith.constant 0 : index
    %0 = vector.load %arg1[%c0, %c0_0] : memref<2x240xf32, #tpu.memory_space<vmem>>, vector<2x240xf32>
    %c0_1 = arith.constant 0 : index
    %c0_2 = arith.constant 0 : index
    %1 = vector.load %arg2[%c0_1, %c0_2] : memref<240x12xf32, #tpu.memory_space<vmem>>, vector<240x12xf32>
    %cst = arith.constant dense<0.000000e+00> : vector<2x12xf32>
    %2 = tpu.matmul %0, %1, %cst {dimension_numbers = #tpu.dot_dimension_numbers<[1], [0], [0], [1], [0, 0, 1, 1], [], []>} : vector<2x240xf32>, vector<240x12xf32>, vector<2x12xf32> -> vector<2x12xf32>
    %c0_3 = arith.constant 0 : index
    %c0_4 = arith.constant 0 : index
    %3 = vector.load %arg3[%c0_3, %c0_4] : memref<1x12xf32, #tpu.memory_space<vmem>>, vector<1x12xf32>
    %4 = vector.broadcast %3 : vector<1x12xf32> to vector<2x12xf32>
    %5 = arith.addf %2, %4 : vector<2x12xf32>
    %cst_5 = arith.constant 0.000000e+00 : f32
    %6 = vector.broadcast %cst_5 : f32 to vector<2x12xf32>
    %7 = arith.cmpf ogt, %5, %6 : vector<2x12xf32>
    %c0_6 = arith.constant 0 : index
    %c0_7 = arith.constant 0 : index
    %8 = vector.load %arg6[%c0_6, %c0_7] : memref<1x1xf32, #tpu.memory_space<vmem>>, vector<1x1xf32>
    %9 = vector.broadcast %8 : vector<1x1xf32> to vector<2x12xf32>
    %10 = arith.mulf %9, %5 : vector<2x12xf32>
    %11 = arith.select %7, %5, %10 : vector<2x12xi1>, vector<2x12xf32>
    %c0_8 = arith.constant 0 : index
    %c0_9 = arith.constant 0 : index
    %12 = vector.load %arg4[%c0_8, %c0_9] : memref<12x1xf32, #tpu.memory_space<vmem>>, vector<12x1xf32>
    %cst_10 = arith.constant dense<0.000000e+00> : vector<2x1xf32>
    %13 = tpu.matmul %11, %12, %cst_10 {dimension_numbers = #tpu.dot_dimension_numbers<[1], [0], [0], [1], [0, 0, 1, 1], [], []>} : vector<2x12xf32>, vector<12x1xf32>, vector<2x1xf32> -> vector<2x1xf32>
    %c0_11 = arith.constant 0 : index
    %c0_12 = arith.constant 0 : index
    %14 = vector.load %arg5[%c0_11, %c0_12] : memref<1x1xf32, #tpu.memory_space<vmem>>, vector<1x1xf32>
    %15 = vector.broadcast %14 : vector<1x1xf32> to vector<2x1xf32>
    %16 = arith.addf %13, %15 : vector<2x1xf32>
    %c0_13 = arith.constant 0 : index
    %c0_14 = arith.constant 0 : index
    %17 = vector.load %arg7[%c0_13, %c0_14] : memref<2x1xf32, #tpu.memory_space<vmem>>, vector<2x1xf32>
    tpu.vector_store %arg7[%c0_13, %c0_14], %16 {strides = array<i32>} : memref<2x1xf32, #tpu.memory_space<vmem>>, vector<2x1xf32>,
    return
  }
  func.func @transform_0(%arg0: i32) -> (i32, i32) {
    %c0_i32 = arith.constant 0 : i32
    %c0_i32_0 = arith.constant 0 : i32
    %c0_i32_1 = arith.constant 0 : i32
    return %c0_i32, %c0_i32_0 : i32, i32
  }
  func.func @transform_1(%arg0: i32) -> (i32, i32) {
    %c0_i32 = arith.constant 0 : i32
    %c0_i32_0 = arith.constant 0 : i32
    %c0_i32_1 = arith.constant 0 : i32
    return %c0_i32, %c0_i32_0 : i32, i32
  }
  func.func @transform_2(%arg0: i32) -> (i32, i32) {
    %c0_i32 = arith.constant 0 : i32
    %c0_i32_0 = arith.constant 0 : i32
    %c0_i32_1 = arith.constant 0 : i32
    return %c0_i32, %c0_i32_0 : i32, i32
  }
  func.func @transform_3(%arg0: i32) -> (i32, i32) {
    %c0_i32 = arith.constant 0 : i32
    %c0_i32_0 = arith.constant 0 : i32
    %c0_i32_1 = arith.constant 0 : i32
    return %c0_i32, %c0_i32_0 : i32, i32
  }
  func.func @transform_4(%arg0: i32) -> (i32, i32) {
    %c0_i32 = arith.constant 0 : i32
    %c0_i32_0 = arith.constant 0 : i32
    %c0_i32_1 = arith.constant 0 : i32
    return %c0_i32, %c0_i32_0 : i32, i32
  }
  func.func @transform_5(%arg0: i32) -> (i32, i32) {
    %c0_i32 = arith.constant 0 : i32
    %c0_i32_0 = arith.constant 0 : i32
    %c0_i32_1 = arith.constant 0 : i32
    return %c0_i32, %c0_i32_0 : i32, i32
  }
  func.func @transform_6(%arg0: i32) -> (i32, i32) {
    %c0_i32 = arith.constant 0 : i32
    %c0_i32_0 = arith.constant 0 : i32
    %c0_i32_1 = arith.constant 0 : i32
    return %c0_i32, %c0_i32_0 : i32, i32
  }
}

module attributes {stable_mosaic.version = 11 : i64} {
  func.func @_bilinear_kernel(%arg0: i32, %arg1: i32, %arg2: memref<1x1x16384xf32, #tpu.memory_space<vmem>>, %arg3: memref<1x1x16384xf32, #tpu.memory_space<vmem>>, %arg4: memref<1x3x16384xf32, #tpu.memory_space<vmem>>, %arg5: memref<1x3x16384xf32, #tpu.memory_space<vmem>>, %arg6: memref<1x3x16384xf32, #tpu.memory_space<vmem>>, %arg7: memref<1x3x16384xf32, #tpu.memory_space<vmem>>, %arg8: memref<1x3x16384xf32, #tpu.memory_space<vmem>>) attributes {dimension_semantics = [#tpu.dimension_semantics<parallel>, #tpu.dimension_semantics<parallel>], iteration_bounds = array<i64: 2, 4>, scalar_prefetch = 0 : i64, scratch_operands = 0 : i64, tpu.core_type = #tpu.core_type<tc>, window_params = [{transform_indices = @transform_0, window_bounds = array<i64: 1, 1, 16384>}, {transform_indices = @transform_1, window_bounds = array<i64: 1, 1, 16384>}, {transform_indices = @transform_2, window_bounds = array<i64: 1, 3, 16384>}, {transform_indices = @transform_3, window_bounds = array<i64: 1, 3, 16384>}, {transform_indices = @transform_4, window_bounds = array<i64: 1, 3, 16384>}, {transform_indices = @transform_5, window_bounds = array<i64: 1, 3, 16384>}, {transform_indices = @transform_6, window_bounds = array<i64: 1, 3, 16384>}]} {
    %c0 = arith.constant 0 : index
    %c0_0 = arith.constant 0 : index
    %c0_1 = arith.constant 0 : index
    %0 = vector.load %arg2[%c0, %c0_0, %c0_1] : memref<1x1x16384xf32, #tpu.memory_space<vmem>>, vector<1x1x16384xf32>
    %c0_2 = arith.constant 0 : index
    %c0_3 = arith.constant 0 : index
    %c0_4 = arith.constant 0 : index
    %1 = vector.load %arg3[%c0_2, %c0_3, %c0_4] : memref<1x1x16384xf32, #tpu.memory_space<vmem>>, vector<1x1x16384xf32>
    %2 = math.floor %0 : vector<1x1x16384xf32>
    %3 = math.floor %1 : vector<1x1x16384xf32>
    %4 = arith.subf %0, %2 : vector<1x1x16384xf32>
    %5 = arith.subf %1, %3 : vector<1x1x16384xf32>
    %cst = arith.constant 0.000000e+00 : f32
    %6 = vector.broadcast %cst : f32 to vector<1x1x16384xf32>
    %7 = arith.cmpf oge, %2, %6 : vector<1x1x16384xf32>
    %cst_5 = arith.constant 3.590000e+02 : f32
    %8 = vector.broadcast %cst_5 : f32 to vector<1x1x16384xf32>
    %9 = arith.cmpf ole, %2, %8 : vector<1x1x16384xf32>
    %10 = arith.andi %7, %9 : vector<1x1x16384xi1>
    %11 = arith.extui %10 : vector<1x1x16384xi1> to vector<1x1x16384xi32>
    %12 = arith.sitofp %11 : vector<1x1x16384xi32> to vector<1x1x16384xf32>
    %cst_6 = arith.constant -1.000000e+00 : f32
    %13 = vector.broadcast %cst_6 : f32 to vector<1x1x16384xf32>
    %14 = arith.cmpf oge, %2, %13 : vector<1x1x16384xf32>
    %cst_7 = arith.constant 3.580000e+02 : f32
    %15 = vector.broadcast %cst_7 : f32 to vector<1x1x16384xf32>
    %16 = arith.cmpf ole, %2, %15 : vector<1x1x16384xf32>
    %17 = arith.andi %14, %16 : vector<1x1x16384xi1>
    %18 = arith.extui %17 : vector<1x1x16384xi1> to vector<1x1x16384xi32>
    %19 = arith.sitofp %18 : vector<1x1x16384xi32> to vector<1x1x16384xf32>
    %cst_8 = arith.constant 0.000000e+00 : f32
    %20 = vector.broadcast %cst_8 : f32 to vector<1x1x16384xf32>
    %21 = arith.cmpf oge, %3, %20 : vector<1x1x16384xf32>
    %cst_9 = arith.constant 3.590000e+02 : f32
    %22 = vector.broadcast %cst_9 : f32 to vector<1x1x16384xf32>
    %23 = arith.cmpf ole, %3, %22 : vector<1x1x16384xf32>
    %24 = arith.andi %21, %23 : vector<1x1x16384xi1>
    %25 = arith.extui %24 : vector<1x1x16384xi1> to vector<1x1x16384xi32>
    %26 = arith.sitofp %25 : vector<1x1x16384xi32> to vector<1x1x16384xf32>
    %cst_10 = arith.constant -1.000000e+00 : f32
    %27 = vector.broadcast %cst_10 : f32 to vector<1x1x16384xf32>
    %28 = arith.cmpf oge, %3, %27 : vector<1x1x16384xf32>
    %cst_11 = arith.constant 3.580000e+02 : f32
    %29 = vector.broadcast %cst_11 : f32 to vector<1x1x16384xf32>
    %30 = arith.cmpf ole, %3, %29 : vector<1x1x16384xf32>
    %31 = arith.andi %28, %30 : vector<1x1x16384xi1>
    %32 = arith.extui %31 : vector<1x1x16384xi1> to vector<1x1x16384xi32>
    %33 = arith.sitofp %32 : vector<1x1x16384xi32> to vector<1x1x16384xf32>
    %cst_12 = arith.constant 1.000000e+00 : f32
    %34 = vector.broadcast %cst_12 : f32 to vector<1x1x16384xf32>
    %35 = arith.subf %34, %5 : vector<1x1x16384xf32>
    %cst_13 = arith.constant 1.000000e+00 : f32
    %36 = vector.broadcast %cst_13 : f32 to vector<1x1x16384xf32>
    %37 = arith.subf %36, %4 : vector<1x1x16384xf32>
    %38 = arith.mulf %35, %37 : vector<1x1x16384xf32>
    %39 = arith.mulf %38, %26 : vector<1x1x16384xf32>
    %40 = arith.mulf %39, %12 : vector<1x1x16384xf32>
    %cst_14 = arith.constant 1.000000e+00 : f32
    %41 = vector.broadcast %cst_14 : f32 to vector<1x1x16384xf32>
    %42 = arith.subf %41, %5 : vector<1x1x16384xf32>
    %43 = arith.mulf %42, %4 : vector<1x1x16384xf32>
    %44 = arith.mulf %43, %26 : vector<1x1x16384xf32>
    %45 = arith.mulf %44, %19 : vector<1x1x16384xf32>
    %cst_15 = arith.constant 1.000000e+00 : f32
    %46 = vector.broadcast %cst_15 : f32 to vector<1x1x16384xf32>
    %47 = arith.subf %46, %4 : vector<1x1x16384xf32>
    %48 = arith.mulf %5, %47 : vector<1x1x16384xf32>
    %49 = arith.mulf %48, %33 : vector<1x1x16384xf32>
    %50 = arith.mulf %49, %12 : vector<1x1x16384xf32>
    %51 = arith.mulf %5, %4 : vector<1x1x16384xf32>
    %52 = arith.mulf %51, %33 : vector<1x1x16384xf32>
    %53 = arith.mulf %52, %19 : vector<1x1x16384xf32>
    %c0_16 = arith.constant 0 : index
    %c0_17 = arith.constant 0 : index
    %c0_18 = arith.constant 0 : index
    %54 = vector.load %arg4[%c0_16, %c0_17, %c0_18] : memref<1x3x16384xf32, #tpu.memory_space<vmem>>, vector<1x3x16384xf32>
    %55 = vector.broadcast %40 : vector<1x1x16384xf32> to vector<1x3x16384xf32>
    %56 = arith.mulf %55, %54 : vector<1x3x16384xf32>
    %c0_19 = arith.constant 0 : index
    %c0_20 = arith.constant 0 : index
    %c0_21 = arith.constant 0 : index
    %57 = vector.load %arg5[%c0_19, %c0_20, %c0_21] : memref<1x3x16384xf32, #tpu.memory_space<vmem>>, vector<1x3x16384xf32>
    %58 = vector.broadcast %45 : vector<1x1x16384xf32> to vector<1x3x16384xf32>
    %59 = arith.mulf %58, %57 : vector<1x3x16384xf32>
    %60 = arith.addf %56, %59 : vector<1x3x16384xf32>
    %c0_22 = arith.constant 0 : index
    %c0_23 = arith.constant 0 : index
    %c0_24 = arith.constant 0 : index
    %61 = vector.load %arg6[%c0_22, %c0_23, %c0_24] : memref<1x3x16384xf32, #tpu.memory_space<vmem>>, vector<1x3x16384xf32>
    %62 = vector.broadcast %50 : vector<1x1x16384xf32> to vector<1x3x16384xf32>
    %63 = arith.mulf %62, %61 : vector<1x3x16384xf32>
    %64 = arith.addf %60, %63 : vector<1x3x16384xf32>
    %c0_25 = arith.constant 0 : index
    %c0_26 = arith.constant 0 : index
    %c0_27 = arith.constant 0 : index
    %65 = vector.load %arg7[%c0_25, %c0_26, %c0_27] : memref<1x3x16384xf32, #tpu.memory_space<vmem>>, vector<1x3x16384xf32>
    %66 = vector.broadcast %53 : vector<1x1x16384xf32> to vector<1x3x16384xf32>
    %67 = arith.mulf %66, %65 : vector<1x3x16384xf32>
    %68 = arith.addf %64, %67 : vector<1x3x16384xf32>
    %c0_28 = arith.constant 0 : index
    %c0_29 = arith.constant 0 : index
    %c0_30 = arith.constant 0 : index
    %69 = vector.load %arg8[%c0_28, %c0_29, %c0_30] : memref<1x3x16384xf32, #tpu.memory_space<vmem>>, vector<1x3x16384xf32>
    tpu.vector_store %arg8[%c0_28, %c0_29, %c0_30], %68 {strides = array<i32>} : memref<1x3x16384xf32, #tpu.memory_space<vmem>>, vector<1x3x16384xf32>,
    return
  }
  func.func @transform_0(%arg0: i32, %arg1: i32) -> (i32, i32, i32) {
    %c0_i32 = arith.constant 0 : i32
    %c0_i32_0 = arith.constant 0 : i32
    return %arg0, %c0_i32, %arg1 : i32, i32, i32
  }
  func.func @transform_1(%arg0: i32, %arg1: i32) -> (i32, i32, i32) {
    %c0_i32 = arith.constant 0 : i32
    %c0_i32_0 = arith.constant 0 : i32
    return %arg0, %c0_i32, %arg1 : i32, i32, i32
  }
  func.func @transform_2(%arg0: i32, %arg1: i32) -> (i32, i32, i32) {
    %c0_i32 = arith.constant 0 : i32
    %c0_i32_0 = arith.constant 0 : i32
    return %arg0, %c0_i32, %arg1 : i32, i32, i32
  }
  func.func @transform_3(%arg0: i32, %arg1: i32) -> (i32, i32, i32) {
    %c0_i32 = arith.constant 0 : i32
    %c0_i32_0 = arith.constant 0 : i32
    return %arg0, %c0_i32, %arg1 : i32, i32, i32
  }
  func.func @transform_4(%arg0: i32, %arg1: i32) -> (i32, i32, i32) {
    %c0_i32 = arith.constant 0 : i32
    %c0_i32_0 = arith.constant 0 : i32
    return %arg0, %c0_i32, %arg1 : i32, i32, i32
  }
  func.func @transform_5(%arg0: i32, %arg1: i32) -> (i32, i32, i32) {
    %c0_i32 = arith.constant 0 : i32
    %c0_i32_0 = arith.constant 0 : i32
    return %arg0, %c0_i32, %arg1 : i32, i32, i32
  }
  func.func @transform_6(%arg0: i32, %arg1: i32) -> (i32, i32, i32) {
    %c0_i32 = arith.constant 0 : i32
    %c0_i32_0 = arith.constant 0 : i32
    return %arg0, %c0_i32, %arg1 : i32, i32, i32
  }
}

</mosaic_0001>

<llo_original>
// kernel: stn_one_forward.5
$region0: #{stn_one_forward.5}
  #allocation0 [shape = 'u32[]', space=smem, size = 0x4, offset = 0x4, fixed_abs, tag = 'smem constant byte address 0x4 - core index']
  #allocation1 [shape = 'u32[144,128]{1,0:T(1,128)}', space=vmem, size = 0x12000, scoped, tag = 'internal scratch']
  #allocation2 [shape = 'f32[1,1]{1,0:T(1,128)S(1)}', space=vmem, size = 0x200, scoped, tag = 'scoped memory for stn_one_forward.5']
  %s0 = inlined_call_operand.vmem [shape: f32[147,288], index: 0, kind: input, shape index: {}]
  %s1 = inlined_call_operand.vmem [shape: f32[147,288], index: 1, kind: input, shape index: {}]
  %s2 = inlined_call_operand.vmem [shape: f32[147,288], index: 2, kind: input, shape index: {}]
  %s3 = inlined_call_operand.vmem [shape: f32[147,288], index: 3, kind: input, shape index: {}]
  %s4 = inlined_call_operand.vmem [shape: f32[15,147], index: 4, kind: input, shape index: {}]
  %s5 = inlined_call_operand.vmem [shape: f32[15,1], index: 5, kind: input, shape index: {}]
  %s6 = inlined_call_operand.<no memory space> [shape: f32[1,1], index: 6, kind: input, shape index: {}]
  %s7 = inlined_call_operand.vmem [shape: f32[15,288], index: 7, kind: output, shape index: {}]
  %s8 = sld [smem:[#allocation0]]
  $region38: #{stn_one_forward.5} parent=0
    _
  %s10 = ssub.s32 1, %s8
  %s11 = scalar_select 0, %s10, %s8
  %v12 = vstv %s6
  %13 = vst [vmem:[#allocation2] sm:$0x1] %v12
  // Predicated region
  $region2: #{stn_one_forward.5} parent=0 // pred_check
    _
  $region3: #{stn_one_forward.5} parent=0 // pred_check_branch
    %15 = sbr.rel (0) target = $region5
  $region4: #{stn_one_forward.5} parent=0 // pred_region
    _
  $region5: #{stn_one_forward.5} parent=0 // pred_fallthru
    _
  // Predicated region
  $region6: #{stn_one_forward.5} parent=0 // pred_check
    _
  $region7: #{stn_one_forward.5} parent=0 // pred_check_branch
    %17 = sbr.rel (0) target = $region9
  $region8: #{stn_one_forward.5} parent=0 // pred_region
    _
  $region9: #{stn_one_forward.5} parent=0 // pred_fallthru
    _
  // Predicated region
  $region10: #{stn_one_forward.5} parent=0 // pred_check
    _
  $region11: #{stn_one_forward.5} parent=0 // pred_check_branch
    %19 = sbr.rel (0) target = $region13
  $region12: #{stn_one_forward.5} parent=0 // pred_region
    _
  $region13: #{stn_one_forward.5} parent=0 // pred_fallthru
    _
  // Predicated region
  $region14: #{stn_one_forward.5} parent=0 // pred_check
    _
  $region15: #{stn_one_forward.5} parent=0 // pred_check_branch
    %21 = sbr.rel (0) target = $region17
  $region16: #{stn_one_forward.5} parent=0 // pred_region
    _
  $region17: #{stn_one_forward.5} parent=0 // pred_fallthru
    _
  // Predicated region
  $region18: #{stn_one_forward.5} parent=0 // pred_check
    _
  $region19: #{stn_one_forward.5} parent=0 // pred_check_branch
    %23 = sbr.rel (0) target = $region21
  $region20: #{stn_one_forward.5} parent=0 // pred_region
    _
  $region21: #{stn_one_forward.5} parent=0 // pred_fallthru
    _
  // Predicated region
  $region22: #{stn_one_forward.5} parent=0 // pred_check
    _
  $region23: #{stn_one_forward.5} parent=0 // pred_check_branch
    %25 = sbr.rel (0) target = $region25
  $region24: #{stn_one_forward.5} parent=0 // pred_region
    _
  $region25: #{stn_one_forward.5} parent=0 // pred_fallthru
    _
  // Predicated region
  $region26: #{stn_one_forward.5} parent=0 // pred_check
    _
  $region27: #{stn_one_forward.5} parent=0 // pred_check_branch
    %27 = sbr.rel (0) target = $region29
  $region28: #{stn_one_forward.5} parent=0 // pred_region
    _
  $region29: #{stn_one_forward.5} parent=0 // pred_fallthru
    _
  %v28 = vld [vmem:[%s4] sm:$0xff]
  %v29 = vld [vmem:[%s4 + $0x8] sm:$0xff]
  %v30 = vld [vmem:[%s4 + $0x10] sm:$0x7f]
  %v31 = vld [vmem:[%s4 + $0x18] sm:$0x7f]
  %v32 = vld [vmem:[%s0] sm:$0xff]
  %v33 = vld [vmem:[%s0 + $0x8] sm:$0xff]
  %v34 = vld [vmem:[%s0 + $0x10] sm:$0xff]
  %v35 = vld [vmem:[%s0 + $0x18] sm:$0xff]
  %v36 = vld [vmem:[%s0 + $0x20] sm:$0xff]
  %v37 = vld [vmem:[%s0 + $0x28] sm:$0xff]
  %v38 = vld [vmem:[%s0 + $0x30] sm:$0xff]
  %v39 = vld [vmem:[%s0 + $0x38] sm:$0xff]
  %v40 = vld [vmem:[%s0 + $0x40] sm:$0xff]
  %v41 = vld [vmem:[%s0 + $0x48] sm:$0xff]
  %v42 = vld [vmem:[%s0 + $0x50] sm:$0xff]
  %v43 = vld [vmem:[%s0 + $0x58] sm:$0xff]
  %v44 = vld [vmem:[%s0 + $0x60] sm:$0xff]
  %v45 = vld [vmem:[%s0 + $0x68] sm:$0xff]
  %v46 = vld [vmem:[%s0 + $0x70] sm:$0xff]
  %v47 = vld [vmem:[%s0 + $0x78] sm:$0xff]
  %v48 = vld [vmem:[%s0 + $0x80] sm:$0xff]
  %v49 = vld [vmem:[%s0 + $0x88] sm:$0xff]
  %v50 = vld [vmem:[%s0 + $0x90] sm:$0xff]
  %v51 = vld [vmem:[%s0 + $0x98] sm:$0xff]
  %v52 = vld [vmem:[%s0 + $0xa0] sm:$0xff]
  %v53 = vld [vmem:[%s0 + $0xa8] sm:$0xff]
  %v54 = vld [vmem:[%s0 + $0xb0] sm:$0xff]
  %v55 = vld [vmem:[%s0 + $0xb8] sm:$0xff]
  %v56 = vld [vmem:[%s0 + $0xc0] sm:$0xff]
  %v57 = vld [vmem:[%s0 + $0xc8] sm:$0xff]
  %v58 = vld [vmem:[%s0 + $0xd0] sm:$0xff]
  %v59 = vld [vmem:[%s0 + $0xd8] sm:$0xff]
  %v60 = vld [vmem:[%s0 + $0xe0] sm:$0xff]
  %v61 = vld [vmem:[%s0 + $0xe8] sm:$0xff]
  %v62 = vld [vmem:[%s0 + $0xf0] sm:$0xff]
  %v63 = vld [vmem:[%s0 + $0xf8] sm:$0xff]
  %v64 = vld [vmem:[%s0 + $0x100] sm:$0xff]
  %v65 = vld [vmem:[%s0 + $0x108] sm:$0xff]
  %v66 = vld [vmem:[%s0 + $0x110] sm:$0xff]
  %v67 = vld [vmem:[%s0 + $0x118] sm:$0xff]
  %v68 = vld [vmem:[%s0 + $0x120] sm:$0xff]
  %v69 = vld [vmem:[%s0 + $0x128] sm:$0xff]
  %v70 = vld [vmem:[%s0 + $0x130] sm:$0xff]
  %v71 = vld [vmem:[%s0 + $0x138] sm:$0xff]
  %v72 = vld [vmem:[%s0 + $0x140] sm:$0xff]
  %v73 = vld [vmem:[%s0 + $0x148] sm:$0xff]
  %v74 = vld [vmem:[%s0 + $0x150] sm:$0xff]
  %v75 = vld [vmem:[%s0 + $0x158] sm:$0xff]
  %v76 = vld [vmem:[%s0 + $0x160] sm:$0xff]
  %v77 = vld [vmem:[%s0 + $0x168] sm:$0xff]
  %v78 = vld [vmem:[%s0 + $0x170] sm:$0xff]
  %v79 = vld [vmem:[%s0 + $0x178] sm:$0xff]
  %v80 = vld [vmem:[%s0 + $0x180] sm:$0xff]
  %v81 = vld [vmem:[%s0 + $0x188] sm:$0xff]
  %v82 = vld [vmem:[%s0 + $0x190] sm:$0xff]
  %v83 = vld [vmem:[%s0 + $0x198] sm:$0xff]
  %v84 = vld [vmem:[%s0 + $0x1a0] sm:$0xff]
  %v85 = vld [vmem:[%s0 + $0x1a8] sm:$0xff]
  %v86 = vld [vmem:[%s0 + $0x1b0] sm:$0x7]
  %v87 = vld [vmem:[%s0 + $0x1b8] sm:$0x7]
  %v88 = vld [vmem:[%s0 + $0x1c0] sm:$0x7]
  %vm89 = vcmask 154624
  %v91 = vsel %vm89, %v29, 0
  %v94 = vsel %vm89, %v31, 0
  %vm96 = vcmask 1042432
  %v98 = vsel %vm96, %v86, 0
  %v101 = vsel %vm96, %v87, 0
  %v104 = vsel %vm96, %v88, 0
  %106 = vmatprep.subr.mxu0 %v33
  %107 = vmatpush1.msra.mxu0 %v32
  %108 = vmatprep.subr.mxu0 %v36
  %109 = vmatpush1.msra.mxu0 %v35
  %110 = vmatprep.subr.mxu0 %v39
  %111 = vmatpush1.msra.mxu0 %v38
  %112 = vmatprep.subr.mxu0 %v42
  %113 = vmatpush1.msra.mxu0 %v41
  %114 = vmatprep.subr.mxu0 %v45
  %115 = vmatpush1.msra.mxu0 %v44
  %116 = vmatprep.subr.mxu0 %v48
  %117 = vmatpush1.msra.mxu0 %v47
  %118 = vmatprep.subr.mxu0 %v51
  %119 = vmatpush1.msra.mxu0 %v50
  %120 = vmatprep.subr.mxu0 %v54
  %121 = vmatpush1.msra.mxu0 %v53
  %122 = vmatprep.subr.mxu0 %v57
  %123 = vmatpush1.msra.mxu0 %v56
  %124 = vmatprep.subr.mxu0 %v60
  %125 = vmatpush1.msra.mxu0 %v59
  %126 = vmatprep.subr.mxu0 %v63
  %127 = vmatpush1.msra.mxu0 %v62
  %128 = vmatprep.subr.mxu0 %v66
  %129 = vmatpush1.msra.mxu0 %v65
  %130 = vmatprep.subr.mxu0 %v69
  %131 = vmatpush1.msra.mxu0 %v68
  %132 = vmatprep.subr.mxu0 %v72
  %133 = vmatpush1.msra.mxu0 %v71
  %134 = vmatprep.subr.mxu0 %v75
  %135 = vmatpush1.msra.mxu0 %v74
  %136 = vmatprep.subr.mxu0 %v78
  %137 = vmatpush1.msra.mxu0 %v77
  %138 = vmatprep.subr.mxu0 %v81
  %139 = vmatpush1.msra.mxu0 %v80
  %140 = vmatprep.subr.mxu0 %v84
  %141 = vmatpush1.msra.mxu0 %v83
  %142 = vmatprep.subr.mxu0 %v101
  %143 = vmatpush1.msra.mxu0 %v98
  %144 = vmatprep.subr.mxu0 0.0
  %145 = vmatpush1.msra.mxu0 0.0
  %146 = vmatprep.subr.mxu0 0.0
  %147 = vmatpush1.msra.mxu0 0.0
  %148 = vmatprep.subr.mxu0 0.0
  %149 = vmatpush1.msra.mxu0 0.0
  %150 = vmatprep.subr.mxu0 0.0
  %151 = vmatpush1.msra.mxu0 0.0
  %152 = vmatprep.subr.mxu0 0.0
  %153 = vmatpush1.msra.mxu0 0.0
  %154 = vmatprep.subr.mxu0 0.0
  %155 = vmatpush1.msra.mxu0 0.0
  %156 = vmatprep.subr.mxu0 0.0
  %157 = vmatpush1.msra.mxu0 0.0
  %158 = vmatprep.subr.mxu0 0.0
  %159 = vmatpush1.msra.mxu0 0.0
  %160 = vmatprep.subr.mxu0 0.0
  %161 = vmatpush1.msra.mxu0 0.0
  %162 = vmatprep.subr.mxu0 0.0
  %163 = vmatpush1.msra.mxu0 0.0
  %164 = vmatprep.subr.mxu0 0.0
  %165 = vmatpush1.msra.mxu0 0.0
  %166 = vmatprep.subr.mxu0 0.0
  %167 = vmatpush1.msra.mxu0 0.0
  %168 = vmatprep.subr.mxu0 0.0
  %169 = vmatpush1.msra.mxu0 0.0
  %170 = vmatprep.mubr.f32.mxu0 %v91
  %171 = vmatmul.mubr.f32.gmra.mrb[0].mxu0 %v28
  %v172 = vpop.f32.mrb[0].mxu0
  %v173 = vadd.f32 0.0, %v172
  %v174 = vpop.f32.mrb[0].mxu0
  %v175 = vadd.f32 0.0, %v174
  %176 = vmatprep.mubr.f32.mxu0 %v94
  %177 = vmatmul.mubr.f32.gmra.mrb[0].mxu0 %v30
  %v178 = vpop.f32.mrb[0].mxu0
  %v179 = vadd.f32 0.0, %v178
  %v180 = vpop.f32.mrb[0].mxu0
  %v181 = vadd.f32 0.0, %v180
  %182 = vdwg.mxu0
  %183 = vmatprep.subr.mxu0 0.0
  %184 = vmatpush1.msra.mxu0 %v34
  %185 = vmatprep.subr.mxu0 0.0
  %186 = vmatpush1.msra.mxu0 %v37
  %187 = vmatprep.subr.mxu0 0.0
  %188 = vmatpush1.msra.mxu0 %v40
  %189 = vmatprep.subr.mxu0 0.0
  %190 = vmatpush1.msra.mxu0 %v43
  %191 = vmatprep.subr.mxu0 0.0
  %192 = vmatpush1.msra.mxu0 %v46
  %193 = vmatprep.subr.mxu0 0.0
  %194 = vmatpush1.msra.mxu0 %v49
  %195 = vmatprep.subr.mxu0 0.0
  %196 = vmatpush1.msra.mxu0 %v52
  %197 = vmatprep.subr.mxu0 0.0
  %198 = vmatpush1.msra.mxu0 %v55
  %199 = vmatprep.subr.mxu0 0.0
  %200 = vmatpush1.msra.mxu0 %v58
  %201 = vmatprep.subr.mxu0 0.0
  %202 = vmatpush1.msra.mxu0 %v61
  %203 = vmatprep.subr.mxu0 0.0
  %204 = vmatpush1.msra.mxu0 %v64
  %205 = vmatprep.subr.mxu0 0.0
  %206 = vmatpush1.msra.mxu0 %v67
  %207 = vmatprep.subr.mxu0 0.0
  %208 = vmatpush1.msra.mxu0 %v70
  %209 = vmatprep.subr.mxu0 0.0
  %210 = vmatpush1.msra.mxu0 %v73
  %211 = vmatprep.subr.mxu0 0.0
  %212 = vmatpush1.msra.mxu0 %v76
  %213 = vmatprep.subr.mxu0 0.0
  %214 = vmatpush1.msra.mxu0 %v79
  %215 = vmatprep.subr.mxu0 0.0
  %216 = vmatpush1.msra.mxu0 %v82
  %217 = vmatprep.subr.mxu0 0.0
  %218 = vmatpush1.msra.mxu0 %v85
  %219 = vmatprep.subr.mxu0 0.0
  %220 = vmatpush1.msra.mxu0 %v104
  %221 = vmatprep.subr.mxu0 0.0
  %222 = vmatpush1.msra.mxu0 0.0
  %223 = vmatprep.subr.mxu0 0.0
  %224 = vmatpush1.msra.mxu0 0.0
  %225 = vmatprep.subr.mxu0 0.0
  %226 = vmatpush1.msra.mxu0 0.0
  %227 = vmatprep.subr.mxu0 0.0
  %228 = vmatpush1.msra.mxu0 0.0
  %229 = vmatprep.subr.mxu0 0.0
  %230 = vmatpush1.msra.mxu0 0.0
  %231 = vmatprep.subr.mxu0 0.0
  %232 = vmatpush1.msra.mxu0 0.0
  %233 = vmatprep.subr.mxu0 0.0
  %234 = vmatpush1.msra.mxu0 0.0
  %235 = vmatprep.subr.mxu0 0.0
  %236 = vmatpush1.msra.mxu0 0.0
  %237 = vmatprep.subr.mxu0 0.0
  %238 = vmatpush1.msra.mxu0 0.0
  %239 = vmatprep.subr.mxu0 0.0
  %240 = vmatpush1.msra.mxu0 0.0
  %241 = vmatprep.subr.mxu0 0.0
  %242 = vmatpush1.msra.mxu0 0.0
  %243 = vmatprep.subr.mxu0 0.0
  %244 = vmatpush1.msra.mxu0 0.0
  %245 = vmatprep.subr.mxu0 0.0
  %246 = vmatpush1.msra.mxu0 0.0
  %247 = vmatprep.mubr.f32.mxu0 %v91
  %248 = vmatmul.mubr.f32.gmra.mrb[0].mxu0 %v28
  %v249 = vpop.f32.mrb[0].mxu0
  %v250 = vadd.f32 0.0, %v249
  %v251 = vpop.f32.mrb[0].mxu0
  %252 = vmatprep.mubr.f32.mxu0 %v94
  %253 = vmatmul.mubr.f32.gmra.mrb[0].mxu0 %v30
  %v254 = vpop.f32.mrb[0].mxu0
  %v255 = vadd.f32 0.0, %v254
  %v256 = vpop.f32.mrb[0].mxu0
  %257 = vdwg.mxu0
  %v258 = vld [vmem:[%s1] sm:$0xff]
  %v259 = vld [vmem:[%s1 + $0x8] sm:$0xff]
  %v260 = vld [vmem:[%s1 + $0x10] sm:$0xff]
  %v261 = vld [vmem:[%s1 + $0x18] sm:$0xff]
  %v262 = vld [vmem:[%s1 + $0x20] sm:$0xff]
  %v263 = vld [vmem:[%s1 + $0x28] sm:$0xff]
  %v264 = vld [vmem:[%s1 + $0x30] sm:$0xff]
  %v265 = vld [vmem:[%s1 + $0x38] sm:$0xff]
  %v266 = vld [vmem:[%s1 + $0x40] sm:$0xff]
  %v267 = vld [vmem:[%s1 + $0x48] sm:$0xff]
  %v268 = vld [vmem:[%s1 + $0x50] sm:$0xff]
  %v269 = vld [vmem:[%s1 + $0x58] sm:$0xff]
  %v270 = vld [vmem:[%s1 + $0x60] sm:$0xff]
  %v271 = vld [vmem:[%s1 + $0x68] sm:$0xff]
  %v272 = vld [vmem:[%s1 + $0x70] sm:$0xff]
  %v273 = vld [vmem:[%s1 + $0x78] sm:$0xff]
  %v274 = vld [vmem:[%s1 + $0x80] sm:$0xff]
  %v275 = vld [vmem:[%s1 + $0x88] sm:$0xff]
  %v276 = vld [vmem:[%s1 + $0x90] sm:$0xff]
  %v277 = vld [vmem:[%s1 + $0x98] sm:$0xff]
  %v278 = vld [vmem:[%s1 + $0xa0] sm:$0xff]
  %v279 = vld [vmem:[%s1 + $0xa8] sm:$0xff]
  %v280 = vld [vmem:[%s1 + $0xb0] sm:$0xff]
  %v281 = vld [vmem:[%s1 + $0xb8] sm:$0xff]
  %v282 = vld [vmem:[%s1 + $0xc0] sm:$0xff]
  %v283 = vld [vmem:[%s1 + $0xc8] sm:$0xff]
  %v284 = vld [vmem:[%s1 + $0xd0] sm:$0xff]
  %v285 = vld [vmem:[%s1 + $0xd8] sm:$0xff]
  %v286 = vld [vmem:[%s1 + $0xe0] sm:$0xff]
  %v287 = vld [vmem:[%s1 + $0xe8] sm:$0xff]
  %v288 = vld [vmem:[%s1 + $0xf0] sm:$0xff]
  %v289 = vld [vmem:[%s1 + $0xf8] sm:$0xff]
  %v290 = vld [vmem:[%s1 + $0x100] sm:$0xff]
  %v291 = vld [vmem:[%s1 + $0x108] sm:$0xff]
  %v292 = vld [vmem:[%s1 + $0x110] sm:$0xff]
  %v293 = vld [vmem:[%s1 + $0x118] sm:$0xff]
  %v294 = vld [vmem:[%s1 + $0x120] sm:$0xff]
  %v295 = vld [vmem:[%s1 + $0x128] sm:$0xff]
  %v296 = vld [vmem:[%s1 + $0x130] sm:$0xff]
  %v297 = vld [vmem:[%s1 + $0x138] sm:$0xff]
  %v298 = vld [vmem:[%s1 + $0x140] sm:$0xff]
  %v299 = vld [vmem:[%s1 + $0x148] sm:$0xff]
  %v300 = vld [vmem:[%s1 + $0x150] sm:$0xff]
  %v301 = vld [vmem:[%s1 + $0x158] sm:$0xff]
  %v302 = vld [vmem:[%s1 + $0x160] sm:$0xff]
  %v303 = vld [vmem:[%s1 + $0x168] sm:$0xff]
  %v304 = vld [vmem:[%s1 + $0x170] sm:$0xff]
  %v305 = vld [vmem:[%s1 + $0x178] sm:$0xff]
  %v306 = vld [vmem:[%s1 + $0x180] sm:$0xff]
  %v307 = vld [vmem:[%s1 + $0x188] sm:$0xff]
  %v308 = vld [vmem:[%s1 + $0x190] sm:$0xff]
  %v309 = vld [vmem:[%s1 + $0x198] sm:$0xff]
  %v310 = vld [vmem:[%s1 + $0x1a0] sm:$0xff]
  %v311 = vld [vmem:[%s1 + $0x1a8] sm:$0xff]
  %v312 = vld [vmem:[%s1 + $0x1b0] sm:$0x7]
  %v313 = vld [vmem:[%s1 + $0x1b8] sm:$0x7]
  %v314 = vld [vmem:[%s1 + $0x1c0] sm:$0x7]
  %v316 = vsel %vm96, %v312, 0
  %v319 = vsel %vm96, %v313, 0
  %v322 = vsel %vm96, %v314, 0
  %324 = vmatprep.subr.mxu0 %v259
  %325 = vmatpush1.msra.mxu0 %v258
  %326 = vmatprep.subr.mxu0 %v262
  %327 = vmatpush1.msra.mxu0 %v261
  %328 = vmatprep.subr.mxu0 %v265
  %329 = vmatpush1.msra.mxu0 %v264
  %330 = vmatprep.subr.mxu0 %v268
  %331 = vmatpush1.msra.mxu0 %v267
  %332 = vmatprep.subr.mxu0 %v271
  %333 = vmatpush1.msra.mxu0 %v270
  %334 = vmatprep.subr.mxu0 %v274
  %335 = vmatpush1.msra.mxu0 %v273
  %336 = vmatprep.subr.mxu0 %v277
  %337 = vmatpush1.msra.mxu0 %v276
  %338 = vmatprep.subr.mxu0 %v280
  %339 = vmatpush1.msra.mxu0 %v279
  %340 = vmatprep.subr.mxu0 %v283
  %341 = vmatpush1.msra.mxu0 %v282
  %342 = vmatprep.subr.mxu0 %v286
  %343 = vmatpush1.msra.mxu0 %v285
  %344 = vmatprep.subr.mxu0 %v289
  %345 = vmatpush1.msra.mxu0 %v288
  %346 = vmatprep.subr.mxu0 %v292
  %347 = vmatpush1.msra.mxu0 %v291
  %348 = vmatprep.subr.mxu0 %v295
  %349 = vmatpush1.msra.mxu0 %v294
  %350 = vmatprep.subr.mxu0 %v298
  %351 = vmatpush1.msra.mxu0 %v297
  %352 = vmatprep.subr.mxu0 %v301
  %353 = vmatpush1.msra.mxu0 %v300
  %354 = vmatprep.subr.mxu0 %v304
  %355 = vmatpush1.msra.mxu0 %v303
  %356 = vmatprep.subr.mxu0 %v307
  %357 = vmatpush1.msra.mxu0 %v306
  %358 = vmatprep.subr.mxu0 %v310
  %359 = vmatpush1.msra.mxu0 %v309
  %360 = vmatprep.subr.mxu0 %v319
  %361 = vmatpush1.msra.mxu0 %v316
  %362 = vmatprep.subr.mxu0 0.0
  %363 = vmatpush1.msra.mxu0 0.0
  %364 = vmatprep.subr.mxu0 0.0
  %365 = vmatpush1.msra.mxu0 0.0
  %366 = vmatprep.subr.mxu0 0.0
  %367 = vmatpush1.msra.mxu0 0.0
  %368 = vmatprep.subr.mxu0 0.0
  %369 = vmatpush1.msra.mxu0 0.0
  %370 = vmatprep.subr.mxu0 0.0
  %371 = vmatpush1.msra.mxu0 0.0
  %372 = vmatprep.subr.mxu0 0.0
  %373 = vmatpush1.msra.mxu0 0.0
  %374 = vmatprep.subr.mxu0 0.0
  %375 = vmatpush1.msra.mxu0 0.0
  %376 = vmatprep.subr.mxu0 0.0
  %377 = vmatpush1.msra.mxu0 0.0
  %378 = vmatprep.subr.mxu0 0.0
  %379 = vmatpush1.msra.mxu0 0.0
  %380 = vmatprep.subr.mxu0 0.0
  %381 = vmatpush1.msra.mxu0 0.0
  %382 = vmatprep.subr.mxu0 0.0
  %383 = vmatpush1.msra.mxu0 0.0
  %384 = vmatprep.subr.mxu0 0.0
  %385 = vmatpush1.msra.mxu0 0.0
  %386 = vmatprep.subr.mxu0 0.0
  %387 = vmatpush1.msra.mxu0 0.0
  %388 = vmatprep.mubr.f32.mxu0 %v91
  %389 = vmatmul.mubr.f32.gmra.mrb[0].mxu0 %v28
  %v390 = vpop.f32.mrb[0].mxu0
  %v391 = vadd.f32 0.0, %v390
  %v392 = vpop.f32.mrb[0].mxu0
  %v393 = vadd.f32 0.0, %v392
  %394 = vmatprep.mubr.f32.mxu0 %v94
  %395 = vmatmul.mubr.f32.gmra.mrb[0].mxu0 %v30
  %v396 = vpop.f32.mrb[0].mxu0
  %v397 = vadd.f32 0.0, %v396
  %v398 = vpop.f32.mrb[0].mxu0
  %v399 = vadd.f32 0.0, %v398
  %400 = vdwg.mxu0
  %401 = vmatprep.subr.mxu0 0.0
  %402 = vmatpush1.msra.mxu0 %v260
  %403 = vmatprep.subr.mxu0 0.0
  %404 = vmatpush1.msra.mxu0 %v263
  %405 = vmatprep.subr.mxu0 0.0
  %406 = vmatpush1.msra.mxu0 %v266
  %407 = vmatprep.subr.mxu0 0.0
  %408 = vmatpush1.msra.mxu0 %v269
  %409 = vmatprep.subr.mxu0 0.0
  %410 = vmatpush1.msra.mxu0 %v272
  %411 = vmatprep.subr.mxu0 0.0
  %412 = vmatpush1.msra.mxu0 %v275
  %413 = vmatprep.subr.mxu0 0.0
  %414 = vmatpush1.msra.mxu0 %v278
  %415 = vmatprep.subr.mxu0 0.0
  %416 = vmatpush1.msra.mxu0 %v281
  %417 = vmatprep.subr.mxu0 0.0
  %418 = vmatpush1.msra.mxu0 %v284
  %419 = vmatprep.subr.mxu0 0.0
  %420 = vmatpush1.msra.mxu0 %v287
  %421 = vmatprep.subr.mxu0 0.0
  %422 = vmatpush1.msra.mxu0 %v290
  %423 = vmatprep.subr.mxu0 0.0
  %424 = vmatpush1.msra.mxu0 %v293
  %425 = vmatprep.subr.mxu0 0.0
  %426 = vmatpush1.msra.mxu0 %v296
  %427 = vmatprep.subr.mxu0 0.0
  %428 = vmatpush1.msra.mxu0 %v299
  %429 = vmatprep.subr.mxu0 0.0
  %430 = vmatpush1.msra.mxu0 %v302
  %431 = vmatprep.subr.mxu0 0.0
  %432 = vmatpush1.msra.mxu0 %v305
  %433 = vmatprep.subr.mxu0 0.0
  %434 = vmatpush1.msra.mxu0 %v308
  %435 = vmatprep.subr.mxu0 0.0
  %436 = vmatpush1.msra.mxu0 %v311
  %437 = vmatprep.subr.mxu0 0.0
  %438 = vmatpush1.msra.mxu0 %v322
  %439 = vmatprep.subr.mxu0 0.0
  %440 = vmatpush1.msra.mxu0 0.0
  %441 = vmatprep.subr.mxu0 0.0
  %442 = vmatpush1.msra.mxu0 0.0
  %443 = vmatprep.subr.mxu0 0.0
  %444 = vmatpush1.msra.mxu0 0.0
  %445 = vmatprep.subr.mxu0 0.0
  %446 = vmatpush1.msra.mxu0 0.0
  %447 = vmatprep.subr.mxu0 0.0
  %448 = vmatpush1.msra.mxu0 0.0
  %449 = vmatprep.subr.mxu0 0.0
  %450 = vmatpush1.msra.mxu0 0.0
  %451 = vmatprep.subr.mxu0 0.0
  %452 = vmatpush1.msra.mxu0 0.0
  %453 = vmatprep.subr.mxu0 0.0
  %454 = vmatpush1.msra.mxu0 0.0
  %455 = vmatprep.subr.mxu0 0.0
  %456 = vmatpush1.msra.mxu0 0.0
  %457 = vmatprep.subr.mxu0 0.0
  %458 = vmatpush1.msra.mxu0 0.0
  %459 = vmatprep.subr.mxu0 0.0
  %460 = vmatpush1.msra.mxu0 0.0
  %461 = vmatprep.subr.mxu0 0.0
  %462 = vmatpush1.msra.mxu0 0.0
  %463 = vmatprep.subr.mxu0 0.0
  %464 = vmatpush1.msra.mxu0 0.0
  %465 = vmatprep.mubr.f32.mxu0 %v91
  %466 = vmatmul.mubr.f32.gmra.mrb[0].mxu0 %v28
  %v467 = vpop.f32.mrb[0].mxu0
  %v468 = vadd.f32 0.0, %v467
  %v469 = vpop.f32.mrb[0].mxu0
  %470 = vmatprep.mubr.f32.mxu0 %v94
  %471 = vmatmul.mubr.f32.gmra.mrb[0].mxu0 %v30
  %v472 = vpop.f32.mrb[0].mxu0
  %v473 = vadd.f32 0.0, %v472
  %v474 = vpop.f32.mrb[0].mxu0
  %475 = vdwg.mxu0
  %v476 = vmax.f32 %v173, %v391
  %v477 = vmax.f32 %v175, %v393
  %v478 = vmax.f32 %v250, %v468
  %v479 = vmax.f32 %v179, %v397
  %v480 = vmax.f32 %v181, %v399
  %v481 = vmax.f32 %v255, %v473
  %v482 = vld [vmem:[%s2] sm:$0xff]
  %v483 = vld [vmem:[%s2 + $0x8] sm:$0xff]
  %v484 = vld [vmem:[%s2 + $0x10] sm:$0xff]
  %v485 = vld [vmem:[%s2 + $0x18] sm:$0xff]
  %v486 = vld [vmem:[%s2 + $0x20] sm:$0xff]
  %v487 = vld [vmem:[%s2 + $0x28] sm:$0xff]
  %v488 = vld [vmem:[%s2 + $0x30] sm:$0xff]
  %v489 = vld [vmem:[%s2 + $0x38] sm:$0xff]
  %v490 = vld [vmem:[%s2 + $0x40] sm:$0xff]
  %v491 = vld [vmem:[%s2 + $0x48] sm:$0xff]
  %v492 = vld [vmem:[%s2 + $0x50] sm:$0xff]
  %v493 = vld [vmem:[%s2 + $0x58] sm:$0xff]
  %v494 = vld [vmem:[%s2 + $0x60] sm:$0xff]
  %v495 = vld [vmem:[%s2 + $0x68] sm:$0xff]
  %v496 = vld [vmem:[%s2 + $0x70] sm:$0xff]
  %v497 = vld [vmem:[%s2 + $0x78] sm:$0xff]
  %v498 = vld [vmem:[%s2 + $0x80] sm:$0xff]
  %v499 = vld [vmem:[%s2 + $0x88] sm:$0xff]
  %v500 = vld [vmem:[%s2 + $0x90] sm:$0xff]
  %v501 = vld [vmem:[%s2 + $0x98] sm:$0xff]
  %v502 = vld [vmem:[%s2 + $0xa0] sm:$0xff]
  %v503 = vld [vmem:[%s2 + $0xa8] sm:$0xff]
  %v504 = vld [vmem:[%s2 + $0xb0] sm:$0xff]
  %v505 = vld [vmem:[%s2 + $0xb8] sm:$0xff]
  %v506 = vld [vmem:[%s2 + $0xc0] sm:$0xff]
  %v507 = vld [vmem:[%s2 + $0xc8] sm:$0xff]
  %v508 = vld [vmem:[%s2 + $0xd0] sm:$0xff]
  %v509 = vld [vmem:[%s2 + $0xd8] sm:$0xff]
  %v510 = vld [vmem:[%s2 + $0xe0] sm:$0xff]
  %v511 = vld [vmem:[%s2 + $0xe8] sm:$0xff]
  %v512 = vld [vmem:[%s2 + $0xf0] sm:$0xff]
  %v513 = vld [vmem:[%s2 + $0xf8] sm:$0xff]
  %v514 = vld [vmem:[%s2 + $0x100] sm:$0xff]
  %v515 = vld [vmem:[%s2 + $0x108] sm:$0xff]
  %v516 = vld [vmem:[%s2 + $0x110] sm:$0xff]
  %v517 = vld [vmem:[%s2 + $0x118] sm:$0xff]
  %v518 = vld [vmem:[%s2 + $0x120] sm:$0xff]
  %v519 = vld [vmem:[%s2 + $0x128] sm:$0xff]
  %v520 = vld [vmem:[%s2 + $0x130] sm:$0xff]
  %v521 = vld [vmem:[%s2 + $0x138] sm:$0xff]
  %v522 = vld [vmem:[%s2 + $0x140] sm:$0xff]
  %v523 = vld [vmem:[%s2 + $0x148] sm:$0xff]
  %v524 = vld [vmem:[%s2 + $0x150] sm:$0xff]
  %v525 = vld [vmem:[%s2 + $0x158] sm:$0xff]
  %v526 = vld [vmem:[%s2 + $0x160] sm:$0xff]
  %v527 = vld [vmem:[%s2 + $0x168] sm:$0xff]
  %v528 = vld [vmem:[%s2 + $0x170] sm:$0xff]
  %v529 = vld [vmem:[%s2 + $0x178] sm:$0xff]
  %v530 = vld [vmem:[%s2 + $0x180] sm:$0xff]
  %v531 = vld [vmem:[%s2 + $0x188] sm:$0xff]
  %v532 = vld [vmem:[%s2 + $0x190] sm:$0xff]
  %v533 = vld [vmem:[%s2 + $0x198] sm:$0xff]
  %v534 = vld [vmem:[%s2 + $0x1a0] sm:$0xff]
  %v535 = vld [vmem:[%s2 + $0x1a8] sm:$0xff]
  %v536 = vld [vmem:[%s2 + $0x1b0] sm:$0x7]
  %v537 = vld [vmem:[%s2 + $0x1b8] sm:$0x7]
  %v538 = vld [vmem:[%s2 + $0x1c0] sm:$0x7]
  %v540 = vsel %vm96, %v536, 0
  %v543 = vsel %vm96, %v537, 0
  %v546 = vsel %vm96, %v538, 0
  %548 = vmatprep.subr.mxu0 %v483
  %549 = vmatpush1.msra.mxu0 %v482
  %550 = vmatprep.subr.mxu0 %v486
  %551 = vmatpush1.msra.mxu0 %v485
  %552 = vmatprep.subr.mxu0 %v489
  %553 = vmatpush1.msra.mxu0 %v488
  %554 = vmatprep.subr.mxu0 %v492
  %555 = vmatpush1.msra.mxu0 %v491
  %556 = vmatprep.subr.mxu0 %v495
  %557 = vmatpush1.msra.mxu0 %v494
  %558 = vmatprep.subr.mxu0 %v498
  %559 = vmatpush1.msra.mxu0 %v497
  %560 = vmatprep.subr.mxu0 %v501
  %561 = vmatpush1.msra.mxu0 %v500
  %562 = vmatprep.subr.mxu0 %v504
  %563 = vmatpush1.msra.mxu0 %v503
  %564 = vmatprep.subr.mxu0 %v507
  %565 = vmatpush1.msra.mxu0 %v506
  %566 = vmatprep.subr.mxu0 %v510
  %567 = vmatpush1.msra.mxu0 %v509
  %568 = vmatprep.subr.mxu0 %v513
  %569 = vmatpush1.msra.mxu0 %v512
  %570 = vmatprep.subr.mxu0 %v516
  %571 = vmatpush1.msra.mxu0 %v515
  %572 = vmatprep.subr.mxu0 %v519
  %573 = vmatpush1.msra.mxu0 %v518
  %574 = vmatprep.subr.mxu0 %v522
  %575 = vmatpush1.msra.mxu0 %v521
  %576 = vmatprep.subr.mxu0 %v525
  %577 = vmatpush1.msra.mxu0 %v524
  %578 = vmatprep.subr.mxu0 %v528
  %579 = vmatpush1.msra.mxu0 %v527
  %580 = vmatprep.subr.mxu0 %v531
  %581 = vmatpush1.msra.mxu0 %v530
  %582 = vmatprep.subr.mxu0 %v534
  %583 = vmatpush1.msra.mxu0 %v533
  %584 = vmatprep.subr.mxu0 %v543
  %585 = vmatpush1.msra.mxu0 %v540
  %586 = vmatprep.subr.mxu0 0.0
  %587 = vmatpush1.msra.mxu0 0.0
  %588 = vmatprep.subr.mxu0 0.0
  %589 = vmatpush1.msra.mxu0 0.0
  %590 = vmatprep.subr.mxu0 0.0
  %591 = vmatpush1.msra.mxu0 0.0
  %592 = vmatprep.subr.mxu0 0.0
  %593 = vmatpush1.msra.mxu0 0.0
  %594 = vmatprep.subr.mxu0 0.0
  %595 = vmatpush1.msra.mxu0 0.0
  %596 = vmatprep.subr.mxu0 0.0
  %597 = vmatpush1.msra.mxu0 0.0
  %598 = vmatprep.subr.mxu0 0.0
  %599 = vmatpush1.msra.mxu0 0.0
  %600 = vmatprep.subr.mxu0 0.0
  %601 = vmatpush1.msra.mxu0 0.0
  %602 = vmatprep.subr.mxu0 0.0
  %603 = vmatpush1.msra.mxu0 0.0
  %604 = vmatprep.subr.mxu0 0.0
  %605 = vmatpush1.msra.mxu0 0.0
  %606 = vmatprep.subr.mxu0 0.0
  %607 = vmatpush1.msra.mxu0 0.0
  %608 = vmatprep.subr.mxu0 0.0
  %609 = vmatpush1.msra.mxu0 0.0
  %610 = vmatprep.subr.mxu0 0.0
  %611 = vmatpush1.msra.mxu0 0.0
  %612 = vmatprep.mubr.f32.mxu0 %v91
  %613 = vmatmul.mubr.f32.gmra.mrb[0].mxu0 %v28
  %v614 = vpop.f32.mrb[0].mxu0
  %v615 = vadd.f32 0.0, %v614
  %v616 = vpop.f32.mrb[0].mxu0
  %v617 = vadd.f32 0.0, %v616
  %618 = vmatprep.mubr.f32.mxu0 %v94
  %619 = vmatmul.mubr.f32.gmra.mrb[0].mxu0 %v30
  %v620 = vpop.f32.mrb[0].mxu0
  %v621 = vadd.f32 0.0, %v620
  %v622 = vpop.f32.mrb[0].mxu0
  %v623 = vadd.f32 0.0, %v622
  %624 = vdwg.mxu0
  %625 = vmatprep.subr.mxu0 0.0
  %626 = vmatpush1.msra.mxu0 %v484
  %627 = vmatprep.subr.mxu0 0.0
  %628 = vmatpush1.msra.mxu0 %v487
  %629 = vmatprep.subr.mxu0 0.0
  %630 = vmatpush1.msra.mxu0 %v490
  %631 = vmatprep.subr.mxu0 0.0
  %632 = vmatpush1.msra.mxu0 %v493
  %633 = vmatprep.subr.mxu0 0.0
  %634 = vmatpush1.msra.mxu0 %v496
  %635 = vmatprep.subr.mxu0 0.0
  %636 = vmatpush1.msra.mxu0 %v499
  %637 = vmatprep.subr.mxu0 0.0
  %638 = vmatpush1.msra.mxu0 %v502
  %639 = vmatprep.subr.mxu0 0.0
  %640 = vmatpush1.msra.mxu0 %v505
  %641 = vmatprep.subr.mxu0 0.0
  %642 = vmatpush1.msra.mxu0 %v508
  %643 = vmatprep.subr.mxu0 0.0
  %644 = vmatpush1.msra.mxu0 %v511
  %645 = vmatprep.subr.mxu0 0.0
  %646 = vmatpush1.msra.mxu0 %v514
  %647 = vmatprep.subr.mxu0 0.0
  %648 = vmatpush1.msra.mxu0 %v517
  %649 = vmatprep.subr.mxu0 0.0
  %650 = vmatpush1.msra.mxu0 %v520
  %651 = vmatprep.subr.mxu0 0.0
  %652 = vmatpush1.msra.mxu0 %v523
  %653 = vmatprep.subr.mxu0 0.0
  %654 = vmatpush1.msra.mxu0 %v526
  %655 = vmatprep.subr.mxu0 0.0
  %656 = vmatpush1.msra.mxu0 %v529
  %657 = vmatprep.subr.mxu0 0.0
  %658 = vmatpush1.msra.mxu0 %v532
  %659 = vmatprep.subr.mxu0 0.0
  %660 = vmatpush1.msra.mxu0 %v535
  %661 = vmatprep.subr.mxu0 0.0
  %662 = vmatpush1.msra.mxu0 %v546
  %663 = vmatprep.subr.mxu0 0.0
  %664 = vmatpush1.msra.mxu0 0.0
  %665 = vmatprep.subr.mxu0 0.0
  %666 = vmatpush1.msra.mxu0 0.0
  %667 = vmatprep.subr.mxu0 0.0
  %668 = vmatpush1.msra.mxu0 0.0
  %669 = vmatprep.subr.mxu0 0.0
  %670 = vmatpush1.msra.mxu0 0.0
  %671 = vmatprep.subr.mxu0 0.0
  %672 = vmatpush1.msra.mxu0 0.0
  %673 = vmatprep.subr.mxu0 0.0
  %674 = vmatpush1.msra.mxu0 0.0
  %675 = vmatprep.subr.mxu0 0.0
  %676 = vmatpush1.msra.mxu0 0.0
  %677 = vmatprep.subr.mxu0 0.0
  %678 = vmatpush1.msra.mxu0 0.0
  %679 = vmatprep.subr.mxu0 0.0
  %680 = vmatpush1.msra.mxu0 0.0
  %681 = vmatprep.subr.mxu0 0.0
  %682 = vmatpush1.msra.mxu0 0.0
  %683 = vmatprep.subr.mxu0 0.0
  %684 = vmatpush1.msra.mxu0 0.0
  %685 = vmatprep.subr.mxu0 0.0
  %686 = vmatpush1.msra.mxu0 0.0
  %687 = vmatprep.subr.mxu0 0.0
  %688 = vmatpush1.msra.mxu0 0.0
  %689 = vmatprep.mubr.f32.mxu0 %v91
  %690 = vmatmul.mubr.f32.gmra.mrb[0].mxu0 %v28
  %v691 = vpop.f32.mrb[0].mxu0
  %v692 = vadd.f32 0.0, %v691
  %v693 = vpop.f32.mrb[0].mxu0
  %694 = vmatprep.mubr.f32.mxu0 %v94
  %695 = vmatmul.mubr.f32.gmra.mrb[0].mxu0 %v30
  %v696 = vpop.f32.mrb[0].mxu0
  %v697 = vadd.f32 0.0, %v696
  %v698 = vpop.f32.mrb[0].mxu0
  %699 = vdwg.mxu0
  %v700 = vld [vmem:[%s3] sm:$0xff]
  %v701 = vld [vmem:[%s3 + $0x8] sm:$0xff]
  %v702 = vld [vmem:[%s3 + $0x10] sm:$0xff]
  %v703 = vld [vmem:[%s3 + $0x18] sm:$0xff]
  %v704 = vld [vmem:[%s3 + $0x20] sm:$0xff]
  %v705 = vld [vmem:[%s3 + $0x28] sm:$0xff]
  %v706 = vld [vmem:[%s3 + $0x30] sm:$0xff]
  %v707 = vld [vmem:[%s3 + $0x38] sm:$0xff]
  %v708 = vld [vmem:[%s3 + $0x40] sm:$0xff]
  %v709 = vld [vmem:[%s3 + $0x48] sm:$0xff]
  %v710 = vld [vmem:[%s3 + $0x50] sm:$0xff]
  %v711 = vld [vmem:[%s3 + $0x58] sm:$0xff]
  %v712 = vld [vmem:[%s3 + $0x60] sm:$0xff]
  %v713 = vld [vmem:[%s3 + $0x68] sm:$0xff]
  %v714 = vld [vmem:[%s3 + $0x70] sm:$0xff]
  %v715 = vld [vmem:[%s3 + $0x78] sm:$0xff]
  %v716 = vld [vmem:[%s3 + $0x80] sm:$0xff]
  %v717 = vld [vmem:[%s3 + $0x88] sm:$0xff]
  %v718 = vld [vmem:[%s3 + $0x90] sm:$0xff]
  %v719 = vld [vmem:[%s3 + $0x98] sm:$0xff]
  %v720 = vld [vmem:[%s3 + $0xa0] sm:$0xff]
  %v721 = vld [vmem:[%s3 + $0xa8] sm:$0xff]
  %v722 = vld [vmem:[%s3 + $0xb0] sm:$0xff]
  %v723 = vld [vmem:[%s3 + $0xb8] sm:$0xff]
  %v724 = vld [vmem:[%s3 + $0xc0] sm:$0xff]
  %v725 = vld [vmem:[%s3 + $0xc8] sm:$0xff]
  %v726 = vld [vmem:[%s3 + $0xd0] sm:$0xff]
  %v727 = vld [vmem:[%s3 + $0xd8] sm:$0xff]
  %v728 = vld [vmem:[%s3 + $0xe0] sm:$0xff]
  %v729 = vld [vmem:[%s3 + $0xe8] sm:$0xff]
  %v730 = vld [vmem:[%s3 + $0xf0] sm:$0xff]
  %v731 = vld [vmem:[%s3 + $0xf8] sm:$0xff]
  %v732 = vld [vmem:[%s3 + $0x100] sm:$0xff]
  %v733 = vld [vmem:[%s3 + $0x108] sm:$0xff]
  %v734 = vld [vmem:[%s3 + $0x110] sm:$0xff]
  %v735 = vld [vmem:[%s3 + $0x118] sm:$0xff]
  %v736 = vld [vmem:[%s3 + $0x120] sm:$0xff]
  %v737 = vld [vmem:[%s3 + $0x128] sm:$0xff]
  %v738 = vld [vmem:[%s3 + $0x130] sm:$0xff]
  %v739 = vld [vmem:[%s3 + $0x138] sm:$0xff]
  %v740 = vld [vmem:[%s3 + $0x140] sm:$0xff]
  %v741 = vld [vmem:[%s3 + $0x148] sm:$0xff]
  %v742 = vld [vmem:[%s3 + $0x150] sm:$0xff]
  %v743 = vld [vmem:[%s3 + $0x158] sm:$0xff]
  %v744 = vld [vmem:[%s3 + $0x160] sm:$0xff]
  %v745 = vld [vmem:[%s3 + $0x168] sm:$0xff]
  %v746 = vld [vmem:[%s3 + $0x170] sm:$0xff]
  %v747 = vld [vmem:[%s3 + $0x178] sm:$0xff]
  %v748 = vld [vmem:[%s3 + $0x180] sm:$0xff]
  %v749 = vld [vmem:[%s3 + $0x188] sm:$0xff]
  %v750 = vld [vmem:[%s3 + $0x190] sm:$0xff]
  %v751 = vld [vmem:[%s3 + $0x198] sm:$0xff]
  %v752 = vld [vmem:[%s3 + $0x1a0] sm:$0xff]
  %v753 = vld [vmem:[%s3 + $0x1a8] sm:$0xff]
  %v754 = vld [vmem:[%s3 + $0x1b0] sm:$0x7]
  %v755 = vld [vmem:[%s3 + $0x1b8] sm:$0x7]
  %v756 = vld [vmem:[%s3 + $0x1c0] sm:$0x7]
  %v758 = vsel %vm96, %v754, 0
  %v761 = vsel %vm96, %v755, 0
  %v764 = vsel %vm96, %v756, 0
  %766 = vmatprep.subr.mxu0 %v701
  %767 = vmatpush1.msra.mxu0 %v700
  %768 = vmatprep.subr.mxu0 %v704
  %769 = vmatpush1.msra.mxu0 %v703
  %770 = vmatprep.subr.mxu0 %v707
  %771 = vmatpush1.msra.mxu0 %v706
  %772 = vmatprep.subr.mxu0 %v710
  %773 = vmatpush1.msra.mxu0 %v709
  %774 = vmatprep.subr.mxu0 %v713
  %775 = vmatpush1.msra.mxu0 %v712
  %776 = vmatprep.subr.mxu0 %v716
  %777 = vmatpush1.msra.mxu0 %v715
  %778 = vmatprep.subr.mxu0 %v719
  %779 = vmatpush1.msra.mxu0 %v718
  %780 = vmatprep.subr.mxu0 %v722
  %781 = vmatpush1.msra.mxu0 %v721
  %782 = vmatprep.subr.mxu0 %v725
  %783 = vmatpush1.msra.mxu0 %v724
  %784 = vmatprep.subr.mxu0 %v728
  %785 = vmatpush1.msra.mxu0 %v727
  %786 = vmatprep.subr.mxu0 %v731
  %787 = vmatpush1.msra.mxu0 %v730
  %788 = vmatprep.subr.mxu0 %v734
  %789 = vmatpush1.msra.mxu0 %v733
  %790 = vmatprep.subr.mxu0 %v737
  %791 = vmatpush1.msra.mxu0 %v736
  %792 = vmatprep.subr.mxu0 %v740
  %793 = vmatpush1.msra.mxu0 %v739
  %794 = vmatprep.subr.mxu0 %v743
  %795 = vmatpush1.msra.mxu0 %v742
  %796 = vmatprep.subr.mxu0 %v746
  %797 = vmatpush1.msra.mxu0 %v745
  %798 = vmatprep.subr.mxu0 %v749
  %799 = vmatpush1.msra.mxu0 %v748
  %800 = vmatprep.subr.mxu0 %v752
  %801 = vmatpush1.msra.mxu0 %v751
  %802 = vmatprep.subr.mxu0 %v761
  %803 = vmatpush1.msra.mxu0 %v758
  %804 = vmatprep.subr.mxu0 0.0
  %805 = vmatpush1.msra.mxu0 0.0
  %806 = vmatprep.subr.mxu0 0.0
  %807 = vmatpush1.msra.mxu0 0.0
  %808 = vmatprep.subr.mxu0 0.0
  %809 = vmatpush1.msra.mxu0 0.0
  %810 = vmatprep.subr.mxu0 0.0
  %811 = vmatpush1.msra.mxu0 0.0
  %812 = vmatprep.subr.mxu0 0.0
  %813 = vmatpush1.msra.mxu0 0.0
  %814 = vmatprep.subr.mxu0 0.0
  %815 = vmatpush1.msra.mxu0 0.0
  %816 = vmatprep.subr.mxu0 0.0
  %817 = vmatpush1.msra.mxu0 0.0
  %818 = vmatprep.subr.mxu0 0.0
  %819 = vmatpush1.msra.mxu0 0.0
  %820 = vmatprep.subr.mxu0 0.0
  %821 = vmatpush1.msra.mxu0 0.0
  %822 = vmatprep.subr.mxu0 0.0
  %823 = vmatpush1.msra.mxu0 0.0
  %824 = vmatprep.subr.mxu0 0.0
  %825 = vmatpush1.msra.mxu0 0.0
  %826 = vmatprep.subr.mxu0 0.0
  %827 = vmatpush1.msra.mxu0 0.0
  %828 = vmatprep.subr.mxu0 0.0
  %829 = vmatpush1.msra.mxu0 0.0
  %830 = vmatprep.mubr.f32.mxu0 %v91
  %831 = vmatmul.mubr.f32.gmra.mrb[0].mxu0 %v28
  %v832 = vpop.f32.mrb[0].mxu0
  %v833 = vadd.f32 0.0, %v832
  %v834 = vpop.f32.mrb[0].mxu0
  %v835 = vadd.f32 0.0, %v834
  %836 = vmatprep.mubr.f32.mxu0 %v94
  %837 = vmatmul.mubr.f32.gmra.mrb[0].mxu0 %v30
  %v838 = vpop.f32.mrb[0].mxu0
  %v839 = vadd.f32 0.0, %v838
  %v840 = vpop.f32.mrb[0].mxu0
  %v841 = vadd.f32 0.0, %v840
  %842 = vdwg.mxu0
  %843 = vmatprep.subr.mxu0 0.0
  %844 = vmatpush1.msra.mxu0 %v702
  %845 = vmatprep.subr.mxu0 0.0
  %846 = vmatpush1.msra.mxu0 %v705
  %847 = vmatprep.subr.mxu0 0.0
  %848 = vmatpush1.msra.mxu0 %v708
  %849 = vmatprep.subr.mxu0 0.0
  %850 = vmatpush1.msra.mxu0 %v711
  %851 = vmatprep.subr.mxu0 0.0
  %852 = vmatpush1.msra.mxu0 %v714
  %853 = vmatprep.subr.mxu0 0.0
  %854 = vmatpush1.msra.mxu0 %v717
  %855 = vmatprep.subr.mxu0 0.0
  %856 = vmatpush1.msra.mxu0 %v720
  %857 = vmatprep.subr.mxu0 0.0
  %858 = vmatpush1.msra.mxu0 %v723
  %859 = vmatprep.subr.mxu0 0.0
  %860 = vmatpush1.msra.mxu0 %v726
  %861 = vmatprep.subr.mxu0 0.0
  %862 = vmatpush1.msra.mxu0 %v729
  %863 = vmatprep.subr.mxu0 0.0
  %864 = vmatpush1.msra.mxu0 %v732
  %865 = vmatprep.subr.mxu0 0.0
  %866 = vmatpush1.msra.mxu0 %v735
  %867 = vmatprep.subr.mxu0 0.0
  %868 = vmatpush1.msra.mxu0 %v738
  %869 = vmatprep.subr.mxu0 0.0
  %870 = vmatpush1.msra.mxu0 %v741
  %871 = vmatprep.subr.mxu0 0.0
  %872 = vmatpush1.msra.mxu0 %v744
  %873 = vmatprep.subr.mxu0 0.0
  %874 = vmatpush1.msra.mxu0 %v747
  %875 = vmatprep.subr.mxu0 0.0
  %876 = vmatpush1.msra.mxu0 %v750
  %877 = vmatprep.subr.mxu0 0.0
  %878 = vmatpush1.msra.mxu0 %v753
  %879 = vmatprep.subr.mxu0 0.0
  %880 = vmatpush1.msra.mxu0 %v764
  %881 = vmatprep.subr.mxu0 0.0
  %882 = vmatpush1.msra.mxu0 0.0
  %883 = vmatprep.subr.mxu0 0.0
  %884 = vmatpush1.msra.mxu0 0.0
  %885 = vmatprep.subr.mxu0 0.0
  %886 = vmatpush1.msra.mxu0 0.0
  %887 = vmatprep.subr.mxu0 0.0
  %888 = vmatpush1.msra.mxu0 0.0
  %889 = vmatprep.subr.mxu0 0.0
  %890 = vmatpush1.msra.mxu0 0.0
  %891 = vmatprep.subr.mxu0 0.0
  %892 = vmatpush1.msra.mxu0 0.0
  %893 = vmatprep.subr.mxu0 0.0
  %894 = vmatpush1.msra.mxu0 0.0
  %895 = vmatprep.subr.mxu0 0.0
  %896 = vmatpush1.msra.mxu0 0.0
  %897 = vmatprep.subr.mxu0 0.0
  %898 = vmatpush1.msra.mxu0 0.0
  %899 = vmatprep.subr.mxu0 0.0
  %900 = vmatpush1.msra.mxu0 0.0
  %901 = vmatprep.subr.mxu0 0.0
  %902 = vmatpush1.msra.mxu0 0.0
  %903 = vmatprep.subr.mxu0 0.0
  %904 = vmatpush1.msra.mxu0 0.0
  %905 = vmatprep.subr.mxu0 0.0
  %906 = vmatpush1.msra.mxu0 0.0
  %907 = vmatprep.mubr.f32.mxu0 %v91
  %908 = vmatmul.mubr.f32.gmra.mrb[0].mxu0 %v28
  %v909 = vpop.f32.mrb[0].mxu0
  %v910 = vadd.f32 0.0, %v909
  %v911 = vpop.f32.mrb[0].mxu0
  %912 = vmatprep.mubr.f32.mxu0 %v94
  %913 = vmatmul.mubr.f32.gmra.mrb[0].mxu0 %v30
  %v914 = vpop.f32.mrb[0].mxu0
  %v915 = vadd.f32 0.0, %v914
  %v916 = vpop.f32.mrb[0].mxu0
  %917 = vdwg.mxu0
  %v918 = vmax.f32 %v615, %v833
  %v919 = vmax.f32 %v617, %v835
  %v920 = vmax.f32 %v692, %v910
  %v921 = vmax.f32 %v621, %v839
  %v922 = vmax.f32 %v623, %v841
  %v923 = vmax.f32 %v697, %v915
  %v924 = vmax.f32 %v476, %v918
  %v925 = vmax.f32 %v477, %v919
  %v926 = vmax.f32 %v478, %v920
  %v927 = vmax.f32 %v479, %v921
  %v928 = vmax.f32 %v480, %v922
  %v929 = vmax.f32 %v481, %v923
  %v930 = vld [vmem:[%s5] sm:$0xff]
  %v931 = vld [vmem:[%s5 + $0x8] sm:$0x7f]
  %933 = vset.pattern.permute.xlu0 0
  %934 = vperm.xlu0 %933, %v930
  %v935 = vpop.permute.xlu0 %934
  %938 = vset.pattern.permute.xlu0 0
  %939 = vperm.xlu0 %938, %v931
  %v940 = vpop.permute.xlu0 %939
  %v942 = vadd.f32 %v924, %v935
  %v943 = vadd.f32 %v925, %v935
  %v944 = vadd.f32 %v926, %v935
  %v945 = vadd.f32 %v927, %v940
  %v946 = vadd.f32 %v928, %v940
  %v947 = vadd.f32 %v929, %v940
  %vm948 = vcmp.gt.f32.partialorder %v942, 0.0
  %vm949 = vcmp.gt.f32.partialorder %v943, 0.0
  %vm950 = vcmp.gt.f32.partialorder %v944, 0.0
  %vm951 = vcmp.gt.f32.partialorder %v945, 0.0
  %vm952 = vcmp.gt.f32.partialorder %v946, 0.0
  %vm953 = vcmp.gt.f32.partialorder %v947, 0.0
  %v954 = vld [vmem:[#allocation2] sm:$0x1]
  %v956 = vlaneseq
  %v957 = vshrl.u32 %v956, 7
  %v958 = vsub.s32 0, %v957
  %v959 = vrot.slane %v954, %v958
  %960 = vset.pattern.permute.xlu0 0
  %961 = vperm.xlu0 %960, %v959
  %v962 = vpop.permute.xlu0 %961
  %v964 = vmul.f32 %v962, %v942
  %v965 = vmul.f32 %v962, %v943
  %v966 = vmul.f32 %v962, %v944
  %v967 = vmul.f32 %v962, %v945
  %v968 = vmul.f32 %v962, %v946
  %v969 = vmul.f32 %v962, %v947
  %v970 = vsel %vm948, %v942, %v964
  %v971 = vsel %vm949, %v943, %v965
  %v972 = vsel %vm950, %v944, %v966
  %v973 = vsel %vm951, %v945, %v967
  %v974 = vsel %vm952, %v946, %v968
  %v975 = vsel %vm953, %v947, %v969
  %976 = vst [vmem:[%s7] sm:$0xff] %v970
  %977 = vst [vmem:[%s7 + $0x8] sm:$0xff] %v971
  %vm978 = vcmask 261120
  %979 = vst.msk [vmem:[%s7 + $0x10] sm:$0xff] %vm978, %v972
  %980 = vst [vmem:[%s7 + $0x18] sm:$0x7f] %v973
  %981 = vst [vmem:[%s7 + $0x20] sm:$0x7f] %v974
  %vm982 = vcmask 260096
  %983 = vst.msk [vmem:[%s7 + $0x28] sm:$0x7f] %vm982, %v975
  // Predicated region
  $region30: #{stn_one_forward.5} parent=0 // pred_check
    _
  $region31: #{stn_one_forward.5} parent=0 // pred_check_branch
    %985 = sbr.rel (0) target = $region33
  $region32: #{stn_one_forward.5} parent=0 // pred_region
    _
  $region33: #{stn_one_forward.5} parent=0 // pred_fallthru
    _
  // Predicated region
  $region34: #{stn_one_forward.5} parent=0 // pred_check
    _
  $region35: #{stn_one_forward.5} parent=0 // pred_check_branch
    %987 = sbr.rel (0) target = $region37
  $region36: #{stn_one_forward.5} parent=0 // pred_region
    _
  $region37: #{stn_one_forward.5} parent=0 // pred_fallthru
    _

// kernel: stn_one_forward.6
$region0: #{stn_one_forward.6}
  #allocation0 [shape = 'u32[]', space=smem, size = 0x4, offset = 0x4, fixed_abs, tag = 'smem constant byte address 0x4 - core index']
  #allocation1 [shape = 'u32[144,128]{1,0:T(1,128)}', space=vmem, size = 0x12000, scoped, tag = 'internal scratch']
  #allocation2 [shape = 'f32[1,1]{1,0:T(1,128)S(1)}', space=vmem, size = 0x200, scoped, tag = 'scoped memory for stn_one_forward.6']
  %s0 = inlined_call_operand.vmem [shape: f32[375,32], index: 0, kind: input, shape index: {}]
  %s1 = inlined_call_operand.vmem [shape: f32[375,32], index: 1, kind: input, shape index: {}]
  %s2 = inlined_call_operand.vmem [shape: f32[375,32], index: 2, kind: input, shape index: {}]
  %s3 = inlined_call_operand.vmem [shape: f32[375,32], index: 3, kind: input, shape index: {}]
  %s4 = inlined_call_operand.vmem [shape: f32[30,375], index: 4, kind: input, shape index: {}]
  %s5 = inlined_call_operand.vmem [shape: f32[30,1], index: 5, kind: input, shape index: {}]
  %s6 = inlined_call_operand.<no memory space> [shape: f32[1,1], index: 6, kind: input, shape index: {}]
  %s7 = inlined_call_operand.vmem [shape: f32[30,32], index: 7, kind: output, shape index: {}]
  %s8 = sld [smem:[#allocation0]]
  $region38: #{stn_one_forward.6} parent=0
    _
  %s10 = ssub.s32 1, %s8
  %s11 = scalar_select 0, %s10, %s8
  %v12 = vstv %s6
  %13 = vst [vmem:[#allocation2] sm:$0x1] %v12
  // Predicated region
  $region2: #{stn_one_forward.6} parent=0 // pred_check
    _
  $region3: #{stn_one_forward.6} parent=0 // pred_check_branch
    %15 = sbr.rel (0) target = $region5
  $region4: #{stn_one_forward.6} parent=0 // pred_region
    _
  $region5: #{stn_one_forward.6} parent=0 // pred_fallthru
    _
  // Predicated region
  $region6: #{stn_one_forward.6} parent=0 // pred_check
    _
  $region7: #{stn_one_forward.6} parent=0 // pred_check_branch
    %17 = sbr.rel (0) target = $region9
  $region8: #{stn_one_forward.6} parent=0 // pred_region
    _
  $region9: #{stn_one_forward.6} parent=0 // pred_fallthru
    _
  // Predicated region
  $region10: #{stn_one_forward.6} parent=0 // pred_check
    _
  $region11: #{stn_one_forward.6} parent=0 // pred_check_branch
    %19 = sbr.rel (0) target = $region13
  $region12: #{stn_one_forward.6} parent=0 // pred_region
    _
  $region13: #{stn_one_forward.6} parent=0 // pred_fallthru
    _
  // Predicated region
  $region14: #{stn_one_forward.6} parent=0 // pred_check
    _
  $region15: #{stn_one_forward.6} parent=0 // pred_check_branch
    %21 = sbr.rel (0) target = $region17
  $region16: #{stn_one_forward.6} parent=0 // pred_region
    _
  $region17: #{stn_one_forward.6} parent=0 // pred_fallthru
    _
  // Predicated region
  $region18: #{stn_one_forward.6} parent=0 // pred_check
    _
  $region19: #{stn_one_forward.6} parent=0 // pred_check_branch
    %23 = sbr.rel (0) target = $region21
  $region20: #{stn_one_forward.6} parent=0 // pred_region
    _
  $region21: #{stn_one_forward.6} parent=0 // pred_fallthru
    _
  // Predicated region
  $region22: #{stn_one_forward.6} parent=0 // pred_check
    _
  $region23: #{stn_one_forward.6} parent=0 // pred_check_branch
    %25 = sbr.rel (0) target = $region25
  $region24: #{stn_one_forward.6} parent=0 // pred_region
    _
  $region25: #{stn_one_forward.6} parent=0 // pred_fallthru
    _
  // Predicated region
  $region26: #{stn_one_forward.6} parent=0 // pred_check
    _
  $region27: #{stn_one_forward.6} parent=0 // pred_check_branch
    %27 = sbr.rel (0) target = $region29
  $region28: #{stn_one_forward.6} parent=0 // pred_region
    _
  $region29: #{stn_one_forward.6} parent=0 // pred_fallthru
    _
  %v28 = vld [vmem:[%s4] sm:$0xff]
  %v29 = vld [vmem:[%s4 + $0x8] sm:$0xff]
  %v30 = vld [vmem:[%s4 + $0x10] sm:$0xff]
  %v31 = vld [vmem:[%s4 + $0x18] sm:$0xff]
  %v32 = vld [vmem:[%s4 + $0x20] sm:$0xff]
  %v33 = vld [vmem:[%s4 + $0x28] sm:$0xff]
  %v34 = vld [vmem:[%s4 + $0x30] sm:$0xff]
  %v35 = vld [vmem:[%s4 + $0x38] sm:$0xff]
  %v36 = vld [vmem:[%s4 + $0x40] sm:$0xff]
  %v37 = vld [vmem:[%s4 + $0x48] sm:$0x3f]
  %v38 = vld [vmem:[%s4 + $0x50] sm:$0x3f]
  %v39 = vld [vmem:[%s4 + $0x58] sm:$0x3f]
  %v40 = vld [vmem:[%s0] sm:$0xff]
  %v41 = vld [vmem:[%s0 + $0x8] sm:$0xff]
  %v42 = vld [vmem:[%s0 + $0x10] sm:$0xff]
  %v43 = vld [vmem:[%s0 + $0x18] sm:$0xff]
  %v44 = vld [vmem:[%s0 + $0x20] sm:$0xff]
  %v45 = vld [vmem:[%s0 + $0x28] sm:$0xff]
  %v46 = vld [vmem:[%s0 + $0x30] sm:$0xff]
  %v47 = vld [vmem:[%s0 + $0x38] sm:$0xff]
  %v48 = vld [vmem:[%s0 + $0x40] sm:$0xff]
  %v49 = vld [vmem:[%s0 + $0x48] sm:$0xff]
  %v50 = vld [vmem:[%s0 + $0x50] sm:$0xff]
  %v51 = vld [vmem:[%s0 + $0x58] sm:$0xff]
  %v52 = vld [vmem:[%s0 + $0x60] sm:$0xff]
  %v53 = vld [vmem:[%s0 + $0x68] sm:$0xff]
  %v54 = vld [vmem:[%s0 + $0x70] sm:$0xff]
  %v55 = vld [vmem:[%s0 + $0x78] sm:$0xff]
  %v56 = vld [vmem:[%s0 + $0x80] sm:$0xff]
  %v57 = vld [vmem:[%s0 + $0x88] sm:$0xff]
  %v58 = vld [vmem:[%s0 + $0x90] sm:$0xff]
  %v59 = vld [vmem:[%s0 + $0x98] sm:$0xff]
  %v60 = vld [vmem:[%s0 + $0xa0] sm:$0xff]
  %v61 = vld [vmem:[%s0 + $0xa8] sm:$0xff]
  %v62 = vld [vmem:[%s0 + $0xb0] sm:$0xff]
  %v63 = vld [vmem:[%s0 + $0xb8] sm:$0xff]
  %v64 = vld [vmem:[%s0 + $0xc0] sm:$0xff]
  %v65 = vld [vmem:[%s0 + $0xc8] sm:$0xff]
  %v66 = vld [vmem:[%s0 + $0xd0] sm:$0xff]
  %v67 = vld [vmem:[%s0 + $0xd8] sm:$0xff]
  %v68 = vld [vmem:[%s0 + $0xe0] sm:$0xff]
  %v69 = vld [vmem:[%s0 + $0xe8] sm:$0xff]
  %v70 = vld [vmem:[%s0 + $0xf0] sm:$0xff]
  %v71 = vld [vmem:[%s0 + $0xf8] sm:$0xff]
  %v72 = vld [vmem:[%s0 + $0x100] sm:$0xff]
  %v73 = vld [vmem:[%s0 + $0x108] sm:$0xff]
  %v74 = vld [vmem:[%s0 + $0x110] sm:$0xff]
  %v75 = vld [vmem:[%s0 + $0x118] sm:$0xff]
  %v76 = vld [vmem:[%s0 + $0x120] sm:$0xff]
  %v77 = vld [vmem:[%s0 + $0x128] sm:$0xff]
  %v78 = vld [vmem:[%s0 + $0x130] sm:$0xff]
  %v79 = vld [vmem:[%s0 + $0x138] sm:$0xff]
  %v80 = vld [vmem:[%s0 + $0x140] sm:$0xff]
  %v81 = vld [vmem:[%s0 + $0x148] sm:$0xff]
  %v82 = vld [vmem:[%s0 + $0x150] sm:$0xff]
  %v83 = vld [vmem:[%s0 + $0x158] sm:$0xff]
  %v84 = vld [vmem:[%s0 + $0x160] sm:$0xff]
  %v85 = vld [vmem:[%s0 + $0x168] sm:$0xff]
  %v86 = vld [vmem:[%s0 + $0x170] sm:$0x7f]
  %vm87 = vcmask 973824
  %v89 = vsel %vm87, %v30, 0
  %v92 = vsel %vm87, %v33, 0
  %v95 = vsel %vm87, %v36, 0
  %v98 = vsel %vm87, %v39, 0
  %vm100 = vcmask 1046528
  %v102 = vsel %vm100, %v86, 0
  %104 = vmatprep.subr.mxu0 0.0
  %105 = vmatpush1.msra.mxu0 %v40
  %106 = vmatprep.subr.mxu0 0.0
  %107 = vmatpush1.msra.mxu0 %v41
  %108 = vmatprep.subr.mxu0 0.0
  %109 = vmatpush1.msra.mxu0 %v42
  %110 = vmatprep.subr.mxu0 0.0
  %111 = vmatpush1.msra.mxu0 %v43
  %112 = vmatprep.subr.mxu0 0.0
  %113 = vmatpush1.msra.mxu0 %v44
  %114 = vmatprep.subr.mxu0 0.0
  %115 = vmatpush1.msra.mxu0 %v45
  %116 = vmatprep.subr.mxu0 0.0
  %117 = vmatpush1.msra.mxu0 %v46
  %118 = vmatprep.subr.mxu0 0.0
  %119 = vmatpush1.msra.mxu0 %v47
  %120 = vmatprep.subr.mxu0 0.0
  %121 = vmatpush1.msra.mxu0 %v48
  %122 = vmatprep.subr.mxu0 0.0
  %123 = vmatpush1.msra.mxu0 %v49
  %124 = vmatprep.subr.mxu0 0.0
  %125 = vmatpush1.msra.mxu0 %v50
  %126 = vmatprep.subr.mxu0 0.0
  %127 = vmatpush1.msra.mxu0 %v51
  %128 = vmatprep.subr.mxu0 0.0
  %129 = vmatpush1.msra.mxu0 %v52
  %130 = vmatprep.subr.mxu0 0.0
  %131 = vmatpush1.msra.mxu0 %v53
  %132 = vmatprep.subr.mxu0 0.0
  %133 = vmatpush1.msra.mxu0 %v54
  %134 = vmatprep.subr.mxu0 0.0
  %135 = vmatpush1.msra.mxu0 %v55
  %136 = vmatprep.subr.mxu0 0.0
  %137 = vmatpush1.msra.mxu0 %v56
  %138 = vmatprep.subr.mxu0 0.0
  %139 = vmatpush1.msra.mxu0 %v57
  %140 = vmatprep.subr.mxu0 0.0
  %141 = vmatpush1.msra.mxu0 %v58
  %142 = vmatprep.subr.mxu0 0.0
  %143 = vmatpush1.msra.mxu0 %v59
  %144 = vmatprep.subr.mxu0 0.0
  %145 = vmatpush1.msra.mxu0 %v60
  %146 = vmatprep.subr.mxu0 0.0
  %147 = vmatpush1.msra.mxu0 %v61
  %148 = vmatprep.subr.mxu0 0.0
  %149 = vmatpush1.msra.mxu0 %v62
  %150 = vmatprep.subr.mxu0 0.0
  %151 = vmatpush1.msra.mxu0 %v63
  %152 = vmatprep.subr.mxu0 0.0
  %153 = vmatpush1.msra.mxu0 %v64
  %154 = vmatprep.subr.mxu0 0.0
  %155 = vmatpush1.msra.mxu0 %v65
  %156 = vmatprep.subr.mxu0 0.0
  %157 = vmatpush1.msra.mxu0 %v66
  %158 = vmatprep.subr.mxu0 0.0
  %159 = vmatpush1.msra.mxu0 %v67
  %160 = vmatprep.subr.mxu0 0.0
  %161 = vmatpush1.msra.mxu0 %v68
  %162 = vmatprep.subr.mxu0 0.0
  %163 = vmatpush1.msra.mxu0 %v69
  %164 = vmatprep.subr.mxu0 0.0
  %165 = vmatpush1.msra.mxu0 %v70
  %166 = vmatprep.subr.mxu0 0.0
  %167 = vmatpush1.msra.mxu0 %v71
  %168 = vmatprep.mubr.f32.mxu0 %v29
  %169 = vmatmul.mubr.f32.gmra.mrb[0].mxu0 %v28
  %v170 = vpop.f32.mrb[0].mxu0
  %v171 = vadd.f32 0.0, %v170
  %v172 = vpop.f32.mrb[0].mxu0
  %173 = vmatprep.mubr.f32.mxu0 %v32
  %174 = vmatmul.mubr.f32.gmra.mrb[0].mxu0 %v31
  %v175 = vpop.f32.mrb[0].mxu0
  %v176 = vadd.f32 0.0, %v175
  %v177 = vpop.f32.mrb[0].mxu0
  %178 = vmatprep.mubr.f32.mxu0 %v35
  %179 = vmatmul.mubr.f32.gmra.mrb[0].mxu0 %v34
  %v180 = vpop.f32.mrb[0].mxu0
  %v181 = vadd.f32 0.0, %v180
  %v182 = vpop.f32.mrb[0].mxu0
  %183 = vmatprep.mubr.f32.mxu0 %v38
  %184 = vmatmul.mubr.f32.gmra.mrb[0].mxu0 %v37
  %v185 = vpop.f32.mrb[0].mxu0
  %v186 = vadd.f32 0.0, %v185
  %v187 = vpop.f32.mrb[0].mxu0
  %188 = vdwg.mxu0
  %189 = vmatprep.subr.mxu0 0.0
  %190 = vmatpush1.msra.mxu0 %v72
  %191 = vmatprep.subr.mxu0 0.0
  %192 = vmatpush1.msra.mxu0 %v73
  %193 = vmatprep.subr.mxu0 0.0
  %194 = vmatpush1.msra.mxu0 %v74
  %195 = vmatprep.subr.mxu0 0.0
  %196 = vmatpush1.msra.mxu0 %v75
  %197 = vmatprep.subr.mxu0 0.0
  %198 = vmatpush1.msra.mxu0 %v76
  %199 = vmatprep.subr.mxu0 0.0
  %200 = vmatpush1.msra.mxu0 %v77
  %201 = vmatprep.subr.mxu0 0.0
  %202 = vmatpush1.msra.mxu0 %v78
  %203 = vmatprep.subr.mxu0 0.0
  %204 = vmatpush1.msra.mxu0 %v79
  %205 = vmatprep.subr.mxu0 0.0
  %206 = vmatpush1.msra.mxu0 %v80
  %207 = vmatprep.subr.mxu0 0.0
  %208 = vmatpush1.msra.mxu0 %v81
  %209 = vmatprep.subr.mxu0 0.0
  %210 = vmatpush1.msra.mxu0 %v82
  %211 = vmatprep.subr.mxu0 0.0
  %212 = vmatpush1.msra.mxu0 %v83
  %213 = vmatprep.subr.mxu0 0.0
  %214 = vmatpush1.msra.mxu0 %v84
  %215 = vmatprep.subr.mxu0 0.0
  %216 = vmatpush1.msra.mxu0 %v85
  %217 = vmatprep.subr.mxu0 0.0
  %218 = vmatpush1.msra.mxu0 %v102
  %219 = vmatprep.subr.mxu0 0.0
  %220 = vmatpush1.msra.mxu0 0.0
  %221 = vmatprep.subr.mxu0 0.0
  %222 = vmatpush1.msra.mxu0 0.0
  %223 = vmatprep.subr.mxu0 0.0
  %224 = vmatpush1.msra.mxu0 0.0
  %225 = vmatprep.subr.mxu0 0.0
  %226 = vmatpush1.msra.mxu0 0.0
  %227 = vmatprep.subr.mxu0 0.0
  %228 = vmatpush1.msra.mxu0 0.0
  %229 = vmatprep.subr.mxu0 0.0
  %230 = vmatpush1.msra.mxu0 0.0
  %231 = vmatprep.subr.mxu0 0.0
  %232 = vmatpush1.msra.mxu0 0.0
  %233 = vmatprep.subr.mxu0 0.0
  %234 = vmatpush1.msra.mxu0 0.0
  %235 = vmatprep.subr.mxu0 0.0
  %236 = vmatpush1.msra.mxu0 0.0
  %237 = vmatprep.subr.mxu0 0.0
  %238 = vmatpush1.msra.mxu0 0.0
  %239 = vmatprep.subr.mxu0 0.0
  %240 = vmatpush1.msra.mxu0 0.0
  %241 = vmatprep.subr.mxu0 0.0
  %242 = vmatpush1.msra.mxu0 0.0
  %243 = vmatprep.subr.mxu0 0.0
  %244 = vmatpush1.msra.mxu0 0.0
  %245 = vmatprep.subr.mxu0 0.0
  %246 = vmatpush1.msra.mxu0 0.0
  %247 = vmatprep.subr.mxu0 0.0
  %248 = vmatpush1.msra.mxu0 0.0
  %249 = vmatprep.subr.mxu0 0.0
  %250 = vmatpush1.msra.mxu0 0.0
  %251 = vmatprep.subr.mxu0 0.0
  %252 = vmatpush1.msra.mxu0 0.0
  %253 = vmatprep.mubr.f32.mxu0 0.0
  %254 = vmatmul.mubr.f32.gmra.mrb[0].mxu0 %v89
  %v255 = vpop.f32.mrb[0].mxu0
  %v256 = vadd.f32 %v171, %v255
  %v257 = vpop.f32.mrb[0].mxu0
  %258 = vmatprep.mubr.f32.mxu0 0.0
  %259 = vmatmul.mubr.f32.gmra.mrb[0].mxu0 %v92
  %v260 = vpop.f32.mrb[0].mxu0
  %v261 = vadd.f32 %v176, %v260
  %v262 = vpop.f32.mrb[0].mxu0
  %263 = vmatprep.mubr.f32.mxu0 0.0
  %264 = vmatmul.mubr.f32.gmra.mrb[0].mxu0 %v95
  %v265 = vpop.f32.mrb[0].mxu0
  %v266 = vadd.f32 %v181, %v265
  %v267 = vpop.f32.mrb[0].mxu0
  %268 = vmatprep.mubr.f32.mxu0 0.0
  %269 = vmatmul.mubr.f32.gmra.mrb[0].mxu0 %v98
  %v270 = vpop.f32.mrb[0].mxu0
  %v271 = vadd.f32 %v186, %v270
  %v272 = vpop.f32.mrb[0].mxu0
  %273 = vdwg.mxu0
  %v274 = vld [vmem:[%s1] sm:$0xff]
  %v275 = vld [vmem:[%s1 + $0x8] sm:$0xff]
  %v276 = vld [vmem:[%s1 + $0x10] sm:$0xff]
  %v277 = vld [vmem:[%s1 + $0x18] sm:$0xff]
  %v278 = vld [vmem:[%s1 + $0x20] sm:$0xff]
  %v279 = vld [vmem:[%s1 + $0x28] sm:$0xff]
  %v280 = vld [vmem:[%s1 + $0x30] sm:$0xff]
  %v281 = vld [vmem:[%s1 + $0x38] sm:$0xff]
  %v282 = vld [vmem:[%s1 + $0x40] sm:$0xff]
  %v283 = vld [vmem:[%s1 + $0x48] sm:$0xff]
  %v284 = vld [vmem:[%s1 + $0x50] sm:$0xff]
  %v285 = vld [vmem:[%s1 + $0x58] sm:$0xff]
  %v286 = vld [vmem:[%s1 + $0x60] sm:$0xff]
  %v287 = vld [vmem:[%s1 + $0x68] sm:$0xff]
  %v288 = vld [vmem:[%s1 + $0x70] sm:$0xff]
  %v289 = vld [vmem:[%s1 + $0x78] sm:$0xff]
  %v290 = vld [vmem:[%s1 + $0x80] sm:$0xff]
  %v291 = vld [vmem:[%s1 + $0x88] sm:$0xff]
  %v292 = vld [vmem:[%s1 + $0x90] sm:$0xff]
  %v293 = vld [vmem:[%s1 + $0x98] sm:$0xff]
  %v294 = vld [vmem:[%s1 + $0xa0] sm:$0xff]
  %v295 = vld [vmem:[%s1 + $0xa8] sm:$0xff]
  %v296 = vld [vmem:[%s1 + $0xb0] sm:$0xff]
  %v297 = vld [vmem:[%s1 + $0xb8] sm:$0xff]
  %v298 = vld [vmem:[%s1 + $0xc0] sm:$0xff]
  %v299 = vld [vmem:[%s1 + $0xc8] sm:$0xff]
  %v300 = vld [vmem:[%s1 + $0xd0] sm:$0xff]
  %v301 = vld [vmem:[%s1 + $0xd8] sm:$0xff]
  %v302 = vld [vmem:[%s1 + $0xe0] sm:$0xff]
  %v303 = vld [vmem:[%s1 + $0xe8] sm:$0xff]
  %v304 = vld [vmem:[%s1 + $0xf0] sm:$0xff]
  %v305 = vld [vmem:[%s1 + $0xf8] sm:$0xff]
  %v306 = vld [vmem:[%s1 + $0x100] sm:$0xff]
  %v307 = vld [vmem:[%s1 + $0x108] sm:$0xff]
  %v308 = vld [vmem:[%s1 + $0x110] sm:$0xff]
  %v309 = vld [vmem:[%s1 + $0x118] sm:$0xff]
  %v310 = vld [vmem:[%s1 + $0x120] sm:$0xff]
  %v311 = vld [vmem:[%s1 + $0x128] sm:$0xff]
  %v312 = vld [vmem:[%s1 + $0x130] sm:$0xff]
  %v313 = vld [vmem:[%s1 + $0x138] sm:$0xff]
  %v314 = vld [vmem:[%s1 + $0x140] sm:$0xff]
  %v315 = vld [vmem:[%s1 + $0x148] sm:$0xff]
  %v316 = vld [vmem:[%s1 + $0x150] sm:$0xff]
  %v317 = vld [vmem:[%s1 + $0x158] sm:$0xff]
  %v318 = vld [vmem:[%s1 + $0x160] sm:$0xff]
  %v319 = vld [vmem:[%s1 + $0x168] sm:$0xff]
  %v320 = vld [vmem:[%s1 + $0x170] sm:$0x7f]
  %v322 = vsel %vm100, %v320, 0
  %324 = vmatprep.subr.mxu0 0.0
  %325 = vmatpush1.msra.mxu0 %v274
  %326 = vmatprep.subr.mxu0 0.0
  %327 = vmatpush1.msra.mxu0 %v275
  %328 = vmatprep.subr.mxu0 0.0
  %329 = vmatpush1.msra.mxu0 %v276
  %330 = vmatprep.subr.mxu0 0.0
  %331 = vmatpush1.msra.mxu0 %v277
  %332 = vmatprep.subr.mxu0 0.0
  %333 = vmatpush1.msra.mxu0 %v278
  %334 = vmatprep.subr.mxu0 0.0
  %335 = vmatpush1.msra.mxu0 %v279
  %336 = vmatprep.subr.mxu0 0.0
  %337 = vmatpush1.msra.mxu0 %v280
  %338 = vmatprep.subr.mxu0 0.0
  %339 = vmatpush1.msra.mxu0 %v281
  %340 = vmatprep.subr.mxu0 0.0
  %341 = vmatpush1.msra.mxu0 %v282
  %342 = vmatprep.subr.mxu0 0.0
  %343 = vmatpush1.msra.mxu0 %v283
  %344 = vmatprep.subr.mxu0 0.0
  %345 = vmatpush1.msra.mxu0 %v284
  %346 = vmatprep.subr.mxu0 0.0
  %347 = vmatpush1.msra.mxu0 %v285
  %348 = vmatprep.subr.mxu0 0.0
  %349 = vmatpush1.msra.mxu0 %v286
  %350 = vmatprep.subr.mxu0 0.0
  %351 = vmatpush1.msra.mxu0 %v287
  %352 = vmatprep.subr.mxu0 0.0
  %353 = vmatpush1.msra.mxu0 %v288
  %354 = vmatprep.subr.mxu0 0.0
  %355 = vmatpush1.msra.mxu0 %v289
  %356 = vmatprep.subr.mxu0 0.0
  %357 = vmatpush1.msra.mxu0 %v290
  %358 = vmatprep.subr.mxu0 0.0
  %359 = vmatpush1.msra.mxu0 %v291
  %360 = vmatprep.subr.mxu0 0.0
  %361 = vmatpush1.msra.mxu0 %v292
  %362 = vmatprep.subr.mxu0 0.0
  %363 = vmatpush1.msra.mxu0 %v293
  %364 = vmatprep.subr.mxu0 0.0
  %365 = vmatpush1.msra.mxu0 %v294
  %366 = vmatprep.subr.mxu0 0.0
  %367 = vmatpush1.msra.mxu0 %v295
  %368 = vmatprep.subr.mxu0 0.0
  %369 = vmatpush1.msra.mxu0 %v296
  %370 = vmatprep.subr.mxu0 0.0
  %371 = vmatpush1.msra.mxu0 %v297
  %372 = vmatprep.subr.mxu0 0.0
  %373 = vmatpush1.msra.mxu0 %v298
  %374 = vmatprep.subr.mxu0 0.0
  %375 = vmatpush1.msra.mxu0 %v299
  %376 = vmatprep.subr.mxu0 0.0
  %377 = vmatpush1.msra.mxu0 %v300
  %378 = vmatprep.subr.mxu0 0.0
  %379 = vmatpush1.msra.mxu0 %v301
  %380 = vmatprep.subr.mxu0 0.0
  %381 = vmatpush1.msra.mxu0 %v302
  %382 = vmatprep.subr.mxu0 0.0
  %383 = vmatpush1.msra.mxu0 %v303
  %384 = vmatprep.subr.mxu0 0.0
  %385 = vmatpush1.msra.mxu0 %v304
  %386 = vmatprep.subr.mxu0 0.0
  %387 = vmatpush1.msra.mxu0 %v305
  %388 = vmatprep.mubr.f32.mxu0 %v29
  %389 = vmatmul.mubr.f32.gmra.mrb[0].mxu0 %v28
  %v390 = vpop.f32.mrb[0].mxu0
  %v391 = vadd.f32 0.0, %v390
  %v392 = vpop.f32.mrb[0].mxu0
  %393 = vmatprep.mubr.f32.mxu0 %v32
  %394 = vmatmul.mubr.f32.gmra.mrb[0].mxu0 %v31
  %v395 = vpop.f32.mrb[0].mxu0
  %v396 = vadd.f32 0.0, %v395
  %v397 = vpop.f32.mrb[0].mxu0
  %398 = vmatprep.mubr.f32.mxu0 %v35
  %399 = vmatmul.mubr.f32.gmra.mrb[0].mxu0 %v34
  %v400 = vpop.f32.mrb[0].mxu0
  %v401 = vadd.f32 0.0, %v400
  %v402 = vpop.f32.mrb[0].mxu0
  %403 = vmatprep.mubr.f32.mxu0 %v38
  %404 = vmatmul.mubr.f32.gmra.mrb[0].mxu0 %v37
  %v405 = vpop.f32.mrb[0].mxu0
  %v406 = vadd.f32 0.0, %v405
  %v407 = vpop.f32.mrb[0].mxu0
  %408 = vdwg.mxu0
  %409 = vmatprep.subr.mxu0 0.0
  %410 = vmatpush1.msra.mxu0 %v306
  %411 = vmatprep.subr.mxu0 0.0
  %412 = vmatpush1.msra.mxu0 %v307
  %413 = vmatprep.subr.mxu0 0.0
  %414 = vmatpush1.msra.mxu0 %v308
  %415 = vmatprep.subr.mxu0 0.0
  %416 = vmatpush1.msra.mxu0 %v309
  %417 = vmatprep.subr.mxu0 0.0
  %418 = vmatpush1.msra.mxu0 %v310
  %419 = vmatprep.subr.mxu0 0.0
  %420 = vmatpush1.msra.mxu0 %v311
  %421 = vmatprep.subr.mxu0 0.0
  %422 = vmatpush1.msra.mxu0 %v312
  %423 = vmatprep.subr.mxu0 0.0
  %424 = vmatpush1.msra.mxu0 %v313
  %425 = vmatprep.subr.mxu0 0.0
  %426 = vmatpush1.msra.mxu0 %v314
  %427 = vmatprep.subr.mxu0 0.0
  %428 = vmatpush1.msra.mxu0 %v315
  %429 = vmatprep.subr.mxu0 0.0
  %430 = vmatpush1.msra.mxu0 %v316
  %431 = vmatprep.subr.mxu0 0.0
  %432 = vmatpush1.msra.mxu0 %v317
  %433 = vmatprep.subr.mxu0 0.0
  %434 = vmatpush1.msra.mxu0 %v318
  %435 = vmatprep.subr.mxu0 0.0
  %436 = vmatpush1.msra.mxu0 %v319
  %437 = vmatprep.subr.mxu0 0.0
  %438 = vmatpush1.msra.mxu0 %v322
  %439 = vmatprep.subr.mxu0 0.0
  %440 = vmatpush1.msra.mxu0 0.0
  %441 = vmatprep.subr.mxu0 0.0
  %442 = vmatpush1.msra.mxu0 0.0
  %443 = vmatprep.subr.mxu0 0.0
  %444 = vmatpush1.msra.mxu0 0.0
  %445 = vmatprep.subr.mxu0 0.0
  %446 = vmatpush1.msra.mxu0 0.0
  %447 = vmatprep.subr.mxu0 0.0
  %448 = vmatpush1.msra.mxu0 0.0
  %449 = vmatprep.subr.mxu0 0.0
  %450 = vmatpush1.msra.mxu0 0.0
  %451 = vmatprep.subr.mxu0 0.0
  %452 = vmatpush1.msra.mxu0 0.0
  %453 = vmatprep.subr.mxu0 0.0
  %454 = vmatpush1.msra.mxu0 0.0
  %455 = vmatprep.subr.mxu0 0.0
  %456 = vmatpush1.msra.mxu0 0.0
  %457 = vmatprep.subr.mxu0 0.0
  %458 = vmatpush1.msra.mxu0 0.0
  %459 = vmatprep.subr.mxu0 0.0
  %460 = vmatpush1.msra.mxu0 0.0
  %461 = vmatprep.subr.mxu0 0.0
  %462 = vmatpush1.msra.mxu0 0.0
  %463 = vmatprep.subr.mxu0 0.0
  %464 = vmatpush1.msra.mxu0 0.0
  %465 = vmatprep.subr.mxu0 0.0
  %466 = vmatpush1.msra.mxu0 0.0
  %467 = vmatprep.subr.mxu0 0.0
  %468 = vmatpush1.msra.mxu0 0.0
  %469 = vmatprep.subr.mxu0 0.0
  %470 = vmatpush1.msra.mxu0 0.0
  %471 = vmatprep.subr.mxu0 0.0
  %472 = vmatpush1.msra.mxu0 0.0
  %473 = vmatprep.mubr.f32.mxu0 0.0
  %474 = vmatmul.mubr.f32.gmra.mrb[0].mxu0 %v89
  %v475 = vpop.f32.mrb[0].mxu0
  %v476 = vadd.f32 %v391, %v475
  %v477 = vpop.f32.mrb[0].mxu0
  %478 = vmatprep.mubr.f32.mxu0 0.0
  %479 = vmatmul.mubr.f32.gmra.mrb[0].mxu0 %v92
  %v480 = vpop.f32.mrb[0].mxu0
  %v481 = vadd.f32 %v396, %v480
  %v482 = vpop.f32.mrb[0].mxu0
  %483 = vmatprep.mubr.f32.mxu0 0.0
  %484 = vmatmul.mubr.f32.gmra.mrb[0].mxu0 %v95
  %v485 = vpop.f32.mrb[0].mxu0
  %v486 = vadd.f32 %v401, %v485
  %v487 = vpop.f32.mrb[0].mxu0
  %488 = vmatprep.mubr.f32.mxu0 0.0
  %489 = vmatmul.mubr.f32.gmra.mrb[0].mxu0 %v98
  %v490 = vpop.f32.mrb[0].mxu0
  %v491 = vadd.f32 %v406, %v490
  %v492 = vpop.f32.mrb[0].mxu0
  %493 = vdwg.mxu0
  %v494 = vmax.f32 %v256, %v476
  %v495 = vmax.f32 %v261, %v481
  %v496 = vmax.f32 %v266, %v486
  %v497 = vmax.f32 %v271, %v491
  %v498 = vld [vmem:[%s2] sm:$0xff]
  %v499 = vld [vmem:[%s2 + $0x8] sm:$0xff]
  %v500 = vld [vmem:[%s2 + $0x10] sm:$0xff]
  %v501 = vld [vmem:[%s2 + $0x18] sm:$0xff]
  %v502 = vld [vmem:[%s2 + $0x20] sm:$0xff]
  %v503 = vld [vmem:[%s2 + $0x28] sm:$0xff]
  %v504 = vld [vmem:[%s2 + $0x30] sm:$0xff]
  %v505 = vld [vmem:[%s2 + $0x38] sm:$0xff]
  %v506 = vld [vmem:[%s2 + $0x40] sm:$0xff]
  %v507 = vld [vmem:[%s2 + $0x48] sm:$0xff]
  %v508 = vld [vmem:[%s2 + $0x50] sm:$0xff]
  %v509 = vld [vmem:[%s2 + $0x58] sm:$0xff]
  %v510 = vld [vmem:[%s2 + $0x60] sm:$0xff]
  %v511 = vld [vmem:[%s2 + $0x68] sm:$0xff]
  %v512 = vld [vmem:[%s2 + $0x70] sm:$0xff]
  %v513 = vld [vmem:[%s2 + $0x78] sm:$0xff]
  %v514 = vld [vmem:[%s2 + $0x80] sm:$0xff]
  %v515 = vld [vmem:[%s2 + $0x88] sm:$0xff]
  %v516 = vld [vmem:[%s2 + $0x90] sm:$0xff]
  %v517 = vld [vmem:[%s2 + $0x98] sm:$0xff]
  %v518 = vld [vmem:[%s2 + $0xa0] sm:$0xff]
  %v519 = vld [vmem:[%s2 + $0xa8] sm:$0xff]
  %v520 = vld [vmem:[%s2 + $0xb0] sm:$0xff]
  %v521 = vld [vmem:[%s2 + $0xb8] sm:$0xff]
  %v522 = vld [vmem:[%s2 + $0xc0] sm:$0xff]
  %v523 = vld [vmem:[%s2 + $0xc8] sm:$0xff]
  %v524 = vld [vmem:[%s2 + $0xd0] sm:$0xff]
  %v525 = vld [vmem:[%s2 + $0xd8] sm:$0xff]
  %v526 = vld [vmem:[%s2 + $0xe0] sm:$0xff]
  %v527 = vld [vmem:[%s2 + $0xe8] sm:$0xff]
  %v528 = vld [vmem:[%s2 + $0xf0] sm:$0xff]
  %v529 = vld [vmem:[%s2 + $0xf8] sm:$0xff]
  %v530 = vld [vmem:[%s2 + $0x100] sm:$0xff]
  %v531 = vld [vmem:[%s2 + $0x108] sm:$0xff]
  %v532 = vld [vmem:[%s2 + $0x110] sm:$0xff]
  %v533 = vld [vmem:[%s2 + $0x118] sm:$0xff]
  %v534 = vld [vmem:[%s2 + $0x120] sm:$0xff]
  %v535 = vld [vmem:[%s2 + $0x128] sm:$0xff]
  %v536 = vld [vmem:[%s2 + $0x130] sm:$0xff]
  %v537 = vld [vmem:[%s2 + $0x138] sm:$0xff]
  %v538 = vld [vmem:[%s2 + $0x140] sm:$0xff]
  %v539 = vld [vmem:[%s2 + $0x148] sm:$0xff]
  %v540 = vld [vmem:[%s2 + $0x150] sm:$0xff]
  %v541 = vld [vmem:[%s2 + $0x158] sm:$0xff]
  %v542 = vld [vmem:[%s2 + $0x160] sm:$0xff]
  %v543 = vld [vmem:[%s2 + $0x168] sm:$0xff]
  %v544 = vld [vmem:[%s2 + $0x170] sm:$0x7f]
  %v546 = vsel %vm100, %v544, 0
  %548 = vmatprep.subr.mxu0 0.0
  %549 = vmatpush1.msra.mxu0 %v498
  %550 = vmatprep.subr.mxu0 0.0
  %551 = vmatpush1.msra.mxu0 %v499
  %552 = vmatprep.subr.mxu0 0.0
  %553 = vmatpush1.msra.mxu0 %v500
  %554 = vmatprep.subr.mxu0 0.0
  %555 = vmatpush1.msra.mxu0 %v501
  %556 = vmatprep.subr.mxu0 0.0
  %557 = vmatpush1.msra.mxu0 %v502
  %558 = vmatprep.subr.mxu0 0.0
  %559 = vmatpush1.msra.mxu0 %v503
  %560 = vmatprep.subr.mxu0 0.0
  %561 = vmatpush1.msra.mxu0 %v504
  %562 = vmatprep.subr.mxu0 0.0
  %563 = vmatpush1.msra.mxu0 %v505
  %564 = vmatprep.subr.mxu0 0.0
  %565 = vmatpush1.msra.mxu0 %v506
  %566 = vmatprep.subr.mxu0 0.0
  %567 = vmatpush1.msra.mxu0 %v507
  %568 = vmatprep.subr.mxu0 0.0
  %569 = vmatpush1.msra.mxu0 %v508
  %570 = vmatprep.subr.mxu0 0.0
  %571 = vmatpush1.msra.mxu0 %v509
  %572 = vmatprep.subr.mxu0 0.0
  %573 = vmatpush1.msra.mxu0 %v510
  %574 = vmatprep.subr.mxu0 0.0
  %575 = vmatpush1.msra.mxu0 %v511
  %576 = vmatprep.subr.mxu0 0.0
  %577 = vmatpush1.msra.mxu0 %v512
  %578 = vmatprep.subr.mxu0 0.0
  %579 = vmatpush1.msra.mxu0 %v513
  %580 = vmatprep.subr.mxu0 0.0
  %581 = vmatpush1.msra.mxu0 %v514
  %582 = vmatprep.subr.mxu0 0.0
  %583 = vmatpush1.msra.mxu0 %v515
  %584 = vmatprep.subr.mxu0 0.0
  %585 = vmatpush1.msra.mxu0 %v516
  %586 = vmatprep.subr.mxu0 0.0
  %587 = vmatpush1.msra.mxu0 %v517
  %588 = vmatprep.subr.mxu0 0.0
  %589 = vmatpush1.msra.mxu0 %v518
  %590 = vmatprep.subr.mxu0 0.0
  %591 = vmatpush1.msra.mxu0 %v519
  %592 = vmatprep.subr.mxu0 0.0
  %593 = vmatpush1.msra.mxu0 %v520
  %594 = vmatprep.subr.mxu0 0.0
  %595 = vmatpush1.msra.mxu0 %v521
  %596 = vmatprep.subr.mxu0 0.0
  %597 = vmatpush1.msra.mxu0 %v522
  %598 = vmatprep.subr.mxu0 0.0
  %599 = vmatpush1.msra.mxu0 %v523
  %600 = vmatprep.subr.mxu0 0.0
  %601 = vmatpush1.msra.mxu0 %v524
  %602 = vmatprep.subr.mxu0 0.0
  %603 = vmatpush1.msra.mxu0 %v525
  %604 = vmatprep.subr.mxu0 0.0
  %605 = vmatpush1.msra.mxu0 %v526
  %606 = vmatprep.subr.mxu0 0.0
  %607 = vmatpush1.msra.mxu0 %v527
  %608 = vmatprep.subr.mxu0 0.0
  %609 = vmatpush1.msra.mxu0 %v528
  %610 = vmatprep.subr.mxu0 0.0
  %611 = vmatpush1.msra.mxu0 %v529
  %612 = vmatprep.mubr.f32.mxu0 %v29
  %613 = vmatmul.mubr.f32.gmra.mrb[0].mxu0 %v28
  %v614 = vpop.f32.mrb[0].mxu0
  %v615 = vadd.f32 0.0, %v614
  %v616 = vpop.f32.mrb[0].mxu0
  %617 = vmatprep.mubr.f32.mxu0 %v32
  %618 = vmatmul.mubr.f32.gmra.mrb[0].mxu0 %v31
  %v619 = vpop.f32.mrb[0].mxu0
  %v620 = vadd.f32 0.0, %v619
  %v621 = vpop.f32.mrb[0].mxu0
  %622 = vmatprep.mubr.f32.mxu0 %v35
  %623 = vmatmul.mubr.f32.gmra.mrb[0].mxu0 %v34
  %v624 = vpop.f32.mrb[0].mxu0
  %v625 = vadd.f32 0.0, %v624
  %v626 = vpop.f32.mrb[0].mxu0
  %627 = vmatprep.mubr.f32.mxu0 %v38
  %628 = vmatmul.mubr.f32.gmra.mrb[0].mxu0 %v37
  %v629 = vpop.f32.mrb[0].mxu0
  %v630 = vadd.f32 0.0, %v629
  %v631 = vpop.f32.mrb[0].mxu0
  %632 = vdwg.mxu0
  %633 = vmatprep.subr.mxu0 0.0
  %634 = vmatpush1.msra.mxu0 %v530
  %635 = vmatprep.subr.mxu0 0.0
  %636 = vmatpush1.msra.mxu0 %v531
  %637 = vmatprep.subr.mxu0 0.0
  %638 = vmatpush1.msra.mxu0 %v532
  %639 = vmatprep.subr.mxu0 0.0
  %640 = vmatpush1.msra.mxu0 %v533
  %641 = vmatprep.subr.mxu0 0.0
  %642 = vmatpush1.msra.mxu0 %v534
  %643 = vmatprep.subr.mxu0 0.0
  %644 = vmatpush1.msra.mxu0 %v535
  %645 = vmatprep.subr.mxu0 0.0
  %646 = vmatpush1.msra.mxu0 %v536
  %647 = vmatprep.subr.mxu0 0.0
  %648 = vmatpush1.msra.mxu0 %v537
  %649 = vmatprep.subr.mxu0 0.0
  %650 = vmatpush1.msra.mxu0 %v538
  %651 = vmatprep.subr.mxu0 0.0
  %652 = vmatpush1.msra.mxu0 %v539
  %653 = vmatprep.subr.mxu0 0.0
  %654 = vmatpush1.msra.mxu0 %v540
  %655 = vmatprep.subr.mxu0 0.0
  %656 = vmatpush1.msra.mxu0 %v541
  %657 = vmatprep.subr.mxu0 0.0
  %658 = vmatpush1.msra.mxu0 %v542
  %659 = vmatprep.subr.mxu0 0.0
  %660 = vmatpush1.msra.mxu0 %v543
  %661 = vmatprep.subr.mxu0 0.0
  %662 = vmatpush1.msra.mxu0 %v546
  %663 = vmatprep.subr.mxu0 0.0
  %664 = vmatpush1.msra.mxu0 0.0
  %665 = vmatprep.subr.mxu0 0.0
  %666 = vmatpush1.msra.mxu0 0.0
  %667 = vmatprep.subr.mxu0 0.0
  %668 = vmatpush1.msra.mxu0 0.0
  %669 = vmatprep.subr.mxu0 0.0
  %670 = vmatpush1.msra.mxu0 0.0
  %671 = vmatprep.subr.mxu0 0.0
  %672 = vmatpush1.msra.mxu0 0.0
  %673 = vmatprep.subr.mxu0 0.0
  %674 = vmatpush1.msra.mxu0 0.0
  %675 = vmatprep.subr.mxu0 0.0
  %676 = vmatpush1.msra.mxu0 0.0
  %677 = vmatprep.subr.mxu0 0.0
  %678 = vmatpush1.msra.mxu0 0.0
  %679 = vmatprep.subr.mxu0 0.0
  %680 = vmatpush1.msra.mxu0 0.0
  %681 = vmatprep.subr.mxu0 0.0
  %682 = vmatpush1.msra.mxu0 0.0
  %683 = vmatprep.subr.mxu0 0.0
  %684 = vmatpush1.msra.mxu0 0.0
  %685 = vmatprep.subr.mxu0 0.0
  %686 = vmatpush1.msra.mxu0 0.0
  %687 = vmatprep.subr.mxu0 0.0
  %688 = vmatpush1.msra.mxu0 0.0
  %689 = vmatprep.subr.mxu0 0.0
  %690 = vmatpush1.msra.mxu0 0.0
  %691 = vmatprep.subr.mxu0 0.0
  %692 = vmatpush1.msra.mxu0 0.0
  %693 = vmatprep.subr.mxu0 0.0
  %694 = vmatpush1.msra.mxu0 0.0
  %695 = vmatprep.subr.mxu0 0.0
  %696 = vmatpush1.msra.mxu0 0.0
  %697 = vmatprep.mubr.f32.mxu0 0.0
  %698 = vmatmul.mubr.f32.gmra.mrb[0].mxu0 %v89
  %v699 = vpop.f32.mrb[0].mxu0
  %v700 = vadd.f32 %v615, %v699
  %v701 = vpop.f32.mrb[0].mxu0
  %702 = vmatprep.mubr.f32.mxu0 0.0
  %703 = vmatmul.mubr.f32.gmra.mrb[0].mxu0 %v92
  %v704 = vpop.f32.mrb[0].mxu0
  %v705 = vadd.f32 %v620, %v704
  %v706 = vpop.f32.mrb[0].mxu0
  %707 = vmatprep.mubr.f32.mxu0 0.0
  %708 = vmatmul.mubr.f32.gmra.mrb[0].mxu0 %v95
  %v709 = vpop.f32.mrb[0].mxu0
  %v710 = vadd.f32 %v625, %v709
  %v711 = vpop.f32.mrb[0].mxu0
  %712 = vmatprep.mubr.f32.mxu0 0.0
  %713 = vmatmul.mubr.f32.gmra.mrb[0].mxu0 %v98
  %v714 = vpop.f32.mrb[0].mxu0
  %v715 = vadd.f32 %v630, %v714
  %v716 = vpop.f32.mrb[0].mxu0
  %717 = vdwg.mxu0
  %v718 = vld [vmem:[%s3] sm:$0xff]
  %v719 = vld [vmem:[%s3 + $0x8] sm:$0xff]
  %v720 = vld [vmem:[%s3 + $0x10] sm:$0xff]
  %v721 = vld [vmem:[%s3 + $0x18] sm:$0xff]
  %v722 = vld [vmem:[%s3 + $0x20] sm:$0xff]
  %v723 = vld [vmem:[%s3 + $0x28] sm:$0xff]
  %v724 = vld [vmem:[%s3 + $0x30] sm:$0xff]
  %v725 = vld [vmem:[%s3 + $0x38] sm:$0xff]
  %v726 = vld [vmem:[%s3 + $0x40] sm:$0xff]
  %v727 = vld [vmem:[%s3 + $0x48] sm:$0xff]
  %v728 = vld [vmem:[%s3 + $0x50] sm:$0xff]
  %v729 = vld [vmem:[%s3 + $0x58] sm:$0xff]
  %v730 = vld [vmem:[%s3 + $0x60] sm:$0xff]
  %v731 = vld [vmem:[%s3 + $0x68] sm:$0xff]
  %v732 = vld [vmem:[%s3 + $0x70] sm:$0xff]
  %v733 = vld [vmem:[%s3 + $0x78] sm:$0xff]
  %v734 = vld [vmem:[%s3 + $0x80] sm:$0xff]
  %v735 = vld [vmem:[%s3 + $0x88] sm:$0xff]
  %v736 = vld [vmem:[%s3 + $0x90] sm:$0xff]
  %v737 = vld [vmem:[%s3 + $0x98] sm:$0xff]
  %v738 = vld [vmem:[%s3 + $0xa0] sm:$0xff]
  %v739 = vld [vmem:[%s3 + $0xa8] sm:$0xff]
  %v740 = vld [vmem:[%s3 + $0xb0] sm:$0xff]
  %v741 = vld [vmem:[%s3 + $0xb8] sm:$0xff]
  %v742 = vld [vmem:[%s3 + $0xc0] sm:$0xff]
  %v743 = vld [vmem:[%s3 + $0xc8] sm:$0xff]
  %v744 = vld [vmem:[%s3 + $0xd0] sm:$0xff]
  %v745 = vld [vmem:[%s3 + $0xd8] sm:$0xff]
  %v746 = vld [vmem:[%s3 + $0xe0] sm:$0xff]
  %v747 = vld [vmem:[%s3 + $0xe8] sm:$0xff]
  %v748 = vld [vmem:[%s3 + $0xf0] sm:$0xff]
  %v749 = vld [vmem:[%s3 + $0xf8] sm:$0xff]
  %v750 = vld [vmem:[%s3 + $0x100] sm:$0xff]
  %v751 = vld [vmem:[%s3 + $0x108] sm:$0xff]
  %v752 = vld [vmem:[%s3 + $0x110] sm:$0xff]
  %v753 = vld [vmem:[%s3 + $0x118] sm:$0xff]
  %v754 = vld [vmem:[%s3 + $0x120] sm:$0xff]
  %v755 = vld [vmem:[%s3 + $0x128] sm:$0xff]
  %v756 = vld [vmem:[%s3 + $0x130] sm:$0xff]
  %v757 = vld [vmem:[%s3 + $0x138] sm:$0xff]
  %v758 = vld [vmem:[%s3 + $0x140] sm:$0xff]
  %v759 = vld [vmem:[%s3 + $0x148] sm:$0xff]
  %v760 = vld [vmem:[%s3 + $0x150] sm:$0xff]
  %v761 = vld [vmem:[%s3 + $0x158] sm:$0xff]
  %v762 = vld [vmem:[%s3 + $0x160] sm:$0xff]
  %v763 = vld [vmem:[%s3 + $0x168] sm:$0xff]
  %v764 = vld [vmem:[%s3 + $0x170] sm:$0x7f]
  %v766 = vsel %vm100, %v764, 0
  %768 = vmatprep.subr.mxu0 0.0
  %769 = vmatpush1.msra.mxu0 %v718
  %770 = vmatprep.subr.mxu0 0.0
  %771 = vmatpush1.msra.mxu0 %v719
  %772 = vmatprep.subr.mxu0 0.0
  %773 = vmatpush1.msra.mxu0 %v720
  %774 = vmatprep.subr.mxu0 0.0
  %775 = vmatpush1.msra.mxu0 %v721
  %776 = vmatprep.subr.mxu0 0.0
  %777 = vmatpush1.msra.mxu0 %v722
  %778 = vmatprep.subr.mxu0 0.0
  %779 = vmatpush1.msra.mxu0 %v723
  %780 = vmatprep.subr.mxu0 0.0
  %781 = vmatpush1.msra.mxu0 %v724
  %782 = vmatprep.subr.mxu0 0.0
  %783 = vmatpush1.msra.mxu0 %v725
  %784 = vmatprep.subr.mxu0 0.0
  %785 = vmatpush1.msra.mxu0 %v726
  %786 = vmatprep.subr.mxu0 0.0
  %787 = vmatpush1.msra.mxu0 %v727
  %788 = vmatprep.subr.mxu0 0.0
  %789 = vmatpush1.msra.mxu0 %v728
  %790 = vmatprep.subr.mxu0 0.0
  %791 = vmatpush1.msra.mxu0 %v729
  %792 = vmatprep.subr.mxu0 0.0
  %793 = vmatpush1.msra.mxu0 %v730
  %794 = vmatprep.subr.mxu0 0.0
  %795 = vmatpush1.msra.mxu0 %v731
  %796 = vmatprep.subr.mxu0 0.0
  %797 = vmatpush1.msra.mxu0 %v732
  %798 = vmatprep.subr.mxu0 0.0
  %799 = vmatpush1.msra.mxu0 %v733
  %800 = vmatprep.subr.mxu0 0.0
  %801 = vmatpush1.msra.mxu0 %v734
  %802 = vmatprep.subr.mxu0 0.0
  %803 = vmatpush1.msra.mxu0 %v735
  %804 = vmatprep.subr.mxu0 0.0
  %805 = vmatpush1.msra.mxu0 %v736
  %806 = vmatprep.subr.mxu0 0.0
  %807 = vmatpush1.msra.mxu0 %v737
  %808 = vmatprep.subr.mxu0 0.0
  %809 = vmatpush1.msra.mxu0 %v738
  %810 = vmatprep.subr.mxu0 0.0
  %811 = vmatpush1.msra.mxu0 %v739
  %812 = vmatprep.subr.mxu0 0.0
  %813 = vmatpush1.msra.mxu0 %v740
  %814 = vmatprep.subr.mxu0 0.0
  %815 = vmatpush1.msra.mxu0 %v741
  %816 = vmatprep.subr.mxu0 0.0
  %817 = vmatpush1.msra.mxu0 %v742
  %818 = vmatprep.subr.mxu0 0.0
  %819 = vmatpush1.msra.mxu0 %v743
  %820 = vmatprep.subr.mxu0 0.0
  %821 = vmatpush1.msra.mxu0 %v744
  %822 = vmatprep.subr.mxu0 0.0
  %823 = vmatpush1.msra.mxu0 %v745
  %824 = vmatprep.subr.mxu0 0.0
  %825 = vmatpush1.msra.mxu0 %v746
  %826 = vmatprep.subr.mxu0 0.0
  %827 = vmatpush1.msra.mxu0 %v747
  %828 = vmatprep.subr.mxu0 0.0
  %829 = vmatpush1.msra.mxu0 %v748
  %830 = vmatprep.subr.mxu0 0.0
  %831 = vmatpush1.msra.mxu0 %v749
  %832 = vmatprep.mubr.f32.mxu0 %v29
  %833 = vmatmul.mubr.f32.gmra.mrb[0].mxu0 %v28
  %v834 = vpop.f32.mrb[0].mxu0
  %v835 = vadd.f32 0.0, %v834
  %v836 = vpop.f32.mrb[0].mxu0
  %837 = vmatprep.mubr.f32.mxu0 %v32
  %838 = vmatmul.mubr.f32.gmra.mrb[0].mxu0 %v31
  %v839 = vpop.f32.mrb[0].mxu0
  %v840 = vadd.f32 0.0, %v839
  %v841 = vpop.f32.mrb[0].mxu0
  %842 = vmatprep.mubr.f32.mxu0 %v35
  %843 = vmatmul.mubr.f32.gmra.mrb[0].mxu0 %v34
  %v844 = vpop.f32.mrb[0].mxu0
  %v845 = vadd.f32 0.0, %v844
  %v846 = vpop.f32.mrb[0].mxu0
  %847 = vmatprep.mubr.f32.mxu0 %v38
  %848 = vmatmul.mubr.f32.gmra.mrb[0].mxu0 %v37
  %v849 = vpop.f32.mrb[0].mxu0
  %v850 = vadd.f32 0.0, %v849
  %v851 = vpop.f32.mrb[0].mxu0
  %852 = vdwg.mxu0
  %853 = vmatprep.subr.mxu0 0.0
  %854 = vmatpush1.msra.mxu0 %v750
  %855 = vmatprep.subr.mxu0 0.0
  %856 = vmatpush1.msra.mxu0 %v751
  %857 = vmatprep.subr.mxu0 0.0
  %858 = vmatpush1.msra.mxu0 %v752
  %859 = vmatprep.subr.mxu0 0.0
  %860 = vmatpush1.msra.mxu0 %v753
  %861 = vmatprep.subr.mxu0 0.0
  %862 = vmatpush1.msra.mxu0 %v754
  %863 = vmatprep.subr.mxu0 0.0
  %864 = vmatpush1.msra.mxu0 %v755
  %865 = vmatprep.subr.mxu0 0.0
  %866 = vmatpush1.msra.mxu0 %v756
  %867 = vmatprep.subr.mxu0 0.0
  %868 = vmatpush1.msra.mxu0 %v757
  %869 = vmatprep.subr.mxu0 0.0
  %870 = vmatpush1.msra.mxu0 %v758
  %871 = vmatprep.subr.mxu0 0.0
  %872 = vmatpush1.msra.mxu0 %v759
  %873 = vmatprep.subr.mxu0 0.0
  %874 = vmatpush1.msra.mxu0 %v760
  %875 = vmatprep.subr.mxu0 0.0
  %876 = vmatpush1.msra.mxu0 %v761
  %877 = vmatprep.subr.mxu0 0.0
  %878 = vmatpush1.msra.mxu0 %v762
  %879 = vmatprep.subr.mxu0 0.0
  %880 = vmatpush1.msra.mxu0 %v763
  %881 = vmatprep.subr.mxu0 0.0
  %882 = vmatpush1.msra.mxu0 %v766
  %883 = vmatprep.subr.mxu0 0.0
  %884 = vmatpush1.msra.mxu0 0.0
  %885 = vmatprep.subr.mxu0 0.0
  %886 = vmatpush1.msra.mxu0 0.0
  %887 = vmatprep.subr.mxu0 0.0
  %888 = vmatpush1.msra.mxu0 0.0
  %889 = vmatprep.subr.mxu0 0.0
  %890 = vmatpush1.msra.mxu0 0.0
  %891 = vmatprep.subr.mxu0 0.0
  %892 = vmatpush1.msra.mxu0 0.0
  %893 = vmatprep.subr.mxu0 0.0
  %894 = vmatpush1.msra.mxu0 0.0
  %895 = vmatprep.subr.mxu0 0.0
  %896 = vmatpush1.msra.mxu0 0.0
  %897 = vmatprep.subr.mxu0 0.0
  %898 = vmatpush1.msra.mxu0 0.0
  %899 = vmatprep.subr.mxu0 0.0
  %900 = vmatpush1.msra.mxu0 0.0
  %901 = vmatprep.subr.mxu0 0.0
  %902 = vmatpush1.msra.mxu0 0.0
  %903 = vmatprep.subr.mxu0 0.0
  %904 = vmatpush1.msra.mxu0 0.0
  %905 = vmatprep.subr.mxu0 0.0
  %906 = vmatpush1.msra.mxu0 0.0
  %907 = vmatprep.subr.mxu0 0.0
  %908 = vmatpush1.msra.mxu0 0.0
  %909 = vmatprep.subr.mxu0 0.0
  %910 = vmatpush1.msra.mxu0 0.0
  %911 = vmatprep.subr.mxu0 0.0
  %912 = vmatpush1.msra.mxu0 0.0
  %913 = vmatprep.subr.mxu0 0.0
  %914 = vmatpush1.msra.mxu0 0.0
  %915 = vmatprep.subr.mxu0 0.0
  %916 = vmatpush1.msra.mxu0 0.0
  %917 = vmatprep.mubr.f32.mxu0 0.0
  %918 = vmatmul.mubr.f32.gmra.mrb[0].mxu0 %v89
  %v919 = vpop.f32.mrb[0].mxu0
  %v920 = vadd.f32 %v835, %v919
  %v921 = vpop.f32.mrb[0].mxu0
  %922 = vmatprep.mubr.f32.mxu0 0.0
  %923 = vmatmul.mubr.f32.gmra.mrb[0].mxu0 %v92
  %v924 = vpop.f32.mrb[0].mxu0
  %v925 = vadd.f32 %v840, %v924
  %v926 = vpop.f32.mrb[0].mxu0
  %927 = vmatprep.mubr.f32.mxu0 0.0
  %928 = vmatmul.mubr.f32.gmra.mrb[0].mxu0 %v95
  %v929 = vpop.f32.mrb[0].mxu0
  %v930 = vadd.f32 %v845, %v929
  %v931 = vpop.f32.mrb[0].mxu0
  %932 = vmatprep.mubr.f32.mxu0 0.0
  %933 = vmatmul.mubr.f32.gmra.mrb[0].mxu0 %v98
  %v934 = vpop.f32.mrb[0].mxu0
  %v935 = vadd.f32 %v850, %v934
  %v936 = vpop.f32.mrb[0].mxu0
  %937 = vdwg.mxu0
  %v938 = vmax.f32 %v700, %v920
  %v939 = vmax.f32 %v705, %v925
  %v940 = vmax.f32 %v710, %v930
  %v941 = vmax.f32 %v715, %v935
  %v942 = vmax.f32 %v494, %v938
  %v943 = vmax.f32 %v495, %v939
  %v944 = vmax.f32 %v496, %v940
  %v945 = vmax.f32 %v497, %v941
  %v946 = vld [vmem:[%s5] sm:$0xff]
  %v947 = vld [vmem:[%s5 + $0x8] sm:$0xff]
  %v948 = vld [vmem:[%s5 + $0x10] sm:$0xff]
  %v949 = vld [vmem:[%s5 + $0x18] sm:$0x3f]
  %951 = vset.pattern.permute.xlu0 0
  %952 = vperm.xlu0 %951, %v946
  %v953 = vpop.permute.xlu0 %952
  %956 = vset.pattern.permute.xlu0 0
  %957 = vperm.xlu0 %956, %v947
  %v958 = vpop.permute.xlu0 %957
  %961 = vset.pattern.permute.xlu0 0
  %962 = vperm.xlu0 %961, %v948
  %v963 = vpop.permute.xlu0 %962
  %966 = vset.pattern.permute.xlu0 0
  %967 = vperm.xlu0 %966, %v949
  %v968 = vpop.permute.xlu0 %967
  %v970 = vadd.f32 %v942, %v953
  %v971 = vadd.f32 %v943, %v958
  %v972 = vadd.f32 %v944, %v963
  %v973 = vadd.f32 %v945, %v968
  %vm974 = vcmp.gt.f32.partialorder %v970, 0.0
  %vm975 = vcmp.gt.f32.partialorder %v971, 0.0
  %vm976 = vcmp.gt.f32.partialorder %v972, 0.0
  %vm977 = vcmp.gt.f32.partialorder %v973, 0.0
  %v978 = vld [vmem:[#allocation2] sm:$0x1]
  %v980 = vlaneseq
  %v981 = vshrl.u32 %v980, 7
  %v982 = vsub.s32 0, %v981
  %v983 = vrot.slane %v978, %v982
  %984 = vset.pattern.permute.xlu0 0
  %985 = vperm.xlu0 %984, %v983
  %v986 = vpop.permute.xlu0 %985
  %v988 = vmul.f32 %v986, %v970
  %v989 = vmul.f32 %v986, %v971
  %v990 = vmul.f32 %v986, %v972
  %v991 = vmul.f32 %v986, %v973
  %v992 = vsel %vm974, %v970, %v988
  %v993 = vsel %vm975, %v971, %v989
  %v994 = vsel %vm976, %v972, %v990
  %v995 = vsel %vm977, %v973, %v991
  %vm996 = vcmask 261120
  %997 = vst.msk [vmem:[%s7] sm:$0xff] %vm996, %v992
  %998 = vst.msk [vmem:[%s7 + $0x8] sm:$0xff] %vm996, %v993
  %999 = vst.msk [vmem:[%s7 + $0x10] sm:$0xff] %vm996, %v994
  %vm1000 = vcmask 259072
  %1001 = vst.msk [vmem:[%s7 + $0x18] sm:$0x3f] %vm1000, %v995
  // Predicated region
  $region30: #{stn_one_forward.6} parent=0 // pred_check
    _
  $region31: #{stn_one_forward.6} parent=0 // pred_check_branch
    %1003 = sbr.rel (0) target = $region33
  $region32: #{stn_one_forward.6} parent=0 // pred_region
    _
  $region33: #{stn_one_forward.6} parent=0 // pred_fallthru
    _
  // Predicated region
  $region34: #{stn_one_forward.6} parent=0 // pred_check
    _
  $region35: #{stn_one_forward.6} parent=0 // pred_check_branch
    %1005 = sbr.rel (0) target = $region37
  $region36: #{stn_one_forward.6} parent=0 // pred_region
    _
  $region37: #{stn_one_forward.6} parent=0 // pred_fallthru
    _

// kernel: neg.1
$region0: #{neg.1}
  #allocation0 [shape = 's32[1]{0}', space=sflag, size = 0x4, scoped, tag = 'scoped memory for neg.1']
  %s0 = inlined_call_operand.vmem [shape: f32[2,1], index: 0, kind: input, shape index: {}]
  %s1 = inlined_call_operand.vmem [shape: f32[2,1], index: 1, kind: output, shape index: {}]
  %v2 = vld [vmem:[%s0] sm:$0x3]
  %3 = xla_tuple %v2
  %4 = xla_tuple %3
  %v5 = vxor.u32 %v2, 2147483648
  %6 = xla_tuple %v5
  %7 = vst [vmem:[%s1] sm:$0x3] %v5

// kernel: stn_one_forward.7
$region0: #{stn_one_forward.7}
  #allocation0 [shape = 'u32[]', space=smem, size = 0x4, offset = 0x4, fixed_abs, tag = 'smem constant byte address 0x4 - core index']
  #allocation1 [shape = 'u32[144,128]{1,0:T(1,128)}', space=vmem, size = 0x12000, scoped, tag = 'internal scratch']
  #allocation2 [shape = 'f32[1,1]{1,0:T(1,128)S(1)}', space=vmem, size = 0x200, scoped, tag = 'scoped memory for stn_one_forward.7']
  %s0 = inlined_call_operand.vmem [shape: f32[270,8], index: 0, kind: input, shape index: {}]
  %s1 = inlined_call_operand.vmem [shape: f32[60,270], index: 1, kind: input, shape index: {}]
  %s2 = inlined_call_operand.vmem [shape: f32[60,1], index: 2, kind: input, shape index: {}]
  %s3 = inlined_call_operand.<no memory space> [shape: f32[1,1], index: 3, kind: input, shape index: {}]
  %s4 = inlined_call_operand.vmem [shape: f32[60,8], index: 4, kind: output, shape index: {}]
  %s5 = sld [smem:[#allocation0]]
  $region26: #{stn_one_forward.7} parent=0
    _
  %s7 = ssub.s32 1, %s5
  %s8 = scalar_select 0, %s7, %s5
  %v9 = vstv %s3
  %10 = vst [vmem:[#allocation2] sm:$0x1] %v9
  // Predicated region
  $region2: #{stn_one_forward.7} parent=0 // pred_check
    _
  $region3: #{stn_one_forward.7} parent=0 // pred_check_branch
    %12 = sbr.rel (0) target = $region5
  $region4: #{stn_one_forward.7} parent=0 // pred_region
    _
  $region5: #{stn_one_forward.7} parent=0 // pred_fallthru
    _
  // Predicated region
  $region6: #{stn_one_forward.7} parent=0 // pred_check
    _
  $region7: #{stn_one_forward.7} parent=0 // pred_check_branch
    %14 = sbr.rel (0) target = $region9
  $region8: #{stn_one_forward.7} parent=0 // pred_region
    _
  $region9: #{stn_one_forward.7} parent=0 // pred_fallthru
    _
  // Predicated region
  $region10: #{stn_one_forward.7} parent=0 // pred_check
    _
  $region11: #{stn_one_forward.7} parent=0 // pred_check_branch
    %16 = sbr.rel (0) target = $region13
  $region12: #{stn_one_forward.7} parent=0 // pred_region
    _
  $region13: #{stn_one_forward.7} parent=0 // pred_fallthru
    _
  // Predicated region
  $region14: #{stn_one_forward.7} parent=0 // pred_check
    _
  $region15: #{stn_one_forward.7} parent=0 // pred_check_branch
    %18 = sbr.rel (0) target = $region17
  $region16: #{stn_one_forward.7} parent=0 // pred_region
    _
  $region17: #{stn_one_forward.7} parent=0 // pred_fallthru
    _
  %v19 = vld [vmem:[%s1] sm:$0xff]
  %v20 = vld [vmem:[%s1 + $0x8] sm:$0xff]
  %v21 = vld [vmem:[%s1 + $0x10] sm:$0xff]
  %v22 = vld [vmem:[%s1 + $0x18] sm:$0xff]
  %v23 = vld [vmem:[%s1 + $0x20] sm:$0xff]
  %v24 = vld [vmem:[%s1 + $0x28] sm:$0xff]
  %v25 = vld [vmem:[%s1 + $0x30] sm:$0xff]
  %v26 = vld [vmem:[%s1 + $0x38] sm:$0xff]
  %v27 = vld [vmem:[%s1 + $0x40] sm:$0xff]
  %v28 = vld [vmem:[%s1 + $0x48] sm:$0xff]
  %v29 = vld [vmem:[%s1 + $0x50] sm:$0xff]
  %v30 = vld [vmem:[%s1 + $0x58] sm:$0xff]
  %v31 = vld [vmem:[%s1 + $0x60] sm:$0xff]
  %v32 = vld [vmem:[%s1 + $0x68] sm:$0xff]
  %v33 = vld [vmem:[%s1 + $0x70] sm:$0xff]
  %v34 = vld [vmem:[%s1 + $0x78] sm:$0xff]
  %v35 = vld [vmem:[%s1 + $0x80] sm:$0xff]
  %v36 = vld [vmem:[%s1 + $0x88] sm:$0xff]
  %v37 = vld [vmem:[%s1 + $0x90] sm:$0xff]
  %v38 = vld [vmem:[%s1 + $0x98] sm:$0xff]
  %v39 = vld [vmem:[%s1 + $0xa0] sm:$0xff]
  %v40 = vld [vmem:[%s1 + $0xa8] sm:$0xf]
  %v41 = vld [vmem:[%s1 + $0xb0] sm:$0xf]
  %v42 = vld [vmem:[%s1 + $0xb8] sm:$0xf]
  %v43 = vld [vmem:[%s0] sm:$0xff]
  %v44 = vld [vmem:[%s0 + $0x8] sm:$0xff]
  %v45 = vld [vmem:[%s0 + $0x10] sm:$0xff]
  %v46 = vld [vmem:[%s0 + $0x18] sm:$0xff]
  %v47 = vld [vmem:[%s0 + $0x20] sm:$0xff]
  %v48 = vld [vmem:[%s0 + $0x28] sm:$0xff]
  %v49 = vld [vmem:[%s0 + $0x30] sm:$0xff]
  %v50 = vld [vmem:[%s0 + $0x38] sm:$0xff]
  %v51 = vld [vmem:[%s0 + $0x40] sm:$0xff]
  %v52 = vld [vmem:[%s0 + $0x48] sm:$0xff]
  %v53 = vld [vmem:[%s0 + $0x50] sm:$0xff]
  %v54 = vld [vmem:[%s0 + $0x58] sm:$0xff]
  %v55 = vld [vmem:[%s0 + $0x60] sm:$0xff]
  %v56 = vld [vmem:[%s0 + $0x68] sm:$0xff]
  %v57 = vld [vmem:[%s0 + $0x70] sm:$0xff]
  %v58 = vld [vmem:[%s0 + $0x78] sm:$0xff]
  %v59 = vld [vmem:[%s0 + $0x80] sm:$0xff]
  %v60 = vld [vmem:[%s0 + $0x88] sm:$0xff]
  %v61 = vld [vmem:[%s0 + $0x90] sm:$0xff]
  %v62 = vld [vmem:[%s0 + $0x98] sm:$0xff]
  %v63 = vld [vmem:[%s0 + $0xa0] sm:$0xff]
  %v64 = vld [vmem:[%s0 + $0xa8] sm:$0xff]
  %v65 = vld [vmem:[%s0 + $0xb0] sm:$0xff]
  %v66 = vld [vmem:[%s0 + $0xb8] sm:$0xff]
  %v67 = vld [vmem:[%s0 + $0xc0] sm:$0xff]
  %v68 = vld [vmem:[%s0 + $0xc8] sm:$0xff]
  %v69 = vld [vmem:[%s0 + $0xd0] sm:$0xff]
  %v70 = vld [vmem:[%s0 + $0xd8] sm:$0xff]
  %v71 = vld [vmem:[%s0 + $0xe0] sm:$0xff]
  %v72 = vld [vmem:[%s0 + $0xe8] sm:$0xff]
  %v73 = vld [vmem:[%s0 + $0xf0] sm:$0xff]
  %v74 = vld [vmem:[%s0 + $0xf8] sm:$0xff]
  %v75 = vld [vmem:[%s0 + $0x100] sm:$0xff]
  %v76 = vld [vmem:[%s0 + $0x108] sm:$0x3f]
  %v77 = vld [vmem:[%s2] sm:$0xff]
  %v78 = vld [vmem:[%s2 + $0x8] sm:$0xff]
  %v79 = vld [vmem:[%s2 + $0x10] sm:$0xff]
  %v80 = vld [vmem:[%s2 + $0x18] sm:$0xff]
  %v81 = vld [vmem:[%s2 + $0x20] sm:$0xff]
  %v82 = vld [vmem:[%s2 + $0x28] sm:$0xff]
  %v83 = vld [vmem:[%s2 + $0x30] sm:$0xff]
  %v84 = vld [vmem:[%s2 + $0x38] sm:$0xf]
  %86 = vset.pattern.permute.xlu0 0
  %87 = vperm.xlu0 %86, %v77
  %v88 = vpop.permute.xlu0 %87
  %91 = vset.pattern.permute.xlu0 0
  %92 = vperm.xlu0 %91, %v78
  %v93 = vpop.permute.xlu0 %92
  %96 = vset.pattern.permute.xlu0 0
  %97 = vperm.xlu0 %96, %v79
  %v98 = vpop.permute.xlu0 %97
  %101 = vset.pattern.permute.xlu0 0
  %102 = vperm.xlu0 %101, %v80
  %v103 = vpop.permute.xlu0 %102
  %106 = vset.pattern.permute.xlu0 0
  %107 = vperm.xlu0 %106, %v81
  %v108 = vpop.permute.xlu0 %107
  %111 = vset.pattern.permute.xlu0 0
  %112 = vperm.xlu0 %111, %v82
  %v113 = vpop.permute.xlu0 %112
  %116 = vset.pattern.permute.xlu0 0
  %117 = vperm.xlu0 %116, %v83
  %v118 = vpop.permute.xlu0 %117
  %121 = vset.pattern.permute.xlu0 0
  %122 = vperm.xlu0 %121, %v84
  %v123 = vpop.permute.xlu0 %122
  %vm125 = vcmask 113664
  %v127 = vsel %vm125, %v21, 0
  %v130 = vsel %vm125, %v24, 0
  %v133 = vsel %vm125, %v27, 0
  %v136 = vsel %vm125, %v30, 0
  %v139 = vsel %vm125, %v33, 0
  %v142 = vsel %vm125, %v36, 0
  %v145 = vsel %vm125, %v39, 0
  %v148 = vsel %vm125, %v42, 0
  %vm150 = vcmask 1045504
  %v152 = vsel %vm150, %v76, 0
  %154 = vmatprep.subr.mxu0 0.0
  %155 = vmatpush1.msra.mxu0 %v43
  %156 = vmatprep.subr.mxu0 0.0
  %157 = vmatpush1.msra.mxu0 %v44
  %158 = vmatprep.subr.mxu0 0.0
  %159 = vmatpush1.msra.mxu0 %v45
  %160 = vmatprep.subr.mxu0 0.0
  %161 = vmatpush1.msra.mxu0 %v46
  %162 = vmatprep.subr.mxu0 0.0
  %163 = vmatpush1.msra.mxu0 %v47
  %164 = vmatprep.subr.mxu0 0.0
  %165 = vmatpush1.msra.mxu0 %v48
  %166 = vmatprep.subr.mxu0 0.0
  %167 = vmatpush1.msra.mxu0 %v49
  %168 = vmatprep.subr.mxu0 0.0
  %169 = vmatpush1.msra.mxu0 %v50
  %170 = vmatprep.subr.mxu0 0.0
  %171 = vmatpush1.msra.mxu0 %v51
  %172 = vmatprep.subr.mxu0 0.0
  %173 = vmatpush1.msra.mxu0 %v52
  %174 = vmatprep.subr.mxu0 0.0
  %175 = vmatpush1.msra.mxu0 %v53
  %176 = vmatprep.subr.mxu0 0.0
  %177 = vmatpush1.msra.mxu0 %v54
  %178 = vmatprep.subr.mxu0 0.0
  %179 = vmatpush1.msra.mxu0 %v55
  %180 = vmatprep.subr.mxu0 0.0
  %181 = vmatpush1.msra.mxu0 %v56
  %182 = vmatprep.subr.mxu0 0.0
  %183 = vmatpush1.msra.mxu0 %v57
  %184 = vmatprep.subr.mxu0 0.0
  %185 = vmatpush1.msra.mxu0 %v58
  %186 = vmatprep.subr.mxu0 0.0
  %187 = vmatpush1.msra.mxu0 %v59
  %188 = vmatprep.subr.mxu0 0.0
  %189 = vmatpush1.msra.mxu0 %v60
  %190 = vmatprep.subr.mxu0 0.0
  %191 = vmatpush1.msra.mxu0 %v61
  %192 = vmatprep.subr.mxu0 0.0
  %193 = vmatpush1.msra.mxu0 %v62
  %194 = vmatprep.subr.mxu0 0.0
  %195 = vmatpush1.msra.mxu0 %v63
  %196 = vmatprep.subr.mxu0 0.0
  %197 = vmatpush1.msra.mxu0 %v64
  %198 = vmatprep.subr.mxu0 0.0
  %199 = vmatpush1.msra.mxu0 %v65
  %200 = vmatprep.subr.mxu0 0.0
  %201 = vmatpush1.msra.mxu0 %v66
  %202 = vmatprep.subr.mxu0 0.0
  %203 = vmatpush1.msra.mxu0 %v67
  %204 = vmatprep.subr.mxu0 0.0
  %205 = vmatpush1.msra.mxu0 %v68
  %206 = vmatprep.subr.mxu0 0.0
  %207 = vmatpush1.msra.mxu0 %v69
  %208 = vmatprep.subr.mxu0 0.0
  %209 = vmatpush1.msra.mxu0 %v70
  %210 = vmatprep.subr.mxu0 0.0
  %211 = vmatpush1.msra.mxu0 %v71
  %212 = vmatprep.subr.mxu0 0.0
  %213 = vmatpush1.msra.mxu0 %v72
  %214 = vmatprep.subr.mxu0 0.0
  %215 = vmatpush1.msra.mxu0 %v73
  %216 = vmatprep.subr.mxu0 0.0
  %217 = vmatpush1.msra.mxu0 %v74
  %218 = vmatprep.mubr.f32.mxu0 %v20
  %219 = vmatmul.mubr.f32.gmra.mrb[0].mxu0 %v19
  %v220 = vpop.f32.mrb[0].mxu0
  %v221 = vadd.f32 %v88, %v220
  %v222 = vpop.f32.mrb[0].mxu0
  %223 = vmatprep.mubr.f32.mxu0 %v23
  %224 = vmatmul.mubr.f32.gmra.mrb[0].mxu0 %v22
  %v225 = vpop.f32.mrb[0].mxu0
  %v226 = vadd.f32 %v93, %v225
  %v227 = vpop.f32.mrb[0].mxu0
  %228 = vmatprep.mubr.f32.mxu0 %v26
  %229 = vmatmul.mubr.f32.gmra.mrb[0].mxu0 %v25
  %v230 = vpop.f32.mrb[0].mxu0
  %v231 = vadd.f32 %v98, %v230
  %v232 = vpop.f32.mrb[0].mxu0
  %233 = vmatprep.mubr.f32.mxu0 %v29
  %234 = vmatmul.mubr.f32.gmra.mrb[0].mxu0 %v28
  %v235 = vpop.f32.mrb[0].mxu0
  %v236 = vadd.f32 %v103, %v235
  %v237 = vpop.f32.mrb[0].mxu0
  %238 = vmatprep.mubr.f32.mxu0 %v32
  %239 = vmatmul.mubr.f32.gmra.mrb[0].mxu0 %v31
  %v240 = vpop.f32.mrb[0].mxu0
  %v241 = vadd.f32 %v108, %v240
  %v242 = vpop.f32.mrb[0].mxu0
  %243 = vmatprep.mubr.f32.mxu0 %v35
  %244 = vmatmul.mubr.f32.gmra.mrb[0].mxu0 %v34
  %v245 = vpop.f32.mrb[0].mxu0
  %v246 = vadd.f32 %v113, %v245
  %v247 = vpop.f32.mrb[0].mxu0
  %248 = vmatprep.mubr.f32.mxu0 %v38
  %249 = vmatmul.mubr.f32.gmra.mrb[0].mxu0 %v37
  %v250 = vpop.f32.mrb[0].mxu0
  %v251 = vadd.f32 %v118, %v250
  %v252 = vpop.f32.mrb[0].mxu0
  %253 = vmatprep.mubr.f32.mxu0 %v41
  %254 = vmatmul.mubr.f32.gmra.mrb[0].mxu0 %v40
  %v255 = vpop.f32.mrb[0].mxu0
  %v256 = vadd.f32 %v123, %v255
  %v257 = vpop.f32.mrb[0].mxu0
  %258 = vdwg.mxu0
  %259 = vmatprep.subr.mxu0 0.0
  %260 = vmatpush1.msra.mxu0 %v75
  %261 = vmatprep.subr.mxu0 0.0
  %262 = vmatpush1.msra.mxu0 %v152
  %263 = vmatprep.subr.mxu0 0.0
  %264 = vmatpush1.msra.mxu0 0.0
  %265 = vmatprep.subr.mxu0 0.0
  %266 = vmatpush1.msra.mxu0 0.0
  %267 = vmatprep.subr.mxu0 0.0
  %268 = vmatpush1.msra.mxu0 0.0
  %269 = vmatprep.subr.mxu0 0.0
  %270 = vmatpush1.msra.mxu0 0.0
  %271 = vmatprep.subr.mxu0 0.0
  %272 = vmatpush1.msra.mxu0 0.0
  %273 = vmatprep.subr.mxu0 0.0
  %274 = vmatpush1.msra.mxu0 0.0
  %275 = vmatprep.subr.mxu0 0.0
  %276 = vmatpush1.msra.mxu0 0.0
  %277 = vmatprep.subr.mxu0 0.0
  %278 = vmatpush1.msra.mxu0 0.0
  %279 = vmatprep.subr.mxu0 0.0
  %280 = vmatpush1.msra.mxu0 0.0
  %281 = vmatprep.subr.mxu0 0.0
  %282 = vmatpush1.msra.mxu0 0.0
  %283 = vmatprep.subr.mxu0 0.0
  %284 = vmatpush1.msra.mxu0 0.0
  %285 = vmatprep.subr.mxu0 0.0
  %286 = vmatpush1.msra.mxu0 0.0
  %287 = vmatprep.subr.mxu0 0.0
  %288 = vmatpush1.msra.mxu0 0.0
  %289 = vmatprep.subr.mxu0 0.0
  %290 = vmatpush1.msra.mxu0 0.0
  %291 = vmatprep.subr.mxu0 0.0
  %292 = vmatpush1.msra.mxu0 0.0
  %293 = vmatprep.subr.mxu0 0.0
  %294 = vmatpush1.msra.mxu0 0.0
  %295 = vmatprep.subr.mxu0 0.0
  %296 = vmatpush1.msra.mxu0 0.0
  %297 = vmatprep.subr.mxu0 0.0
  %298 = vmatpush1.msra.mxu0 0.0
  %299 = vmatprep.subr.mxu0 0.0
  %300 = vmatpush1.msra.mxu0 0.0
  %301 = vmatprep.subr.mxu0 0.0
  %302 = vmatpush1.msra.mxu0 0.0
  %303 = vmatprep.subr.mxu0 0.0
  %304 = vmatpush1.msra.mxu0 0.0
  %305 = vmatprep.subr.mxu0 0.0
  %306 = vmatpush1.msra.mxu0 0.0
  %307 = vmatprep.subr.mxu0 0.0
  %308 = vmatpush1.msra.mxu0 0.0
  %309 = vmatprep.subr.mxu0 0.0
  %310 = vmatpush1.msra.mxu0 0.0
  %311 = vmatprep.subr.mxu0 0.0
  %312 = vmatpush1.msra.mxu0 0.0
  %313 = vmatprep.subr.mxu0 0.0
  %314 = vmatpush1.msra.mxu0 0.0
  %315 = vmatprep.subr.mxu0 0.0
  %316 = vmatpush1.msra.mxu0 0.0
  %317 = vmatprep.subr.mxu0 0.0
  %318 = vmatpush1.msra.mxu0 0.0
  %319 = vmatprep.subr.mxu0 0.0
  %320 = vmatpush1.msra.mxu0 0.0
  %321 = vmatprep.subr.mxu0 0.0
  %322 = vmatpush1.msra.mxu0 0.0
  %323 = vmatprep.mubr.f32.mxu0 0.0
  %324 = vmatmul.mubr.f32.gmra.mrb[0].mxu0 %v127
  %v325 = vpop.f32.mrb[0].mxu0
  %v326 = vadd.f32 %v221, %v325
  %v327 = vpop.f32.mrb[0].mxu0
  %328 = vmatprep.mubr.f32.mxu0 0.0
  %329 = vmatmul.mubr.f32.gmra.mrb[0].mxu0 %v130
  %v330 = vpop.f32.mrb[0].mxu0
  %v331 = vadd.f32 %v226, %v330
  %v332 = vpop.f32.mrb[0].mxu0
  %333 = vmatprep.mubr.f32.mxu0 0.0
  %334 = vmatmul.mubr.f32.gmra.mrb[0].mxu0 %v133
  %v335 = vpop.f32.mrb[0].mxu0
  %v336 = vadd.f32 %v231, %v335
  %v337 = vpop.f32.mrb[0].mxu0
  %338 = vmatprep.mubr.f32.mxu0 0.0
  %339 = vmatmul.mubr.f32.gmra.mrb[0].mxu0 %v136
  %v340 = vpop.f32.mrb[0].mxu0
  %v341 = vadd.f32 %v236, %v340
  %v342 = vpop.f32.mrb[0].mxu0
  %343 = vmatprep.mubr.f32.mxu0 0.0
  %344 = vmatmul.mubr.f32.gmra.mrb[0].mxu0 %v139
  %v345 = vpop.f32.mrb[0].mxu0
  %v346 = vadd.f32 %v241, %v345
  %v347 = vpop.f32.mrb[0].mxu0
  %348 = vmatprep.mubr.f32.mxu0 0.0
  %349 = vmatmul.mubr.f32.gmra.mrb[0].mxu0 %v142
  %v350 = vpop.f32.mrb[0].mxu0
  %v351 = vadd.f32 %v246, %v350
  %v352 = vpop.f32.mrb[0].mxu0
  %353 = vmatprep.mubr.f32.mxu0 0.0
  %354 = vmatmul.mubr.f32.gmra.mrb[0].mxu0 %v145
  %v355 = vpop.f32.mrb[0].mxu0
  %v356 = vadd.f32 %v251, %v355
  %v357 = vpop.f32.mrb[0].mxu0
  %358 = vmatprep.mubr.f32.mxu0 0.0
  %359 = vmatmul.mubr.f32.gmra.mrb[0].mxu0 %v148
  %v360 = vpop.f32.mrb[0].mxu0
  %v361 = vadd.f32 %v256, %v360
  %v362 = vpop.f32.mrb[0].mxu0
  %363 = vdwg.mxu0
  %vm364 = vcmp.gt.f32.partialorder %v326, 0.0
  %vm365 = vcmp.gt.f32.partialorder %v331, 0.0
  %vm366 = vcmp.gt.f32.partialorder %v336, 0.0
  %vm367 = vcmp.gt.f32.partialorder %v341, 0.0
  %vm368 = vcmp.gt.f32.partialorder %v346, 0.0
  %vm369 = vcmp.gt.f32.partialorder %v351, 0.0
  %vm370 = vcmp.gt.f32.partialorder %v356, 0.0
  %vm371 = vcmp.gt.f32.partialorder %v361, 0.0
  %v372 = vld [vmem:[#allocation2] sm:$0x1]
  %v374 = vlaneseq
  %v375 = vshrl.u32 %v374, 7
  %v376 = vsub.s32 0, %v375
  %v377 = vrot.slane %v372, %v376
  %378 = vset.pattern.permute.xlu0 0
  %379 = vperm.xlu0 %378, %v377
  %v380 = vpop.permute.xlu0 %379
  %v382 = vmul.f32 %v380, %v326
  %v383 = vmul.f32 %v380, %v331
  %v384 = vmul.f32 %v380, %v336
  %v385 = vmul.f32 %v380, %v341
  %v386 = vmul.f32 %v380, %v346
  %v387 = vmul.f32 %v380, %v351
  %v388 = vmul.f32 %v380, %v356
  %v389 = vmul.f32 %v380, %v361
  %v390 = vsel %vm364, %v326, %v382
  %v391 = vsel %vm365, %v331, %v383
  %v392 = vsel %vm366, %v336, %v384
  %v393 = vsel %vm367, %v341, %v385
  %v394 = vsel %vm368, %v346, %v386
  %v395 = vsel %vm369, %v351, %v387
  %v396 = vsel %vm370, %v356, %v388
  %v397 = vsel %vm371, %v361, %v389
  %vm398 = vcmask 64512
  %399 = vst.msk [vmem:[%s4] sm:$0xff] %vm398, %v390
  %400 = vst.msk [vmem:[%s4 + $0x8] sm:$0xff] %vm398, %v391
  %401 = vst.msk [vmem:[%s4 + $0x10] sm:$0xff] %vm398, %v392
  %402 = vst.msk [vmem:[%s4 + $0x18] sm:$0xff] %vm398, %v393
  %403 = vst.msk [vmem:[%s4 + $0x20] sm:$0xff] %vm398, %v394
  %404 = vst.msk [vmem:[%s4 + $0x28] sm:$0xff] %vm398, %v395
  %405 = vst.msk [vmem:[%s4 + $0x30] sm:$0xff] %vm398, %v396
  %vm406 = vcmask 60416
  %407 = vst.msk [vmem:[%s4 + $0x38] sm:$0xf] %vm406, %v397
  // Predicated region
  $region18: #{stn_one_forward.7} parent=0 // pred_check
    _
  $region19: #{stn_one_forward.7} parent=0 // pred_check_branch
    %409 = sbr.rel (0) target = $region21
  $region20: #{stn_one_forward.7} parent=0 // pred_region
    _
  $region21: #{stn_one_forward.7} parent=0 // pred_fallthru
    _
  // Predicated region
  $region22: #{stn_one_forward.7} parent=0 // pred_check
    _
  $region23: #{stn_one_forward.7} parent=0 // pred_check_branch
    %411 = sbr.rel (0) target = $region25
  $region24: #{stn_one_forward.7} parent=0 // pred_region
    _
  $region25: #{stn_one_forward.7} parent=0 // pred_fallthru
    _

// kernel: stn_one_forward.8
$region0: #{stn_one_forward.8}
  #allocation0 [shape = 'u32[]', space=smem, size = 0x4, offset = 0x4, fixed_abs, tag = 'smem constant byte address 0x4 - core index']
  #allocation1 [shape = 'u32[144,128]{1,0:T(1,128)}', space=vmem, size = 0x12000, scoped, tag = 'internal scratch']
  #allocation2 [shape = 'f32[1,1]{1,0:T(1,128)S(1)}', space=vmem, size = 0x200, scoped, tag = 'scoped memory for stn_one_forward.8']
  #allocation3 [shape = 'f32[1,1]{1,0:T(1,128)S(1)}', space=vmem, size = 0x200, scoped, tag = 'scoped memory for stn_one_forward.8']
  %s0 = inlined_call_operand.vmem [shape: f32[2,240], index: 0, kind: input, shape index: {}]
  %s1 = inlined_call_operand.vmem [shape: f32[240,12], index: 1, kind: input, shape index: {}]
  %s2 = inlined_call_operand.vmem [shape: f32[1,12], index: 2, kind: input, shape index: {}]
  %s3 = inlined_call_operand.vmem [shape: f32[12,1], index: 3, kind: input, shape index: {}]
  %s4 = inlined_call_operand.<no memory space> [shape: f32[1,1], index: 4, kind: input, shape index: {}]
  %s5 = inlined_call_operand.<no memory space> [shape: f32[1,1], index: 5, kind: input, shape index: {}]
  %s6 = inlined_call_operand.vmem [shape: f32[2,1], index: 6, kind: output, shape index: {}]
  %s7 = sld [smem:[#allocation0]]
  $region34: #{stn_one_forward.8} parent=0
    _
  %s9 = ssub.s32 1, %s7
  %s10 = scalar_select 0, %s9, %s7
  %v11 = vstv %s4
  %12 = vst [vmem:[#allocation2] sm:$0x1] %v11
  %v13 = vstv %s5
  %14 = vst [vmem:[#allocation3] sm:$0x1] %v13
  // Predicated region
  $region2: #{stn_one_forward.8} parent=0 // pred_check
    _
  $region3: #{stn_one_forward.8} parent=0 // pred_check_branch
    %16 = sbr.rel (0) target = $region5
  $region4: #{stn_one_forward.8} parent=0 // pred_region
    _
  $region5: #{stn_one_forward.8} parent=0 // pred_fallthru
    _
  // Predicated region
  $region6: #{stn_one_forward.8} parent=0 // pred_check
    _
  $region7: #{stn_one_forward.8} parent=0 // pred_check_branch
    %18 = sbr.rel (0) target = $region9
  $region8: #{stn_one_forward.8} parent=0 // pred_region
    _
  $region9: #{stn_one_forward.8} parent=0 // pred_fallthru
    _
  // Predicated region
  $region10: #{stn_one_forward.8} parent=0 // pred_check
    _
  $region11: #{stn_one_forward.8} parent=0 // pred_check_branch
    %20 = sbr.rel (0) target = $region13
  $region12: #{stn_one_forward.8} parent=0 // pred_region
    _
  $region13: #{stn_one_forward.8} parent=0 // pred_fallthru
    _
  // Predicated region
  $region14: #{stn_one_forward.8} parent=0 // pred_check
    _
  $region15: #{stn_one_forward.8} parent=0 // pred_check_branch
    %22 = sbr.rel (0) target = $region17
  $region16: #{stn_one_forward.8} parent=0 // pred_region
    _
  $region17: #{stn_one_forward.8} parent=0 // pred_fallthru
    _
  // Predicated region
  $region18: #{stn_one_forward.8} parent=0 // pred_check
    _
  $region19: #{stn_one_forward.8} parent=0 // pred_check_branch
    %24 = sbr.rel (0) target = $region21
  $region20: #{stn_one_forward.8} parent=0 // pred_region
    _
  $region21: #{stn_one_forward.8} parent=0 // pred_fallthru
    _
  // Predicated region
  $region22: #{stn_one_forward.8} parent=0 // pred_check
    _
  $region23: #{stn_one_forward.8} parent=0 // pred_check_branch
    %26 = sbr.rel (0) target = $region25
  $region24: #{stn_one_forward.8} parent=0 // pred_region
    _
  $region25: #{stn_one_forward.8} parent=0 // pred_fallthru
    _
  %v27 = vld [vmem:[%s0] sm:$0xf]
  %v28 = vld [vmem:[%s1] sm:$0xff]
  %v29 = vld [vmem:[%s1 + $0x8] sm:$0xff]
  %v30 = vld [vmem:[%s1 + $0x10] sm:$0xff]
  %v31 = vld [vmem:[%s1 + $0x18] sm:$0xff]
  %v32 = vld [vmem:[%s1 + $0x20] sm:$0xff]
  %v33 = vld [vmem:[%s1 + $0x28] sm:$0xff]
  %v34 = vld [vmem:[%s1 + $0x30] sm:$0xff]
  %v35 = vld [vmem:[%s1 + $0x38] sm:$0xff]
  %v36 = vld [vmem:[%s1 + $0x40] sm:$0xff]
  %v37 = vld [vmem:[%s1 + $0x48] sm:$0xff]
  %v38 = vld [vmem:[%s1 + $0x50] sm:$0xff]
  %v39 = vld [vmem:[%s1 + $0x58] sm:$0xff]
  %v40 = vld [vmem:[%s1 + $0x60] sm:$0xff]
  %v41 = vld [vmem:[%s1 + $0x68] sm:$0xff]
  %v42 = vld [vmem:[%s1 + $0x70] sm:$0xff]
  %v43 = vld [vmem:[%s1 + $0x78] sm:$0xff]
  %v44 = vld [vmem:[%s1 + $0x80] sm:$0xff]
  %v45 = vld [vmem:[%s1 + $0x88] sm:$0xff]
  %v46 = vld [vmem:[%s1 + $0x90] sm:$0xff]
  %v47 = vld [vmem:[%s1 + $0x98] sm:$0xff]
  %v48 = vld [vmem:[%s1 + $0xa0] sm:$0xff]
  %v49 = vld [vmem:[%s1 + $0xa8] sm:$0xff]
  %v50 = vld [vmem:[%s1 + $0xb0] sm:$0xff]
  %v51 = vld [vmem:[%s1 + $0xb8] sm:$0xff]
  %v52 = vld [vmem:[%s1 + $0xc0] sm:$0xff]
  %v53 = vld [vmem:[%s1 + $0xc8] sm:$0xff]
  %v54 = vld [vmem:[%s1 + $0xd0] sm:$0xff]
  %v55 = vld [vmem:[%s1 + $0xd8] sm:$0xff]
  %v56 = vld [vmem:[%s1 + $0xe0] sm:$0xff]
  %v57 = vld [vmem:[%s1 + $0xe8] sm:$0xff]
  %v58 = vld [vmem:[%s2] sm:$0x1]
  %v60 = vlaneseq
  %v61 = vshrl.u32 %v60, 7
  %v62 = vsub.s32 0, %v61
  %v63 = vrot.slane %v58, %v62
  %v67 = vunpack.c.l.s4 1983009808
  %v68 = vunpack.c.0.s8 %v67
  %v69 = vlaneseq
  %v70 = vshrl.u32 %v69, 7
  %v71 = vsub.s32 %v68, %v70
  %v72 = vrot.slane %v27, %v71
  %v73 = vcombine.high %v72, %v72
  %vm75 = vcmask 916480
  %v76 = vsel %vm75, %v73, 0
  %78 = vmatprep.subr.mxu0 0.0
  %79 = vmatpush1.msra.mxu0 %v28
  %80 = vmatprep.subr.mxu0 0.0
  %81 = vmatpush1.msra.mxu0 %v29
  %82 = vmatprep.subr.mxu0 0.0
  %83 = vmatpush1.msra.mxu0 %v30
  %84 = vmatprep.subr.mxu0 0.0
  %85 = vmatpush1.msra.mxu0 %v31
  %86 = vmatprep.subr.mxu0 0.0
  %87 = vmatpush1.msra.mxu0 %v32
  %88 = vmatprep.subr.mxu0 0.0
  %89 = vmatpush1.msra.mxu0 %v33
  %90 = vmatprep.subr.mxu0 0.0
  %91 = vmatpush1.msra.mxu0 %v34
  %92 = vmatprep.subr.mxu0 0.0
  %93 = vmatpush1.msra.mxu0 %v35
  %94 = vmatprep.subr.mxu0 0.0
  %95 = vmatpush1.msra.mxu0 %v36
  %96 = vmatprep.subr.mxu0 0.0
  %97 = vmatpush1.msra.mxu0 %v37
  %98 = vmatprep.subr.mxu0 0.0
  %99 = vmatpush1.msra.mxu0 %v38
  %100 = vmatprep.subr.mxu0 0.0
  %101 = vmatpush1.msra.mxu0 %v39
  %102 = vmatprep.subr.mxu0 0.0
  %103 = vmatpush1.msra.mxu0 %v40
  %104 = vmatprep.subr.mxu0 0.0
  %105 = vmatpush1.msra.mxu0 %v41
  %106 = vmatprep.subr.mxu0 0.0
  %107 = vmatpush1.msra.mxu0 %v42
  %108 = vmatprep.subr.mxu0 0.0
  %109 = vmatpush1.msra.mxu0 %v43
  %110 = vmatprep.subr.mxu0 0.0
  %111 = vmatpush1.msra.mxu0 %v44
  %112 = vmatprep.subr.mxu0 0.0
  %113 = vmatpush1.msra.mxu0 %v45
  %114 = vmatprep.subr.mxu0 0.0
  %115 = vmatpush1.msra.mxu0 %v46
  %116 = vmatprep.subr.mxu0 0.0
  %117 = vmatpush1.msra.mxu0 %v47
  %118 = vmatprep.subr.mxu0 0.0
  %119 = vmatpush1.msra.mxu0 %v48
  %120 = vmatprep.subr.mxu0 0.0
  %121 = vmatpush1.msra.mxu0 %v49
  %122 = vmatprep.subr.mxu0 0.0
  %123 = vmatpush1.msra.mxu0 %v50
  %124 = vmatprep.subr.mxu0 0.0
  %125 = vmatpush1.msra.mxu0 %v51
  %126 = vmatprep.subr.mxu0 0.0
  %127 = vmatpush1.msra.mxu0 %v52
  %128 = vmatprep.subr.mxu0 0.0
  %129 = vmatpush1.msra.mxu0 %v53
  %130 = vmatprep.subr.mxu0 0.0
  %131 = vmatpush1.msra.mxu0 %v54
  %132 = vmatprep.subr.mxu0 0.0
  %133 = vmatpush1.msra.mxu0 %v55
  %134 = vmatprep.subr.mxu0 0.0
  %135 = vmatpush1.msra.mxu0 %v56
  %136 = vmatprep.subr.mxu0 0.0
  %137 = vmatpush1.msra.mxu0 %v57
  %138 = vmatprep.subr.mxu0 0.0
  %139 = vmatpush1.msra.mxu0 0.0
  %140 = vmatprep.subr.mxu0 0.0
  %141 = vmatpush1.msra.mxu0 0.0
  %142 = vmatprep.mubr.f32.mxu0 %v76
  %143 = vmatmul.mubr.f32.gmra.mrb[0].mxu0 %v72
  %v144 = vpop.f32.mrb[0].mxu0
  %v145 = vadd.f32 %v63, %v144
  %v146 = vpop.f32.mrb[0].mxu0
  %147 = vdwg.mxu0
  %vm148 = vcmp.gt.f32.partialorder %v145, 0.0
  %v149 = vld [vmem:[#allocation3] sm:$0x1]
  %v151 = vlaneseq
  %v152 = vshrl.u32 %v151, 7
  %v153 = vsub.s32 0, %v152
  %v154 = vrot.slane %v149, %v153
  %155 = vset.pattern.permute.xlu0 0
  %156 = vperm.xlu0 %155, %v154
  %v157 = vpop.permute.xlu0 %156
  %v159 = vmul.f32 %v157, %v145
  %v160 = vsel %vm148, %v145, %v159
  %v161 = vld [vmem:[%s3] sm:$0xff]
  %v162 = vld [vmem:[%s3 + $0x8] sm:$0xf]
  %v163 = vld [vmem:[#allocation2] sm:$0x1]
  %v165 = vlaneseq
  %v166 = vshrl.u32 %v165, 7
  %v167 = vsub.s32 0, %v166
  %v168 = vrot.slane %v163, %v167
  %vm170 = vcmask 97280
  %v172 = vsel %vm170, %v160, 0
  %vm174 = vcmask 1043456
  %v176 = vsel %vm174, %v162, 0
  %178 = vmatprep.subr.mxu0 0.0
  %179 = vmatpush1.msra.mxu0 %v161
  %180 = vmatprep.subr.mxu0 0.0
  %181 = vmatpush1.msra.mxu0 %v176
  %182 = vmatprep.subr.mxu0 0.0
  %183 = vmatpush1.msra.mxu0 0.0
  %184 = vmatprep.subr.mxu0 0.0
  %185 = vmatpush1.msra.mxu0 0.0
  %186 = vmatprep.subr.mxu0 0.0
  %187 = vmatpush1.msra.mxu0 0.0
  %188 = vmatprep.subr.mxu0 0.0
  %189 = vmatpush1.msra.mxu0 0.0
  %190 = vmatprep.subr.mxu0 0.0
  %191 = vmatpush1.msra.mxu0 0.0
  %192 = vmatprep.subr.mxu0 0.0
  %193 = vmatpush1.msra.mxu0 0.0
  %194 = vmatprep.subr.mxu0 0.0
  %195 = vmatpush1.msra.mxu0 0.0
  %196 = vmatprep.subr.mxu0 0.0
  %197 = vmatpush1.msra.mxu0 0.0
  %198 = vmatprep.subr.mxu0 0.0
  %199 = vmatpush1.msra.mxu0 0.0
  %200 = vmatprep.subr.mxu0 0.0
  %201 = vmatpush1.msra.mxu0 0.0
  %202 = vmatprep.subr.mxu0 0.0
  %203 = vmatpush1.msra.mxu0 0.0
  %204 = vmatprep.subr.mxu0 0.0
  %205 = vmatpush1.msra.mxu0 0.0
  %206 = vmatprep.subr.mxu0 0.0
  %207 = vmatpush1.msra.mxu0 0.0
  %208 = vmatprep.subr.mxu0 0.0
  %209 = vmatpush1.msra.mxu0 0.0
  %210 = vmatprep.subr.mxu0 0.0
  %211 = vmatpush1.msra.mxu0 0.0
  %212 = vmatprep.subr.mxu0 0.0
  %213 = vmatpush1.msra.mxu0 0.0
  %214 = vmatprep.subr.mxu0 0.0
  %215 = vmatpush1.msra.mxu0 0.0
  %216 = vmatprep.subr.mxu0 0.0
  %217 = vmatpush1.msra.mxu0 0.0
  %218 = vmatprep.subr.mxu0 0.0
  %219 = vmatpush1.msra.mxu0 0.0
  %220 = vmatprep.subr.mxu0 0.0
  %221 = vmatpush1.msra.mxu0 0.0
  %222 = vmatprep.subr.mxu0 0.0
  %223 = vmatpush1.msra.mxu0 0.0
  %224 = vmatprep.subr.mxu0 0.0
  %225 = vmatpush1.msra.mxu0 0.0
  %226 = vmatprep.subr.mxu0 0.0
  %227 = vmatpush1.msra.mxu0 0.0
  %228 = vmatprep.subr.mxu0 0.0
  %229 = vmatpush1.msra.mxu0 0.0
  %230 = vmatprep.subr.mxu0 0.0
  %231 = vmatpush1.msra.mxu0 0.0
  %232 = vmatprep.subr.mxu0 0.0
  %233 = vmatpush1.msra.mxu0 0.0
  %234 = vmatprep.subr.mxu0 0.0
  %235 = vmatpush1.msra.mxu0 0.0
  %236 = vmatprep.subr.mxu0 0.0
  %237 = vmatpush1.msra.mxu0 0.0
  %238 = vmatprep.subr.mxu0 0.0
  %239 = vmatpush1.msra.mxu0 0.0
  %240 = vmatprep.subr.mxu0 0.0
  %241 = vmatpush1.msra.mxu0 0.0
  %242 = vmatprep.mubr.f32.mxu0 0.0
  %243 = vmatmul.mubr.f32.gmra.mrb[0].mxu0 %v172
  %v244 = vpop.f32.mrb[0].mxu0
  %v245 = vadd.f32 %v168, %v244
  %v246 = vpop.f32.mrb[0].mxu0
  %247 = vdwg.mxu0
  %vm248 = vcmask 1024
  %249 = vst.msk [vmem:[%s6] sm:$0x3] %vm248, %v245
  // Predicated region
  $region26: #{stn_one_forward.8} parent=0 // pred_check
    _
  $region27: #{stn_one_forward.8} parent=0 // pred_check_branch
    %251 = sbr.rel (0) target = $region29
  $region28: #{stn_one_forward.8} parent=0 // pred_region
    _
  $region29: #{stn_one_forward.8} parent=0 // pred_fallthru
    _
  // Predicated region
  $region30: #{stn_one_forward.8} parent=0 // pred_check
    _
  $region31: #{stn_one_forward.8} parent=0 // pred_check_branch
    %253 = sbr.rel (0) target = $region33
  $region32: #{stn_one_forward.8} parent=0 // pred_region
    _
  $region33: #{stn_one_forward.8} parent=0 // pred_fallthru
    _

// kernel: stn_one_forward.9
$region0: #{stn_one_forward.9}
  #allocation0 [shape = 'u32[]', space=smem, size = 0x4, offset = 0x4, fixed_abs, tag = 'smem constant byte address 0x4 - core index']
  #allocation1 [shape = 'u32[144,128]{1,0:T(1,128)}', space=vmem, size = 0x12000, scoped, tag = 'internal scratch']
  %s0 = inlined_call_operand.vmem [shape: f32[2,1,65536], index: 0, kind: input, shape index: {}]
  %s1 = inlined_call_operand.vmem [shape: f32[2,1,65536], index: 1, kind: input, shape index: {}]
  %s2 = inlined_call_operand.vmem [shape: f32[2,3,65536], index: 2, kind: input, shape index: {}]
  %s3 = inlined_call_operand.vmem [shape: f32[2,3,65536], index: 3, kind: input, shape index: {}]
  %s4 = inlined_call_operand.vmem [shape: f32[2,3,65536], index: 4, kind: input, shape index: {}]
  %s5 = inlined_call_operand.vmem [shape: f32[2,3,65536], index: 5, kind: input, shape index: {}]
  %s6 = inlined_call_operand.vmem [shape: f32[2,3,65536], index: 6, kind: output, shape index: {}]
  %s7 = sld [smem:[#allocation0]]
  $region57: #{stn_one_forward.9} parent=0
    _
  %s9 = ssub.s32 1, %s7
  %s10 = scalar_select 0, %s9, %s7
  loop: start=0, step=1, limit=10
  $region2: #{stn_one_forward.9} parent=0 // loop_pre_header
    _
  $region3: #{stn_one_forward.9} parent=0 // loop_header
    %s12 = sphi 0, %s16
    %p13 = scmp.ge.s32.totalorder %s12, 10
    %s19 = sphi 0, %s31
    %s20 = sphi 0, %s27
    %s21 = sphi 0, %s19
    %s22 = sphi 0, %s20
    %s23 = sphi 0, %s21
    %s24 = sphi 0, %s22
    %s36 = sphi 0, %s38
    %s39 = sphi 0, %s36
    %s40 = sphi 0, %s39
    %s56 = sphi 0, %s40
    %s64 = sphi 0, %s66
    %s67 = sphi 0, %s64
    %s68 = sphi 0, %s67
    %s84 = sphi 0, %s68
    %s92 = sphi 0, %s94
    %s95 = sphi 0, %s92
    %s96 = sphi 0, %s95
    %s112 = sphi 0, %s96
    %s120 = sphi 0, %s122
    %s123 = sphi 0, %s120
    %s124 = sphi 0, %s123
    %s140 = sphi 0, %s124
    %s148 = sphi 0, %s150
    %s151 = sphi 0, %s148
    %s152 = sphi 0, %s151
    %s168 = sphi 0, %s152
    %s176 = sphi 0, %s178
    %s179 = sphi 0, %s176
    %s180 = sphi 0, %s179
    %s196 = sphi 0, %s180
    %s204 = sphi 0, %s206
    %s207 = sphi 0, %s204
    %s208 = sphi 0, %s207
    %s224 = sphi 0, %s208
  $region4: #{stn_one_forward.9} parent=0 // loop_header_branch
    %15 = sbr.rel (%p13) target = $region8
  $region5: #{stn_one_forward.9} parent=0 // loop_body
    %s17 = ssub.s32 %s12, 1
    %s18 = ssub.s32 %s12, 2
    %s25 = sadd.s32 1, %s20
    %p26 = scmp.ge.s32.totalorder %s25, 4
    %s27 = scalar_select %p26, 0, %s25
    %s28 = sadd.s32 1, %s19
    %s29 = scalar_select %p26, %s28, %s19
    %p30 = scmp.ge.s32.totalorder %s29, 2
    %s31 = scalar_select %p30, 0, %s29
    %s32 = ssub.s32 %s19, %s31
    %s33 = ssub.s32 %s20, %s27
    %s34 = sor.u32 %s32, %s33
    %p35 = scmp.eq.s32.totalorder %s34, 0
    %s37 = sadd.s32 %s36, 1
    %s38 = scalar_select %p35, %s36, %s37
    %p41 = pneg %p35
    %p42 = scmp.eq.s32.totalorder %s12, 7
    %p43 = por %p41, %p42
    %p44 = scmp.ne.s32.totalorder %s36, %s39
    %p45 = scmp.eq.s32.totalorder %s12, 0
    %p46 = por %p44, %p45
    %p47 = scmp.ne.s32.totalorder %s36, %s39
    %p48 = scmp.eq.s32.totalorder %s17, 7
    %p49 = por %p47, %p48
    %p50 = scmp.ne.s32.totalorder %s39, %s40
    %p51 = scmp.eq.s32.totalorder %s17, 0
    %p52 = por %p50, %p51
    %p53 = scmp.ne.s32.totalorder %s39, %s40
    %p54 = scmp.eq.s32.totalorder %s18, 7
    %p55 = por %p53, %p54
    %p57 = scmp.ne.s32.totalorder %s40, %s56
    %p58 = scmp.eq.s32.totalorder %s18, 0
    %p59 = por %p57, %p58
    %s60 = ssub.s32 %s19, %s31
    %s61 = ssub.s32 %s20, %s27
    %s62 = sor.u32 %s60, %s61
    %p63 = scmp.eq.s32.totalorder %s62, 0
    %s65 = sadd.s32 %s64, 1
    %s66 = scalar_select %p63, %s64, %s65
    %p69 = pneg %p63
    %p70 = scmp.eq.s32.totalorder %s12, 7
    %p71 = por %p69, %p70
    %p72 = scmp.ne.s32.totalorder %s64, %s67
    %p73 = scmp.eq.s32.totalorder %s12, 0
    %p74 = por %p72, %p73
    %p75 = scmp.ne.s32.totalorder %s64, %s67
    %p76 = scmp.eq.s32.totalorder %s17, 7
    %p77 = por %p75, %p76
    %p78 = scmp.ne.s32.totalorder %s67, %s68
    %p79 = scmp.eq.s32.totalorder %s17, 0
    %p80 = por %p78, %p79
    %p81 = scmp.ne.s32.totalorder %s67, %s68
    %p82 = scmp.eq.s32.totalorder %s18, 7
    %p83 = por %p81, %p82
    %p85 = scmp.ne.s32.totalorder %s68, %s84
    %p86 = scmp.eq.s32.totalorder %s18, 0
    %p87 = por %p85, %p86
    %s88 = ssub.s32 %s19, %s31
    %s89 = ssub.s32 %s20, %s27
    %s90 = sor.u32 %s88, %s89
    %p91 = scmp.eq.s32.totalorder %s90, 0
    %s93 = sadd.s32 %s92, 1
    %s94 = scalar_select %p91, %s92, %s93
    %p97 = pneg %p91
    %p98 = scmp.eq.s32.totalorder %s12, 7
    %p99 = por %p97, %p98
    %p100 = scmp.ne.s32.totalorder %s92, %s95
    %p101 = scmp.eq.s32.totalorder %s12, 0
    %p102 = por %p100, %p101
    %p103 = scmp.ne.s32.totalorder %s92, %s95
    %p104 = scmp.eq.s32.totalorder %s17, 7
    %p105 = por %p103, %p104
    %p106 = scmp.ne.s32.totalorder %s95, %s96
    %p107 = scmp.eq.s32.totalorder %s17, 0
    %p108 = por %p106, %p107
    %p109 = scmp.ne.s32.totalorder %s95, %s96
    %p110 = scmp.eq.s32.totalorder %s18, 7
    %p111 = por %p109, %p110
    %p113 = scmp.ne.s32.totalorder %s96, %s112
    %p114 = scmp.eq.s32.totalorder %s18, 0
    %p115 = por %p113, %p114
    %s116 = ssub.s32 %s19, %s31
    %s117 = ssub.s32 %s20, %s27
    %s118 = sor.u32 %s116, %s117
    %p119 = scmp.eq.s32.totalorder %s118, 0
    %s121 = sadd.s32 %s120, 1
    %s122 = scalar_select %p119, %s120, %s121
    %p125 = pneg %p119
    %p126 = scmp.eq.s32.totalorder %s12, 7
    %p127 = por %p125, %p126
    %p128 = scmp.ne.s32.totalorder %s120, %s123
    %p129 = scmp.eq.s32.totalorder %s12, 0
    %p130 = por %p128, %p129
    %p131 = scmp.ne.s32.totalorder %s120, %s123
    %p132 = scmp.eq.s32.totalorder %s17, 7
    %p133 = por %p131, %p132
    %p134 = scmp.ne.s32.totalorder %s123, %s124
    %p135 = scmp.eq.s32.totalorder %s17, 0
    %p136 = por %p134, %p135
    %p137 = scmp.ne.s32.totalorder %s123, %s124
    %p138 = scmp.eq.s32.totalorder %s18, 7
    %p139 = por %p137, %p138
    %p141 = scmp.ne.s32.totalorder %s124, %s140
    %p142 = scmp.eq.s32.totalorder %s18, 0
    %p143 = por %p141, %p142
    %s144 = ssub.s32 %s19, %s31
    %s145 = ssub.s32 %s20, %s27
    %s146 = sor.u32 %s144, %s145
    %p147 = scmp.eq.s32.totalorder %s146, 0
    %s149 = sadd.s32 %s148, 1
    %s150 = scalar_select %p147, %s148, %s149
    %p153 = pneg %p147
    %p154 = scmp.eq.s32.totalorder %s12, 7
    %p155 = por %p153, %p154
    %p156 = scmp.ne.s32.totalorder %s148, %s151
    %p157 = scmp.eq.s32.totalorder %s12, 0
    %p158 = por %p156, %p157
    %p159 = scmp.ne.s32.totalorder %s148, %s151
    %p160 = scmp.eq.s32.totalorder %s17, 7
    %p161 = por %p159, %p160
    %p162 = scmp.ne.s32.totalorder %s151, %s152
    %p163 = scmp.eq.s32.totalorder %s17, 0
    %p164 = por %p162, %p163
    %p165 = scmp.ne.s32.totalorder %s151, %s152
    %p166 = scmp.eq.s32.totalorder %s18, 7
    %p167 = por %p165, %p166
    %p169 = scmp.ne.s32.totalorder %s152, %s168
    %p170 = scmp.eq.s32.totalorder %s18, 0
    %p171 = por %p169, %p170
    %s172 = ssub.s32 %s19, %s31
    %s173 = ssub.s32 %s20, %s27
    %s174 = sor.u32 %s172, %s173
    %p175 = scmp.eq.s32.totalorder %s174, 0
    %s177 = sadd.s32 %s176, 1
    %s178 = scalar_select %p175, %s176, %s177
    %p181 = pneg %p175
    %p182 = scmp.eq.s32.totalorder %s12, 7
    %p183 = por %p181, %p182
    %p184 = scmp.ne.s32.totalorder %s176, %s179
    %p185 = scmp.eq.s32.totalorder %s12, 0
    %p186 = por %p184, %p185
    %p187 = scmp.ne.s32.totalorder %s176, %s179
    %p188 = scmp.eq.s32.totalorder %s17, 7
    %p189 = por %p187, %p188
    %p190 = scmp.ne.s32.totalorder %s179, %s180
    %p191 = scmp.eq.s32.totalorder %s17, 0
    %p192 = por %p190, %p191
    %p193 = scmp.ne.s32.totalorder %s179, %s180
    %p194 = scmp.eq.s32.totalorder %s18, 7
    %p195 = por %p193, %p194
    %p197 = scmp.ne.s32.totalorder %s180, %s196
    %p198 = scmp.eq.s32.totalorder %s18, 0
    %p199 = por %p197, %p198
    %s200 = ssub.s32 %s19, %s31
    %s201 = ssub.s32 %s20, %s27
    %s202 = sor.u32 %s200, %s201
    %p203 = scmp.eq.s32.totalorder %s202, 0
    %s205 = sadd.s32 %s204, 1
    %s206 = scalar_select %p203, %s204, %s205
    %p209 = pneg %p203
    %p210 = scmp.eq.s32.totalorder %s12, 7
    %p211 = por %p209, %p210
    %p212 = scmp.ne.s32.totalorder %s204, %s207
    %p213 = scmp.eq.s32.totalorder %s12, 0
    %p214 = por %p212, %p213
    %p215 = scmp.ne.s32.totalorder %s204, %s207
    %p216 = scmp.eq.s32.totalorder %s17, 7
    %p217 = por %p215, %p216
    %p218 = scmp.ne.s32.totalorder %s207, %s208
    %p219 = scmp.eq.s32.totalorder %s17, 0
    %p220 = por %p218, %p219
    %p221 = scmp.ne.s32.totalorder %s207, %s208
    %p222 = scmp.eq.s32.totalorder %s18, 7
    %p223 = por %p221, %p222
    %p225 = scmp.ne.s32.totalorder %s208, %s224
    %p226 = scmp.eq.s32.totalorder %s18, 0
    %p227 = por %p225, %p226
    %p228 = scmp.le.s32.totalorder 1, %s12
    %p229 = scmp.lt.s32.totalorder %s12, 9
    %p230 = pnand %p228, %p229
    %p231 = pneg %p230
    // Predicated region
    $region9: #{stn_one_forward.9} parent=5 // pred_check
      _
    $region10: #{stn_one_forward.9} parent=5 // pred_check_branch
      %233 = sbr.rel (%p230) target = $region12
    $region11: #{stn_one_forward.9} parent=5 // pred_region
      %s234 = ssub.s32 %s12, 1
    $region12: #{stn_one_forward.9} parent=5 // pred_fallthru
      _
    %p235 = scmp.lt.s32.totalorder %s12, 8
    // Predicated region
    $region13: #{stn_one_forward.9} parent=5 // pred_check
      %p236 = pneg %p235
    $region14: #{stn_one_forward.9} parent=5 // pred_check_branch
      %238 = sbr.rel (%p236) target = $region16
    $region15: #{stn_one_forward.9} parent=5 // pred_region
      // Predicated region
      $region17: #{stn_one_forward.9} parent=15 // pred_check
        %p239 = pneg %p46
      $region18: #{stn_one_forward.9} parent=15 // pred_check_branch
        %241 = sbr.rel (%p239) target = $region20
      $region19: #{stn_one_forward.9} parent=15 // pred_region
        %s242 = smul.u32 128, %s20
        %p243 = scmp.lt.s32.totalorder %s19, 1
        %s244 = scalar_select %p243, %s19, 1
        %p245 = scmp.lt.s32.totalorder %s242, 511
        %s246 = scalar_select %p245, %s242, 511
        %s247 = smul.addr %s244, 512
        %s248 = sadd.s32 %s246, %s247
        %s249 = scalar_lea.vmem %s0, %s248
        %s250 = smul.u32 128, %s20
      $region20: #{stn_one_forward.9} parent=15 // pred_fallthru
        _
      // Predicated region
      $region21: #{stn_one_forward.9} parent=15 // pred_check
        %p251 = pneg %p74
      $region22: #{stn_one_forward.9} parent=15 // pred_check_branch
        %253 = sbr.rel (%p251) target = $region24
      $region23: #{stn_one_forward.9} parent=15 // pred_region
        %s254 = smul.u32 128, %s20
        %p255 = scmp.lt.s32.totalorder %s19, 1
        %s256 = scalar_select %p255, %s19, 1
        %p257 = scmp.lt.s32.totalorder %s254, 511
        %s258 = scalar_select %p257, %s254, 511
        %s259 = smul.addr %s256, 512
        %s260 = sadd.s32 %s258, %s259
        %s261 = scalar_lea.vmem %s1, %s260
        %s262 = smul.u32 128, %s20
      $region24: #{stn_one_forward.9} parent=15 // pred_fallthru
        _
      // Predicated region
      $region25: #{stn_one_forward.9} parent=15 // pred_check
        %p263 = pneg %p102
      $region26: #{stn_one_forward.9} parent=15 // pred_check_branch
        %265 = sbr.rel (%p263) target = $region28
      $region27: #{stn_one_forward.9} parent=15 // pred_region
        %s266 = smul.u32 128, %s20
        %p267 = scmp.lt.s32.totalorder %s19, 1
        %s268 = scalar_select %p267, %s19, 1
        %p269 = scmp.lt.s32.totalorder %s266, 511
        %s270 = scalar_select %p269, %s266, 511
        %s271 = smul.addr %s268, 512
        %s272 = sadd.s32 %s270, %s271
        %s273 = smul.addr %s272, 4
        %s274 = scalar_lea.vmem %s2, %s273
        %s275 = smul.u32 128, %s20
      $region28: #{stn_one_forward.9} parent=15 // pred_fallthru
        _
      // Predicated region
      $region29: #{stn_one_forward.9} parent=15 // pred_check
        %p276 = pneg %p130
      $region30: #{stn_one_forward.9} parent=15 // pred_check_branch
        %278 = sbr.rel (%p276) target = $region32
      $region31: #{stn_one_forward.9} parent=15 // pred_region
        %s279 = smul.u32 128, %s20
        %p280 = scmp.lt.s32.totalorder %s19, 1
        %s281 = scalar_select %p280, %s19, 1
        %p282 = scmp.lt.s32.totalorder %s279, 511
        %s283 = scalar_select %p282, %s279, 511
        %s284 = smul.addr %s281, 512
        %s285 = sadd.s32 %s283, %s284
        %s286 = smul.addr %s285, 4
        %s287 = scalar_lea.vmem %s3, %s286
        %s288 = smul.u32 128, %s20
      $region32: #{stn_one_forward.9} parent=15 // pred_fallthru
        _
      // Predicated region
      $region33: #{stn_one_forward.9} parent=15 // pred_check
        %p289 = pneg %p158
      $region34: #{stn_one_forward.9} parent=15 // pred_check_branch
        %291 = sbr.rel (%p289) target = $region36
      $region35: #{stn_one_forward.9} parent=15 // pred_region
        %s292 = smul.u32 128, %s20
        %p293 = scmp.lt.s32.totalorder %s19, 1
        %s294 = scalar_select %p293, %s19, 1
        %p295 = scmp.lt.s32.totalorder %s292, 511
        %s296 = scalar_select %p295, %s292, 511
        %s297 = smul.addr %s294, 512
        %s298 = sadd.s32 %s296, %s297
        %s299 = smul.addr %s298, 4
        %s300 = scalar_lea.vmem %s4, %s299
        %s301 = smul.u32 128, %s20
      $region36: #{stn_one_forward.9} parent=15 // pred_fallthru
        _
      // Predicated region
      $region37: #{stn_one_forward.9} parent=15 // pred_check
        %p302 = pneg %p186
      $region38: #{stn_one_forward.9} parent=15 // pred_check_branch
        %304 = sbr.rel (%p302) target = $region40
      $region39: #{stn_one_forward.9} parent=15 // pred_region
        %s305 = smul.u32 128, %s20
        %p306 = scmp.lt.s32.totalorder %s19, 1
        %s307 = scalar_select %p306, %s19, 1
        %p308 = scmp.lt.s32.totalorder %s305, 511
        %s309 = scalar_select %p308, %s305, 511
        %s310 = smul.addr %s307, 512
        %s311 = sadd.s32 %s309, %s310
        %s312 = smul.addr %s311, 4
        %s313 = scalar_lea.vmem %s5, %s312
        %s314 = smul.u32 128, %s20
      $region40: #{stn_one_forward.9} parent=15 // pred_fallthru
        _
    $region16: #{stn_one_forward.9} parent=5 // pred_fallthru
      _
    %p315 = scmp.le.s32.totalorder 1, %s12
    %p316 = scmp.lt.s32.totalorder %s12, 9
    %p317 = pnand %p315, %p316
    %p318 = pneg %p317
    // Predicated region
    $region41: #{stn_one_forward.9} parent=5 // pred_check
      _
    $region42: #{stn_one_forward.9} parent=5 // pred_check_branch
      %320 = sbr.rel (%p317) target = $region44
    $region43: #{stn_one_forward.9} parent=5 // pred_region
      %s321 = ssub.s32 %s12, 1
      %s322 = smul.u32 128, %s22
      %p323 = scmp.lt.s32.totalorder %s21, 1
      %s324 = scalar_select %p323, %s21, 1
      %p325 = scmp.lt.s32.totalorder %s322, 511
      %s326 = scalar_select %p325, %s322, 511
      %s327 = smul.addr %s324, 512
      %s328 = sadd.s32 %s326, %s327
      %s329 = scalar_lea.vmem %s0, %s328
      %p330 = pneg %p52
      %p331 = pneg %p49
      %s332 = smul.u32 128, %s22
      %p333 = scmp.lt.s32.totalorder %s21, 1
      %s334 = scalar_select %p333, %s21, 1
      %p335 = scmp.lt.s32.totalorder %s332, 511
      %s336 = scalar_select %p335, %s332, 511
      %s337 = smul.addr %s334, 512
      %s338 = sadd.s32 %s336, %s337
      %s339 = scalar_lea.vmem %s1, %s338
      %p340 = pneg %p80
      %p341 = pneg %p77
      %s342 = smul.u32 128, %s22
      %p343 = scmp.lt.s32.totalorder %s21, 1
      %s344 = scalar_select %p343, %s21, 1
      %p345 = scmp.lt.s32.totalorder %s342, 511
      %s346 = scalar_select %p345, %s342, 511
      %s347 = smul.addr %s344, 512
      %s348 = sadd.s32 %s346, %s347
      %s349 = smul.addr %s348, 4
      %s350 = scalar_lea.vmem %s2, %s349
      %p351 = pneg %p108
      %p352 = pneg %p105
      %s353 = smul.u32 128, %s22
      %p354 = scmp.lt.s32.totalorder %s21, 1
      %s355 = scalar_select %p354, %s21, 1
      %p356 = scmp.lt.s32.totalorder %s353, 511
      %s357 = scalar_select %p356, %s353, 511
      %s358 = smul.addr %s355, 512
      %s359 = sadd.s32 %s357, %s358
      %s360 = smul.addr %s359, 4
      %s361 = scalar_lea.vmem %s3, %s360
      %p362 = pneg %p136
      %p363 = pneg %p133
      %s364 = smul.u32 128, %s22
      %p365 = scmp.lt.s32.totalorder %s21, 1
      %s366 = scalar_select %p365, %s21, 1
      %p367 = scmp.lt.s32.totalorder %s364, 511
      %s368 = scalar_select %p367, %s364, 511
      %s369 = smul.addr %s366, 512
      %s370 = sadd.s32 %s368, %s369
      %s371 = smul.addr %s370, 4
      %s372 = scalar_lea.vmem %s4, %s371
      %p373 = pneg %p164
      %p374 = pneg %p161
      %s375 = smul.u32 128, %s22
      %p376 = scmp.lt.s32.totalorder %s21, 1
      %s377 = scalar_select %p376, %s21, 1
      %p378 = scmp.lt.s32.totalorder %s375, 511
      %s379 = scalar_select %p378, %s375, 511
      %s380 = smul.addr %s377, 512
      %s381 = sadd.s32 %s379, %s380
      %s382 = smul.addr %s381, 4
      %s383 = scalar_lea.vmem %s5, %s382
      %p384 = pneg %p192
      %p385 = pneg %p189
      %p386 = pneg %p220
      %p387 = pneg %p217
      %s388 = smul.u32 128, %s22
      %p389 = scmp.lt.s32.totalorder %s21, 1
      %s390 = scalar_select %p389, %s21, 1
      %p391 = scmp.lt.s32.totalorder %s388, 511
      %s392 = scalar_select %p391, %s388, 511
      %s393 = smul.addr %s390, 512
      %s394 = sadd.s32 %s392, %s393
      %s395 = smul.addr %s394, 4
      %s396 = scalar_lea.vmem %s6, %s395
      %s397 = smul.u32 128, %s22
      %p398 = scmp.lt.s32.totalorder %s21, 1
      %s399 = scalar_select %p398, %s21, 1
      %p400 = scmp.lt.s32.totalorder %s397, 511
      %s401 = scalar_select %p400, %s397, 511
      %s402 = smul.addr %s399, 512
      %s403 = sadd.s32 %s401, %s402
      %s404 = scalar_lea.vmem %s0, %s403
      %s405 = smul.u32 128, %s22
      %s406 = smul.u32 128, %s22
      %p407 = scmp.lt.s32.totalorder %s21, 1
      %s408 = scalar_select %p407, %s21, 1
      %p409 = scmp.lt.s32.totalorder %s406, 511
      %s410 = scalar_select %p409, %s406, 511
      %s411 = smul.addr %s408, 512
      %s412 = sadd.s32 %s410, %s411
      %s413 = scalar_lea.vmem %s1, %s412
      %s414 = smul.u32 128, %s22
      %s415 = smul.u32 128, %s22
      %p416 = scmp.lt.s32.totalorder %s21, 1
      %s417 = scalar_select %p416, %s21, 1
      %p418 = scmp.lt.s32.totalorder %s415, 511
      %s419 = scalar_select %p418, %s415, 511
      %s420 = smul.addr %s417, 512
      %s421 = sadd.s32 %s419, %s420
      %s422 = smul.addr %s421, 4
      %s423 = scalar_lea.vmem %s2, %s422
      %s424 = smul.u32 128, %s22
      %s425 = smul.u32 128, %s22
      %p426 = scmp.lt.s32.totalorder %s21, 1
      %s427 = scalar_select %p426, %s21, 1
      %p428 = scmp.lt.s32.totalorder %s425, 511
      %s429 = scalar_select %p428, %s425, 511
      %s430 = smul.addr %s427, 512
      %s431 = sadd.s32 %s429, %s430
      %s432 = smul.addr %s431, 4
      %s433 = scalar_lea.vmem %s3, %s432
      %s434 = smul.u32 128, %s22
      %s435 = smul.u32 128, %s22
      %p436 = scmp.lt.s32.totalorder %s21, 1
      %s437 = scalar_select %p436, %s21, 1
      %p438 = scmp.lt.s32.totalorder %s435, 511
      %s439 = scalar_select %p438, %s435, 511
      %s440 = smul.addr %s437, 512
      %s441 = sadd.s32 %s439, %s440
      %s442 = smul.addr %s441, 4
      %s443 = scalar_lea.vmem %s4, %s442
      %s444 = smul.u32 128, %s22
      %s445 = smul.u32 128, %s22
      %p446 = scmp.lt.s32.totalorder %s21, 1
      %s447 = scalar_select %p446, %s21, 1
      %p448 = scmp.lt.s32.totalorder %s445, 511
      %s449 = scalar_select %p448, %s445, 511
      %s450 = smul.addr %s447, 512
      %s451 = sadd.s32 %s449, %s450
      %s452 = smul.addr %s451, 4
      %s453 = scalar_lea.vmem %s5, %s452
      %s454 = smul.u32 128, %s22
      %s455 = smul.u32 128, %s22
      %p456 = scmp.lt.s32.totalorder %s21, 1
      %s457 = scalar_select %p456, %s21, 1
      %p458 = scmp.lt.s32.totalorder %s455, 511
      %s459 = scalar_select %p458, %s455, 511
      %s460 = smul.addr %s457, 512
      %s461 = sadd.s32 %s459, %s460
      %s462 = smul.addr %s461, 4
      %s463 = scalar_lea.vmem %s6, %s462
      %s464 = smul.u32 128, %s22
      %v465 = vld [vmem:[%s404] sm:$0xff]
      %v466 = vld [vmem:[%s404 + $0x8] sm:$0xff]
      %v467 = vld [vmem:[%s404 + $0x10] sm:$0xff]
      %v468 = vld [vmem:[%s404 + $0x18] sm:$0xff]
      %v469 = vld [vmem:[%s404 + $0x20] sm:$0xff]
      %v470 = vld [vmem:[%s404 + $0x28] sm:$0xff]
      %v471 = vld [vmem:[%s404 + $0x30] sm:$0xff]
      %v472 = vld [vmem:[%s404 + $0x38] sm:$0xff]
      %v473 = vld [vmem:[%s404 + $0x40] sm:$0xff]
      %v474 = vld [vmem:[%s404 + $0x48] sm:$0xff]
      %v475 = vld [vmem:[%s404 + $0x50] sm:$0xff]
      %v476 = vld [vmem:[%s404 + $0x58] sm:$0xff]
      %v477 = vld [vmem:[%s404 + $0x60] sm:$0xff]
      %v478 = vld [vmem:[%s404 + $0x68] sm:$0xff]
      %v479 = vld [vmem:[%s404 + $0x70] sm:$0xff]
      %v480 = vld [vmem:[%s404 + $0x78] sm:$0xff]
      %v481 = vld [vmem:[%s413] sm:$0xff]
      %v482 = vld [vmem:[%s413 + $0x8] sm:$0xff]
      %v483 = vld [vmem:[%s413 + $0x10] sm:$0xff]
      %v484 = vld [vmem:[%s413 + $0x18] sm:$0xff]
      %v485 = vld [vmem:[%s413 + $0x20] sm:$0xff]
      %v486 = vld [vmem:[%s413 + $0x28] sm:$0xff]
      %v487 = vld [vmem:[%s413 + $0x30] sm:$0xff]
      %v488 = vld [vmem:[%s413 + $0x38] sm:$0xff]
      %v489 = vld [vmem:[%s413 + $0x40] sm:$0xff]
      %v490 = vld [vmem:[%s413 + $0x48] sm:$0xff]
      %v491 = vld [vmem:[%s413 + $0x50] sm:$0xff]
      %v492 = vld [vmem:[%s413 + $0x58] sm:$0xff]
      %v493 = vld [vmem:[%s413 + $0x60] sm:$0xff]
      %v494 = vld [vmem:[%s413 + $0x68] sm:$0xff]
      %v495 = vld [vmem:[%s413 + $0x70] sm:$0xff]
      %v496 = vld [vmem:[%s413 + $0x78] sm:$0xff]
      %v497 = vfloor.f32 %v465
      %v498 = vfloor.f32 %v466
      %v499 = vfloor.f32 %v467
      %v500 = vfloor.f32 %v468
      %v501 = vfloor.f32 %v469
      %v502 = vfloor.f32 %v470
      %v503 = vfloor.f32 %v471
      %v504 = vfloor.f32 %v472
      %v505 = vfloor.f32 %v473
      %v506 = vfloor.f32 %v474
      %v507 = vfloor.f32 %v475
      %v508 = vfloor.f32 %v476
      %v509 = vfloor.f32 %v477
      %v510 = vfloor.f32 %v478
      %v511 = vfloor.f32 %v479
      %v512 = vfloor.f32 %v480
      %v513 = vfloor.f32 %v481
      %v514 = vfloor.f32 %v482
      %v515 = vfloor.f32 %v483
      %v516 = vfloor.f32 %v484
      %v517 = vfloor.f32 %v485
      %v518 = vfloor.f32 %v486
      %v519 = vfloor.f32 %v487
      %v520 = vfloor.f32 %v488
      %v521 = vfloor.f32 %v489
      %v522 = vfloor.f32 %v490
      %v523 = vfloor.f32 %v491
      %v524 = vfloor.f32 %v492
      %v525 = vfloor.f32 %v493
      %v526 = vfloor.f32 %v494
      %v527 = vfloor.f32 %v495
      %v528 = vfloor.f32 %v496
      %v529 = vsub.f32 %v465, %v497
      %v530 = vsub.f32 %v466, %v498
      %v531 = vsub.f32 %v467, %v499
      %v532 = vsub.f32 %v468, %v500
      %v533 = vsub.f32 %v469, %v501
      %v534 = vsub.f32 %v470, %v502
      %v535 = vsub.f32 %v471, %v503
      %v536 = vsub.f32 %v472, %v504
      %v537 = vsub.f32 %v473, %v505
      %v538 = vsub.f32 %v474, %v506
      %v539 = vsub.f32 %v475, %v507
      %v540 = vsub.f32 %v476, %v508
      %v541 = vsub.f32 %v477, %v509
      %v542 = vsub.f32 %v478, %v510
      %v543 = vsub.f32 %v479, %v511
      %v544 = vsub.f32 %v480, %v512
      %v545 = vsub.f32 %v481, %v513
      %v546 = vsub.f32 %v482, %v514
      %v547 = vsub.f32 %v483, %v515
      %v548 = vsub.f32 %v484, %v516
      %v549 = vsub.f32 %v485, %v517
      %v550 = vsub.f32 %v486, %v518
      %v551 = vsub.f32 %v487, %v519
      %v552 = vsub.f32 %v488, %v520
      %v553 = vsub.f32 %v489, %v521
      %v554 = vsub.f32 %v490, %v522
      %v555 = vsub.f32 %v491, %v523
      %v556 = vsub.f32 %v492, %v524
      %v557 = vsub.f32 %v493, %v525
      %v558 = vsub.f32 %v494, %v526
      %v559 = vsub.f32 %v495, %v527
      %v560 = vsub.f32 %v496, %v528
      %vm561 = vcmp.ge.f32.partialorder %v497, 0.0
      %vm562 = vcmp.ge.f32.partialorder %v498, 0.0
      %vm563 = vcmp.ge.f32.partialorder %v499, 0.0
      %vm564 = vcmp.ge.f32.partialorder %v500, 0.0
      %vm565 = vcmp.ge.f32.partialorder %v501, 0.0
      %vm566 = vcmp.ge.f32.partialorder %v502, 0.0
      %vm567 = vcmp.ge.f32.partialorder %v503, 0.0
      %vm568 = vcmp.ge.f32.partialorder %v504, 0.0
      %vm569 = vcmp.ge.f32.partialorder %v505, 0.0
      %vm570 = vcmp.ge.f32.partialorder %v506, 0.0
      %vm571 = vcmp.ge.f32.partialorder %v507, 0.0
      %vm572 = vcmp.ge.f32.partialorder %v508, 0.0
      %vm573 = vcmp.ge.f32.partialorder %v509, 0.0
      %vm574 = vcmp.ge.f32.partialorder %v510, 0.0
      %vm575 = vcmp.ge.f32.partialorder %v511, 0.0
      %vm576 = vcmp.ge.f32.partialorder %v512, 0.0
      %vm577 = vcmp.le.f32.partialorder %v497, 359.0
      %vm578 = vcmp.le.f32.partialorder %v498, 359.0
      %vm579 = vcmp.le.f32.partialorder %v499, 359.0
      %vm580 = vcmp.le.f32.partialorder %v500, 359.0
      %vm581 = vcmp.le.f32.partialorder %v501, 359.0
      %vm582 = vcmp.le.f32.partialorder %v502, 359.0
      %vm583 = vcmp.le.f32.partialorder %v503, 359.0
      %vm584 = vcmp.le.f32.partialorder %v504, 359.0
      %vm585 = vcmp.le.f32.partialorder %v505, 359.0
      %vm586 = vcmp.le.f32.partialorder %v506, 359.0
      %vm587 = vcmp.le.f32.partialorder %v507, 359.0
      %vm588 = vcmp.le.f32.partialorder %v508, 359.0
      %vm589 = vcmp.le.f32.partialorder %v509, 359.0
      %vm590 = vcmp.le.f32.partialorder %v510, 359.0
      %vm591 = vcmp.le.f32.partialorder %v511, 359.0
      %vm592 = vcmp.le.f32.partialorder %v512, 359.0
      %vm593 = vmand %vm561, %vm577
      %vm594 = vmand %vm562, %vm578
      %vm595 = vmand %vm563, %vm579
      %vm596 = vmand %vm564, %vm580
      %vm597 = vmand %vm565, %vm581
      %vm598 = vmand %vm566, %vm582
      %vm599 = vmand %vm567, %vm583
      %vm600 = vmand %vm568, %vm584
      %vm601 = vmand %vm569, %vm585
      %vm602 = vmand %vm570, %vm586
      %vm603 = vmand %vm571, %vm587
      %vm604 = vmand %vm572, %vm588
      %vm605 = vmand %vm573, %vm589
      %vm606 = vmand %vm574, %vm590
      %vm607 = vmand %vm575, %vm591
      %vm608 = vmand %vm576, %vm592
      %v609 = vsel %vm593, 1, 0
      %v610 = vsel %vm594, 1, 0
      %v611 = vsel %vm595, 1, 0
      %v612 = vsel %vm596, 1, 0
      %v613 = vsel %vm597, 1, 0
      %v614 = vsel %vm598, 1, 0
      %v615 = vsel %vm599, 1, 0
      %v616 = vsel %vm600, 1, 0
      %v617 = vsel %vm601, 1, 0
      %v618 = vsel %vm602, 1, 0
      %v619 = vsel %vm603, 1, 0
      %v620 = vsel %vm604, 1, 0
      %v621 = vsel %vm605, 1, 0
      %v622 = vsel %vm606, 1, 0
      %v623 = vsel %vm607, 1, 0
      %v624 = vsel %vm608, 1, 0
      %v625 = vcvt.s32.f32 %v609
      %v626 = vcvt.s32.f32 %v610
      %v627 = vcvt.s32.f32 %v611
      %v628 = vcvt.s32.f32 %v612
      %v629 = vcvt.s32.f32 %v613
      %v630 = vcvt.s32.f32 %v614
      %v631 = vcvt.s32.f32 %v615
      %v632 = vcvt.s32.f32 %v616
      %v633 = vcvt.s32.f32 %v617
      %v634 = vcvt.s32.f32 %v618
      %v635 = vcvt.s32.f32 %v619
      %v636 = vcvt.s32.f32 %v620
      %v637 = vcvt.s32.f32 %v621
      %v638 = vcvt.s32.f32 %v622
      %v639 = vcvt.s32.f32 %v623
      %v640 = vcvt.s32.f32 %v624
      %vm641 = vcmp.ge.f32.partialorder %v497, -1.0
      %vm642 = vcmp.ge.f32.partialorder %v498, -1.0
      %vm643 = vcmp.ge.f32.partialorder %v499, -1.0
      %vm644 = vcmp.ge.f32.partialorder %v500, -1.0
      %vm645 = vcmp.ge.f32.partialorder %v501, -1.0
      %vm646 = vcmp.ge.f32.partialorder %v502, -1.0
      %vm647 = vcmp.ge.f32.partialorder %v503, -1.0
      %vm648 = vcmp.ge.f32.partialorder %v504, -1.0
      %vm649 = vcmp.ge.f32.partialorder %v505, -1.0
      %vm650 = vcmp.ge.f32.partialorder %v506, -1.0
      %vm651 = vcmp.ge.f32.partialorder %v507, -1.0
      %vm652 = vcmp.ge.f32.partialorder %v508, -1.0
      %vm653 = vcmp.ge.f32.partialorder %v509, -1.0
      %vm654 = vcmp.ge.f32.partialorder %v510, -1.0
      %vm655 = vcmp.ge.f32.partialorder %v511, -1.0
      %vm656 = vcmp.ge.f32.partialorder %v512, -1.0
      %vm657 = vcmp.le.f32.partialorder %v497, 358.0
      %vm658 = vcmp.le.f32.partialorder %v498, 358.0
      %vm659 = vcmp.le.f32.partialorder %v499, 358.0
      %vm660 = vcmp.le.f32.partialorder %v500, 358.0
      %vm661 = vcmp.le.f32.partialorder %v501, 358.0
      %vm662 = vcmp.le.f32.partialorder %v502, 358.0
      %vm663 = vcmp.le.f32.partialorder %v503, 358.0
      %vm664 = vcmp.le.f32.partialorder %v504, 358.0
      %vm665 = vcmp.le.f32.partialorder %v505, 358.0
      %vm666 = vcmp.le.f32.partialorder %v506, 358.0
      %vm667 = vcmp.le.f32.partialorder %v507, 358.0
      %vm668 = vcmp.le.f32.partialorder %v508, 358.0
      %vm669 = vcmp.le.f32.partialorder %v509, 358.0
      %vm670 = vcmp.le.f32.partialorder %v510, 358.0
      %vm671 = vcmp.le.f32.partialorder %v511, 358.0
      %vm672 = vcmp.le.f32.partialorder %v512, 358.0
      %vm673 = vmand %vm641, %vm657
      %vm674 = vmand %vm642, %vm658
      %vm675 = vmand %vm643, %vm659
      %vm676 = vmand %vm644, %vm660
      %vm677 = vmand %vm645, %vm661
      %vm678 = vmand %vm646, %vm662
      %vm679 = vmand %vm647, %vm663
      %vm680 = vmand %vm648, %vm664
      %vm681 = vmand %vm649, %vm665
      %vm682 = vmand %vm650, %vm666
      %vm683 = vmand %vm651, %vm667
      %vm684 = vmand %vm652, %vm668
      %vm685 = vmand %vm653, %vm669
      %vm686 = vmand %vm654, %vm670
      %vm687 = vmand %vm655, %vm671
      %vm688 = vmand %vm656, %vm672
      %v689 = vsel %vm673, 1, 0
      %v690 = vsel %vm674, 1, 0
      %v691 = vsel %vm675, 1, 0
      %v692 = vsel %vm676, 1, 0
      %v693 = vsel %vm677, 1, 0
      %v694 = vsel %vm678, 1, 0
      %v695 = vsel %vm679, 1, 0
      %v696 = vsel %vm680, 1, 0
      %v697 = vsel %vm681, 1, 0
      %v698 = vsel %vm682, 1, 0
      %v699 = vsel %vm683, 1, 0
      %v700 = vsel %vm684, 1, 0
      %v701 = vsel %vm685, 1, 0
      %v702 = vsel %vm686, 1, 0
      %v703 = vsel %vm687, 1, 0
      %v704 = vsel %vm688, 1, 0
      %v705 = vcvt.s32.f32 %v689
      %v706 = vcvt.s32.f32 %v690
      %v707 = vcvt.s32.f32 %v691
      %v708 = vcvt.s32.f32 %v692
      %v709 = vcvt.s32.f32 %v693
      %v710 = vcvt.s32.f32 %v694
      %v711 = vcvt.s32.f32 %v695
      %v712 = vcvt.s32.f32 %v696
      %v713 = vcvt.s32.f32 %v697
      %v714 = vcvt.s32.f32 %v698
      %v715 = vcvt.s32.f32 %v699
      %v716 = vcvt.s32.f32 %v700
      %v717 = vcvt.s32.f32 %v701
      %v718 = vcvt.s32.f32 %v702
      %v719 = vcvt.s32.f32 %v703
      %v720 = vcvt.s32.f32 %v704
      %vm721 = vcmp.ge.f32.partialorder %v513, 0.0
      %vm722 = vcmp.ge.f32.partialorder %v514, 0.0
      %vm723 = vcmp.ge.f32.partialorder %v515, 0.0
      %vm724 = vcmp.ge.f32.partialorder %v516, 0.0
      %vm725 = vcmp.ge.f32.partialorder %v517, 0.0
      %vm726 = vcmp.ge.f32.partialorder %v518, 0.0
      %vm727 = vcmp.ge.f32.partialorder %v519, 0.0
      %vm728 = vcmp.ge.f32.partialorder %v520, 0.0
      %vm729 = vcmp.ge.f32.partialorder %v521, 0.0
      %vm730 = vcmp.ge.f32.partialorder %v522, 0.0
      %vm731 = vcmp.ge.f32.partialorder %v523, 0.0
      %vm732 = vcmp.ge.f32.partialorder %v524, 0.0
      %vm733 = vcmp.ge.f32.partialorder %v525, 0.0
      %vm734 = vcmp.ge.f32.partialorder %v526, 0.0
      %vm735 = vcmp.ge.f32.partialorder %v527, 0.0
      %vm736 = vcmp.ge.f32.partialorder %v528, 0.0
      %vm737 = vcmp.le.f32.partialorder %v513, 359.0
      %vm738 = vcmp.le.f32.partialorder %v514, 359.0
      %vm739 = vcmp.le.f32.partialorder %v515, 359.0
      %vm740 = vcmp.le.f32.partialorder %v516, 359.0
      %vm741 = vcmp.le.f32.partialorder %v517, 359.0
      %vm742 = vcmp.le.f32.partialorder %v518, 359.0
      %vm743 = vcmp.le.f32.partialorder %v519, 359.0
      %vm744 = vcmp.le.f32.partialorder %v520, 359.0
      %vm745 = vcmp.le.f32.partialorder %v521, 359.0
      %vm746 = vcmp.le.f32.partialorder %v522, 359.0
      %vm747 = vcmp.le.f32.partialorder %v523, 359.0
      %vm748 = vcmp.le.f32.partialorder %v524, 359.0
      %vm749 = vcmp.le.f32.partialorder %v525, 359.0
      %vm750 = vcmp.le.f32.partialorder %v526, 359.0
      %vm751 = vcmp.le.f32.partialorder %v527, 359.0
      %vm752 = vcmp.le.f32.partialorder %v528, 359.0
      %vm753 = vmand %vm721, %vm737
      %vm754 = vmand %vm722, %vm738
      %vm755 = vmand %vm723, %vm739
      %vm756 = vmand %vm724, %vm740
      %vm757 = vmand %vm725, %vm741
      %vm758 = vmand %vm726, %vm742
      %vm759 = vmand %vm727, %vm743
      %vm760 = vmand %vm728, %vm744
      %vm761 = vmand %vm729, %vm745
      %vm762 = vmand %vm730, %vm746
      %vm763 = vmand %vm731, %vm747
      %vm764 = vmand %vm732, %vm748
      %vm765 = vmand %vm733, %vm749
      %vm766 = vmand %vm734, %vm750
      %vm767 = vmand %vm735, %vm751
      %vm768 = vmand %vm736, %vm752
      %v769 = vsel %vm753, 1, 0
      %v770 = vsel %vm754, 1, 0
      %v771 = vsel %vm755, 1, 0
      %v772 = vsel %vm756, 1, 0
      %v773 = vsel %vm757, 1, 0
      %v774 = vsel %vm758, 1, 0
      %v775 = vsel %vm759, 1, 0
      %v776 = vsel %vm760, 1, 0
      %v777 = vsel %vm761, 1, 0
      %v778 = vsel %vm762, 1, 0
      %v779 = vsel %vm763, 1, 0
      %v780 = vsel %vm764, 1, 0
      %v781 = vsel %vm765, 1, 0
      %v782 = vsel %vm766, 1, 0
      %v783 = vsel %vm767, 1, 0
      %v784 = vsel %vm768, 1, 0
      %v785 = vcvt.s32.f32 %v769
      %v786 = vcvt.s32.f32 %v770
      %v787 = vcvt.s32.f32 %v771
      %v788 = vcvt.s32.f32 %v772
      %v789 = vcvt.s32.f32 %v773
      %v790 = vcvt.s32.f32 %v774
      %v791 = vcvt.s32.f32 %v775
      %v792 = vcvt.s32.f32 %v776
      %v793 = vcvt.s32.f32 %v777
      %v794 = vcvt.s32.f32 %v778
      %v795 = vcvt.s32.f32 %v779
      %v796 = vcvt.s32.f32 %v780
      %v797 = vcvt.s32.f32 %v781
      %v798 = vcvt.s32.f32 %v782
      %v799 = vcvt.s32.f32 %v783
      %v800 = vcvt.s32.f32 %v784
      %vm801 = vcmp.ge.f32.partialorder %v513, -1.0
      %vm802 = vcmp.ge.f32.partialorder %v514, -1.0
      %vm803 = vcmp.ge.f32.partialorder %v515, -1.0
      %vm804 = vcmp.ge.f32.partialorder %v516, -1.0
      %vm805 = vcmp.ge.f32.partialorder %v517, -1.0
      %vm806 = vcmp.ge.f32.partialorder %v518, -1.0
      %vm807 = vcmp.ge.f32.partialorder %v519, -1.0
      %vm808 = vcmp.ge.f32.partialorder %v520, -1.0
      %vm809 = vcmp.ge.f32.partialorder %v521, -1.0
      %vm810 = vcmp.ge.f32.partialorder %v522, -1.0
      %vm811 = vcmp.ge.f32.partialorder %v523, -1.0
      %vm812 = vcmp.ge.f32.partialorder %v524, -1.0
      %vm813 = vcmp.ge.f32.partialorder %v525, -1.0
      %vm814 = vcmp.ge.f32.partialorder %v526, -1.0
      %vm815 = vcmp.ge.f32.partialorder %v527, -1.0
      %vm816 = vcmp.ge.f32.partialorder %v528, -1.0
      %vm817 = vcmp.le.f32.partialorder %v513, 358.0
      %vm818 = vcmp.le.f32.partialorder %v514, 358.0
      %vm819 = vcmp.le.f32.partialorder %v515, 358.0
      %vm820 = vcmp.le.f32.partialorder %v516, 358.0
      %vm821 = vcmp.le.f32.partialorder %v517, 358.0
      %vm822 = vcmp.le.f32.partialorder %v518, 358.0
      %vm823 = vcmp.le.f32.partialorder %v519, 358.0
      %vm824 = vcmp.le.f32.partialorder %v520, 358.0
      %vm825 = vcmp.le.f32.partialorder %v521, 358.0
      %vm826 = vcmp.le.f32.partialorder %v522, 358.0
      %vm827 = vcmp.le.f32.partialorder %v523, 358.0
      %vm828 = vcmp.le.f32.partialorder %v524, 358.0
      %vm829 = vcmp.le.f32.partialorder %v525, 358.0
      %vm830 = vcmp.le.f32.partialorder %v526, 358.0
      %vm831 = vcmp.le.f32.partialorder %v527, 358.0
      %vm832 = vcmp.le.f32.partialorder %v528, 358.0
      %vm833 = vmand %vm801, %vm817
      %vm834 = vmand %vm802, %vm818
      %vm835 = vmand %vm803, %vm819
      %vm836 = vmand %vm804, %vm820
      %vm837 = vmand %vm805, %vm821
      %vm838 = vmand %vm806, %vm822
      %vm839 = vmand %vm807, %vm823
      %vm840 = vmand %vm808, %vm824
      %vm841 = vmand %vm809, %vm825
      %vm842 = vmand %vm810, %vm826
      %vm843 = vmand %vm811, %vm827
      %vm844 = vmand %vm812, %vm828
      %vm845 = vmand %vm813, %vm829
      %vm846 = vmand %vm814, %vm830
      %vm847 = vmand %vm815, %vm831
      %vm848 = vmand %vm816, %vm832
      %v849 = vsel %vm833, 1, 0
      %v850 = vsel %vm834, 1, 0
      %v851 = vsel %vm835, 1, 0
      %v852 = vsel %vm836, 1, 0
      %v853 = vsel %vm837, 1, 0
      %v854 = vsel %vm838, 1, 0
      %v855 = vsel %vm839, 1, 0
      %v856 = vsel %vm840, 1, 0
      %v857 = vsel %vm841, 1, 0
      %v858 = vsel %vm842, 1, 0
      %v859 = vsel %vm843, 1, 0
      %v860 = vsel %vm844, 1, 0
      %v861 = vsel %vm845, 1, 0
      %v862 = vsel %vm846, 1, 0
      %v863 = vsel %vm847, 1, 0
      %v864 = vsel %vm848, 1, 0
      %v865 = vcvt.s32.f32 %v849
      %v866 = vcvt.s32.f32 %v850
      %v867 = vcvt.s32.f32 %v851
      %v868 = vcvt.s32.f32 %v852
      %v869 = vcvt.s32.f32 %v853
      %v870 = vcvt.s32.f32 %v854
      %v871 = vcvt.s32.f32 %v855
      %v872 = vcvt.s32.f32 %v856
      %v873 = vcvt.s32.f32 %v857
      %v874 = vcvt.s32.f32 %v858
      %v875 = vcvt.s32.f32 %v859
      %v876 = vcvt.s32.f32 %v860
      %v877 = vcvt.s32.f32 %v861
      %v878 = vcvt.s32.f32 %v862
      %v879 = vcvt.s32.f32 %v863
      %v880 = vcvt.s32.f32 %v864
      %v881 = vsub.f32 1.0, %v545
      %v882 = vsub.f32 1.0, %v546
      %v883 = vsub.f32 1.0, %v547
      %v884 = vsub.f32 1.0, %v548
      %v885 = vsub.f32 1.0, %v549
      %v886 = vsub.f32 1.0, %v550
      %v887 = vsub.f32 1.0, %v551
      %v888 = vsub.f32 1.0, %v552
      %v889 = vsub.f32 1.0, %v553
      %v890 = vsub.f32 1.0, %v554
      %v891 = vsub.f32 1.0, %v555
      %v892 = vsub.f32 1.0, %v556
      %v893 = vsub.f32 1.0, %v557
      %v894 = vsub.f32 1.0, %v558
      %v895 = vsub.f32 1.0, %v559
      %v896 = vsub.f32 1.0, %v560
      %v897 = vsub.f32 1.0, %v529
      %v898 = vsub.f32 1.0, %v530
      %v899 = vsub.f32 1.0, %v531
      %v900 = vsub.f32 1.0, %v532
      %v901 = vsub.f32 1.0, %v533
      %v902 = vsub.f32 1.0, %v534
      %v903 = vsub.f32 1.0, %v535
      %v904 = vsub.f32 1.0, %v536
      %v905 = vsub.f32 1.0, %v537
      %v906 = vsub.f32 1.0, %v538
      %v907 = vsub.f32 1.0, %v539
      %v908 = vsub.f32 1.0, %v540
      %v909 = vsub.f32 1.0, %v541
      %v910 = vsub.f32 1.0, %v542
      %v911 = vsub.f32 1.0, %v543
      %v912 = vsub.f32 1.0, %v544
      %v913 = vmul.f32 %v881, %v897
      %v914 = vmul.f32 %v882, %v898
      %v915 = vmul.f32 %v883, %v899
      %v916 = vmul.f32 %v884, %v900
      %v917 = vmul.f32 %v885, %v901
      %v918 = vmul.f32 %v886, %v902
      %v919 = vmul.f32 %v887, %v903
      %v920 = vmul.f32 %v888, %v904
      %v921 = vmul.f32 %v889, %v905
      %v922 = vmul.f32 %v890, %v906
      %v923 = vmul.f32 %v891, %v907
      %v924 = vmul.f32 %v892, %v908
      %v925 = vmul.f32 %v893, %v909
      %v926 = vmul.f32 %v894, %v910
      %v927 = vmul.f32 %v895, %v911
      %v928 = vmul.f32 %v896, %v912
      %v929 = vmul.f32 %v913, %v785
      %v930 = vmul.f32 %v914, %v786
      %v931 = vmul.f32 %v915, %v787
      %v932 = vmul.f32 %v916, %v788
      %v933 = vmul.f32 %v917, %v789
      %v934 = vmul.f32 %v918, %v790
      %v935 = vmul.f32 %v919, %v791
      %v936 = vmul.f32 %v920, %v792
      %v937 = vmul.f32 %v921, %v793
      %v938 = vmul.f32 %v922, %v794
      %v939 = vmul.f32 %v923, %v795
      %v940 = vmul.f32 %v924, %v796
      %v941 = vmul.f32 %v925, %v797
      %v942 = vmul.f32 %v926, %v798
      %v943 = vmul.f32 %v927, %v799
      %v944 = vmul.f32 %v928, %v800
      %v945 = vmul.f32 %v929, %v625
      %v946 = vmul.f32 %v930, %v626
      %v947 = vmul.f32 %v931, %v627
      %v948 = vmul.f32 %v932, %v628
      %v949 = vmul.f32 %v933, %v629
      %v950 = vmul.f32 %v934, %v630
      %v951 = vmul.f32 %v935, %v631
      %v952 = vmul.f32 %v936, %v632
      %v953 = vmul.f32 %v937, %v633
      %v954 = vmul.f32 %v938, %v634
      %v955 = vmul.f32 %v939, %v635
      %v956 = vmul.f32 %v940, %v636
      %v957 = vmul.f32 %v941, %v637
      %v958 = vmul.f32 %v942, %v638
      %v959 = vmul.f32 %v943, %v639
      %v960 = vmul.f32 %v944, %v640
      %v961 = vmul.f32 %v881, %v529
      %v962 = vmul.f32 %v882, %v530
      %v963 = vmul.f32 %v883, %v531
      %v964 = vmul.f32 %v884, %v532
      %v965 = vmul.f32 %v885, %v533
      %v966 = vmul.f32 %v886, %v534
      %v967 = vmul.f32 %v887, %v535
      %v968 = vmul.f32 %v888, %v536
      %v969 = vmul.f32 %v889, %v537
      %v970 = vmul.f32 %v890, %v538
      %v971 = vmul.f32 %v891, %v539
      %v972 = vmul.f32 %v892, %v540
      %v973 = vmul.f32 %v893, %v541
      %v974 = vmul.f32 %v894, %v542
      %v975 = vmul.f32 %v895, %v543
      %v976 = vmul.f32 %v896, %v544
      %v977 = vmul.f32 %v961, %v785
      %v978 = vmul.f32 %v962, %v786
      %v979 = vmul.f32 %v963, %v787
      %v980 = vmul.f32 %v964, %v788
      %v981 = vmul.f32 %v965, %v789
      %v982 = vmul.f32 %v966, %v790
      %v983 = vmul.f32 %v967, %v791
      %v984 = vmul.f32 %v968, %v792
      %v985 = vmul.f32 %v969, %v793
      %v986 = vmul.f32 %v970, %v794
      %v987 = vmul.f32 %v971, %v795
      %v988 = vmul.f32 %v972, %v796
      %v989 = vmul.f32 %v973, %v797
      %v990 = vmul.f32 %v974, %v798
      %v991 = vmul.f32 %v975, %v799
      %v992 = vmul.f32 %v976, %v800
      %v993 = vmul.f32 %v977, %v705
      %v994 = vmul.f32 %v978, %v706
      %v995 = vmul.f32 %v979, %v707
      %v996 = vmul.f32 %v980, %v708
      %v997 = vmul.f32 %v981, %v709
      %v998 = vmul.f32 %v982, %v710
      %v999 = vmul.f32 %v983, %v711
      %v1000 = vmul.f32 %v984, %v712
      %v1001 = vmul.f32 %v985, %v713
      %v1002 = vmul.f32 %v986, %v714
      %v1003 = vmul.f32 %v987, %v715
      %v1004 = vmul.f32 %v988, %v716
      %v1005 = vmul.f32 %v989, %v717
      %v1006 = vmul.f32 %v990, %v718
      %v1007 = vmul.f32 %v991, %v719
      %v1008 = vmul.f32 %v992, %v720
      %v1009 = vmul.f32 %v545, %v897
      %v1010 = vmul.f32 %v546, %v898
      %v1011 = vmul.f32 %v547, %v899
      %v1012 = vmul.f32 %v548, %v900
      %v1013 = vmul.f32 %v549, %v901
      %v1014 = vmul.f32 %v550, %v902
      %v1015 = vmul.f32 %v551, %v903
      %v1016 = vmul.f32 %v552, %v904
      %v1017 = vmul.f32 %v553, %v905
      %v1018 = vmul.f32 %v554, %v906
      %v1019 = vmul.f32 %v555, %v907
      %v1020 = vmul.f32 %v556, %v908
      %v1021 = vmul.f32 %v557, %v909
      %v1022 = vmul.f32 %v558, %v910
      %v1023 = vmul.f32 %v559, %v911
      %v1024 = vmul.f32 %v560, %v912
      %v1025 = vmul.f32 %v1009, %v865
      %v1026 = vmul.f32 %v1010, %v866
      %v1027 = vmul.f32 %v1011, %v867
      %v1028 = vmul.f32 %v1012, %v868
      %v1029 = vmul.f32 %v1013, %v869
      %v1030 = vmul.f32 %v1014, %v870
      %v1031 = vmul.f32 %v1015, %v871
      %v1032 = vmul.f32 %v1016, %v872
      %v1033 = vmul.f32 %v1017, %v873
      %v1034 = vmul.f32 %v1018, %v874
      %v1035 = vmul.f32 %v1019, %v875
      %v1036 = vmul.f32 %v1020, %v876
      %v1037 = vmul.f32 %v1021, %v877
      %v1038 = vmul.f32 %v1022, %v878
      %v1039 = vmul.f32 %v1023, %v879
      %v1040 = vmul.f32 %v1024, %v880
      %v1041 = vmul.f32 %v1025, %v625
      %v1042 = vmul.f32 %v1026, %v626
      %v1043 = vmul.f32 %v1027, %v627
      %v1044 = vmul.f32 %v1028, %v628
      %v1045 = vmul.f32 %v1029, %v629
      %v1046 = vmul.f32 %v1030, %v630
      %v1047 = vmul.f32 %v1031, %v631
      %v1048 = vmul.f32 %v1032, %v632
      %v1049 = vmul.f32 %v1033, %v633
      %v1050 = vmul.f32 %v1034, %v634
      %v1051 = vmul.f32 %v1035, %v635
      %v1052 = vmul.f32 %v1036, %v636
      %v1053 = vmul.f32 %v1037, %v637
      %v1054 = vmul.f32 %v1038, %v638
      %v1055 = vmul.f32 %v1039, %v639
      %v1056 = vmul.f32 %v1040, %v640
      %v1057 = vmul.f32 %v545, %v529
      %v1058 = vmul.f32 %v546, %v530
      %v1059 = vmul.f32 %v547, %v531
      %v1060 = vmul.f32 %v548, %v532
      %v1061 = vmul.f32 %v549, %v533
      %v1062 = vmul.f32 %v550, %v534
      %v1063 = vmul.f32 %v551, %v535
      %v1064 = vmul.f32 %v552, %v536
      %v1065 = vmul.f32 %v553, %v537
      %v1066 = vmul.f32 %v554, %v538
      %v1067 = vmul.f32 %v555, %v539
      %v1068 = vmul.f32 %v556, %v540
      %v1069 = vmul.f32 %v557, %v541
      %v1070 = vmul.f32 %v558, %v542
      %v1071 = vmul.f32 %v559, %v543
      %v1072 = vmul.f32 %v560, %v544
      %v1073 = vmul.f32 %v1057, %v865
      %v1074 = vmul.f32 %v1058, %v866
      %v1075 = vmul.f32 %v1059, %v867
      %v1076 = vmul.f32 %v1060, %v868
      %v1077 = vmul.f32 %v1061, %v869
      %v1078 = vmul.f32 %v1062, %v870
      %v1079 = vmul.f32 %v1063, %v871
      %v1080 = vmul.f32 %v1064, %v872
      %v1081 = vmul.f32 %v1065, %v873
      %v1082 = vmul.f32 %v1066, %v874
      %v1083 = vmul.f32 %v1067, %v875
      %v1084 = vmul.f32 %v1068, %v876
      %v1085 = vmul.f32 %v1069, %v877
      %v1086 = vmul.f32 %v1070, %v878
      %v1087 = vmul.f32 %v1071, %v879
      %v1088 = vmul.f32 %v1072, %v880
      %v1089 = vmul.f32 %v1073, %v705
      %v1090 = vmul.f32 %v1074, %v706
      %v1091 = vmul.f32 %v1075, %v707
      %v1092 = vmul.f32 %v1076, %v708
      %v1093 = vmul.f32 %v1077, %v709
      %v1094 = vmul.f32 %v1078, %v710
      %v1095 = vmul.f32 %v1079, %v711
      %v1096 = vmul.f32 %v1080, %v712
      %v1097 = vmul.f32 %v1081, %v713
      %v1098 = vmul.f32 %v1082, %v714
      %v1099 = vmul.f32 %v1083, %v715
      %v1100 = vmul.f32 %v1084, %v716
      %v1101 = vmul.f32 %v1085, %v717
      %v1102 = vmul.f32 %v1086, %v718
      %v1103 = vmul.f32 %v1087, %v719
      %v1104 = vmul.f32 %v1088, %v720
      %v1105 = vld [vmem:[%s423] sm:$0x77]
      %v1106 = vld [vmem:[%s423 + $0x8] sm:$0x77]
      %v1107 = vld [vmem:[%s423 + $0x10] sm:$0x77]
      %v1108 = vld [vmem:[%s423 + $0x18] sm:$0x77]
      %v1109 = vld [vmem:[%s423 + $0x20] sm:$0x77]
      %v1110 = vld [vmem:[%s423 + $0x28] sm:$0x77]
      %v1111 = vld [vmem:[%s423 + $0x30] sm:$0x77]
      %v1112 = vld [vmem:[%s423 + $0x38] sm:$0x77]
      %v1113 = vld [vmem:[%s423 + $0x40] sm:$0x77]
      %v1114 = vld [vmem:[%s423 + $0x48] sm:$0x77]
      %v1115 = vld [vmem:[%s423 + $0x50] sm:$0x77]
      %v1116 = vld [vmem:[%s423 + $0x58] sm:$0x77]
      %v1117 = vld [vmem:[%s423 + $0x60] sm:$0x77]
      %v1118 = vld [vmem:[%s423 + $0x68] sm:$0x77]
      %v1119 = vld [vmem:[%s423 + $0x70] sm:$0x77]
      %v1120 = vld [vmem:[%s423 + $0x78] sm:$0x77]
      %v1121 = vld [vmem:[%s423 + $0x80] sm:$0x77]
      %v1122 = vld [vmem:[%s423 + $0x88] sm:$0x77]
      %v1123 = vld [vmem:[%s423 + $0x90] sm:$0x77]
      %v1124 = vld [vmem:[%s423 + $0x98] sm:$0x77]
      %v1125 = vld [vmem:[%s423 + $0xa0] sm:$0x77]
      %v1126 = vld [vmem:[%s423 + $0xa8] sm:$0x77]
      %v1127 = vld [vmem:[%s423 + $0xb0] sm:$0x77]
      %v1128 = vld [vmem:[%s423 + $0xb8] sm:$0x77]
      %v1129 = vld [vmem:[%s423 + $0xc0] sm:$0x77]
      %v1130 = vld [vmem:[%s423 + $0xc8] sm:$0x77]
      %v1131 = vld [vmem:[%s423 + $0xd0] sm:$0x77]
      %v1132 = vld [vmem:[%s423 + $0xd8] sm:$0x77]
      %v1133 = vld [vmem:[%s423 + $0xe0] sm:$0x77]
      %v1134 = vld [vmem:[%s423 + $0xe8] sm:$0x77]
      %v1135 = vld [vmem:[%s423 + $0xf0] sm:$0x77]
      %v1136 = vld [vmem:[%s423 + $0xf8] sm:$0x77]
      %v1137 = vld [vmem:[%s423 + $0x100] sm:$0x77]
      %v1138 = vld [vmem:[%s423 + $0x108] sm:$0x77]
      %v1139 = vld [vmem:[%s423 + $0x110] sm:$0x77]
      %v1140 = vld [vmem:[%s423 + $0x118] sm:$0x77]
      %v1141 = vld [vmem:[%s423 + $0x120] sm:$0x77]
      %v1142 = vld [vmem:[%s423 + $0x128] sm:$0x77]
      %v1143 = vld [vmem:[%s423 + $0x130] sm:$0x77]
      %v1144 = vld [vmem:[%s423 + $0x138] sm:$0x77]
      %v1145 = vld [vmem:[%s423 + $0x140] sm:$0x77]
      %v1146 = vld [vmem:[%s423 + $0x148] sm:$0x77]
      %v1147 = vld [vmem:[%s423 + $0x150] sm:$0x77]
      %v1148 = vld [vmem:[%s423 + $0x158] sm:$0x77]
      %v1149 = vld [vmem:[%s423 + $0x160] sm:$0x77]
      %v1150 = vld [vmem:[%s423 + $0x168] sm:$0x77]
      %v1151 = vld [vmem:[%s423 + $0x170] sm:$0x77]
      %v1152 = vld [vmem:[%s423 + $0x178] sm:$0x77]
      %v1153 = vld [vmem:[%s423 + $0x180] sm:$0x77]
      %v1154 = vld [vmem:[%s423 + $0x188] sm:$0x77]
      %v1155 = vld [vmem:[%s423 + $0x190] sm:$0x77]
      %v1156 = vld [vmem:[%s423 + $0x198] sm:$0x77]
      %v1157 = vld [vmem:[%s423 + $0x1a0] sm:$0x77]
      %v1158 = vld [vmem:[%s423 + $0x1a8] sm:$0x77]
      %v1159 = vld [vmem:[%s423 + $0x1b0] sm:$0x77]
      %v1160 = vld [vmem:[%s423 + $0x1b8] sm:$0x77]
      %v1161 = vld [vmem:[%s423 + $0x1c0] sm:$0x77]
      %v1162 = vld [vmem:[%s423 + $0x1c8] sm:$0x77]
      %v1163 = vld [vmem:[%s423 + $0x1d0] sm:$0x77]
      %v1164 = vld [vmem:[%s423 + $0x1d8] sm:$0x77]
      %v1165 = vld [vmem:[%s423 + $0x1e0] sm:$0x77]
      %v1166 = vld [vmem:[%s423 + $0x1e8] sm:$0x77]
      %v1167 = vld [vmem:[%s423 + $0x1f0] sm:$0x77]
      %v1168 = vld [vmem:[%s423 + $0x1f8] sm:$0x77]
      %v1185 = vlaneseq
      %v1186 = vshrl.u32 %v1185, 7
      %v1187 = vsub.s32 0, %v1186
      %v1188 = vrot.slane %v945, %v1187
      %v1189 = vlaneseq
      %v1190 = vshrl.u32 %v1189, 7
      %v1191 = vsub.s32 1, %v1190
      %v1192 = vrot.slane %v945, %v1191
      %v1193 = vlaneseq
      %v1194 = vshrl.u32 %v1193, 7
      %v1195 = vsub.s32 2, %v1194
      %v1196 = vrot.slane %v945, %v1195
      %v1197 = vlaneseq
      %v1198 = vshrl.u32 %v1197, 7
      %v1199 = vsub.s32 3, %v1198
      %v1200 = vrot.slane %v945, %v1199
      %v1201 = vlaneseq
      %v1202 = vshrl.u32 %v1201, 7
      %v1203 = vsub.s32 4, %v1202
      %v1204 = vrot.slane %v945, %v1203
      %v1205 = vlaneseq
      %v1206 = vshrl.u32 %v1205, 7
      %v1207 = vsub.s32 5, %v1206
      %v1208 = vrot.slane %v945, %v1207
      %v1209 = vlaneseq
      %v1210 = vshrl.u32 %v1209, 7
      %v1211 = vsub.s32 6, %v1210
      %v1212 = vrot.slane %v945, %v1211
      %v1213 = vlaneseq
      %v1214 = vshrl.u32 %v1213, 7
      %v1215 = vsub.s32 7, %v1214
      %v1216 = vrot.slane %v945, %v1215
      %v1217 = vlaneseq
      %v1218 = vshrl.u32 %v1217, 7
      %v1219 = vsub.s32 0, %v1218
      %v1220 = vrot.slane %v946, %v1219
      %v1221 = vlaneseq
      %v1222 = vshrl.u32 %v1221, 7
      %v1223 = vsub.s32 1, %v1222
      %v1224 = vrot.slane %v946, %v1223
      %v1225 = vlaneseq
      %v1226 = vshrl.u32 %v1225, 7
      %v1227 = vsub.s32 2, %v1226
      %v1228 = vrot.slane %v946, %v1227
      %v1229 = vlaneseq
      %v1230 = vshrl.u32 %v1229, 7
      %v1231 = vsub.s32 3, %v1230
      %v1232 = vrot.slane %v946, %v1231
      %v1233 = vlaneseq
      %v1234 = vshrl.u32 %v1233, 7
      %v1235 = vsub.s32 4, %v1234
      %v1236 = vrot.slane %v946, %v1235
      %v1237 = vlaneseq
      %v1238 = vshrl.u32 %v1237, 7
      %v1239 = vsub.s32 5, %v1238
      %v1240 = vrot.slane %v946, %v1239
      %v1241 = vlaneseq
      %v1242 = vshrl.u32 %v1241, 7
      %v1243 = vsub.s32 6, %v1242
      %v1244 = vrot.slane %v946, %v1243
      %v1245 = vlaneseq
      %v1246 = vshrl.u32 %v1245, 7
      %v1247 = vsub.s32 7, %v1246
      %v1248 = vrot.slane %v946, %v1247
      %v1249 = vlaneseq
      %v1250 = vshrl.u32 %v1249, 7
      %v1251 = vsub.s32 0, %v1250
      %v1252 = vrot.slane %v947, %v1251
      %v1253 = vlaneseq
      %v1254 = vshrl.u32 %v1253, 7
      %v1255 = vsub.s32 1, %v1254
      %v1256 = vrot.slane %v947, %v1255
      %v1257 = vlaneseq
      %v1258 = vshrl.u32 %v1257, 7
      %v1259 = vsub.s32 2, %v1258
      %v1260 = vrot.slane %v947, %v1259
      %v1261 = vlaneseq
      %v1262 = vshrl.u32 %v1261, 7
      %v1263 = vsub.s32 3, %v1262
      %v1264 = vrot.slane %v947, %v1263
      %v1265 = vlaneseq
      %v1266 = vshrl.u32 %v1265, 7
      %v1267 = vsub.s32 4, %v1266
      %v1268 = vrot.slane %v947, %v1267
      %v1269 = vlaneseq
      %v1270 = vshrl.u32 %v1269, 7
      %v1271 = vsub.s32 5, %v1270
      %v1272 = vrot.slane %v947, %v1271
      %v1273 = vlaneseq
      %v1274 = vshrl.u32 %v1273, 7
      %v1275 = vsub.s32 6, %v1274
      %v1276 = vrot.slane %v947, %v1275
      %v1277 = vlaneseq
      %v1278 = vshrl.u32 %v1277, 7
      %v1279 = vsub.s32 7, %v1278
      %v1280 = vrot.slane %v947, %v1279
      %v1281 = vlaneseq
      %v1282 = vshrl.u32 %v1281, 7
      %v1283 = vsub.s32 0, %v1282
      %v1284 = vrot.slane %v948, %v1283
      %v1285 = vlaneseq
      %v1286 = vshrl.u32 %v1285, 7
      %v1287 = vsub.s32 1, %v1286
      %v1288 = vrot.slane %v948, %v1287
      %v1289 = vlaneseq
      %v1290 = vshrl.u32 %v1289, 7
      %v1291 = vsub.s32 2, %v1290
      %v1292 = vrot.slane %v948, %v1291
      %v1293 = vlaneseq
      %v1294 = vshrl.u32 %v1293, 7
      %v1295 = vsub.s32 3, %v1294
      %v1296 = vrot.slane %v948, %v1295
      %v1297 = vlaneseq
      %v1298 = vshrl.u32 %v1297, 7
      %v1299 = vsub.s32 4, %v1298
      %v1300 = vrot.slane %v948, %v1299
      %v1301 = vlaneseq
      %v1302 = vshrl.u32 %v1301, 7
      %v1303 = vsub.s32 5, %v1302
      %v1304 = vrot.slane %v948, %v1303
      %v1305 = vlaneseq
      %v1306 = vshrl.u32 %v1305, 7
      %v1307 = vsub.s32 6, %v1306
      %v1308 = vrot.slane %v948, %v1307
      %v1309 = vlaneseq
      %v1310 = vshrl.u32 %v1309, 7
      %v1311 = vsub.s32 7, %v1310
      %v1312 = vrot.slane %v948, %v1311
      %v1313 = vlaneseq
      %v1314 = vshrl.u32 %v1313, 7
      %v1315 = vsub.s32 0, %v1314
      %v1316 = vrot.slane %v949, %v1315
      %v1317 = vlaneseq
      %v1318 = vshrl.u32 %v1317, 7
      %v1319 = vsub.s32 1, %v1318
      %v1320 = vrot.slane %v949, %v1319
      %v1321 = vlaneseq
      %v1322 = vshrl.u32 %v1321, 7
      %v1323 = vsub.s32 2, %v1322
      %v1324 = vrot.slane %v949, %v1323
      %v1325 = vlaneseq
      %v1326 = vshrl.u32 %v1325, 7
      %v1327 = vsub.s32 3, %v1326
      %v1328 = vrot.slane %v949, %v1327
      %v1329 = vlaneseq
      %v1330 = vshrl.u32 %v1329, 7
      %v1331 = vsub.s32 4, %v1330
      %v1332 = vrot.slane %v949, %v1331
      %v1333 = vlaneseq
      %v1334 = vshrl.u32 %v1333, 7
      %v1335 = vsub.s32 5, %v1334
      %v1336 = vrot.slane %v949, %v1335
      %v1337 = vlaneseq
      %v1338 = vshrl.u32 %v1337, 7
      %v1339 = vsub.s32 6, %v1338
      %v1340 = vrot.slane %v949, %v1339
      %v1341 = vlaneseq
      %v1342 = vshrl.u32 %v1341, 7
      %v1343 = vsub.s32 7, %v1342
      %v1344 = vrot.slane %v949, %v1343
      %v1345 = vlaneseq
      %v1346 = vshrl.u32 %v1345, 7
      %v1347 = vsub.s32 0, %v1346
      %v1348 = vrot.slane %v950, %v1347
      %v1349 = vlaneseq
      %v1350 = vshrl.u32 %v1349, 7
      %v1351 = vsub.s32 1, %v1350
      %v1352 = vrot.slane %v950, %v1351
      %v1353 = vlaneseq
      %v1354 = vshrl.u32 %v1353, 7
      %v1355 = vsub.s32 2, %v1354
      %v1356 = vrot.slane %v950, %v1355
      %v1357 = vlaneseq
      %v1358 = vshrl.u32 %v1357, 7
      %v1359 = vsub.s32 3, %v1358
      %v1360 = vrot.slane %v950, %v1359
      %v1361 = vlaneseq
      %v1362 = vshrl.u32 %v1361, 7
      %v1363 = vsub.s32 4, %v1362
      %v1364 = vrot.slane %v950, %v1363
      %v1365 = vlaneseq
      %v1366 = vshrl.u32 %v1365, 7
      %v1367 = vsub.s32 5, %v1366
      %v1368 = vrot.slane %v950, %v1367
      %v1369 = vlaneseq
      %v1370 = vshrl.u32 %v1369, 7
      %v1371 = vsub.s32 6, %v1370
      %v1372 = vrot.slane %v950, %v1371
      %v1373 = vlaneseq
      %v1374 = vshrl.u32 %v1373, 7
      %v1375 = vsub.s32 7, %v1374
      %v1376 = vrot.slane %v950, %v1375
      %v1377 = vlaneseq
      %v1378 = vshrl.u32 %v1377, 7
      %v1379 = vsub.s32 0, %v1378
      %v1380 = vrot.slane %v951, %v1379
      %v1381 = vlaneseq
      %v1382 = vshrl.u32 %v1381, 7
      %v1383 = vsub.s32 1, %v1382
      %v1384 = vrot.slane %v951, %v1383
      %v1385 = vlaneseq
      %v1386 = vshrl.u32 %v1385, 7
      %v1387 = vsub.s32 2, %v1386
      %v1388 = vrot.slane %v951, %v1387
      %v1389 = vlaneseq
      %v1390 = vshrl.u32 %v1389, 7
      %v1391 = vsub.s32 3, %v1390
      %v1392 = vrot.slane %v951, %v1391
      %v1393 = vlaneseq
      %v1394 = vshrl.u32 %v1393, 7
      %v1395 = vsub.s32 4, %v1394
      %v1396 = vrot.slane %v951, %v1395
      %v1397 = vlaneseq
      %v1398 = vshrl.u32 %v1397, 7
      %v1399 = vsub.s32 5, %v1398
      %v1400 = vrot.slane %v951, %v1399
      %v1401 = vlaneseq
      %v1402 = vshrl.u32 %v1401, 7
      %v1403 = vsub.s32 6, %v1402
      %v1404 = vrot.slane %v951, %v1403
      %v1405 = vlaneseq
      %v1406 = vshrl.u32 %v1405, 7
      %v1407 = vsub.s32 7, %v1406
      %v1408 = vrot.slane %v951, %v1407
      %v1409 = vlaneseq
      %v1410 = vshrl.u32 %v1409, 7
      %v1411 = vsub.s32 0, %v1410
      %v1412 = vrot.slane %v952, %v1411
      %v1413 = vlaneseq
      %v1414 = vshrl.u32 %v1413, 7
      %v1415 = vsub.s32 1, %v1414
      %v1416 = vrot.slane %v952, %v1415
      %v1417 = vlaneseq
      %v1418 = vshrl.u32 %v1417, 7
      %v1419 = vsub.s32 2, %v1418
      %v1420 = vrot.slane %v952, %v1419
      %v1421 = vlaneseq
      %v1422 = vshrl.u32 %v1421, 7
      %v1423 = vsub.s32 3, %v1422
      %v1424 = vrot.slane %v952, %v1423
      %v1425 = vlaneseq
      %v1426 = vshrl.u32 %v1425, 7
      %v1427 = vsub.s32 4, %v1426
      %v1428 = vrot.slane %v952, %v1427
      %v1429 = vlaneseq
      %v1430 = vshrl.u32 %v1429, 7
      %v1431 = vsub.s32 5, %v1430
      %v1432 = vrot.slane %v952, %v1431
      %v1433 = vlaneseq
      %v1434 = vshrl.u32 %v1433, 7
      %v1435 = vsub.s32 6, %v1434
      %v1436 = vrot.slane %v952, %v1435
      %v1437 = vlaneseq
      %v1438 = vshrl.u32 %v1437, 7
      %v1439 = vsub.s32 7, %v1438
      %v1440 = vrot.slane %v952, %v1439
      %v1441 = vlaneseq
      %v1442 = vshrl.u32 %v1441, 7
      %v1443 = vsub.s32 0, %v1442
      %v1444 = vrot.slane %v953, %v1443
      %v1445 = vlaneseq
      %v1446 = vshrl.u32 %v1445, 7
      %v1447 = vsub.s32 1, %v1446
      %v1448 = vrot.slane %v953, %v1447
      %v1449 = vlaneseq
      %v1450 = vshrl.u32 %v1449, 7
      %v1451 = vsub.s32 2, %v1450
      %v1452 = vrot.slane %v953, %v1451
      %v1453 = vlaneseq
      %v1454 = vshrl.u32 %v1453, 7
      %v1455 = vsub.s32 3, %v1454
      %v1456 = vrot.slane %v953, %v1455
      %v1457 = vlaneseq
      %v1458 = vshrl.u32 %v1457, 7
      %v1459 = vsub.s32 4, %v1458
      %v1460 = vrot.slane %v953, %v1459
      %v1461 = vlaneseq
      %v1462 = vshrl.u32 %v1461, 7
      %v1463 = vsub.s32 5, %v1462
      %v1464 = vrot.slane %v953, %v1463
      %v1465 = vlaneseq
      %v1466 = vshrl.u32 %v1465, 7
      %v1467 = vsub.s32 6, %v1466
      %v1468 = vrot.slane %v953, %v1467
      %v1469 = vlaneseq
      %v1470 = vshrl.u32 %v1469, 7
      %v1471 = vsub.s32 7, %v1470
      %v1472 = vrot.slane %v953, %v1471
      %v1473 = vlaneseq
      %v1474 = vshrl.u32 %v1473, 7
      %v1475 = vsub.s32 0, %v1474
      %v1476 = vrot.slane %v954, %v1475
      %v1477 = vlaneseq
      %v1478 = vshrl.u32 %v1477, 7
      %v1479 = vsub.s32 1, %v1478
      %v1480 = vrot.slane %v954, %v1479
      %v1481 = vlaneseq
      %v1482 = vshrl.u32 %v1481, 7
      %v1483 = vsub.s32 2, %v1482
      %v1484 = vrot.slane %v954, %v1483
      %v1485 = vlaneseq
      %v1486 = vshrl.u32 %v1485, 7
      %v1487 = vsub.s32 3, %v1486
      %v1488 = vrot.slane %v954, %v1487
      %v1489 = vlaneseq
      %v1490 = vshrl.u32 %v1489, 7
      %v1491 = vsub.s32 4, %v1490
      %v1492 = vrot.slane %v954, %v1491
      %v1493 = vlaneseq
      %v1494 = vshrl.u32 %v1493, 7
      %v1495 = vsub.s32 5, %v1494
      %v1496 = vrot.slane %v954, %v1495
      %v1497 = vlaneseq
      %v1498 = vshrl.u32 %v1497, 7
      %v1499 = vsub.s32 6, %v1498
      %v1500 = vrot.slane %v954, %v1499
      %v1501 = vlaneseq
      %v1502 = vshrl.u32 %v1501, 7
      %v1503 = vsub.s32 7, %v1502
      %v1504 = vrot.slane %v954, %v1503
      %v1505 = vlaneseq
      %v1506 = vshrl.u32 %v1505, 7
      %v1507 = vsub.s32 0, %v1506
      %v1508 = vrot.slane %v955, %v1507
      %v1509 = vlaneseq
      %v1510 = vshrl.u32 %v1509, 7
      %v1511 = vsub.s32 1, %v1510
      %v1512 = vrot.slane %v955, %v1511
      %v1513 = vlaneseq
      %v1514 = vshrl.u32 %v1513, 7
      %v1515 = vsub.s32 2, %v1514
      %v1516 = vrot.slane %v955, %v1515
      %v1517 = vlaneseq
      %v1518 = vshrl.u32 %v1517, 7
      %v1519 = vsub.s32 3, %v1518
      %v1520 = vrot.slane %v955, %v1519
      %v1521 = vlaneseq
      %v1522 = vshrl.u32 %v1521, 7
      %v1523 = vsub.s32 4, %v1522
      %v1524 = vrot.slane %v955, %v1523
      %v1525 = vlaneseq
      %v1526 = vshrl.u32 %v1525, 7
      %v1527 = vsub.s32 5, %v1526
      %v1528 = vrot.slane %v955, %v1527
      %v1529 = vlaneseq
      %v1530 = vshrl.u32 %v1529, 7
      %v1531 = vsub.s32 6, %v1530
      %v1532 = vrot.slane %v955, %v1531
      %v1533 = vlaneseq
      %v1534 = vshrl.u32 %v1533, 7
      %v1535 = vsub.s32 7, %v1534
      %v1536 = vrot.slane %v955, %v1535
      %v1537 = vlaneseq
      %v1538 = vshrl.u32 %v1537, 7
      %v1539 = vsub.s32 0, %v1538
      %v1540 = vrot.slane %v956, %v1539
      %v1541 = vlaneseq
      %v1542 = vshrl.u32 %v1541, 7
      %v1543 = vsub.s32 1, %v1542
      %v1544 = vrot.slane %v956, %v1543
      %v1545 = vlaneseq
      %v1546 = vshrl.u32 %v1545, 7
      %v1547 = vsub.s32 2, %v1546
      %v1548 = vrot.slane %v956, %v1547
      %v1549 = vlaneseq
      %v1550 = vshrl.u32 %v1549, 7
      %v1551 = vsub.s32 3, %v1550
      %v1552 = vrot.slane %v956, %v1551
      %v1553 = vlaneseq
      %v1554 = vshrl.u32 %v1553, 7
      %v1555 = vsub.s32 4, %v1554
      %v1556 = vrot.slane %v956, %v1555
      %v1557 = vlaneseq
      %v1558 = vshrl.u32 %v1557, 7
      %v1559 = vsub.s32 5, %v1558
      %v1560 = vrot.slane %v956, %v1559
      %v1561 = vlaneseq
      %v1562 = vshrl.u32 %v1561, 7
      %v1563 = vsub.s32 6, %v1562
      %v1564 = vrot.slane %v956, %v1563
      %v1565 = vlaneseq
      %v1566 = vshrl.u32 %v1565, 7
      %v1567 = vsub.s32 7, %v1566
      %v1568 = vrot.slane %v956, %v1567
      %v1569 = vlaneseq
      %v1570 = vshrl.u32 %v1569, 7
      %v1571 = vsub.s32 0, %v1570
      %v1572 = vrot.slane %v957, %v1571
      %v1573 = vlaneseq
      %v1574 = vshrl.u32 %v1573, 7
      %v1575 = vsub.s32 1, %v1574
      %v1576 = vrot.slane %v957, %v1575
      %v1577 = vlaneseq
      %v1578 = vshrl.u32 %v1577, 7
      %v1579 = vsub.s32 2, %v1578
      %v1580 = vrot.slane %v957, %v1579
      %v1581 = vlaneseq
      %v1582 = vshrl.u32 %v1581, 7
      %v1583 = vsub.s32 3, %v1582
      %v1584 = vrot.slane %v957, %v1583
      %v1585 = vlaneseq
      %v1586 = vshrl.u32 %v1585, 7
      %v1587 = vsub.s32 4, %v1586
      %v1588 = vrot.slane %v957, %v1587
      %v1589 = vlaneseq
      %v1590 = vshrl.u32 %v1589, 7
      %v1591 = vsub.s32 5, %v1590
      %v1592 = vrot.slane %v957, %v1591
      %v1593 = vlaneseq
      %v1594 = vshrl.u32 %v1593, 7
      %v1595 = vsub.s32 6, %v1594
      %v1596 = vrot.slane %v957, %v1595
      %v1597 = vlaneseq
      %v1598 = vshrl.u32 %v1597, 7
      %v1599 = vsub.s32 7, %v1598
      %v1600 = vrot.slane %v957, %v1599
      %v1601 = vlaneseq
      %v1602 = vshrl.u32 %v1601, 7
      %v1603 = vsub.s32 0, %v1602
      %v1604 = vrot.slane %v958, %v1603
      %v1605 = vlaneseq
      %v1606 = vshrl.u32 %v1605, 7
      %v1607 = vsub.s32 1, %v1606
      %v1608 = vrot.slane %v958, %v1607
      %v1609 = vlaneseq
      %v1610 = vshrl.u32 %v1609, 7
      %v1611 = vsub.s32 2, %v1610
      %v1612 = vrot.slane %v958, %v1611
      %v1613 = vlaneseq
      %v1614 = vshrl.u32 %v1613, 7
      %v1615 = vsub.s32 3, %v1614
      %v1616 = vrot.slane %v958, %v1615
      %v1617 = vlaneseq
      %v1618 = vshrl.u32 %v1617, 7
      %v1619 = vsub.s32 4, %v1618
      %v1620 = vrot.slane %v958, %v1619
      %v1621 = vlaneseq
      %v1622 = vshrl.u32 %v1621, 7
      %v1623 = vsub.s32 5, %v1622
      %v1624 = vrot.slane %v958, %v1623
      %v1625 = vlaneseq
      %v1626 = vshrl.u32 %v1625, 7
      %v1627 = vsub.s32 6, %v1626
      %v1628 = vrot.slane %v958, %v1627
      %v1629 = vlaneseq
      %v1630 = vshrl.u32 %v1629, 7
      %v1631 = vsub.s32 7, %v1630
      %v1632 = vrot.slane %v958, %v1631
      %v1633 = vlaneseq
      %v1634 = vshrl.u32 %v1633, 7
      %v1635 = vsub.s32 0, %v1634
      %v1636 = vrot.slane %v959, %v1635
      %v1637 = vlaneseq
      %v1638 = vshrl.u32 %v1637, 7
      %v1639 = vsub.s32 1, %v1638
      %v1640 = vrot.slane %v959, %v1639
      %v1641 = vlaneseq
      %v1642 = vshrl.u32 %v1641, 7
      %v1643 = vsub.s32 2, %v1642
      %v1644 = vrot.slane %v959, %v1643
      %v1645 = vlaneseq
      %v1646 = vshrl.u32 %v1645, 7
      %v1647 = vsub.s32 3, %v1646
      %v1648 = vrot.slane %v959, %v1647
      %v1649 = vlaneseq
      %v1650 = vshrl.u32 %v1649, 7
      %v1651 = vsub.s32 4, %v1650
      %v1652 = vrot.slane %v959, %v1651
      %v1653 = vlaneseq
      %v1654 = vshrl.u32 %v1653, 7
      %v1655 = vsub.s32 5, %v1654
      %v1656 = vrot.slane %v959, %v1655
      %v1657 = vlaneseq
      %v1658 = vshrl.u32 %v1657, 7
      %v1659 = vsub.s32 6, %v1658
      %v1660 = vrot.slane %v959, %v1659
      %v1661 = vlaneseq
      %v1662 = vshrl.u32 %v1661, 7
      %v1663 = vsub.s32 7, %v1662
      %v1664 = vrot.slane %v959, %v1663
      %v1665 = vlaneseq
      %v1666 = vshrl.u32 %v1665, 7
      %v1667 = vsub.s32 0, %v1666
      %v1668 = vrot.slane %v960, %v1667
      %v1669 = vlaneseq
      %v1670 = vshrl.u32 %v1669, 7
      %v1671 = vsub.s32 1, %v1670
      %v1672 = vrot.slane %v960, %v1671
      %v1673 = vlaneseq
      %v1674 = vshrl.u32 %v1673, 7
      %v1675 = vsub.s32 2, %v1674
      %v1676 = vrot.slane %v960, %v1675
      %v1677 = vlaneseq
      %v1678 = vshrl.u32 %v1677, 7
      %v1679 = vsub.s32 3, %v1678
      %v1680 = vrot.slane %v960, %v1679
      %v1681 = vlaneseq
      %v1682 = vshrl.u32 %v1681, 7
      %v1683 = vsub.s32 4, %v1682
      %v1684 = vrot.slane %v960, %v1683
      %v1685 = vlaneseq
      %v1686 = vshrl.u32 %v1685, 7
      %v1687 = vsub.s32 5, %v1686
      %v1688 = vrot.slane %v960, %v1687
      %v1689 = vlaneseq
      %v1690 = vshrl.u32 %v1689, 7
      %v1691 = vsub.s32 6, %v1690
      %v1692 = vrot.slane %v960, %v1691
      %v1693 = vlaneseq
      %v1694 = vshrl.u32 %v1693, 7
      %v1695 = vsub.s32 7, %v1694
      %v1696 = vrot.slane %v960, %v1695
      %v1889 = vcombine.high %v1105, %v1105
      %v1890 = vcombine.high %v1106, %v1106
      %v1891 = vcombine.high %v1107, %v1107
      %v1892 = vcombine.high %v1108, %v1108
      %v1893 = vcombine.high %v1109, %v1109
      %v1894 = vcombine.high %v1110, %v1110
      %v1895 = vcombine.high %v1111, %v1111
      %v1896 = vcombine.high %v1112, %v1112
      %v1897 = vcombine.high %v1113, %v1113
      %v1898 = vcombine.high %v1114, %v1114
      %v1899 = vcombine.high %v1115, %v1115
      %v1900 = vcombine.high %v1116, %v1116
      %v1901 = vcombine.high %v1117, %v1117
      %v1902 = vcombine.high %v1118, %v1118
      %v1903 = vcombine.high %v1119, %v1119
      %v1904 = vcombine.high %v1120, %v1120
      %v1905 = vcombine.high %v1121, %v1121
      %v1906 = vcombine.high %v1122, %v1122
      %v1907 = vcombine.high %v1123, %v1123
      %v1908 = vcombine.high %v1124, %v1124
      %v1909 = vcombine.high %v1125, %v1125
      %v1910 = vcombine.high %v1126, %v1126
      %v1911 = vcombine.high %v1127, %v1127
      %v1912 = vcombine.high %v1128, %v1128
      %v1913 = vcombine.high %v1129, %v1129
      %v1914 = vcombine.high %v1130, %v1130
      %v1915 = vcombine.high %v1131, %v1131
      %v1916 = vcombine.high %v1132, %v1132
      %v1917 = vcombine.high %v1133, %v1133
      %v1918 = vcombine.high %v1134, %v1134
      %v1919 = vcombine.high %v1135, %v1135
      %v1920 = vcombine.high %v1136, %v1136
      %v1921 = vcombine.high %v1137, %v1137
      %v1922 = vcombine.high %v1138, %v1138
      %v1923 = vcombine.high %v1139, %v1139
      %v1924 = vcombine.high %v1140, %v1140
      %v1925 = vcombine.high %v1141, %v1141
      %v1926 = vcombine.high %v1142, %v1142
      %v1927 = vcombine.high %v1143, %v1143
      %v1928 = vcombine.high %v1144, %v1144
      %v1929 = vcombine.high %v1145, %v1145
      %v1930 = vcombine.high %v1146, %v1146
      %v1931 = vcombine.high %v1147, %v1147
      %v1932 = vcombine.high %v1148, %v1148
      %v1933 = vcombine.high %v1149, %v1149
      %v1934 = vcombine.high %v1150, %v1150
      %v1935 = vcombine.high %v1151, %v1151
      %v1936 = vcombine.high %v1152, %v1152
      %v1937 = vcombine.high %v1153, %v1153
      %v1938 = vcombine.high %v1154, %v1154
      %v1939 = vcombine.high %v1155, %v1155
      %v1940 = vcombine.high %v1156, %v1156
      %v1941 = vcombine.high %v1157, %v1157
      %v1942 = vcombine.high %v1158, %v1158
      %v1943 = vcombine.high %v1159, %v1159
      %v1944 = vcombine.high %v1160, %v1160
      %v1945 = vcombine.high %v1161, %v1161
      %v1946 = vcombine.high %v1162, %v1162
      %v1947 = vcombine.high %v1163, %v1163
      %v1948 = vcombine.high %v1164, %v1164
      %v1949 = vcombine.high %v1165, %v1165
      %v1950 = vcombine.high %v1166, %v1166
      %v1951 = vcombine.high %v1167, %v1167
      %v1952 = vcombine.high %v1168, %v1168
      %v2017 = vmul.f32 %v1188, %v1105
      %v2018 = vmul.f32 %v1192, %v1889
      %v2019 = vmul.f32 %v1196, %v1106
      %v2020 = vmul.f32 %v1200, %v1890
      %v2021 = vmul.f32 %v1204, %v1107
      %v2022 = vmul.f32 %v1208, %v1891
      %v2023 = vmul.f32 %v1212, %v1108
      %v2024 = vmul.f32 %v1216, %v1892
      %v2025 = vmul.f32 %v1220, %v1109
      %v2026 = vmul.f32 %v1224, %v1893
      %v2027 = vmul.f32 %v1228, %v1110
      %v2028 = vmul.f32 %v1232, %v1894
      %v2029 = vmul.f32 %v1236, %v1111
      %v2030 = vmul.f32 %v1240, %v1895
      %v2031 = vmul.f32 %v1244, %v1112
      %v2032 = vmul.f32 %v1248, %v1896
      %v2033 = vmul.f32 %v1252, %v1113
      %v2034 = vmul.f32 %v1256, %v1897
      %v2035 = vmul.f32 %v1260, %v1114
      %v2036 = vmul.f32 %v1264, %v1898
      %v2037 = vmul.f32 %v1268, %v1115
      %v2038 = vmul.f32 %v1272, %v1899
      %v2039 = vmul.f32 %v1276, %v1116
      %v2040 = vmul.f32 %v1280, %v1900
      %v2041 = vmul.f32 %v1284, %v1117
      %v2042 = vmul.f32 %v1288, %v1901
      %v2043 = vmul.f32 %v1292, %v1118
      %v2044 = vmul.f32 %v1296, %v1902
      %v2045 = vmul.f32 %v1300, %v1119
      %v2046 = vmul.f32 %v1304, %v1903
      %v2047 = vmul.f32 %v1308, %v1120
      %v2048 = vmul.f32 %v1312, %v1904
      %v2049 = vmul.f32 %v1316, %v1121
      %v2050 = vmul.f32 %v1320, %v1905
      %v2051 = vmul.f32 %v1324, %v1122
      %v2052 = vmul.f32 %v1328, %v1906
      %v2053 = vmul.f32 %v1332, %v1123
      %v2054 = vmul.f32 %v1336, %v1907
      %v2055 = vmul.f32 %v1340, %v1124
      %v2056 = vmul.f32 %v1344, %v1908
      %v2057 = vmul.f32 %v1348, %v1125
      %v2058 = vmul.f32 %v1352, %v1909
      %v2059 = vmul.f32 %v1356, %v1126
      %v2060 = vmul.f32 %v1360, %v1910
      %v2061 = vmul.f32 %v1364, %v1127
      %v2062 = vmul.f32 %v1368, %v1911
      %v2063 = vmul.f32 %v1372, %v1128
      %v2064 = vmul.f32 %v1376, %v1912
      %v2065 = vmul.f32 %v1380, %v1129
      %v2066 = vmul.f32 %v1384, %v1913
      %v2067 = vmul.f32 %v1388, %v1130
      %v2068 = vmul.f32 %v1392, %v1914
      %v2069 = vmul.f32 %v1396, %v1131
      %v2070 = vmul.f32 %v1400, %v1915
      %v2071 = vmul.f32 %v1404, %v1132
      %v2072 = vmul.f32 %v1408, %v1916
      %v2073 = vmul.f32 %v1412, %v1133
      %v2074 = vmul.f32 %v1416, %v1917
      %v2075 = vmul.f32 %v1420, %v1134
      %v2076 = vmul.f32 %v1424, %v1918
      %v2077 = vmul.f32 %v1428, %v1135
      %v2078 = vmul.f32 %v1432, %v1919
      %v2079 = vmul.f32 %v1436, %v1136
      %v2080 = vmul.f32 %v1440, %v1920
      %v2081 = vmul.f32 %v1444, %v1137
      %v2082 = vmul.f32 %v1448, %v1921
      %v2083 = vmul.f32 %v1452, %v1138
      %v2084 = vmul.f32 %v1456, %v1922
      %v2085 = vmul.f32 %v1460, %v1139
      %v2086 = vmul.f32 %v1464, %v1923
      %v2087 = vmul.f32 %v1468, %v1140
      %v2088 = vmul.f32 %v1472, %v1924
      %v2089 = vmul.f32 %v1476, %v1141
      %v2090 = vmul.f32 %v1480, %v1925
      %v2091 = vmul.f32 %v1484, %v1142
      %v2092 = vmul.f32 %v1488, %v1926
      %v2093 = vmul.f32 %v1492, %v1143
      %v2094 = vmul.f32 %v1496, %v1927
      %v2095 = vmul.f32 %v1500, %v1144
      %v2096 = vmul.f32 %v1504, %v1928
      %v2097 = vmul.f32 %v1508, %v1145
      %v2098 = vmul.f32 %v1512, %v1929
      %v2099 = vmul.f32 %v1516, %v1146
      %v2100 = vmul.f32 %v1520, %v1930
      %v2101 = vmul.f32 %v1524, %v1147
      %v2102 = vmul.f32 %v1528, %v1931
      %v2103 = vmul.f32 %v1532, %v1148
      %v2104 = vmul.f32 %v1536, %v1932
      %v2105 = vmul.f32 %v1540, %v1149
      %v2106 = vmul.f32 %v1544, %v1933
      %v2107 = vmul.f32 %v1548, %v1150
      %v2108 = vmul.f32 %v1552, %v1934
      %v2109 = vmul.f32 %v1556, %v1151
      %v2110 = vmul.f32 %v1560, %v1935
      %v2111 = vmul.f32 %v1564, %v1152
      %v2112 = vmul.f32 %v1568, %v1936
      %v2113 = vmul.f32 %v1572, %v1153
      %v2114 = vmul.f32 %v1576, %v1937
      %v2115 = vmul.f32 %v1580, %v1154
      %v2116 = vmul.f32 %v1584, %v1938
      %v2117 = vmul.f32 %v1588, %v1155
      %v2118 = vmul.f32 %v1592, %v1939
      %v2119 = vmul.f32 %v1596, %v1156
      %v2120 = vmul.f32 %v1600, %v1940
      %v2121 = vmul.f32 %v1604, %v1157
      %v2122 = vmul.f32 %v1608, %v1941
      %v2123 = vmul.f32 %v1612, %v1158
      %v2124 = vmul.f32 %v1616, %v1942
      %v2125 = vmul.f32 %v1620, %v1159
      %v2126 = vmul.f32 %v1624, %v1943
      %v2127 = vmul.f32 %v1628, %v1160
      %v2128 = vmul.f32 %v1632, %v1944
      %v2129 = vmul.f32 %v1636, %v1161
      %v2130 = vmul.f32 %v1640, %v1945
      %v2131 = vmul.f32 %v1644, %v1162
      %v2132 = vmul.f32 %v1648, %v1946
      %v2133 = vmul.f32 %v1652, %v1163
      %v2134 = vmul.f32 %v1656, %v1947
      %v2135 = vmul.f32 %v1660, %v1164
      %v2136 = vmul.f32 %v1664, %v1948
      %v2137 = vmul.f32 %v1668, %v1165
      %v2138 = vmul.f32 %v1672, %v1949
      %v2139 = vmul.f32 %v1676, %v1166
      %v2140 = vmul.f32 %v1680, %v1950
      %v2141 = vmul.f32 %v1684, %v1167
      %v2142 = vmul.f32 %v1688, %v1951
      %v2143 = vmul.f32 %v1692, %v1168
      %v2144 = vmul.f32 %v1696, %v1952
      %v2145 = vld [vmem:[%s433] sm:$0x77]
      %v2146 = vld [vmem:[%s433 + $0x8] sm:$0x77]
      %v2147 = vld [vmem:[%s433 + $0x10] sm:$0x77]
      %v2148 = vld [vmem:[%s433 + $0x18] sm:$0x77]
      %v2149 = vld [vmem:[%s433 + $0x20] sm:$0x77]
      %v2150 = vld [vmem:[%s433 + $0x28] sm:$0x77]
      %v2151 = vld [vmem:[%s433 + $0x30] sm:$0x77]
      %v2152 = vld [vmem:[%s433 + $0x38] sm:$0x77]
      %v2153 = vld [vmem:[%s433 + $0x40] sm:$0x77]
      %v2154 = vld [vmem:[%s433 + $0x48] sm:$0x77]
      %v2155 = vld [vmem:[%s433 + $0x50] sm:$0x77]
      %v2156 = vld [vmem:[%s433 + $0x58] sm:$0x77]
      %v2157 = vld [vmem:[%s433 + $0x60] sm:$0x77]
      %v2158 = vld [vmem:[%s433 + $0x68] sm:$0x77]
      %v2159 = vld [vmem:[%s433 + $0x70] sm:$0x77]
      %v2160 = vld [vmem:[%s433 + $0x78] sm:$0x77]
      %v2161 = vld [vmem:[%s433 + $0x80] sm:$0x77]
      %v2162 = vld [vmem:[%s433 + $0x88] sm:$0x77]
      %v2163 = vld [vmem:[%s433 + $0x90] sm:$0x77]
      %v2164 = vld [vmem:[%s433 + $0x98] sm:$0x77]
      %v2165 = vld [vmem:[%s433 + $0xa0] sm:$0x77]
      %v2166 = vld [vmem:[%s433 + $0xa8] sm:$0x77]
      %v2167 = vld [vmem:[%s433 + $0xb0] sm:$0x77]
      %v2168 = vld [vmem:[%s433 + $0xb8] sm:$0x77]
      %v2169 = vld [vmem:[%s433 + $0xc0] sm:$0x77]
      %v2170 = vld [vmem:[%s433 + $0xc8] sm:$0x77]
      %v2171 = vld [vmem:[%s433 + $0xd0] sm:$0x77]
      %v2172 = vld [vmem:[%s433 + $0xd8] sm:$0x77]
      %v2173 = vld [vmem:[%s433 + $0xe0] sm:$0x77]
      %v2174 = vld [vmem:[%s433 + $0xe8] sm:$0x77]
      %v2175 = vld [vmem:[%s433 + $0xf0] sm:$0x77]
      %v2176 = vld [vmem:[%s433 + $0xf8] sm:$0x77]
      %v2177 = vld [vmem:[%s433 + $0x100] sm:$0x77]
      %v2178 = vld [vmem:[%s433 + $0x108] sm:$0x77]
      %v2179 = vld [vmem:[%s433 + $0x110] sm:$0x77]
      %v2180 = vld [vmem:[%s433 + $0x118] sm:$0x77]
      %v2181 = vld [vmem:[%s433 + $0x120] sm:$0x77]
      %v2182 = vld [vmem:[%s433 + $0x128] sm:$0x77]
      %v2183 = vld [vmem:[%s433 + $0x130] sm:$0x77]
      %v2184 = vld [vmem:[%s433 + $0x138] sm:$0x77]
      %v2185 = vld [vmem:[%s433 + $0x140] sm:$0x77]
      %v2186 = vld [vmem:[%s433 + $0x148] sm:$0x77]
      %v2187 = vld [vmem:[%s433 + $0x150] sm:$0x77]
      %v2188 = vld [vmem:[%s433 + $0x158] sm:$0x77]
      %v2189 = vld [vmem:[%s433 + $0x160] sm:$0x77]
      %v2190 = vld [vmem:[%s433 + $0x168] sm:$0x77]
      %v2191 = vld [vmem:[%s433 + $0x170] sm:$0x77]
      %v2192 = vld [vmem:[%s433 + $0x178] sm:$0x77]
      %v2193 = vld [vmem:[%s433 + $0x180] sm:$0x77]
      %v2194 = vld [vmem:[%s433 + $0x188] sm:$0x77]
      %v2195 = vld [vmem:[%s433 + $0x190] sm:$0x77]
      %v2196 = vld [vmem:[%s433 + $0x198] sm:$0x77]
      %v2197 = vld [vmem:[%s433 + $0x1a0] sm:$0x77]
      %v2198 = vld [vmem:[%s433 + $0x1a8] sm:$0x77]
      %v2199 = vld [vmem:[%s433 + $0x1b0] sm:$0x77]
      %v2200 = vld [vmem:[%s433 + $0x1b8] sm:$0x77]
      %v2201 = vld [vmem:[%s433 + $0x1c0] sm:$0x77]
      %v2202 = vld [vmem:[%s433 + $0x1c8] sm:$0x77]
      %v2203 = vld [vmem:[%s433 + $0x1d0] sm:$0x77]
      %v2204 = vld [vmem:[%s433 + $0x1d8] sm:$0x77]
      %v2205 = vld [vmem:[%s433 + $0x1e0] sm:$0x77]
      %v2206 = vld [vmem:[%s433 + $0x1e8] sm:$0x77]
      %v2207 = vld [vmem:[%s433 + $0x1f0] sm:$0x77]
      %v2208 = vld [vmem:[%s433 + $0x1f8] sm:$0x77]
      %v2225 = vlaneseq
      %v2226 = vshrl.u32 %v2225, 7
      %v2227 = vsub.s32 0, %v2226
      %v2228 = vrot.slane %v993, %v2227
      %v2229 = vlaneseq
      %v2230 = vshrl.u32 %v2229, 7
      %v2231 = vsub.s32 1, %v2230
      %v2232 = vrot.slane %v993, %v2231
      %v2233 = vlaneseq
      %v2234 = vshrl.u32 %v2233, 7
      %v2235 = vsub.s32 2, %v2234
      %v2236 = vrot.slane %v993, %v2235
      %v2237 = vlaneseq
      %v2238 = vshrl.u32 %v2237, 7
      %v2239 = vsub.s32 3, %v2238
      %v2240 = vrot.slane %v993, %v2239
      %v2241 = vlaneseq
      %v2242 = vshrl.u32 %v2241, 7
      %v2243 = vsub.s32 4, %v2242
      %v2244 = vrot.slane %v993, %v2243
      %v2245 = vlaneseq
      %v2246 = vshrl.u32 %v2245, 7
      %v2247 = vsub.s32 5, %v2246
      %v2248 = vrot.slane %v993, %v2247
      %v2249 = vlaneseq
      %v2250 = vshrl.u32 %v2249, 7
      %v2251 = vsub.s32 6, %v2250
      %v2252 = vrot.slane %v993, %v2251
      %v2253 = vlaneseq
      %v2254 = vshrl.u32 %v2253, 7
      %v2255 = vsub.s32 7, %v2254
      %v2256 = vrot.slane %v993, %v2255
      %v2257 = vlaneseq
      %v2258 = vshrl.u32 %v2257, 7
      %v2259 = vsub.s32 0, %v2258
      %v2260 = vrot.slane %v994, %v2259
      %v2261 = vlaneseq
      %v2262 = vshrl.u32 %v2261, 7
      %v2263 = vsub.s32 1, %v2262
      %v2264 = vrot.slane %v994, %v2263
      %v2265 = vlaneseq
      %v2266 = vshrl.u32 %v2265, 7
      %v2267 = vsub.s32 2, %v2266
      %v2268 = vrot.slane %v994, %v2267
      %v2269 = vlaneseq
      %v2270 = vshrl.u32 %v2269, 7
      %v2271 = vsub.s32 3, %v2270
      %v2272 = vrot.slane %v994, %v2271
      %v2273 = vlaneseq
      %v2274 = vshrl.u32 %v2273, 7
      %v2275 = vsub.s32 4, %v2274
      %v2276 = vrot.slane %v994, %v2275
      %v2277 = vlaneseq
      %v2278 = vshrl.u32 %v2277, 7
      %v2279 = vsub.s32 5, %v2278
      %v2280 = vrot.slane %v994, %v2279
      %v2281 = vlaneseq
      %v2282 = vshrl.u32 %v2281, 7
      %v2283 = vsub.s32 6, %v2282
      %v2284 = vrot.slane %v994, %v2283
      %v2285 = vlaneseq
      %v2286 = vshrl.u32 %v2285, 7
      %v2287 = vsub.s32 7, %v2286
      %v2288 = vrot.slane %v994, %v2287
      %v2289 = vlaneseq
      %v2290 = vshrl.u32 %v2289, 7
      %v2291 = vsub.s32 0, %v2290
      %v2292 = vrot.slane %v995, %v2291
      %v2293 = vlaneseq
      %v2294 = vshrl.u32 %v2293, 7
      %v2295 = vsub.s32 1, %v2294
      %v2296 = vrot.slane %v995, %v2295
      %v2297 = vlaneseq
      %v2298 = vshrl.u32 %v2297, 7
      %v2299 = vsub.s32 2, %v2298
      %v2300 = vrot.slane %v995, %v2299
      %v2301 = vlaneseq
      %v2302 = vshrl.u32 %v2301, 7
      %v2303 = vsub.s32 3, %v2302
      %v2304 = vrot.slane %v995, %v2303
      %v2305 = vlaneseq
      %v2306 = vshrl.u32 %v2305, 7
      %v2307 = vsub.s32 4, %v2306
      %v2308 = vrot.slane %v995, %v2307
      %v2309 = vlaneseq
      %v2310 = vshrl.u32 %v2309, 7
      %v2311 = vsub.s32 5, %v2310
      %v2312 = vrot.slane %v995, %v2311
      %v2313 = vlaneseq
      %v2314 = vshrl.u32 %v2313, 7
      %v2315 = vsub.s32 6, %v2314
      %v2316 = vrot.slane %v995, %v2315
      %v2317 = vlaneseq
      %v2318 = vshrl.u32 %v2317, 7
      %v2319 = vsub.s32 7, %v2318
      %v2320 = vrot.slane %v995, %v2319
      %v2321 = vlaneseq
      %v2322 = vshrl.u32 %v2321, 7
      %v2323 = vsub.s32 0, %v2322
      %v2324 = vrot.slane %v996, %v2323
      %v2325 = vlaneseq
      %v2326 = vshrl.u32 %v2325, 7
      %v2327 = vsub.s32 1, %v2326
      %v2328 = vrot.slane %v996, %v2327
      %v2329 = vlaneseq
      %v2330 = vshrl.u32 %v2329, 7
      %v2331 = vsub.s32 2, %v2330
      %v2332 = vrot.slane %v996, %v2331
      %v2333 = vlaneseq
      %v2334 = vshrl.u32 %v2333, 7
      %v2335 = vsub.s32 3, %v2334
      %v2336 = vrot.slane %v996, %v2335
      %v2337 = vlaneseq
      %v2338 = vshrl.u32 %v2337, 7
      %v2339 = vsub.s32 4, %v2338
      %v2340 = vrot.slane %v996, %v2339
      %v2341 = vlaneseq
      %v2342 = vshrl.u32 %v2341, 7
      %v2343 = vsub.s32 5, %v2342
      %v2344 = vrot.slane %v996, %v2343
      %v2345 = vlaneseq
      %v2346 = vshrl.u32 %v2345, 7
      %v2347 = vsub.s32 6, %v2346
      %v2348 = vrot.slane %v996, %v2347
      %v2349 = vlaneseq
      %v2350 = vshrl.u32 %v2349, 7
      %v2351 = vsub.s32 7, %v2350
      %v2352 = vrot.slane %v996, %v2351
      %v2353 = vlaneseq
      %v2354 = vshrl.u32 %v2353, 7
      %v2355 = vsub.s32 0, %v2354
      %v2356 = vrot.slane %v997, %v2355
      %v2357 = vlaneseq
      %v2358 = vshrl.u32 %v2357, 7
      %v2359 = vsub.s32 1, %v2358
      %v2360 = vrot.slane %v997, %v2359
      %v2361 = vlaneseq
      %v2362 = vshrl.u32 %v2361, 7
      %v2363 = vsub.s32 2, %v2362
      %v2364 = vrot.slane %v997, %v2363
      %v2365 = vlaneseq
      %v2366 = vshrl.u32 %v2365, 7
      %v2367 = vsub.s32 3, %v2366
      %v2368 = vrot.slane %v997, %v2367
      %v2369 = vlaneseq
      %v2370 = vshrl.u32 %v2369, 7
      %v2371 = vsub.s32 4, %v2370
      %v2372 = vrot.slane %v997, %v2371
      %v2373 = vlaneseq
      %v2374 = vshrl.u32 %v2373, 7
      %v2375 = vsub.s32 5, %v2374
      %v2376 = vrot.slane %v997, %v2375
      %v2377 = vlaneseq
      %v2378 = vshrl.u32 %v2377, 7
      %v2379 = vsub.s32 6, %v2378
      %v2380 = vrot.slane %v997, %v2379
      %v2381 = vlaneseq
      %v2382 = vshrl.u32 %v2381, 7
      %v2383 = vsub.s32 7, %v2382
      %v2384 = vrot.slane %v997, %v2383
      %v2385 = vlaneseq
      %v2386 = vshrl.u32 %v2385, 7
      %v2387 = vsub.s32 0, %v2386
      %v2388 = vrot.slane %v998, %v2387
      %v2389 = vlaneseq
      %v2390 = vshrl.u32 %v2389, 7
      %v2391 = vsub.s32 1, %v2390
      %v2392 = vrot.slane %v998, %v2391
      %v2393 = vlaneseq
      %v2394 = vshrl.u32 %v2393, 7
      %v2395 = vsub.s32 2, %v2394
      %v2396 = vrot.slane %v998, %v2395
      %v2397 = vlaneseq
      %v2398 = vshrl.u32 %v2397, 7
      %v2399 = vsub.s32 3, %v2398
      %v2400 = vrot.slane %v998, %v2399
      %v2401 = vlaneseq
      %v2402 = vshrl.u32 %v2401, 7
      %v2403 = vsub.s32 4, %v2402
      %v2404 = vrot.slane %v998, %v2403
      %v2405 = vlaneseq
      %v2406 = vshrl.u32 %v2405, 7
      %v2407 = vsub.s32 5, %v2406
      %v2408 = vrot.slane %v998, %v2407
      %v2409 = vlaneseq
      %v2410 = vshrl.u32 %v2409, 7
      %v2411 = vsub.s32 6, %v2410
      %v2412 = vrot.slane %v998, %v2411
      %v2413 = vlaneseq
      %v2414 = vshrl.u32 %v2413, 7
      %v2415 = vsub.s32 7, %v2414
      %v2416 = vrot.slane %v998, %v2415
      %v2417 = vlaneseq
      %v2418 = vshrl.u32 %v2417, 7
      %v2419 = vsub.s32 0, %v2418
      %v2420 = vrot.slane %v999, %v2419
      %v2421 = vlaneseq
      %v2422 = vshrl.u32 %v2421, 7
      %v2423 = vsub.s32 1, %v2422
      %v2424 = vrot.slane %v999, %v2423
      %v2425 = vlaneseq
      %v2426 = vshrl.u32 %v2425, 7
      %v2427 = vsub.s32 2, %v2426
      %v2428 = vrot.slane %v999, %v2427
      %v2429 = vlaneseq
      %v2430 = vshrl.u32 %v2429, 7
      %v2431 = vsub.s32 3, %v2430
      %v2432 = vrot.slane %v999, %v2431
      %v2433 = vlaneseq
      %v2434 = vshrl.u32 %v2433, 7
      %v2435 = vsub.s32 4, %v2434
      %v2436 = vrot.slane %v999, %v2435
      %v2437 = vlaneseq
      %v2438 = vshrl.u32 %v2437, 7
      %v2439 = vsub.s32 5, %v2438
      %v2440 = vrot.slane %v999, %v2439
      %v2441 = vlaneseq
      %v2442 = vshrl.u32 %v2441, 7
      %v2443 = vsub.s32 6, %v2442
      %v2444 = vrot.slane %v999, %v2443
      %v2445 = vlaneseq
      %v2446 = vshrl.u32 %v2445, 7
      %v2447 = vsub.s32 7, %v2446
      %v2448 = vrot.slane %v999, %v2447
      %v2449 = vlaneseq
      %v2450 = vshrl.u32 %v2449, 7
      %v2451 = vsub.s32 0, %v2450
      %v2452 = vrot.slane %v1000, %v2451
      %v2453 = vlaneseq
      %v2454 = vshrl.u32 %v2453, 7
      %v2455 = vsub.s32 1, %v2454
      %v2456 = vrot.slane %v1000, %v2455
      %v2457 = vlaneseq
      %v2458 = vshrl.u32 %v2457, 7
      %v2459 = vsub.s32 2, %v2458
      %v2460 = vrot.slane %v1000, %v2459
      %v2461 = vlaneseq
      %v2462 = vshrl.u32 %v2461, 7
      %v2463 = vsub.s32 3, %v2462
      %v2464 = vrot.slane %v1000, %v2463
      %v2465 = vlaneseq
      %v2466 = vshrl.u32 %v2465, 7
      %v2467 = vsub.s32 4, %v2466
      %v2468 = vrot.slane %v1000, %v2467
      %v2469 = vlaneseq
      %v2470 = vshrl.u32 %v2469, 7
      %v2471 = vsub.s32 5, %v2470
      %v2472 = vrot.slane %v1000, %v2471
      %v2473 = vlaneseq
      %v2474 = vshrl.u32 %v2473, 7
      %v2475 = vsub.s32 6, %v2474
      %v2476 = vrot.slane %v1000, %v2475
      %v2477 = vlaneseq
      %v2478 = vshrl.u32 %v2477, 7
      %v2479 = vsub.s32 7, %v2478
      %v2480 = vrot.slane %v1000, %v2479
      %v2481 = vlaneseq
      %v2482 = vshrl.u32 %v2481, 7
      %v2483 = vsub.s32 0, %v2482
      %v2484 = vrot.slane %v1001, %v2483
      %v2485 = vlaneseq
      %v2486 = vshrl.u32 %v2485, 7
      %v2487 = vsub.s32 1, %v2486
      %v2488 = vrot.slane %v1001, %v2487
      %v2489 = vlaneseq
      %v2490 = vshrl.u32 %v2489, 7
      %v2491 = vsub.s32 2, %v2490
      %v2492 = vrot.slane %v1001, %v2491
      %v2493 = vlaneseq
      %v2494 = vshrl.u32 %v2493, 7
      %v2495 = vsub.s32 3, %v2494
      %v2496 = vrot.slane %v1001, %v2495
      %v2497 = vlaneseq
      %v2498 = vshrl.u32 %v2497, 7
      %v2499 = vsub.s32 4, %v2498
      %v2500 = vrot.slane %v1001, %v2499
      %v2501 = vlaneseq
      %v2502 = vshrl.u32 %v2501, 7
      %v2503 = vsub.s32 5, %v2502
      %v2504 = vrot.slane %v1001, %v2503
      %v2505 = vlaneseq
      %v2506 = vshrl.u32 %v2505, 7
      %v2507 = vsub.s32 6, %v2506
      %v2508 = vrot.slane %v1001, %v2507
      %v2509 = vlaneseq
      %v2510 = vshrl.u32 %v2509, 7
      %v2511 = vsub.s32 7, %v2510
      %v2512 = vrot.slane %v1001, %v2511
      %v2513 = vlaneseq
      %v2514 = vshrl.u32 %v2513, 7
      %v2515 = vsub.s32 0, %v2514
      %v2516 = vrot.slane %v1002, %v2515
      %v2517 = vlaneseq
      %v2518 = vshrl.u32 %v2517, 7
      %v2519 = vsub.s32 1, %v2518
      %v2520 = vrot.slane %v1002, %v2519
      %v2521 = vlaneseq
      %v2522 = vshrl.u32 %v2521, 7
      %v2523 = vsub.s32 2, %v2522
      %v2524 = vrot.slane %v1002, %v2523
      %v2525 = vlaneseq
      %v2526 = vshrl.u32 %v2525, 7
      %v2527 = vsub.s32 3, %v2526
      %v2528 = vrot.slane %v1002, %v2527
      %v2529 = vlaneseq
      %v2530 = vshrl.u32 %v2529, 7
      %v2531 = vsub.s32 4, %v2530
      %v2532 = vrot.slane %v1002, %v2531
      %v2533 = vlaneseq
      %v2534 = vshrl.u32 %v2533, 7
      %v2535 = vsub.s32 5, %v2534
      %v2536 = vrot.slane %v1002, %v2535
      %v2537 = vlaneseq
      %v2538 = vshrl.u32 %v2537, 7
      %v2539 = vsub.s32 6, %v2538
      %v2540 = vrot.slane %v1002, %v2539
      %v2541 = vlaneseq
      %v2542 = vshrl.u32 %v2541, 7
      %v2543 = vsub.s32 7, %v2542
      %v2544 = vrot.slane %v1002, %v2543
      %v2545 = vlaneseq
      %v2546 = vshrl.u32 %v2545, 7
      %v2547 = vsub.s32 0, %v2546
      %v2548 = vrot.slane %v1003, %v2547
      %v2549 = vlaneseq
      %v2550 = vshrl.u32 %v2549, 7
      %v2551 = vsub.s32 1, %v2550
      %v2552 = vrot.slane %v1003, %v2551
      %v2553 = vlaneseq
      %v2554 = vshrl.u32 %v2553, 7
      %v2555 = vsub.s32 2, %v2554
      %v2556 = vrot.slane %v1003, %v2555
      %v2557 = vlaneseq
      %v2558 = vshrl.u32 %v2557, 7
      %v2559 = vsub.s32 3, %v2558
      %v2560 = vrot.slane %v1003, %v2559
      %v2561 = vlaneseq
      %v2562 = vshrl.u32 %v2561, 7
      %v2563 = vsub.s32 4, %v2562
      %v2564 = vrot.slane %v1003, %v2563
      %v2565 = vlaneseq
      %v2566 = vshrl.u32 %v2565, 7
      %v2567 = vsub.s32 5, %v2566
      %v2568 = vrot.slane %v1003, %v2567
      %v2569 = vlaneseq
      %v2570 = vshrl.u32 %v2569, 7
      %v2571 = vsub.s32 6, %v2570
      %v2572 = vrot.slane %v1003, %v2571
      %v2573 = vlaneseq
      %v2574 = vshrl.u32 %v2573, 7
      %v2575 = vsub.s32 7, %v2574
      %v2576 = vrot.slane %v1003, %v2575
      %v2577 = vlaneseq
      %v2578 = vshrl.u32 %v2577, 7
      %v2579 = vsub.s32 0, %v2578
      %v2580 = vrot.slane %v1004, %v2579
      %v2581 = vlaneseq
      %v2582 = vshrl.u32 %v2581, 7
      %v2583 = vsub.s32 1, %v2582
      %v2584 = vrot.slane %v1004, %v2583
      %v2585 = vlaneseq
      %v2586 = vshrl.u32 %v2585, 7
      %v2587 = vsub.s32 2, %v2586
      %v2588 = vrot.slane %v1004, %v2587
      %v2589 = vlaneseq
      %v2590 = vshrl.u32 %v2589, 7
      %v2591 = vsub.s32 3, %v2590
      %v2592 = vrot.slane %v1004, %v2591
      %v2593 = vlaneseq
      %v2594 = vshrl.u32 %v2593, 7
      %v2595 = vsub.s32 4, %v2594
      %v2596 = vrot.slane %v1004, %v2595
      %v2597 = vlaneseq
      %v2598 = vshrl.u32 %v2597, 7
      %v2599 = vsub.s32 5, %v2598
      %v2600 = vrot.slane %v1004, %v2599
      %v2601 = vlaneseq
      %v2602 = vshrl.u32 %v2601, 7
      %v2603 = vsub.s32 6, %v2602
      %v2604 = vrot.slane %v1004, %v2603
      %v2605 = vlaneseq
      %v2606 = vshrl.u32 %v2605, 7
      %v2607 = vsub.s32 7, %v2606
      %v2608 = vrot.slane %v1004, %v2607
      %v2609 = vlaneseq
      %v2610 = vshrl.u32 %v2609, 7
      %v2611 = vsub.s32 0, %v2610
      %v2612 = vrot.slane %v1005, %v2611
      %v2613 = vlaneseq
      %v2614 = vshrl.u32 %v2613, 7
      %v2615 = vsub.s32 1, %v2614
      %v2616 = vrot.slane %v1005, %v2615
      %v2617 = vlaneseq
      %v2618 = vshrl.u32 %v2617, 7
      %v2619 = vsub.s32 2, %v2618
      %v2620 = vrot.slane %v1005, %v2619
      %v2621 = vlaneseq
      %v2622 = vshrl.u32 %v2621, 7
      %v2623 = vsub.s32 3, %v2622
      %v2624 = vrot.slane %v1005, %v2623
      %v2625 = vlaneseq
      %v2626 = vshrl.u32 %v2625, 7
      %v2627 = vsub.s32 4, %v2626
      %v2628 = vrot.slane %v1005, %v2627
      %v2629 = vlaneseq
      %v2630 = vshrl.u32 %v2629, 7
      %v2631 = vsub.s32 5, %v2630
      %v2632 = vrot.slane %v1005, %v2631
      %v2633 = vlaneseq
      %v2634 = vshrl.u32 %v2633, 7
      %v2635 = vsub.s32 6, %v2634
      %v2636 = vrot.slane %v1005, %v2635
      %v2637 = vlaneseq
      %v2638 = vshrl.u32 %v2637, 7
      %v2639 = vsub.s32 7, %v2638
      %v2640 = vrot.slane %v1005, %v2639
      %v2641 = vlaneseq
      %v2642 = vshrl.u32 %v2641, 7
      %v2643 = vsub.s32 0, %v2642
      %v2644 = vrot.slane %v1006, %v2643
      %v2645 = vlaneseq
      %v2646 = vshrl.u32 %v2645, 7
      %v2647 = vsub.s32 1, %v2646
      %v2648 = vrot.slane %v1006, %v2647
      %v2649 = vlaneseq
      %v2650 = vshrl.u32 %v2649, 7
      %v2651 = vsub.s32 2, %v2650
      %v2652 = vrot.slane %v1006, %v2651
      %v2653 = vlaneseq
      %v2654 = vshrl.u32 %v2653, 7
      %v2655 = vsub.s32 3, %v2654
      %v2656 = vrot.slane %v1006, %v2655
      %v2657 = vlaneseq
      %v2658 = vshrl.u32 %v2657, 7
      %v2659 = vsub.s32 4, %v2658
      %v2660 = vrot.slane %v1006, %v2659
      %v2661 = vlaneseq
      %v2662 = vshrl.u32 %v2661, 7
      %v2663 = vsub.s32 5, %v2662
      %v2664 = vrot.slane %v1006, %v2663
      %v2665 = vlaneseq
      %v2666 = vshrl.u32 %v2665, 7
      %v2667 = vsub.s32 6, %v2666
      %v2668 = vrot.slane %v1006, %v2667
      %v2669 = vlaneseq
      %v2670 = vshrl.u32 %v2669, 7
      %v2671 = vsub.s32 7, %v2670
      %v2672 = vrot.slane %v1006, %v2671
      %v2673 = vlaneseq
      %v2674 = vshrl.u32 %v2673, 7
      %v2675 = vsub.s32 0, %v2674
      %v2676 = vrot.slane %v1007, %v2675
      %v2677 = vlaneseq
      %v2678 = vshrl.u32 %v2677, 7
      %v2679 = vsub.s32 1, %v2678
      %v2680 = vrot.slane %v1007, %v2679
      %v2681 = vlaneseq
      %v2682 = vshrl.u32 %v2681, 7
      %v2683 = vsub.s32 2, %v2682
      %v2684 = vrot.slane %v1007, %v2683
      %v2685 = vlaneseq
      %v2686 = vshrl.u32 %v2685, 7
      %v2687 = vsub.s32 3, %v2686
      %v2688 = vrot.slane %v1007, %v2687
      %v2689 = vlaneseq
      %v2690 = vshrl.u32 %v2689, 7
      %v2691 = vsub.s32 4, %v2690
      %v2692 = vrot.slane %v1007, %v2691
      %v2693 = vlaneseq
      %v2694 = vshrl.u32 %v2693, 7
      %v2695 = vsub.s32 5, %v2694
      %v2696 = vrot.slane %v1007, %v2695
      %v2697 = vlaneseq
      %v2698 = vshrl.u32 %v2697, 7
      %v2699 = vsub.s32 6, %v2698
      %v2700 = vrot.slane %v1007, %v2699
      %v2701 = vlaneseq
      %v2702 = vshrl.u32 %v2701, 7
      %v2703 = vsub.s32 7, %v2702
      %v2704 = vrot.slane %v1007, %v2703
      %v2705 = vlaneseq
      %v2706 = vshrl.u32 %v2705, 7
      %v2707 = vsub.s32 0, %v2706
      %v2708 = vrot.slane %v1008, %v2707
      %v2709 = vlaneseq
      %v2710 = vshrl.u32 %v2709, 7
      %v2711 = vsub.s32 1, %v2710
      %v2712 = vrot.slane %v1008, %v2711
      %v2713 = vlaneseq
      %v2714 = vshrl.u32 %v2713, 7
      %v2715 = vsub.s32 2, %v2714
      %v2716 = vrot.slane %v1008, %v2715
      %v2717 = vlaneseq
      %v2718 = vshrl.u32 %v2717, 7
      %v2719 = vsub.s32 3, %v2718
      %v2720 = vrot.slane %v1008, %v2719
      %v2721 = vlaneseq
      %v2722 = vshrl.u32 %v2721, 7
      %v2723 = vsub.s32 4, %v2722
      %v2724 = vrot.slane %v1008, %v2723
      %v2725 = vlaneseq
      %v2726 = vshrl.u32 %v2725, 7
      %v2727 = vsub.s32 5, %v2726
      %v2728 = vrot.slane %v1008, %v2727
      %v2729 = vlaneseq
      %v2730 = vshrl.u32 %v2729, 7
      %v2731 = vsub.s32 6, %v2730
      %v2732 = vrot.slane %v1008, %v2731
      %v2733 = vlaneseq
      %v2734 = vshrl.u32 %v2733, 7
      %v2735 = vsub.s32 7, %v2734
      %v2736 = vrot.slane %v1008, %v2735
      %v2929 = vcombine.high %v2145, %v2145
      %v2930 = vcombine.high %v2146, %v2146
      %v2931 = vcombine.high %v2147, %v2147
      %v2932 = vcombine.high %v2148, %v2148
      %v2933 = vcombine.high %v2149, %v2149
      %v2934 = vcombine.high %v2150, %v2150
      %v2935 = vcombine.high %v2151, %v2151
      %v2936 = vcombine.high %v2152, %v2152
      %v2937 = vcombine.high %v2153, %v2153
      %v2938 = vcombine.high %v2154, %v2154
      %v2939 = vcombine.high %v2155, %v2155
      %v2940 = vcombine.high %v2156, %v2156
      %v2941 = vcombine.high %v2157, %v2157
      %v2942 = vcombine.high %v2158, %v2158
      %v2943 = vcombine.high %v2159, %v2159
      %v2944 = vcombine.high %v2160, %v2160
      %v2945 = vcombine.high %v2161, %v2161
      %v2946 = vcombine.high %v2162, %v2162
      %v2947 = vcombine.high %v2163, %v2163
      %v2948 = vcombine.high %v2164, %v2164
      %v2949 = vcombine.high %v2165, %v2165
      %v2950 = vcombine.high %v2166, %v2166
      %v2951 = vcombine.high %v2167, %v2167
      %v2952 = vcombine.high %v2168, %v2168
      %v2953 = vcombine.high %v2169, %v2169
      %v2954 = vcombine.high %v2170, %v2170
      %v2955 = vcombine.high %v2171, %v2171
      %v2956 = vcombine.high %v2172, %v2172
      %v2957 = vcombine.high %v2173, %v2173
      %v2958 = vcombine.high %v2174, %v2174
      %v2959 = vcombine.high %v2175, %v2175
      %v2960 = vcombine.high %v2176, %v2176
      %v2961 = vcombine.high %v2177, %v2177
      %v2962 = vcombine.high %v2178, %v2178
      %v2963 = vcombine.high %v2179, %v2179
      %v2964 = vcombine.high %v2180, %v2180
      %v2965 = vcombine.high %v2181, %v2181
      %v2966 = vcombine.high %v2182, %v2182
      %v2967 = vcombine.high %v2183, %v2183
      %v2968 = vcombine.high %v2184, %v2184
      %v2969 = vcombine.high %v2185, %v2185
      %v2970 = vcombine.high %v2186, %v2186
      %v2971 = vcombine.high %v2187, %v2187
      %v2972 = vcombine.high %v2188, %v2188
      %v2973 = vcombine.high %v2189, %v2189
      %v2974 = vcombine.high %v2190, %v2190
      %v2975 = vcombine.high %v2191, %v2191
      %v2976 = vcombine.high %v2192, %v2192
      %v2977 = vcombine.high %v2193, %v2193
      %v2978 = vcombine.high %v2194, %v2194
      %v2979 = vcombine.high %v2195, %v2195
      %v2980 = vcombine.high %v2196, %v2196
      %v2981 = vcombine.high %v2197, %v2197
      %v2982 = vcombine.high %v2198, %v2198
      %v2983 = vcombine.high %v2199, %v2199
      %v2984 = vcombine.high %v2200, %v2200
      %v2985 = vcombine.high %v2201, %v2201
      %v2986 = vcombine.high %v2202, %v2202
      %v2987 = vcombine.high %v2203, %v2203
      %v2988 = vcombine.high %v2204, %v2204
      %v2989 = vcombine.high %v2205, %v2205
      %v2990 = vcombine.high %v2206, %v2206
      %v2991 = vcombine.high %v2207, %v2207
      %v2992 = vcombine.high %v2208, %v2208
      %v3057 = vmul.f32 %v2228, %v2145
      %v3058 = vmul.f32 %v2232, %v2929
      %v3059 = vmul.f32 %v2236, %v2146
      %v3060 = vmul.f32 %v2240, %v2930
      %v3061 = vmul.f32 %v2244, %v2147
      %v3062 = vmul.f32 %v2248, %v2931
      %v3063 = vmul.f32 %v2252, %v2148
      %v3064 = vmul.f32 %v2256, %v2932
      %v3065 = vmul.f32 %v2260, %v2149
      %v3066 = vmul.f32 %v2264, %v2933
      %v3067 = vmul.f32 %v2268, %v2150
      %v3068 = vmul.f32 %v2272, %v2934
      %v3069 = vmul.f32 %v2276, %v2151
      %v3070 = vmul.f32 %v2280, %v2935
      %v3071 = vmul.f32 %v2284, %v2152
      %v3072 = vmul.f32 %v2288, %v2936
      %v3073 = vmul.f32 %v2292, %v2153
      %v3074 = vmul.f32 %v2296, %v2937
      %v3075 = vmul.f32 %v2300, %v2154
      %v3076 = vmul.f32 %v2304, %v2938
      %v3077 = vmul.f32 %v2308, %v2155
      %v3078 = vmul.f32 %v2312, %v2939
      %v3079 = vmul.f32 %v2316, %v2156
      %v3080 = vmul.f32 %v2320, %v2940
      %v3081 = vmul.f32 %v2324, %v2157
      %v3082 = vmul.f32 %v2328, %v2941
      %v3083 = vmul.f32 %v2332, %v2158
      %v3084 = vmul.f32 %v2336, %v2942
      %v3085 = vmul.f32 %v2340, %v2159
      %v3086 = vmul.f32 %v2344, %v2943
      %v3087 = vmul.f32 %v2348, %v2160
      %v3088 = vmul.f32 %v2352, %v2944
      %v3089 = vmul.f32 %v2356, %v2161
      %v3090 = vmul.f32 %v2360, %v2945
      %v3091 = vmul.f32 %v2364, %v2162
      %v3092 = vmul.f32 %v2368, %v2946
      %v3093 = vmul.f32 %v2372, %v2163
      %v3094 = vmul.f32 %v2376, %v2947
      %v3095 = vmul.f32 %v2380, %v2164
      %v3096 = vmul.f32 %v2384, %v2948
      %v3097 = vmul.f32 %v2388, %v2165
      %v3098 = vmul.f32 %v2392, %v2949
      %v3099 = vmul.f32 %v2396, %v2166
      %v3100 = vmul.f32 %v2400, %v2950
      %v3101 = vmul.f32 %v2404, %v2167
      %v3102 = vmul.f32 %v2408, %v2951
      %v3103 = vmul.f32 %v2412, %v2168
      %v3104 = vmul.f32 %v2416, %v2952
      %v3105 = vmul.f32 %v2420, %v2169
      %v3106 = vmul.f32 %v2424, %v2953
      %v3107 = vmul.f32 %v2428, %v2170
      %v3108 = vmul.f32 %v2432, %v2954
      %v3109 = vmul.f32 %v2436, %v2171
      %v3110 = vmul.f32 %v2440, %v2955
      %v3111 = vmul.f32 %v2444, %v2172
      %v3112 = vmul.f32 %v2448, %v2956
      %v3113 = vmul.f32 %v2452, %v2173
      %v3114 = vmul.f32 %v2456, %v2957
      %v3115 = vmul.f32 %v2460, %v2174
      %v3116 = vmul.f32 %v2464, %v2958
      %v3117 = vmul.f32 %v2468, %v2175
      %v3118 = vmul.f32 %v2472, %v2959
      %v3119 = vmul.f32 %v2476, %v2176
      %v3120 = vmul.f32 %v2480, %v2960
      %v3121 = vmul.f32 %v2484, %v2177
      %v3122 = vmul.f32 %v2488, %v2961
      %v3123 = vmul.f32 %v2492, %v2178
      %v3124 = vmul.f32 %v2496, %v2962
      %v3125 = vmul.f32 %v2500, %v2179
      %v3126 = vmul.f32 %v2504, %v2963
      %v3127 = vmul.f32 %v2508, %v2180
      %v3128 = vmul.f32 %v2512, %v2964
      %v3129 = vmul.f32 %v2516, %v2181
      %v3130 = vmul.f32 %v2520, %v2965
      %v3131 = vmul.f32 %v2524, %v2182
      %v3132 = vmul.f32 %v2528, %v2966
      %v3133 = vmul.f32 %v2532, %v2183
      %v3134 = vmul.f32 %v2536, %v2967
      %v3135 = vmul.f32 %v2540, %v2184
      %v3136 = vmul.f32 %v2544, %v2968
      %v3137 = vmul.f32 %v2548, %v2185
      %v3138 = vmul.f32 %v2552, %v2969
      %v3139 = vmul.f32 %v2556, %v2186
      %v3140 = vmul.f32 %v2560, %v2970
      %v3141 = vmul.f32 %v2564, %v2187
      %v3142 = vmul.f32 %v2568, %v2971
      %v3143 = vmul.f32 %v2572, %v2188
      %v3144 = vmul.f32 %v2576, %v2972
      %v3145 = vmul.f32 %v2580, %v2189
      %v3146 = vmul.f32 %v2584, %v2973
      %v3147 = vmul.f32 %v2588, %v2190
      %v3148 = vmul.f32 %v2592, %v2974
      %v3149 = vmul.f32 %v2596, %v2191
      %v3150 = vmul.f32 %v2600, %v2975
      %v3151 = vmul.f32 %v2604, %v2192
      %v3152 = vmul.f32 %v2608, %v2976
      %v3153 = vmul.f32 %v2612, %v2193
      %v3154 = vmul.f32 %v2616, %v2977
      %v3155 = vmul.f32 %v2620, %v2194
      %v3156 = vmul.f32 %v2624, %v2978
      %v3157 = vmul.f32 %v2628, %v2195
      %v3158 = vmul.f32 %v2632, %v2979
      %v3159 = vmul.f32 %v2636, %v2196
      %v3160 = vmul.f32 %v2640, %v2980
      %v3161 = vmul.f32 %v2644, %v2197
      %v3162 = vmul.f32 %v2648, %v2981
      %v3163 = vmul.f32 %v2652, %v2198
      %v3164 = vmul.f32 %v2656, %v2982
      %v3165 = vmul.f32 %v2660, %v2199
      %v3166 = vmul.f32 %v2664, %v2983
      %v3167 = vmul.f32 %v2668, %v2200
      %v3168 = vmul.f32 %v2672, %v2984
      %v3169 = vmul.f32 %v2676, %v2201
      %v3170 = vmul.f32 %v2680, %v2985
      %v3171 = vmul.f32 %v2684, %v2202
      %v3172 = vmul.f32 %v2688, %v2986
      %v3173 = vmul.f32 %v2692, %v2203
      %v3174 = vmul.f32 %v2696, %v2987
      %v3175 = vmul.f32 %v2700, %v2204
      %v3176 = vmul.f32 %v2704, %v2988
      %v3177 = vmul.f32 %v2708, %v2205
      %v3178 = vmul.f32 %v2712, %v2989
      %v3179 = vmul.f32 %v2716, %v2206
      %v3180 = vmul.f32 %v2720, %v2990
      %v3181 = vmul.f32 %v2724, %v2207
      %v3182 = vmul.f32 %v2728, %v2991
      %v3183 = vmul.f32 %v2732, %v2208
      %v3184 = vmul.f32 %v2736, %v2992
      %v3185 = vadd.f32 %v2017, %v3057
      %v3186 = vadd.f32 %v2018, %v3058
      %v3187 = vadd.f32 %v2019, %v3059
      %v3188 = vadd.f32 %v2020, %v3060
      %v3189 = vadd.f32 %v2021, %v3061
      %v3190 = vadd.f32 %v2022, %v3062
      %v3191 = vadd.f32 %v2023, %v3063
      %v3192 = vadd.f32 %v2024, %v3064
      %v3193 = vadd.f32 %v2025, %v3065
      %v3194 = vadd.f32 %v2026, %v3066
      %v3195 = vadd.f32 %v2027, %v3067
      %v3196 = vadd.f32 %v2028, %v3068
      %v3197 = vadd.f32 %v2029, %v3069
      %v3198 = vadd.f32 %v2030, %v3070
      %v3199 = vadd.f32 %v2031, %v3071
      %v3200 = vadd.f32 %v2032, %v3072
      %v3201 = vadd.f32 %v2033, %v3073
      %v3202 = vadd.f32 %v2034, %v3074
      %v3203 = vadd.f32 %v2035, %v3075
      %v3204 = vadd.f32 %v2036, %v3076
      %v3205 = vadd.f32 %v2037, %v3077
      %v3206 = vadd.f32 %v2038, %v3078
      %v3207 = vadd.f32 %v2039, %v3079
      %v3208 = vadd.f32 %v2040, %v3080
      %v3209 = vadd.f32 %v2041, %v3081
      %v3210 = vadd.f32 %v2042, %v3082
      %v3211 = vadd.f32 %v2043, %v3083
      %v3212 = vadd.f32 %v2044, %v3084
      %v3213 = vadd.f32 %v2045, %v3085
      %v3214 = vadd.f32 %v2046, %v3086
      %v3215 = vadd.f32 %v2047, %v3087
      %v3216 = vadd.f32 %v2048, %v3088
      %v3217 = vadd.f32 %v2049, %v3089
      %v3218 = vadd.f32 %v2050, %v3090
      %v3219 = vadd.f32 %v2051, %v3091
      %v3220 = vadd.f32 %v2052, %v3092
      %v3221 = vadd.f32 %v2053, %v3093
      %v3222 = vadd.f32 %v2054, %v3094
      %v3223 = vadd.f32 %v2055, %v3095
      %v3224 = vadd.f32 %v2056, %v3096
      %v3225 = vadd.f32 %v2057, %v3097
      %v3226 = vadd.f32 %v2058, %v3098
      %v3227 = vadd.f32 %v2059, %v3099
      %v3228 = vadd.f32 %v2060, %v3100
      %v3229 = vadd.f32 %v2061, %v3101
      %v3230 = vadd.f32 %v2062, %v3102
      %v3231 = vadd.f32 %v2063, %v3103
      %v3232 = vadd.f32 %v2064, %v3104
      %v3233 = vadd.f32 %v2065, %v3105
      %v3234 = vadd.f32 %v2066, %v3106
      %v3235 = vadd.f32 %v2067, %v3107
      %v3236 = vadd.f32 %v2068, %v3108
      %v3237 = vadd.f32 %v2069, %v3109
      %v3238 = vadd.f32 %v2070, %v3110
      %v3239 = vadd.f32 %v2071, %v3111
      %v3240 = vadd.f32 %v2072, %v3112
      %v3241 = vadd.f32 %v2073, %v3113
      %v3242 = vadd.f32 %v2074, %v3114
      %v3243 = vadd.f32 %v2075, %v3115
      %v3244 = vadd.f32 %v2076, %v3116
      %v3245 = vadd.f32 %v2077, %v3117
      %v3246 = vadd.f32 %v2078, %v3118
      %v3247 = vadd.f32 %v2079, %v3119
      %v3248 = vadd.f32 %v2080, %v3120
      %v3249 = vadd.f32 %v2081, %v3121
      %v3250 = vadd.f32 %v2082, %v3122
      %v3251 = vadd.f32 %v2083, %v3123
      %v3252 = vadd.f32 %v2084, %v3124
      %v3253 = vadd.f32 %v2085, %v3125
      %v3254 = vadd.f32 %v2086, %v3126
      %v3255 = vadd.f32 %v2087, %v3127
      %v3256 = vadd.f32 %v2088, %v3128
      %v3257 = vadd.f32 %v2089, %v3129
      %v3258 = vadd.f32 %v2090, %v3130
      %v3259 = vadd.f32 %v2091, %v3131
      %v3260 = vadd.f32 %v2092, %v3132
      %v3261 = vadd.f32 %v2093, %v3133
      %v3262 = vadd.f32 %v2094, %v3134
      %v3263 = vadd.f32 %v2095, %v3135
      %v3264 = vadd.f32 %v2096, %v3136
      %v3265 = vadd.f32 %v2097, %v3137
      %v3266 = vadd.f32 %v2098, %v3138
      %v3267 = vadd.f32 %v2099, %v3139
      %v3268 = vadd.f32 %v2100, %v3140
      %v3269 = vadd.f32 %v2101, %v3141
      %v3270 = vadd.f32 %v2102, %v3142
      %v3271 = vadd.f32 %v2103, %v3143
      %v3272 = vadd.f32 %v2104, %v3144
      %v3273 = vadd.f32 %v2105, %v3145
      %v3274 = vadd.f32 %v2106, %v3146
      %v3275 = vadd.f32 %v2107, %v3147
      %v3276 = vadd.f32 %v2108, %v3148
      %v3277 = vadd.f32 %v2109, %v3149
      %v3278 = vadd.f32 %v2110, %v3150
      %v3279 = vadd.f32 %v2111, %v3151
      %v3280 = vadd.f32 %v2112, %v3152
      %v3281 = vadd.f32 %v2113, %v3153
      %v3282 = vadd.f32 %v2114, %v3154
      %v3283 = vadd.f32 %v2115, %v3155
      %v3284 = vadd.f32 %v2116, %v3156
      %v3285 = vadd.f32 %v2117, %v3157
      %v3286 = vadd.f32 %v2118, %v3158
      %v3287 = vadd.f32 %v2119, %v3159
      %v3288 = vadd.f32 %v2120, %v3160
      %v3289 = vadd.f32 %v2121, %v3161
      %v3290 = vadd.f32 %v2122, %v3162
      %v3291 = vadd.f32 %v2123, %v3163
      %v3292 = vadd.f32 %v2124, %v3164
      %v3293 = vadd.f32 %v2125, %v3165
      %v3294 = vadd.f32 %v2126, %v3166
      %v3295 = vadd.f32 %v2127, %v3167
      %v3296 = vadd.f32 %v2128, %v3168
      %v3297 = vadd.f32 %v2129, %v3169
      %v3298 = vadd.f32 %v2130, %v3170
      %v3299 = vadd.f32 %v2131, %v3171
      %v3300 = vadd.f32 %v2132, %v3172
      %v3301 = vadd.f32 %v2133, %v3173
      %v3302 = vadd.f32 %v2134, %v3174
      %v3303 = vadd.f32 %v2135, %v3175
      %v3304 = vadd.f32 %v2136, %v3176
      %v3305 = vadd.f32 %v2137, %v3177
      %v3306 = vadd.f32 %v2138, %v3178
      %v3307 = vadd.f32 %v2139, %v3179
      %v3308 = vadd.f32 %v2140, %v3180
      %v3309 = vadd.f32 %v2141, %v3181
      %v3310 = vadd.f32 %v2142, %v3182
      %v3311 = vadd.f32 %v2143, %v3183
      %v3312 = vadd.f32 %v2144, %v3184
      %v3313 = vld [vmem:[%s443] sm:$0x77]
      %v3314 = vld [vmem:[%s443 + $0x8] sm:$0x77]
      %v3315 = vld [vmem:[%s443 + $0x10] sm:$0x77]
      %v3316 = vld [vmem:[%s443 + $0x18] sm:$0x77]
      %v3317 = vld [vmem:[%s443 + $0x20] sm:$0x77]
      %v3318 = vld [vmem:[%s443 + $0x28] sm:$0x77]
      %v3319 = vld [vmem:[%s443 + $0x30] sm:$0x77]
      %v3320 = vld [vmem:[%s443 + $0x38] sm:$0x77]
      %v3321 = vld [vmem:[%s443 + $0x40] sm:$0x77]
      %v3322 = vld [vmem:[%s443 + $0x48] sm:$0x77]
      %v3323 = vld [vmem:[%s443 + $0x50] sm:$0x77]
      %v3324 = vld [vmem:[%s443 + $0x58] sm:$0x77]
      %v3325 = vld [vmem:[%s443 + $0x60] sm:$0x77]
      %v3326 = vld [vmem:[%s443 + $0x68] sm:$0x77]
      %v3327 = vld [vmem:[%s443 + $0x70] sm:$0x77]
      %v3328 = vld [vmem:[%s443 + $0x78] sm:$0x77]
      %v3329 = vld [vmem:[%s443 + $0x80] sm:$0x77]
      %v3330 = vld [vmem:[%s443 + $0x88] sm:$0x77]
      %v3331 = vld [vmem:[%s443 + $0x90] sm:$0x77]
      %v3332 = vld [vmem:[%s443 + $0x98] sm:$0x77]
      %v3333 = vld [vmem:[%s443 + $0xa0] sm:$0x77]
      %v3334 = vld [vmem:[%s443 + $0xa8] sm:$0x77]
      %v3335 = vld [vmem:[%s443 + $0xb0] sm:$0x77]
      %v3336 = vld [vmem:[%s443 + $0xb8] sm:$0x77]
      %v3337 = vld [vmem:[%s443 + $0xc0] sm:$0x77]
      %v3338 = vld [vmem:[%s443 + $0xc8] sm:$0x77]
      %v3339 = vld [vmem:[%s443 + $0xd0] sm:$0x77]
      %v3340 = vld [vmem:[%s443 + $0xd8] sm:$0x77]
      %v3341 = vld [vmem:[%s443 + $0xe0] sm:$0x77]
      %v3342 = vld [vmem:[%s443 + $0xe8] sm:$0x77]
      %v3343 = vld [vmem:[%s443 + $0xf0] sm:$0x77]
      %v3344 = vld [vmem:[%s443 + $0xf8] sm:$0x77]
      %v3345 = vld [vmem:[%s443 + $0x100] sm:$0x77]
      %v3346 = vld [vmem:[%s443 + $0x108] sm:$0x77]
      %v3347 = vld [vmem:[%s443 + $0x110] sm:$0x77]
      %v3348 = vld [vmem:[%s443 + $0x118] sm:$0x77]
      %v3349 = vld [vmem:[%s443 + $0x120] sm:$0x77]
      %v3350 = vld [vmem:[%s443 + $0x128] sm:$0x77]
      %v3351 = vld [vmem:[%s443 + $0x130] sm:$0x77]
      %v3352 = vld [vmem:[%s443 + $0x138] sm:$0x77]
      %v3353 = vld [vmem:[%s443 + $0x140] sm:$0x77]
      %v3354 = vld [vmem:[%s443 + $0x148] sm:$0x77]
      %v3355 = vld [vmem:[%s443 + $0x150] sm:$0x77]
      %v3356 = vld [vmem:[%s443 + $0x158] sm:$0x77]
      %v3357 = vld [vmem:[%s443 + $0x160] sm:$0x77]
      %v3358 = vld [vmem:[%s443 + $0x168] sm:$0x77]
      %v3359 = vld [vmem:[%s443 + $0x170] sm:$0x77]
      %v3360 = vld [vmem:[%s443 + $0x178] sm:$0x77]
      %v3361 = vld [vmem:[%s443 + $0x180] sm:$0x77]
      %v3362 = vld [vmem:[%s443 + $0x188] sm:$0x77]
      %v3363 = vld [vmem:[%s443 + $0x190] sm:$0x77]
      %v3364 = vld [vmem:[%s443 + $0x198] sm:$0x77]
      %v3365 = vld [vmem:[%s443 + $0x1a0] sm:$0x77]
      %v3366 = vld [vmem:[%s443 + $0x1a8] sm:$0x77]
      %v3367 = vld [vmem:[%s443 + $0x1b0] sm:$0x77]
      %v3368 = vld [vmem:[%s443 + $0x1b8] sm:$0x77]
      %v3369 = vld [vmem:[%s443 + $0x1c0] sm:$0x77]
      %v3370 = vld [vmem:[%s443 + $0x1c8] sm:$0x77]
      %v3371 = vld [vmem:[%s443 + $0x1d0] sm:$0x77]
      %v3372 = vld [vmem:[%s443 + $0x1d8] sm:$0x77]
      %v3373 = vld [vmem:[%s443 + $0x1e0] sm:$0x77]
      %v3374 = vld [vmem:[%s443 + $0x1e8] sm:$0x77]
      %v3375 = vld [vmem:[%s443 + $0x1f0] sm:$0x77]
      %v3376 = vld [vmem:[%s443 + $0x1f8] sm:$0x77]
      %v3393 = vlaneseq
      %v3394 = vshrl.u32 %v3393, 7
      %v3395 = vsub.s32 0, %v3394
      %v3396 = vrot.slane %v1041, %v3395
      %v3397 = vlaneseq
      %v3398 = vshrl.u32 %v3397, 7
      %v3399 = vsub.s32 1, %v3398
      %v3400 = vrot.slane %v1041, %v3399
      %v3401 = vlaneseq
      %v3402 = vshrl.u32 %v3401, 7
      %v3403 = vsub.s32 2, %v3402
      %v3404 = vrot.slane %v1041, %v3403
      %v3405 = vlaneseq
      %v3406 = vshrl.u32 %v3405, 7
      %v3407 = vsub.s32 3, %v3406
      %v3408 = vrot.slane %v1041, %v3407
      %v3409 = vlaneseq
      %v3410 = vshrl.u32 %v3409, 7
      %v3411 = vsub.s32 4, %v3410
      %v3412 = vrot.slane %v1041, %v3411
      %v3413 = vlaneseq
      %v3414 = vshrl.u32 %v3413, 7
      %v3415 = vsub.s32 5, %v3414
      %v3416 = vrot.slane %v1041, %v3415
      %v3417 = vlaneseq
      %v3418 = vshrl.u32 %v3417, 7
      %v3419 = vsub.s32 6, %v3418
      %v3420 = vrot.slane %v1041, %v3419
      %v3421 = vlaneseq
      %v3422 = vshrl.u32 %v3421, 7
      %v3423 = vsub.s32 7, %v3422
      %v3424 = vrot.slane %v1041, %v3423
      %v3425 = vlaneseq
      %v3426 = vshrl.u32 %v3425, 7
      %v3427 = vsub.s32 0, %v3426
      %v3428 = vrot.slane %v1042, %v3427
      %v3429 = vlaneseq
      %v3430 = vshrl.u32 %v3429, 7
      %v3431 = vsub.s32 1, %v3430
      %v3432 = vrot.slane %v1042, %v3431
      %v3433 = vlaneseq
      %v3434 = vshrl.u32 %v3433, 7
      %v3435 = vsub.s32 2, %v3434
      %v3436 = vrot.slane %v1042, %v3435
      %v3437 = vlaneseq
      %v3438 = vshrl.u32 %v3437, 7
      %v3439 = vsub.s32 3, %v3438
      %v3440 = vrot.slane %v1042, %v3439
      %v3441 = vlaneseq
      %v3442 = vshrl.u32 %v3441, 7
      %v3443 = vsub.s32 4, %v3442
      %v3444 = vrot.slane %v1042, %v3443
      %v3445 = vlaneseq
      %v3446 = vshrl.u32 %v3445, 7
      %v3447 = vsub.s32 5, %v3446
      %v3448 = vrot.slane %v1042, %v3447
      %v3449 = vlaneseq
      %v3450 = vshrl.u32 %v3449, 7
      %v3451 = vsub.s32 6, %v3450
      %v3452 = vrot.slane %v1042, %v3451
      %v3453 = vlaneseq
      %v3454 = vshrl.u32 %v3453, 7
      %v3455 = vsub.s32 7, %v3454
      %v3456 = vrot.slane %v1042, %v3455
      %v3457 = vlaneseq
      %v3458 = vshrl.u32 %v3457, 7
      %v3459 = vsub.s32 0, %v3458
      %v3460 = vrot.slane %v1043, %v3459
      %v3461 = vlaneseq
      %v3462 = vshrl.u32 %v3461, 7
      %v3463 = vsub.s32 1, %v3462
      %v3464 = vrot.slane %v1043, %v3463
      %v3465 = vlaneseq
      %v3466 = vshrl.u32 %v3465, 7
      %v3467 = vsub.s32 2, %v3466
      %v3468 = vrot.slane %v1043, %v3467
      %v3469 = vlaneseq
      %v3470 = vshrl.u32 %v3469, 7
      %v3471 = vsub.s32 3, %v3470
      %v3472 = vrot.slane %v1043, %v3471
      %v3473 = vlaneseq
      %v3474 = vshrl.u32 %v3473, 7
      %v3475 = vsub.s32 4, %v3474
      %v3476 = vrot.slane %v1043, %v3475
      %v3477 = vlaneseq
      %v3478 = vshrl.u32 %v3477, 7
      %v3479 = vsub.s32 5, %v3478
      %v3480 = vrot.slane %v1043, %v3479
      %v3481 = vlaneseq
      %v3482 = vshrl.u32 %v3481, 7
      %v3483 = vsub.s32 6, %v3482
      %v3484 = vrot.slane %v1043, %v3483
      %v3485 = vlaneseq
      %v3486 = vshrl.u32 %v3485, 7
      %v3487 = vsub.s32 7, %v3486
      %v3488 = vrot.slane %v1043, %v3487
      %v3489 = vlaneseq
      %v3490 = vshrl.u32 %v3489, 7
      %v3491 = vsub.s32 0, %v3490
      %v3492 = vrot.slane %v1044, %v3491
      %v3493 = vlaneseq
      %v3494 = vshrl.u32 %v3493, 7
      %v3495 = vsub.s32 1, %v3494
      %v3496 = vrot.slane %v1044, %v3495
      %v3497 = vlaneseq
      %v3498 = vshrl.u32 %v3497, 7
      %v3499 = vsub.s32 2, %v3498
      %v3500 = vrot.slane %v1044, %v3499
      %v3501 = vlaneseq
      %v3502 = vshrl.u32 %v3501, 7
      %v3503 = vsub.s32 3, %v3502
      %v3504 = vrot.slane %v1044, %v3503
      %v3505 = vlaneseq
      %v3506 = vshrl.u32 %v3505, 7
      %v3507 = vsub.s32 4, %v3506
      %v3508 = vrot.slane %v1044, %v3507
      %v3509 = vlaneseq
      %v3510 = vshrl.u32 %v3509, 7
      %v3511 = vsub.s32 5, %v3510
      %v3512 = vrot.slane %v1044, %v3511
      %v3513 = vlaneseq
      %v3514 = vshrl.u32 %v3513, 7
      %v3515 = vsub.s32 6, %v3514
      %v3516 = vrot.slane %v1044, %v3515
      %v3517 = vlaneseq
      %v3518 = vshrl.u32 %v3517, 7
      %v3519 = vsub.s32 7, %v3518
      %v3520 = vrot.slane %v1044, %v3519
      %v3521 = vlaneseq
      %v3522 = vshrl.u32 %v3521, 7
      %v3523 = vsub.s32 0, %v3522
      %v3524 = vrot.slane %v1045, %v3523
      %v3525 = vlaneseq
      %v3526 = vshrl.u32 %v3525, 7
      %v3527 = vsub.s32 1, %v3526
      %v3528 = vrot.slane %v1045, %v3527
      %v3529 = vlaneseq
      %v3530 = vshrl.u32 %v3529, 7
      %v3531 = vsub.s32 2, %v3530
      %v3532 = vrot.slane %v1045, %v3531
      %v3533 = vlaneseq
      %v3534 = vshrl.u32 %v3533, 7
      %v3535 = vsub.s32 3, %v3534
      %v3536 = vrot.slane %v1045, %v3535
      %v3537 = vlaneseq
      %v3538 = vshrl.u32 %v3537, 7
      %v3539 = vsub.s32 4, %v3538
      %v3540 = vrot.slane %v1045, %v3539
      %v3541 = vlaneseq
      %v3542 = vshrl.u32 %v3541, 7
      %v3543 = vsub.s32 5, %v3542
      %v3544 = vrot.slane %v1045, %v3543
      %v3545 = vlaneseq
      %v3546 = vshrl.u32 %v3545, 7
      %v3547 = vsub.s32 6, %v3546
      %v3548 = vrot.slane %v1045, %v3547
      %v3549 = vlaneseq
      %v3550 = vshrl.u32 %v3549, 7
      %v3551 = vsub.s32 7, %v3550
      %v3552 = vrot.slane %v1045, %v3551
      %v3553 = vlaneseq
      %v3554 = vshrl.u32 %v3553, 7
      %v3555 = vsub.s32 0, %v3554
      %v3556 = vrot.slane %v1046, %v3555
      %v3557 = vlaneseq
      %v3558 = vshrl.u32 %v3557, 7
      %v3559 = vsub.s32 1, %v3558
      %v3560 = vrot.slane %v1046, %v3559
      %v3561 = vlaneseq
      %v3562 = vshrl.u32 %v3561, 7
      %v3563 = vsub.s32 2, %v3562
      %v3564 = vrot.slane %v1046, %v3563
      %v3565 = vlaneseq
      %v3566 = vshrl.u32 %v3565, 7
      %v3567 = vsub.s32 3, %v3566
      %v3568 = vrot.slane %v1046, %v3567
      %v3569 = vlaneseq
      %v3570 = vshrl.u32 %v3569, 7
      %v3571 = vsub.s32 4, %v3570
      %v3572 = vrot.slane %v1046, %v3571
      %v3573 = vlaneseq
      %v3574 = vshrl.u32 %v3573, 7
      %v3575 = vsub.s32 5, %v3574
      %v3576 = vrot.slane %v1046, %v3575
      %v3577 = vlaneseq
      %v3578 = vshrl.u32 %v3577, 7
      %v3579 = vsub.s32 6, %v3578
      %v3580 = vrot.slane %v1046, %v3579
      %v3581 = vlaneseq
      %v3582 = vshrl.u32 %v3581, 7
      %v3583 = vsub.s32 7, %v3582
      %v3584 = vrot.slane %v1046, %v3583
      %v3585 = vlaneseq
      %v3586 = vshrl.u32 %v3585, 7
      %v3587 = vsub.s32 0, %v3586
      %v3588 = vrot.slane %v1047, %v3587
      %v3589 = vlaneseq
      %v3590 = vshrl.u32 %v3589, 7
      %v3591 = vsub.s32 1, %v3590
      %v3592 = vrot.slane %v1047, %v3591
      %v3593 = vlaneseq
      %v3594 = vshrl.u32 %v3593, 7
      %v3595 = vsub.s32 2, %v3594
      %v3596 = vrot.slane %v1047, %v3595
      %v3597 = vlaneseq
      %v3598 = vshrl.u32 %v3597, 7
      %v3599 = vsub.s32 3, %v3598
      %v3600 = vrot.slane %v1047, %v3599
      %v3601 = vlaneseq
      %v3602 = vshrl.u32 %v3601, 7
      %v3603 = vsub.s32 4, %v3602
      %v3604 = vrot.slane %v1047, %v3603
      %v3605 = vlaneseq
      %v3606 = vshrl.u32 %v3605, 7
      %v3607 = vsub.s32 5, %v3606
      %v3608 = vrot.slane %v1047, %v3607
      %v3609 = vlaneseq
      %v3610 = vshrl.u32 %v3609, 7
      %v3611 = vsub.s32 6, %v3610
      %v3612 = vrot.slane %v1047, %v3611
      %v3613 = vlaneseq
      %v3614 = vshrl.u32 %v3613, 7
      %v3615 = vsub.s32 7, %v3614
      %v3616 = vrot.slane %v1047, %v3615
      %v3617 = vlaneseq
      %v3618 = vshrl.u32 %v3617, 7
      %v3619 = vsub.s32 0, %v3618
      %v3620 = vrot.slane %v1048, %v3619
      %v3621 = vlaneseq
      %v3622 = vshrl.u32 %v3621, 7
      %v3623 = vsub.s32 1, %v3622
      %v3624 = vrot.slane %v1048, %v3623
      %v3625 = vlaneseq
      %v3626 = vshrl.u32 %v3625, 7
      %v3627 = vsub.s32 2, %v3626
      %v3628 = vrot.slane %v1048, %v3627
      %v3629 = vlaneseq
      %v3630 = vshrl.u32 %v3629, 7
      %v3631 = vsub.s32 3, %v3630
      %v3632 = vrot.slane %v1048, %v3631
      %v3633 = vlaneseq
      %v3634 = vshrl.u32 %v3633, 7
      %v3635 = vsub.s32 4, %v3634
      %v3636 = vrot.slane %v1048, %v3635
      %v3637 = vlaneseq
      %v3638 = vshrl.u32 %v3637, 7
      %v3639 = vsub.s32 5, %v3638
      %v3640 = vrot.slane %v1048, %v3639
      %v3641 = vlaneseq
      %v3642 = vshrl.u32 %v3641, 7
      %v3643 = vsub.s32 6, %v3642
      %v3644 = vrot.slane %v1048, %v3643
      %v3645 = vlaneseq
      %v3646 = vshrl.u32 %v3645, 7
      %v3647 = vsub.s32 7, %v3646
      %v3648 = vrot.slane %v1048, %v3647
      %v3649 = vlaneseq
      %v3650 = vshrl.u32 %v3649, 7
      %v3651 = vsub.s32 0, %v3650
      %v3652 = vrot.slane %v1049, %v3651
      %v3653 = vlaneseq
      %v3654 = vshrl.u32 %v3653, 7
      %v3655 = vsub.s32 1, %v3654
      %v3656 = vrot.slane %v1049, %v3655
      %v3657 = vlaneseq
      %v3658 = vshrl.u32 %v3657, 7
      %v3659 = vsub.s32 2, %v3658
      %v3660 = vrot.slane %v1049, %v3659
      %v3661 = vlaneseq
      %v3662 = vshrl.u32 %v3661, 7
      %v3663 = vsub.s32 3, %v3662
      %v3664 = vrot.slane %v1049, %v3663
      %v3665 = vlaneseq
      %v3666 = vshrl.u32 %v3665, 7
      %v3667 = vsub.s32 4, %v3666
      %v3668 = vrot.slane %v1049, %v3667
      %v3669 = vlaneseq
      %v3670 = vshrl.u32 %v3669, 7
      %v3671 = vsub.s32 5, %v3670
      %v3672 = vrot.slane %v1049, %v3671
      %v3673 = vlaneseq
      %v3674 = vshrl.u32 %v3673, 7
      %v3675 = vsub.s32 6, %v3674
      %v3676 = vrot.slane %v1049, %v3675
      %v3677 = vlaneseq
      %v3678 = vshrl.u32 %v3677, 7
      %v3679 = vsub.s32 7, %v3678
      %v3680 = vrot.slane %v1049, %v3679
      %v3681 = vlaneseq
      %v3682 = vshrl.u32 %v3681, 7
      %v3683 = vsub.s32 0, %v3682
      %v3684 = vrot.slane %v1050, %v3683
      %v3685 = vlaneseq
      %v3686 = vshrl.u32 %v3685, 7
      %v3687 = vsub.s32 1, %v3686
      %v3688 = vrot.slane %v1050, %v3687
      %v3689 = vlaneseq
      %v3690 = vshrl.u32 %v3689, 7
      %v3691 = vsub.s32 2, %v3690
      %v3692 = vrot.slane %v1050, %v3691
      %v3693 = vlaneseq
      %v3694 = vshrl.u32 %v3693, 7
      %v3695 = vsub.s32 3, %v3694
      %v3696 = vrot.slane %v1050, %v3695
      %v3697 = vlaneseq
      %v3698 = vshrl.u32 %v3697, 7
      %v3699 = vsub.s32 4, %v3698
      %v3700 = vrot.slane %v1050, %v3699
      %v3701 = vlaneseq
      %v3702 = vshrl.u32 %v3701, 7
      %v3703 = vsub.s32 5, %v3702
      %v3704 = vrot.slane %v1050, %v3703
      %v3705 = vlaneseq
      %v3706 = vshrl.u32 %v3705, 7
      %v3707 = vsub.s32 6, %v3706
      %v3708 = vrot.slane %v1050, %v3707
      %v3709 = vlaneseq
      %v3710 = vshrl.u32 %v3709, 7
      %v3711 = vsub.s32 7, %v3710
      %v3712 = vrot.slane %v1050, %v3711
      %v3713 = vlaneseq
      %v3714 = vshrl.u32 %v3713, 7
      %v3715 = vsub.s32 0, %v3714
      %v3716 = vrot.slane %v1051, %v3715
      %v3717 = vlaneseq
      %v3718 = vshrl.u32 %v3717, 7
      %v3719 = vsub.s32 1, %v3718
      %v3720 = vrot.slane %v1051, %v3719
      %v3721 = vlaneseq
      %v3722 = vshrl.u32 %v3721, 7
      %v3723 = vsub.s32 2, %v3722
      %v3724 = vrot.slane %v1051, %v3723
      %v3725 = vlaneseq
      %v3726 = vshrl.u32 %v3725, 7
      %v3727 = vsub.s32 3, %v3726
      %v3728 = vrot.slane %v1051, %v3727
      %v3729 = vlaneseq
      %v3730 = vshrl.u32 %v3729, 7
      %v3731 = vsub.s32 4, %v3730
      %v3732 = vrot.slane %v1051, %v3731
      %v3733 = vlaneseq
      %v3734 = vshrl.u32 %v3733, 7
      %v3735 = vsub.s32 5, %v3734
      %v3736 = vrot.slane %v1051, %v3735
      %v3737 = vlaneseq
      %v3738 = vshrl.u32 %v3737, 7
      %v3739 = vsub.s32 6, %v3738
      %v3740 = vrot.slane %v1051, %v3739
      %v3741 = vlaneseq
      %v3742 = vshrl.u32 %v3741, 7
      %v3743 = vsub.s32 7, %v3742
      %v3744 = vrot.slane %v1051, %v3743
      %v3745 = vlaneseq
      %v3746 = vshrl.u32 %v3745, 7
      %v3747 = vsub.s32 0, %v3746
      %v3748 = vrot.slane %v1052, %v3747
      %v3749 = vlaneseq
      %v3750 = vshrl.u32 %v3749, 7
      %v3751 = vsub.s32 1, %v3750
      %v3752 = vrot.slane %v1052, %v3751
      %v3753 = vlaneseq
      %v3754 = vshrl.u32 %v3753, 7
      %v3755 = vsub.s32 2, %v3754
      %v3756 = vrot.slane %v1052, %v3755
      %v3757 = vlaneseq
      %v3758 = vshrl.u32 %v3757, 7
      %v3759 = vsub.s32 3, %v3758
      %v3760 = vrot.slane %v1052, %v3759
      %v3761 = vlaneseq
      %v3762 = vshrl.u32 %v3761, 7
      %v3763 = vsub.s32 4, %v3762
      %v3764 = vrot.slane %v1052, %v3763
      %v3765 = vlaneseq
      %v3766 = vshrl.u32 %v3765, 7
      %v3767 = vsub.s32 5, %v3766
      %v3768 = vrot.slane %v1052, %v3767
      %v3769 = vlaneseq
      %v3770 = vshrl.u32 %v3769, 7
      %v3771 = vsub.s32 6, %v3770
      %v3772 = vrot.slane %v1052, %v3771
      %v3773 = vlaneseq
      %v3774 = vshrl.u32 %v3773, 7
      %v3775 = vsub.s32 7, %v3774
      %v3776 = vrot.slane %v1052, %v3775
      %v3777 = vlaneseq
      %v3778 = vshrl.u32 %v3777, 7
      %v3779 = vsub.s32 0, %v3778
      %v3780 = vrot.slane %v1053, %v3779
      %v3781 = vlaneseq
      %v3782 = vshrl.u32 %v3781, 7
      %v3783 = vsub.s32 1, %v3782
      %v3784 = vrot.slane %v1053, %v3783
      %v3785 = vlaneseq
      %v3786 = vshrl.u32 %v3785, 7
      %v3787 = vsub.s32 2, %v3786
      %v3788 = vrot.slane %v1053, %v3787
      %v3789 = vlaneseq
      %v3790 = vshrl.u32 %v3789, 7
      %v3791 = vsub.s32 3, %v3790
      %v3792 = vrot.slane %v1053, %v3791
      %v3793 = vlaneseq
      %v3794 = vshrl.u32 %v3793, 7
      %v3795 = vsub.s32 4, %v3794
      %v3796 = vrot.slane %v1053, %v3795
      %v3797 = vlaneseq
      %v3798 = vshrl.u32 %v3797, 7
      %v3799 = vsub.s32 5, %v3798
      %v3800 = vrot.slane %v1053, %v3799
      %v3801 = vlaneseq
      %v3802 = vshrl.u32 %v3801, 7
      %v3803 = vsub.s32 6, %v3802
      %v3804 = vrot.slane %v1053, %v3803
      %v3805 = vlaneseq
      %v3806 = vshrl.u32 %v3805, 7
      %v3807 = vsub.s32 7, %v3806
      %v3808 = vrot.slane %v1053, %v3807
      %v3809 = vlaneseq
      %v3810 = vshrl.u32 %v3809, 7
      %v3811 = vsub.s32 0, %v3810
      %v3812 = vrot.slane %v1054, %v3811
      %v3813 = vlaneseq
      %v3814 = vshrl.u32 %v3813, 7
      %v3815 = vsub.s32 1, %v3814
      %v3816 = vrot.slane %v1054, %v3815
      %v3817 = vlaneseq
      %v3818 = vshrl.u32 %v3817, 7
      %v3819 = vsub.s32 2, %v3818
      %v3820 = vrot.slane %v1054, %v3819
      %v3821 = vlaneseq
      %v3822 = vshrl.u32 %v3821, 7
      %v3823 = vsub.s32 3, %v3822
      %v3824 = vrot.slane %v1054, %v3823
      %v3825 = vlaneseq
      %v3826 = vshrl.u32 %v3825, 7
      %v3827 = vsub.s32 4, %v3826
      %v3828 = vrot.slane %v1054, %v3827
      %v3829 = vlaneseq
      %v3830 = vshrl.u32 %v3829, 7
      %v3831 = vsub.s32 5, %v3830
      %v3832 = vrot.slane %v1054, %v3831
      %v3833 = vlaneseq
      %v3834 = vshrl.u32 %v3833, 7
      %v3835 = vsub.s32 6, %v3834
      %v3836 = vrot.slane %v1054, %v3835
      %v3837 = vlaneseq
      %v3838 = vshrl.u32 %v3837, 7
      %v3839 = vsub.s32 7, %v3838
      %v3840 = vrot.slane %v1054, %v3839
      %v3841 = vlaneseq
      %v3842 = vshrl.u32 %v3841, 7
      %v3843 = vsub.s32 0, %v3842
      %v3844 = vrot.slane %v1055, %v3843
      %v3845 = vlaneseq
      %v3846 = vshrl.u32 %v3845, 7
      %v3847 = vsub.s32 1, %v3846
      %v3848 = vrot.slane %v1055, %v3847
      %v3849 = vlaneseq
      %v3850 = vshrl.u32 %v3849, 7
      %v3851 = vsub.s32 2, %v3850
      %v3852 = vrot.slane %v1055, %v3851
      %v3853 = vlaneseq
      %v3854 = vshrl.u32 %v3853, 7
      %v3855 = vsub.s32 3, %v3854
      %v3856 = vrot.slane %v1055, %v3855
      %v3857 = vlaneseq
      %v3858 = vshrl.u32 %v3857, 7
      %v3859 = vsub.s32 4, %v3858
      %v3860 = vrot.slane %v1055, %v3859
      %v3861 = vlaneseq
      %v3862 = vshrl.u32 %v3861, 7
      %v3863 = vsub.s32 5, %v3862
      %v3864 = vrot.slane %v1055, %v3863
      %v3865 = vlaneseq
      %v3866 = vshrl.u32 %v3865, 7
      %v3867 = vsub.s32 6, %v3866
      %v3868 = vrot.slane %v1055, %v3867
      %v3869 = vlaneseq
      %v3870 = vshrl.u32 %v3869, 7
      %v3871 = vsub.s32 7, %v3870
      %v3872 = vrot.slane %v1055, %v3871
      %v3873 = vlaneseq
      %v3874 = vshrl.u32 %v3873, 7
      %v3875 = vsub.s32 0, %v3874
      %v3876 = vrot.slane %v1056, %v3875
      %v3877 = vlaneseq
      %v3878 = vshrl.u32 %v3877, 7
      %v3879 = vsub.s32 1, %v3878
      %v3880 = vrot.slane %v1056, %v3879
      %v3881 = vlaneseq
      %v3882 = vshrl.u32 %v3881, 7
      %v3883 = vsub.s32 2, %v3882
      %v3884 = vrot.slane %v1056, %v3883
      %v3885 = vlaneseq
      %v3886 = vshrl.u32 %v3885, 7
      %v3887 = vsub.s32 3, %v3886
      %v3888 = vrot.slane %v1056, %v3887
      %v3889 = vlaneseq
      %v3890 = vshrl.u32 %v3889, 7
      %v3891 = vsub.s32 4, %v3890
      %v3892 = vrot.slane %v1056, %v3891
      %v3893 = vlaneseq
      %v3894 = vshrl.u32 %v3893, 7
      %v3895 = vsub.s32 5, %v3894
      %v3896 = vrot.slane %v1056, %v3895
      %v3897 = vlaneseq
      %v3898 = vshrl.u32 %v3897, 7
      %v3899 = vsub.s32 6, %v3898
      %v3900 = vrot.slane %v1056, %v3899
      %v3901 = vlaneseq
      %v3902 = vshrl.u32 %v3901, 7
      %v3903 = vsub.s32 7, %v3902
      %v3904 = vrot.slane %v1056, %v3903
      %v4097 = vcombine.high %v3313, %v3313
      %v4098 = vcombine.high %v3314, %v3314
      %v4099 = vcombine.high %v3315, %v3315
      %v4100 = vcombine.high %v3316, %v3316
      %v4101 = vcombine.high %v3317, %v3317
      %v4102 = vcombine.high %v3318, %v3318
      %v4103 = vcombine.high %v3319, %v3319
      %v4104 = vcombine.high %v3320, %v3320
      %v4105 = vcombine.high %v3321, %v3321
      %v4106 = vcombine.high %v3322, %v3322
      %v4107 = vcombine.high %v3323, %v3323
      %v4108 = vcombine.high %v3324, %v3324
      %v4109 = vcombine.high %v3325, %v3325
      %v4110 = vcombine.high %v3326, %v3326
      %v4111 = vcombine.high %v3327, %v3327
      %v4112 = vcombine.high %v3328, %v3328
      %v4113 = vcombine.high %v3329, %v3329
      %v4114 = vcombine.high %v3330, %v3330
      %v4115 = vcombine.high %v3331, %v3331
      %v4116 = vcombine.high %v3332, %v3332
      %v4117 = vcombine.high %v3333, %v3333
      %v4118 = vcombine.high %v3334, %v3334
      %v4119 = vcombine.high %v3335, %v3335
      %v4120 = vcombine.high %v3336, %v3336
      %v4121 = vcombine.high %v3337, %v3337
      %v4122 = vcombine.high %v3338, %v3338
      %v4123 = vcombine.high %v3339, %v3339
      %v4124 = vcombine.high %v3340, %v3340
      %v4125 = vcombine.high %v3341, %v3341
      %v4126 = vcombine.high %v3342, %v3342
      %v4127 = vcombine.high %v3343, %v3343
      %v4128 = vcombine.high %v3344, %v3344
      %v4129 = vcombine.high %v3345, %v3345
      %v4130 = vcombine.high %v3346, %v3346
      %v4131 = vcombine.high %v3347, %v3347
      %v4132 = vcombine.high %v3348, %v3348
      %v4133 = vcombine.high %v3349, %v3349
      %v4134 = vcombine.high %v3350, %v3350
      %v4135 = vcombine.high %v3351, %v3351
      %v4136 = vcombine.high %v3352, %v3352
      %v4137 = vcombine.high %v3353, %v3353
      %v4138 = vcombine.high %v3354, %v3354
      %v4139 = vcombine.high %v3355, %v3355
      %v4140 = vcombine.high %v3356, %v3356
      %v4141 = vcombine.high %v3357, %v3357
      %v4142 = vcombine.high %v3358, %v3358
      %v4143 = vcombine.high %v3359, %v3359
      %v4144 = vcombine.high %v3360, %v3360
      %v4145 = vcombine.high %v3361, %v3361
      %v4146 = vcombine.high %v3362, %v3362
      %v4147 = vcombine.high %v3363, %v3363
      %v4148 = vcombine.high %v3364, %v3364
      %v4149 = vcombine.high %v3365, %v3365
      %v4150 = vcombine.high %v3366, %v3366
      %v4151 = vcombine.high %v3367, %v3367
      %v4152 = vcombine.high %v3368, %v3368
      %v4153 = vcombine.high %v3369, %v3369
      %v4154 = vcombine.high %v3370, %v3370
      %v4155 = vcombine.high %v3371, %v3371
      %v4156 = vcombine.high %v3372, %v3372
      %v4157 = vcombine.high %v3373, %v3373
      %v4158 = vcombine.high %v3374, %v3374
      %v4159 = vcombine.high %v3375, %v3375
      %v4160 = vcombine.high %v3376, %v3376
      %v4225 = vmul.f32 %v3396, %v3313
      %v4226 = vmul.f32 %v3400, %v4097
      %v4227 = vmul.f32 %v3404, %v3314
      %v4228 = vmul.f32 %v3408, %v4098
      %v4229 = vmul.f32 %v3412, %v3315
      %v4230 = vmul.f32 %v3416, %v4099
      %v4231 = vmul.f32 %v3420, %v3316
      %v4232 = vmul.f32 %v3424, %v4100
      %v4233 = vmul.f32 %v3428, %v3317
      %v4234 = vmul.f32 %v3432, %v4101
      %v4235 = vmul.f32 %v3436, %v3318
      %v4236 = vmul.f32 %v3440, %v4102
      %v4237 = vmul.f32 %v3444, %v3319
      %v4238 = vmul.f32 %v3448, %v4103
      %v4239 = vmul.f32 %v3452, %v3320
      %v4240 = vmul.f32 %v3456, %v4104
      %v4241 = vmul.f32 %v3460, %v3321
      %v4242 = vmul.f32 %v3464, %v4105
      %v4243 = vmul.f32 %v3468, %v3322
      %v4244 = vmul.f32 %v3472, %v4106
      %v4245 = vmul.f32 %v3476, %v3323
      %v4246 = vmul.f32 %v3480, %v4107
      %v4247 = vmul.f32 %v3484, %v3324
      %v4248 = vmul.f32 %v3488, %v4108
      %v4249 = vmul.f32 %v3492, %v3325
      %v4250 = vmul.f32 %v3496, %v4109
      %v4251 = vmul.f32 %v3500, %v3326
      %v4252 = vmul.f32 %v3504, %v4110
      %v4253 = vmul.f32 %v3508, %v3327
      %v4254 = vmul.f32 %v3512, %v4111
      %v4255 = vmul.f32 %v3516, %v3328
      %v4256 = vmul.f32 %v3520, %v4112
      %v4257 = vmul.f32 %v3524, %v3329
      %v4258 = vmul.f32 %v3528, %v4113
      %v4259 = vmul.f32 %v3532, %v3330
      %v4260 = vmul.f32 %v3536, %v4114
      %v4261 = vmul.f32 %v3540, %v3331
      %v4262 = vmul.f32 %v3544, %v4115
      %v4263 = vmul.f32 %v3548, %v3332
      %v4264 = vmul.f32 %v3552, %v4116
      %v4265 = vmul.f32 %v3556, %v3333
      %v4266 = vmul.f32 %v3560, %v4117
      %v4267 = vmul.f32 %v3564, %v3334
      %v4268 = vmul.f32 %v3568, %v4118
      %v4269 = vmul.f32 %v3572, %v3335
      %v4270 = vmul.f32 %v3576, %v4119
      %v4271 = vmul.f32 %v3580, %v3336
      %v4272 = vmul.f32 %v3584, %v4120
      %v4273 = vmul.f32 %v3588, %v3337
      %v4274 = vmul.f32 %v3592, %v4121
      %v4275 = vmul.f32 %v3596, %v3338
      %v4276 = vmul.f32 %v3600, %v4122
      %v4277 = vmul.f32 %v3604, %v3339
      %v4278 = vmul.f32 %v3608, %v4123
      %v4279 = vmul.f32 %v3612, %v3340
      %v4280 = vmul.f32 %v3616, %v4124
      %v4281 = vmul.f32 %v3620, %v3341
      %v4282 = vmul.f32 %v3624, %v4125
      %v4283 = vmul.f32 %v3628, %v3342
      %v4284 = vmul.f32 %v3632, %v4126
      %v4285 = vmul.f32 %v3636, %v3343
      %v4286 = vmul.f32 %v3640, %v4127
      %v4287 = vmul.f32 %v3644, %v3344
      %v4288 = vmul.f32 %v3648, %v4128
      %v4289 = vmul.f32 %v3652, %v3345
      %v4290 = vmul.f32 %v3656, %v4129
      %v4291 = vmul.f32 %v3660, %v3346
      %v4292 = vmul.f32 %v3664, %v4130
      %v4293 = vmul.f32 %v3668, %v3347
      %v4294 = vmul.f32 %v3672, %v4131
      %v4295 = vmul.f32 %v3676, %v3348
      %v4296 = vmul.f32 %v3680, %v4132
      %v4297 = vmul.f32 %v3684, %v3349
      %v4298 = vmul.f32 %v3688, %v4133
      %v4299 = vmul.f32 %v3692, %v3350
      %v4300 = vmul.f32 %v3696, %v4134
      %v4301 = vmul.f32 %v3700, %v3351
      %v4302 = vmul.f32 %v3704, %v4135
      %v4303 = vmul.f32 %v3708, %v3352
      %v4304 = vmul.f32 %v3712, %v4136
      %v4305 = vmul.f32 %v3716, %v3353
      %v4306 = vmul.f32 %v3720, %v4137
      %v4307 = vmul.f32 %v3724, %v3354
      %v4308 = vmul.f32 %v3728, %v4138
      %v4309 = vmul.f32 %v3732, %v3355
      %v4310 = vmul.f32 %v3736, %v4139
      %v4311 = vmul.f32 %v3740, %v3356
      %v4312 = vmul.f32 %v3744, %v4140
      %v4313 = vmul.f32 %v3748, %v3357
      %v4314 = vmul.f32 %v3752, %v4141
      %v4315 = vmul.f32 %v3756, %v3358
      %v4316 = vmul.f32 %v3760, %v4142
      %v4317 = vmul.f32 %v3764, %v3359
      %v4318 = vmul.f32 %v3768, %v4143
      %v4319 = vmul.f32 %v3772, %v3360
      %v4320 = vmul.f32 %v3776, %v4144
      %v4321 = vmul.f32 %v3780, %v3361
      %v4322 = vmul.f32 %v3784, %v4145
      %v4323 = vmul.f32 %v3788, %v3362
      %v4324 = vmul.f32 %v3792, %v4146
      %v4325 = vmul.f32 %v3796, %v3363
      %v4326 = vmul.f32 %v3800, %v4147
      %v4327 = vmul.f32 %v3804, %v3364
      %v4328 = vmul.f32 %v3808, %v4148
      %v4329 = vmul.f32 %v3812, %v3365
      %v4330 = vmul.f32 %v3816, %v4149
      %v4331 = vmul.f32 %v3820, %v3366
      %v4332 = vmul.f32 %v3824, %v4150
      %v4333 = vmul.f32 %v3828, %v3367
      %v4334 = vmul.f32 %v3832, %v4151
      %v4335 = vmul.f32 %v3836, %v3368
      %v4336 = vmul.f32 %v3840, %v4152
      %v4337 = vmul.f32 %v3844, %v3369
      %v4338 = vmul.f32 %v3848, %v4153
      %v4339 = vmul.f32 %v3852, %v3370
      %v4340 = vmul.f32 %v3856, %v4154
      %v4341 = vmul.f32 %v3860, %v3371
      %v4342 = vmul.f32 %v3864, %v4155
      %v4343 = vmul.f32 %v3868, %v3372
      %v4344 = vmul.f32 %v3872, %v4156
      %v4345 = vmul.f32 %v3876, %v3373
      %v4346 = vmul.f32 %v3880, %v4157
      %v4347 = vmul.f32 %v3884, %v3374
      %v4348 = vmul.f32 %v3888, %v4158
      %v4349 = vmul.f32 %v3892, %v3375
      %v4350 = vmul.f32 %v3896, %v4159
      %v4351 = vmul.f32 %v3900, %v3376
      %v4352 = vmul.f32 %v3904, %v4160
      %v4353 = vadd.f32 %v3185, %v4225
      %v4354 = vadd.f32 %v3186, %v4226
      %v4355 = vadd.f32 %v3187, %v4227
      %v4356 = vadd.f32 %v3188, %v4228
      %v4357 = vadd.f32 %v3189, %v4229
      %v4358 = vadd.f32 %v3190, %v4230
      %v4359 = vadd.f32 %v3191, %v4231
      %v4360 = vadd.f32 %v3192, %v4232
      %v4361 = vadd.f32 %v3193, %v4233
      %v4362 = vadd.f32 %v3194, %v4234
      %v4363 = vadd.f32 %v3195, %v4235
      %v4364 = vadd.f32 %v3196, %v4236
      %v4365 = vadd.f32 %v3197, %v4237
      %v4366 = vadd.f32 %v3198, %v4238
      %v4367 = vadd.f32 %v3199, %v4239
      %v4368 = vadd.f32 %v3200, %v4240
      %v4369 = vadd.f32 %v3201, %v4241
      %v4370 = vadd.f32 %v3202, %v4242
      %v4371 = vadd.f32 %v3203, %v4243
      %v4372 = vadd.f32 %v3204, %v4244
      %v4373 = vadd.f32 %v3205, %v4245
      %v4374 = vadd.f32 %v3206, %v4246
      %v4375 = vadd.f32 %v3207, %v4247
      %v4376 = vadd.f32 %v3208, %v4248
      %v4377 = vadd.f32 %v3209, %v4249
      %v4378 = vadd.f32 %v3210, %v4250
      %v4379 = vadd.f32 %v3211, %v4251
      %v4380 = vadd.f32 %v3212, %v4252
      %v4381 = vadd.f32 %v3213, %v4253
      %v4382 = vadd.f32 %v3214, %v4254
      %v4383 = vadd.f32 %v3215, %v4255
      %v4384 = vadd.f32 %v3216, %v4256
      %v4385 = vadd.f32 %v3217, %v4257
      %v4386 = vadd.f32 %v3218, %v4258
      %v4387 = vadd.f32 %v3219, %v4259
      %v4388 = vadd.f32 %v3220, %v4260
      %v4389 = vadd.f32 %v3221, %v4261
      %v4390 = vadd.f32 %v3222, %v4262
      %v4391 = vadd.f32 %v3223, %v4263
      %v4392 = vadd.f32 %v3224, %v4264
      %v4393 = vadd.f32 %v3225, %v4265
      %v4394 = vadd.f32 %v3226, %v4266
      %v4395 = vadd.f32 %v3227, %v4267
      %v4396 = vadd.f32 %v3228, %v4268
      %v4397 = vadd.f32 %v3229, %v4269
      %v4398 = vadd.f32 %v3230, %v4270
      %v4399 = vadd.f32 %v3231, %v4271
      %v4400 = vadd.f32 %v3232, %v4272
      %v4401 = vadd.f32 %v3233, %v4273
      %v4402 = vadd.f32 %v3234, %v4274
      %v4403 = vadd.f32 %v3235, %v4275
      %v4404 = vadd.f32 %v3236, %v4276
      %v4405 = vadd.f32 %v3237, %v4277
      %v4406 = vadd.f32 %v3238, %v4278
      %v4407 = vadd.f32 %v3239, %v4279
      %v4408 = vadd.f32 %v3240, %v4280
      %v4409 = vadd.f32 %v3241, %v4281
      %v4410 = vadd.f32 %v3242, %v4282
      %v4411 = vadd.f32 %v3243, %v4283
      %v4412 = vadd.f32 %v3244, %v4284
      %v4413 = vadd.f32 %v3245, %v4285
      %v4414 = vadd.f32 %v3246, %v4286
      %v4415 = vadd.f32 %v3247, %v4287
      %v4416 = vadd.f32 %v3248, %v4288
      %v4417 = vadd.f32 %v3249, %v4289
      %v4418 = vadd.f32 %v3250, %v4290
      %v4419 = vadd.f32 %v3251, %v4291
      %v4420 = vadd.f32 %v3252, %v4292
      %v4421 = vadd.f32 %v3253, %v4293
      %v4422 = vadd.f32 %v3254, %v4294
      %v4423 = vadd.f32 %v3255, %v4295
      %v4424 = vadd.f32 %v3256, %v4296
      %v4425 = vadd.f32 %v3257, %v4297
      %v4426 = vadd.f32 %v3258, %v4298
      %v4427 = vadd.f32 %v3259, %v4299
      %v4428 = vadd.f32 %v3260, %v4300
      %v4429 = vadd.f32 %v3261, %v4301
      %v4430 = vadd.f32 %v3262, %v4302
      %v4431 = vadd.f32 %v3263, %v4303
      %v4432 = vadd.f32 %v3264, %v4304
      %v4433 = vadd.f32 %v3265, %v4305
      %v4434 = vadd.f32 %v3266, %v4306
      %v4435 = vadd.f32 %v3267, %v4307
      %v4436 = vadd.f32 %v3268, %v4308
      %v4437 = vadd.f32 %v3269, %v4309
      %v4438 = vadd.f32 %v3270, %v4310
      %v4439 = vadd.f32 %v3271, %v4311
      %v4440 = vadd.f32 %v3272, %v4312
      %v4441 = vadd.f32 %v3273, %v4313
      %v4442 = vadd.f32 %v3274, %v4314
      %v4443 = vadd.f32 %v3275, %v4315
      %v4444 = vadd.f32 %v3276, %v4316
      %v4445 = vadd.f32 %v3277, %v4317
      %v4446 = vadd.f32 %v3278, %v4318
      %v4447 = vadd.f32 %v3279, %v4319
      %v4448 = vadd.f32 %v3280, %v4320
      %v4449 = vadd.f32 %v3281, %v4321
      %v4450 = vadd.f32 %v3282, %v4322
      %v4451 = vadd.f32 %v3283, %v4323
      %v4452 = vadd.f32 %v3284, %v4324
      %v4453 = vadd.f32 %v3285, %v4325
      %v4454 = vadd.f32 %v3286, %v4326
      %v4455 = vadd.f32 %v3287, %v4327
      %v4456 = vadd.f32 %v3288, %v4328
      %v4457 = vadd.f32 %v3289, %v4329
      %v4458 = vadd.f32 %v3290, %v4330
      %v4459 = vadd.f32 %v3291, %v4331
      %v4460 = vadd.f32 %v3292, %v4332
      %v4461 = vadd.f32 %v3293, %v4333
      %v4462 = vadd.f32 %v3294, %v4334
      %v4463 = vadd.f32 %v3295, %v4335
      %v4464 = vadd.f32 %v3296, %v4336
      %v4465 = vadd.f32 %v3297, %v4337
      %v4466 = vadd.f32 %v3298, %v4338
      %v4467 = vadd.f32 %v3299, %v4339
      %v4468 = vadd.f32 %v3300, %v4340
      %v4469 = vadd.f32 %v3301, %v4341
      %v4470 = vadd.f32 %v3302, %v4342
      %v4471 = vadd.f32 %v3303, %v4343
      %v4472 = vadd.f32 %v3304, %v4344
      %v4473 = vadd.f32 %v3305, %v4345
      %v4474 = vadd.f32 %v3306, %v4346
      %v4475 = vadd.f32 %v3307, %v4347
      %v4476 = vadd.f32 %v3308, %v4348
      %v4477 = vadd.f32 %v3309, %v4349
      %v4478 = vadd.f32 %v3310, %v4350
      %v4479 = vadd.f32 %v3311, %v4351
      %v4480 = vadd.f32 %v3312, %v4352
      %v4481 = vld [vmem:[%s453] sm:$0x77]
      %v4482 = vld [vmem:[%s453 + $0x8] sm:$0x77]
      %v4483 = vld [vmem:[%s453 + $0x10] sm:$0x77]
      %v4484 = vld [vmem:[%s453 + $0x18] sm:$0x77]
      %v4485 = vld [vmem:[%s453 + $0x20] sm:$0x77]
      %v4486 = vld [vmem:[%s453 + $0x28] sm:$0x77]
      %v4487 = vld [vmem:[%s453 + $0x30] sm:$0x77]
      %v4488 = vld [vmem:[%s453 + $0x38] sm:$0x77]
      %v4489 = vld [vmem:[%s453 + $0x40] sm:$0x77]
      %v4490 = vld [vmem:[%s453 + $0x48] sm:$0x77]
      %v4491 = vld [vmem:[%s453 + $0x50] sm:$0x77]
      %v4492 = vld [vmem:[%s453 + $0x58] sm:$0x77]
      %v4493 = vld [vmem:[%s453 + $0x60] sm:$0x77]
      %v4494 = vld [vmem:[%s453 + $0x68] sm:$0x77]
      %v4495 = vld [vmem:[%s453 + $0x70] sm:$0x77]
      %v4496 = vld [vmem:[%s453 + $0x78] sm:$0x77]
      %v4497 = vld [vmem:[%s453 + $0x80] sm:$0x77]
      %v4498 = vld [vmem:[%s453 + $0x88] sm:$0x77]
      %v4499 = vld [vmem:[%s453 + $0x90] sm:$0x77]
      %v4500 = vld [vmem:[%s453 + $0x98] sm:$0x77]
      %v4501 = vld [vmem:[%s453 + $0xa0] sm:$0x77]
      %v4502 = vld [vmem:[%s453 + $0xa8] sm:$0x77]
      %v4503 = vld [vmem:[%s453 + $0xb0] sm:$0x77]
      %v4504 = vld [vmem:[%s453 + $0xb8] sm:$0x77]
      %v4505 = vld [vmem:[%s453 + $0xc0] sm:$0x77]
      %v4506 = vld [vmem:[%s453 + $0xc8] sm:$0x77]
      %v4507 = vld [vmem:[%s453 + $0xd0] sm:$0x77]
      %v4508 = vld [vmem:[%s453 + $0xd8] sm:$0x77]
      %v4509 = vld [vmem:[%s453 + $0xe0] sm:$0x77]
      %v4510 = vld [vmem:[%s453 + $0xe8] sm:$0x77]
      %v4511 = vld [vmem:[%s453 + $0xf0] sm:$0x77]
      %v4512 = vld [vmem:[%s453 + $0xf8] sm:$0x77]
      %v4513 = vld [vmem:[%s453 + $0x100] sm:$0x77]
      %v4514 = vld [vmem:[%s453 + $0x108] sm:$0x77]
      %v4515 = vld [vmem:[%s453 + $0x110] sm:$0x77]
      %v4516 = vld [vmem:[%s453 + $0x118] sm:$0x77]
      %v4517 = vld [vmem:[%s453 + $0x120] sm:$0x77]
      %v4518 = vld [vmem:[%s453 + $0x128] sm:$0x77]
      %v4519 = vld [vmem:[%s453 + $0x130] sm:$0x77]
      %v4520 = vld [vmem:[%s453 + $0x138] sm:$0x77]
      %v4521 = vld [vmem:[%s453 + $0x140] sm:$0x77]
      %v4522 = vld [vmem:[%s453 + $0x148] sm:$0x77]
      %v4523 = vld [vmem:[%s453 + $0x150] sm:$0x77]
      %v4524 = vld [vmem:[%s453 + $0x158] sm:$0x77]
      %v4525 = vld [vmem:[%s453 + $0x160] sm:$0x77]
      %v4526 = vld [vmem:[%s453 + $0x168] sm:$0x77]
      %v4527 = vld [vmem:[%s453 + $0x170] sm:$0x77]
      %v4528 = vld [vmem:[%s453 + $0x178] sm:$0x77]
      %v4529 = vld [vmem:[%s453 + $0x180] sm:$0x77]
      %v4530 = vld [vmem:[%s453 + $0x188] sm:$0x77]
      %v4531 = vld [vmem:[%s453 + $0x190] sm:$0x77]
      %v4532 = vld [vmem:[%s453 + $0x198] sm:$0x77]
      %v4533 = vld [vmem:[%s453 + $0x1a0] sm:$0x77]
      %v4534 = vld [vmem:[%s453 + $0x1a8] sm:$0x77]
      %v4535 = vld [vmem:[%s453 + $0x1b0] sm:$0x77]
      %v4536 = vld [vmem:[%s453 + $0x1b8] sm:$0x77]
      %v4537 = vld [vmem:[%s453 + $0x1c0] sm:$0x77]
      %v4538 = vld [vmem:[%s453 + $0x1c8] sm:$0x77]
      %v4539 = vld [vmem:[%s453 + $0x1d0] sm:$0x77]
      %v4540 = vld [vmem:[%s453 + $0x1d8] sm:$0x77]
      %v4541 = vld [vmem:[%s453 + $0x1e0] sm:$0x77]
      %v4542 = vld [vmem:[%s453 + $0x1e8] sm:$0x77]
      %v4543 = vld [vmem:[%s453 + $0x1f0] sm:$0x77]
      %v4544 = vld [vmem:[%s453 + $0x1f8] sm:$0x77]
      %v4561 = vlaneseq
      %v4562 = vshrl.u32 %v4561, 7
      %v4563 = vsub.s32 0, %v4562
      %v4564 = vrot.slane %v1089, %v4563
      %v4565 = vlaneseq
      %v4566 = vshrl.u32 %v4565, 7
      %v4567 = vsub.s32 1, %v4566
      %v4568 = vrot.slane %v1089, %v4567
      %v4569 = vlaneseq
      %v4570 = vshrl.u32 %v4569, 7
      %v4571 = vsub.s32 2, %v4570
      %v4572 = vrot.slane %v1089, %v4571
      %v4573 = vlaneseq
      %v4574 = vshrl.u32 %v4573, 7
      %v4575 = vsub.s32 3, %v4574
      %v4576 = vrot.slane %v1089, %v4575
      %v4577 = vlaneseq
      %v4578 = vshrl.u32 %v4577, 7
      %v4579 = vsub.s32 4, %v4578
      %v4580 = vrot.slane %v1089, %v4579
      %v4581 = vlaneseq
      %v4582 = vshrl.u32 %v4581, 7
      %v4583 = vsub.s32 5, %v4582
      %v4584 = vrot.slane %v1089, %v4583
      %v4585 = vlaneseq
      %v4586 = vshrl.u32 %v4585, 7
      %v4587 = vsub.s32 6, %v4586
      %v4588 = vrot.slane %v1089, %v4587
      %v4589 = vlaneseq
      %v4590 = vshrl.u32 %v4589, 7
      %v4591 = vsub.s32 7, %v4590
      %v4592 = vrot.slane %v1089, %v4591
      %v4593 = vlaneseq
      %v4594 = vshrl.u32 %v4593, 7
      %v4595 = vsub.s32 0, %v4594
      %v4596 = vrot.slane %v1090, %v4595
      %v4597 = vlaneseq
      %v4598 = vshrl.u32 %v4597, 7
      %v4599 = vsub.s32 1, %v4598
      %v4600 = vrot.slane %v1090, %v4599
      %v4601 = vlaneseq
      %v4602 = vshrl.u32 %v4601, 7
      %v4603 = vsub.s32 2, %v4602
      %v4604 = vrot.slane %v1090, %v4603
      %v4605 = vlaneseq
      %v4606 = vshrl.u32 %v4605, 7
      %v4607 = vsub.s32 3, %v4606
      %v4608 = vrot.slane %v1090, %v4607
      %v4609 = vlaneseq
      %v4610 = vshrl.u32 %v4609, 7
      %v4611 = vsub.s32 4, %v4610
      %v4612 = vrot.slane %v1090, %v4611
      %v4613 = vlaneseq
      %v4614 = vshrl.u32 %v4613, 7
      %v4615 = vsub.s32 5, %v4614
      %v4616 = vrot.slane %v1090, %v4615
      %v4617 = vlaneseq
      %v4618 = vshrl.u32 %v4617, 7
      %v4619 = vsub.s32 6, %v4618
      %v4620 = vrot.slane %v1090, %v4619
      %v4621 = vlaneseq
      %v4622 = vshrl.u32 %v4621, 7
      %v4623 = vsub.s32 7, %v4622
      %v4624 = vrot.slane %v1090, %v4623
      %v4625 = vlaneseq
      %v4626 = vshrl.u32 %v4625, 7
      %v4627 = vsub.s32 0, %v4626
      %v4628 = vrot.slane %v1091, %v4627
      %v4629 = vlaneseq
      %v4630 = vshrl.u32 %v4629, 7
      %v4631 = vsub.s32 1, %v4630
      %v4632 = vrot.slane %v1091, %v4631
      %v4633 = vlaneseq
      %v4634 = vshrl.u32 %v4633, 7
      %v4635 = vsub.s32 2, %v4634
      %v4636 = vrot.slane %v1091, %v4635
      %v4637 = vlaneseq
      %v4638 = vshrl.u32 %v4637, 7
      %v4639 = vsub.s32 3, %v4638
      %v4640 = vrot.slane %v1091, %v4639
      %v4641 = vlaneseq
      %v4642 = vshrl.u32 %v4641, 7
      %v4643 = vsub.s32 4, %v4642
      %v4644 = vrot.slane %v1091, %v4643
      %v4645 = vlaneseq
      %v4646 = vshrl.u32 %v4645, 7
      %v4647 = vsub.s32 5, %v4646
      %v4648 = vrot.slane %v1091, %v4647
      %v4649 = vlaneseq
      %v4650 = vshrl.u32 %v4649, 7
      %v4651 = vsub.s32 6, %v4650
      %v4652 = vrot.slane %v1091, %v4651
      %v4653 = vlaneseq
      %v4654 = vshrl.u32 %v4653, 7
      %v4655 = vsub.s32 7, %v4654
      %v4656 = vrot.slane %v1091, %v4655
      %v4657 = vlaneseq
      %v4658 = vshrl.u32 %v4657, 7
      %v4659 = vsub.s32 0, %v4658
      %v4660 = vrot.slane %v1092, %v4659
      %v4661 = vlaneseq
      %v4662 = vshrl.u32 %v4661, 7
      %v4663 = vsub.s32 1, %v4662
      %v4664 = vrot.slane %v1092, %v4663
      %v4665 = vlaneseq
      %v4666 = vshrl.u32 %v4665, 7
      %v4667 = vsub.s32 2, %v4666
      %v4668 = vrot.slane %v1092, %v4667
      %v4669 = vlaneseq
      %v4670 = vshrl.u32 %v4669, 7
      %v4671 = vsub.s32 3, %v4670
      %v4672 = vrot.slane %v1092, %v4671
      %v4673 = vlaneseq
      %v4674 = vshrl.u32 %v4673, 7
      %v4675 = vsub.s32 4, %v4674
      %v4676 = vrot.slane %v1092, %v4675
      %v4677 = vlaneseq
      %v4678 = vshrl.u32 %v4677, 7
      %v4679 = vsub.s32 5, %v4678
      %v4680 = vrot.slane %v1092, %v4679
      %v4681 = vlaneseq
      %v4682 = vshrl.u32 %v4681, 7
      %v4683 = vsub.s32 6, %v4682
      %v4684 = vrot.slane %v1092, %v4683
      %v4685 = vlaneseq
      %v4686 = vshrl.u32 %v4685, 7
      %v4687 = vsub.s32 7, %v4686
      %v4688 = vrot.slane %v1092, %v4687
      %v4689 = vlaneseq
      %v4690 = vshrl.u32 %v4689, 7
      %v4691 = vsub.s32 0, %v4690
      %v4692 = vrot.slane %v1093, %v4691
      %v4693 = vlaneseq
      %v4694 = vshrl.u32 %v4693, 7
      %v4695 = vsub.s32 1, %v4694
      %v4696 = vrot.slane %v1093, %v4695
      %v4697 = vlaneseq
      %v4698 = vshrl.u32 %v4697, 7
      %v4699 = vsub.s32 2, %v4698
      %v4700 = vrot.slane %v1093, %v4699
      %v4701 = vlaneseq
      %v4702 = vshrl.u32 %v4701, 7
      %v4703 = vsub.s32 3, %v4702
      %v4704 = vrot.slane %v1093, %v4703
      %v4705 = vlaneseq
      %v4706 = vshrl.u32 %v4705, 7
      %v4707 = vsub.s32 4, %v4706
      %v4708 = vrot.slane %v1093, %v4707
      %v4709 = vlaneseq
      %v4710 = vshrl.u32 %v4709, 7
      %v4711 = vsub.s32 5, %v4710
      %v4712 = vrot.slane %v1093, %v4711
      %v4713 = vlaneseq
      %v4714 = vshrl.u32 %v4713, 7
      %v4715 = vsub.s32 6, %v4714
      %v4716 = vrot.slane %v1093, %v4715
      %v4717 = vlaneseq
      %v4718 = vshrl.u32 %v4717, 7
      %v4719 = vsub.s32 7, %v4718
      %v4720 = vrot.slane %v1093, %v4719
      %v4721 = vlaneseq
      %v4722 = vshrl.u32 %v4721, 7
      %v4723 = vsub.s32 0, %v4722
      %v4724 = vrot.slane %v1094, %v4723
      %v4725 = vlaneseq
      %v4726 = vshrl.u32 %v4725, 7
      %v4727 = vsub.s32 1, %v4726
      %v4728 = vrot.slane %v1094, %v4727
      %v4729 = vlaneseq
      %v4730 = vshrl.u32 %v4729, 7
      %v4731 = vsub.s32 2, %v4730
      %v4732 = vrot.slane %v1094, %v4731
      %v4733 = vlaneseq
      %v4734 = vshrl.u32 %v4733, 7
      %v4735 = vsub.s32 3, %v4734
      %v4736 = vrot.slane %v1094, %v4735
      %v4737 = vlaneseq
      %v4738 = vshrl.u32 %v4737, 7
      %v4739 = vsub.s32 4, %v4738
      %v4740 = vrot.slane %v1094, %v4739
      %v4741 = vlaneseq
      %v4742 = vshrl.u32 %v4741, 7
      %v4743 = vsub.s32 5, %v4742
      %v4744 = vrot.slane %v1094, %v4743
      %v4745 = vlaneseq
      %v4746 = vshrl.u32 %v4745, 7
      %v4747 = vsub.s32 6, %v4746
      %v4748 = vrot.slane %v1094, %v4747
      %v4749 = vlaneseq
      %v4750 = vshrl.u32 %v4749, 7
      %v4751 = vsub.s32 7, %v4750
      %v4752 = vrot.slane %v1094, %v4751
      %v4753 = vlaneseq
      %v4754 = vshrl.u32 %v4753, 7
      %v4755 = vsub.s32 0, %v4754
      %v4756 = vrot.slane %v1095, %v4755
      %v4757 = vlaneseq
      %v4758 = vshrl.u32 %v4757, 7
      %v4759 = vsub.s32 1, %v4758
      %v4760 = vrot.slane %v1095, %v4759
      %v4761 = vlaneseq
      %v4762 = vshrl.u32 %v4761, 7
      %v4763 = vsub.s32 2, %v4762
      %v4764 = vrot.slane %v1095, %v4763
      %v4765 = vlaneseq
      %v4766 = vshrl.u32 %v4765, 7
      %v4767 = vsub.s32 3, %v4766
      %v4768 = vrot.slane %v1095, %v4767
      %v4769 = vlaneseq
      %v4770 = vshrl.u32 %v4769, 7
      %v4771 = vsub.s32 4, %v4770
      %v4772 = vrot.slane %v1095, %v4771
      %v4773 = vlaneseq
      %v4774 = vshrl.u32 %v4773, 7
      %v4775 = vsub.s32 5, %v4774
      %v4776 = vrot.slane %v1095, %v4775
      %v4777 = vlaneseq
      %v4778 = vshrl.u32 %v4777, 7
      %v4779 = vsub.s32 6, %v4778
      %v4780 = vrot.slane %v1095, %v4779
      %v4781 = vlaneseq
      %v4782 = vshrl.u32 %v4781, 7
      %v4783 = vsub.s32 7, %v4782
      %v4784 = vrot.slane %v1095, %v4783
      %v4785 = vlaneseq
      %v4786 = vshrl.u32 %v4785, 7
      %v4787 = vsub.s32 0, %v4786
      %v4788 = vrot.slane %v1096, %v4787
      %v4789 = vlaneseq
      %v4790 = vshrl.u32 %v4789, 7
      %v4791 = vsub.s32 1, %v4790
      %v4792 = vrot.slane %v1096, %v4791
      %v4793 = vlaneseq
      %v4794 = vshrl.u32 %v4793, 7
      %v4795 = vsub.s32 2, %v4794
      %v4796 = vrot.slane %v1096, %v4795
      %v4797 = vlaneseq
      %v4798 = vshrl.u32 %v4797, 7
      %v4799 = vsub.s32 3, %v4798
      %v4800 = vrot.slane %v1096, %v4799
      %v4801 = vlaneseq
      %v4802 = vshrl.u32 %v4801, 7
      %v4803 = vsub.s32 4, %v4802
      %v4804 = vrot.slane %v1096, %v4803
      %v4805 = vlaneseq
      %v4806 = vshrl.u32 %v4805, 7
      %v4807 = vsub.s32 5, %v4806
      %v4808 = vrot.slane %v1096, %v4807
      %v4809 = vlaneseq
      %v4810 = vshrl.u32 %v4809, 7
      %v4811 = vsub.s32 6, %v4810
      %v4812 = vrot.slane %v1096, %v4811
      %v4813 = vlaneseq
      %v4814 = vshrl.u32 %v4813, 7
      %v4815 = vsub.s32 7, %v4814
      %v4816 = vrot.slane %v1096, %v4815
      %v4817 = vlaneseq
      %v4818 = vshrl.u32 %v4817, 7
      %v4819 = vsub.s32 0, %v4818
      %v4820 = vrot.slane %v1097, %v4819
      %v4821 = vlaneseq
      %v4822 = vshrl.u32 %v4821, 7
      %v4823 = vsub.s32 1, %v4822
      %v4824 = vrot.slane %v1097, %v4823
      %v4825 = vlaneseq
      %v4826 = vshrl.u32 %v4825, 7
      %v4827 = vsub.s32 2, %v4826
      %v4828 = vrot.slane %v1097, %v4827
      %v4829 = vlaneseq
      %v4830 = vshrl.u32 %v4829, 7
      %v4831 = vsub.s32 3, %v4830
      %v4832 = vrot.slane %v1097, %v4831
      %v4833 = vlaneseq
      %v4834 = vshrl.u32 %v4833, 7
      %v4835 = vsub.s32 4, %v4834
      %v4836 = vrot.slane %v1097, %v4835
      %v4837 = vlaneseq
      %v4838 = vshrl.u32 %v4837, 7
      %v4839 = vsub.s32 5, %v4838
      %v4840 = vrot.slane %v1097, %v4839
      %v4841 = vlaneseq
      %v4842 = vshrl.u32 %v4841, 7
      %v4843 = vsub.s32 6, %v4842
      %v4844 = vrot.slane %v1097, %v4843
      %v4845 = vlaneseq
      %v4846 = vshrl.u32 %v4845, 7
      %v4847 = vsub.s32 7, %v4846
      %v4848 = vrot.slane %v1097, %v4847
      %v4849 = vlaneseq
      %v4850 = vshrl.u32 %v4849, 7
      %v4851 = vsub.s32 0, %v4850
      %v4852 = vrot.slane %v1098, %v4851
      %v4853 = vlaneseq
      %v4854 = vshrl.u32 %v4853, 7
      %v4855 = vsub.s32 1, %v4854
      %v4856 = vrot.slane %v1098, %v4855
      %v4857 = vlaneseq
      %v4858 = vshrl.u32 %v4857, 7
      %v4859 = vsub.s32 2, %v4858
      %v4860 = vrot.slane %v1098, %v4859
      %v4861 = vlaneseq
      %v4862 = vshrl.u32 %v4861, 7
      %v4863 = vsub.s32 3, %v4862
      %v4864 = vrot.slane %v1098, %v4863
      %v4865 = vlaneseq
      %v4866 = vshrl.u32 %v4865, 7
      %v4867 = vsub.s32 4, %v4866
      %v4868 = vrot.slane %v1098, %v4867
      %v4869 = vlaneseq
      %v4870 = vshrl.u32 %v4869, 7
      %v4871 = vsub.s32 5, %v4870
      %v4872 = vrot.slane %v1098, %v4871
      %v4873 = vlaneseq
      %v4874 = vshrl.u32 %v4873, 7
      %v4875 = vsub.s32 6, %v4874
      %v4876 = vrot.slane %v1098, %v4875
      %v4877 = vlaneseq
      %v4878 = vshrl.u32 %v4877, 7
      %v4879 = vsub.s32 7, %v4878
      %v4880 = vrot.slane %v1098, %v4879
      %v4881 = vlaneseq
      %v4882 = vshrl.u32 %v4881, 7
      %v4883 = vsub.s32 0, %v4882
      %v4884 = vrot.slane %v1099, %v4883
      %v4885 = vlaneseq
      %v4886 = vshrl.u32 %v4885, 7
      %v4887 = vsub.s32 1, %v4886
      %v4888 = vrot.slane %v1099, %v4887
      %v4889 = vlaneseq
      %v4890 = vshrl.u32 %v4889, 7
      %v4891 = vsub.s32 2, %v4890
      %v4892 = vrot.slane %v1099, %v4891
      %v4893 = vlaneseq
      %v4894 = vshrl.u32 %v4893, 7
      %v4895 = vsub.s32 3, %v4894
      %v4896 = vrot.slane %v1099, %v4895
      %v4897 = vlaneseq
      %v4898 = vshrl.u32 %v4897, 7
      %v4899 = vsub.s32 4, %v4898
      %v4900 = vrot.slane %v1099, %v4899
      %v4901 = vlaneseq
      %v4902 = vshrl.u32 %v4901, 7
      %v4903 = vsub.s32 5, %v4902
      %v4904 = vrot.slane %v1099, %v4903
      %v4905 = vlaneseq
      %v4906 = vshrl.u32 %v4905, 7
      %v4907 = vsub.s32 6, %v4906
      %v4908 = vrot.slane %v1099, %v4907
      %v4909 = vlaneseq
      %v4910 = vshrl.u32 %v4909, 7
      %v4911 = vsub.s32 7, %v4910
      %v4912 = vrot.slane %v1099, %v4911
      %v4913 = vlaneseq
      %v4914 = vshrl.u32 %v4913, 7
      %v4915 = vsub.s32 0, %v4914
      %v4916 = vrot.slane %v1100, %v4915
      %v4917 = vlaneseq
      %v4918 = vshrl.u32 %v4917, 7
      %v4919 = vsub.s32 1, %v4918
      %v4920 = vrot.slane %v1100, %v4919
      %v4921 = vlaneseq
      %v4922 = vshrl.u32 %v4921, 7
      %v4923 = vsub.s32 2, %v4922
      %v4924 = vrot.slane %v1100, %v4923
      %v4925 = vlaneseq
      %v4926 = vshrl.u32 %v4925, 7
      %v4927 = vsub.s32 3, %v4926
      %v4928 = vrot.slane %v1100, %v4927
      %v4929 = vlaneseq
      %v4930 = vshrl.u32 %v4929, 7
      %v4931 = vsub.s32 4, %v4930
      %v4932 = vrot.slane %v1100, %v4931
      %v4933 = vlaneseq
      %v4934 = vshrl.u32 %v4933, 7
      %v4935 = vsub.s32 5, %v4934
      %v4936 = vrot.slane %v1100, %v4935
      %v4937 = vlaneseq
      %v4938 = vshrl.u32 %v4937, 7
      %v4939 = vsub.s32 6, %v4938
      %v4940 = vrot.slane %v1100, %v4939
      %v4941 = vlaneseq
      %v4942 = vshrl.u32 %v4941, 7
      %v4943 = vsub.s32 7, %v4942
      %v4944 = vrot.slane %v1100, %v4943
      %v4945 = vlaneseq
      %v4946 = vshrl.u32 %v4945, 7
      %v4947 = vsub.s32 0, %v4946
      %v4948 = vrot.slane %v1101, %v4947
      %v4949 = vlaneseq
      %v4950 = vshrl.u32 %v4949, 7
      %v4951 = vsub.s32 1, %v4950
      %v4952 = vrot.slane %v1101, %v4951
      %v4953 = vlaneseq
      %v4954 = vshrl.u32 %v4953, 7
      %v4955 = vsub.s32 2, %v4954
      %v4956 = vrot.slane %v1101, %v4955
      %v4957 = vlaneseq
      %v4958 = vshrl.u32 %v4957, 7
      %v4959 = vsub.s32 3, %v4958
      %v4960 = vrot.slane %v1101, %v4959
      %v4961 = vlaneseq
      %v4962 = vshrl.u32 %v4961, 7
      %v4963 = vsub.s32 4, %v4962
      %v4964 = vrot.slane %v1101, %v4963
      %v4965 = vlaneseq
      %v4966 = vshrl.u32 %v4965, 7
      %v4967 = vsub.s32 5, %v4966
      %v4968 = vrot.slane %v1101, %v4967
      %v4969 = vlaneseq
      %v4970 = vshrl.u32 %v4969, 7
      %v4971 = vsub.s32 6, %v4970
      %v4972 = vrot.slane %v1101, %v4971
      %v4973 = vlaneseq
      %v4974 = vshrl.u32 %v4973, 7
      %v4975 = vsub.s32 7, %v4974
      %v4976 = vrot.slane %v1101, %v4975
      %v4977 = vlaneseq
      %v4978 = vshrl.u32 %v4977, 7
      %v4979 = vsub.s32 0, %v4978
      %v4980 = vrot.slane %v1102, %v4979
      %v4981 = vlaneseq
      %v4982 = vshrl.u32 %v4981, 7
      %v4983 = vsub.s32 1, %v4982
      %v4984 = vrot.slane %v1102, %v4983
      %v4985 = vlaneseq
      %v4986 = vshrl.u32 %v4985, 7
      %v4987 = vsub.s32 2, %v4986
      %v4988 = vrot.slane %v1102, %v4987
      %v4989 = vlaneseq
      %v4990 = vshrl.u32 %v4989, 7
      %v4991 = vsub.s32 3, %v4990
      %v4992 = vrot.slane %v1102, %v4991
      %v4993 = vlaneseq
      %v4994 = vshrl.u32 %v4993, 7
      %v4995 = vsub.s32 4, %v4994
      %v4996 = vrot.slane %v1102, %v4995
      %v4997 = vlaneseq
      %v4998 = vshrl.u32 %v4997, 7
      %v4999 = vsub.s32 5, %v4998
      %v5000 = vrot.slane %v1102, %v4999
      %v5001 = vlaneseq
      %v5002 = vshrl.u32 %v5001, 7
      %v5003 = vsub.s32 6, %v5002
      %v5004 = vrot.slane %v1102, %v5003
      %v5005 = vlaneseq
      %v5006 = vshrl.u32 %v5005, 7
      %v5007 = vsub.s32 7, %v5006
      %v5008 = vrot.slane %v1102, %v5007
      %v5009 = vlaneseq
      %v5010 = vshrl.u32 %v5009, 7
      %v5011 = vsub.s32 0, %v5010
      %v5012 = vrot.slane %v1103, %v5011
      %v5013 = vlaneseq
      %v5014 = vshrl.u32 %v5013, 7
      %v5015 = vsub.s32 1, %v5014
      %v5016 = vrot.slane %v1103, %v5015
      %v5017 = vlaneseq
      %v5018 = vshrl.u32 %v5017, 7
      %v5019 = vsub.s32 2, %v5018
      %v5020 = vrot.slane %v1103, %v5019
      %v5021 = vlaneseq
      %v5022 = vshrl.u32 %v5021, 7
      %v5023 = vsub.s32 3, %v5022
      %v5024 = vrot.slane %v1103, %v5023
      %v5025 = vlaneseq
      %v5026 = vshrl.u32 %v5025, 7
      %v5027 = vsub.s32 4, %v5026
      %v5028 = vrot.slane %v1103, %v5027
      %v5029 = vlaneseq
      %v5030 = vshrl.u32 %v5029, 7
      %v5031 = vsub.s32 5, %v5030
      %v5032 = vrot.slane %v1103, %v5031
      %v5033 = vlaneseq
      %v5034 = vshrl.u32 %v5033, 7
      %v5035 = vsub.s32 6, %v5034
      %v5036 = vrot.slane %v1103, %v5035
      %v5037 = vlaneseq
      %v5038 = vshrl.u32 %v5037, 7
      %v5039 = vsub.s32 7, %v5038
      %v5040 = vrot.slane %v1103, %v5039
      %v5041 = vlaneseq
      %v5042 = vshrl.u32 %v5041, 7
      %v5043 = vsub.s32 0, %v5042
      %v5044 = vrot.slane %v1104, %v5043
      %v5045 = vlaneseq
      %v5046 = vshrl.u32 %v5045, 7
      %v5047 = vsub.s32 1, %v5046
      %v5048 = vrot.slane %v1104, %v5047
      %v5049 = vlaneseq
      %v5050 = vshrl.u32 %v5049, 7
      %v5051 = vsub.s32 2, %v5050
      %v5052 = vrot.slane %v1104, %v5051
      %v5053 = vlaneseq
      %v5054 = vshrl.u32 %v5053, 7
      %v5055 = vsub.s32 3, %v5054
      %v5056 = vrot.slane %v1104, %v5055
      %v5057 = vlaneseq
      %v5058 = vshrl.u32 %v5057, 7
      %v5059 = vsub.s32 4, %v5058
      %v5060 = vrot.slane %v1104, %v5059
      %v5061 = vlaneseq
      %v5062 = vshrl.u32 %v5061, 7
      %v5063 = vsub.s32 5, %v5062
      %v5064 = vrot.slane %v1104, %v5063
      %v5065 = vlaneseq
      %v5066 = vshrl.u32 %v5065, 7
      %v5067 = vsub.s32 6, %v5066
      %v5068 = vrot.slane %v1104, %v5067
      %v5069 = vlaneseq
      %v5070 = vshrl.u32 %v5069, 7
      %v5071 = vsub.s32 7, %v5070
      %v5072 = vrot.slane %v1104, %v5071
      %v5265 = vcombine.high %v4481, %v4481
      %v5266 = vcombine.high %v4482, %v4482
      %v5267 = vcombine.high %v4483, %v4483
      %v5268 = vcombine.high %v4484, %v4484
      %v5269 = vcombine.high %v4485, %v4485
      %v5270 = vcombine.high %v4486, %v4486
      %v5271 = vcombine.high %v4487, %v4487
      %v5272 = vcombine.high %v4488, %v4488
      %v5273 = vcombine.high %v4489, %v4489
      %v5274 = vcombine.high %v4490, %v4490
      %v5275 = vcombine.high %v4491, %v4491
      %v5276 = vcombine.high %v4492, %v4492
      %v5277 = vcombine.high %v4493, %v4493
      %v5278 = vcombine.high %v4494, %v4494
      %v5279 = vcombine.high %v4495, %v4495
      %v5280 = vcombine.high %v4496, %v4496
      %v5281 = vcombine.high %v4497, %v4497
      %v5282 = vcombine.high %v4498, %v4498
      %v5283 = vcombine.high %v4499, %v4499
      %v5284 = vcombine.high %v4500, %v4500
      %v5285 = vcombine.high %v4501, %v4501
      %v5286 = vcombine.high %v4502, %v4502
      %v5287 = vcombine.high %v4503, %v4503
      %v5288 = vcombine.high %v4504, %v4504
      %v5289 = vcombine.high %v4505, %v4505
      %v5290 = vcombine.high %v4506, %v4506
      %v5291 = vcombine.high %v4507, %v4507
      %v5292 = vcombine.high %v4508, %v4508
      %v5293 = vcombine.high %v4509, %v4509
      %v5294 = vcombine.high %v4510, %v4510
      %v5295 = vcombine.high %v4511, %v4511
      %v5296 = vcombine.high %v4512, %v4512
      %v5297 = vcombine.high %v4513, %v4513
      %v5298 = vcombine.high %v4514, %v4514
      %v5299 = vcombine.high %v4515, %v4515
      %v5300 = vcombine.high %v4516, %v4516
      %v5301 = vcombine.high %v4517, %v4517
      %v5302 = vcombine.high %v4518, %v4518
      %v5303 = vcombine.high %v4519, %v4519
      %v5304 = vcombine.high %v4520, %v4520
      %v5305 = vcombine.high %v4521, %v4521
      %v5306 = vcombine.high %v4522, %v4522
      %v5307 = vcombine.high %v4523, %v4523
      %v5308 = vcombine.high %v4524, %v4524
      %v5309 = vcombine.high %v4525, %v4525
      %v5310 = vcombine.high %v4526, %v4526
      %v5311 = vcombine.high %v4527, %v4527
      %v5312 = vcombine.high %v4528, %v4528
      %v5313 = vcombine.high %v4529, %v4529
      %v5314 = vcombine.high %v4530, %v4530
      %v5315 = vcombine.high %v4531, %v4531
      %v5316 = vcombine.high %v4532, %v4532
      %v5317 = vcombine.high %v4533, %v4533
      %v5318 = vcombine.high %v4534, %v4534
      %v5319 = vcombine.high %v4535, %v4535
      %v5320 = vcombine.high %v4536, %v4536
      %v5321 = vcombine.high %v4537, %v4537
      %v5322 = vcombine.high %v4538, %v4538
      %v5323 = vcombine.high %v4539, %v4539
      %v5324 = vcombine.high %v4540, %v4540
      %v5325 = vcombine.high %v4541, %v4541
      %v5326 = vcombine.high %v4542, %v4542
      %v5327 = vcombine.high %v4543, %v4543
      %v5328 = vcombine.high %v4544, %v4544
      %v5393 = vmul.f32 %v4564, %v4481
      %v5394 = vmul.f32 %v4568, %v5265
      %v5395 = vmul.f32 %v4572, %v4482
      %v5396 = vmul.f32 %v4576, %v5266
      %v5397 = vmul.f32 %v4580, %v4483
      %v5398 = vmul.f32 %v4584, %v5267
      %v5399 = vmul.f32 %v4588, %v4484
      %v5400 = vmul.f32 %v4592, %v5268
      %v5401 = vmul.f32 %v4596, %v4485
      %v5402 = vmul.f32 %v4600, %v5269
      %v5403 = vmul.f32 %v4604, %v4486
      %v5404 = vmul.f32 %v4608, %v5270
      %v5405 = vmul.f32 %v4612, %v4487
      %v5406 = vmul.f32 %v4616, %v5271
      %v5407 = vmul.f32 %v4620, %v4488
      %v5408 = vmul.f32 %v4624, %v5272
      %v5409 = vmul.f32 %v4628, %v4489
      %v5410 = vmul.f32 %v4632, %v5273
      %v5411 = vmul.f32 %v4636, %v4490
      %v5412 = vmul.f32 %v4640, %v5274
      %v5413 = vmul.f32 %v4644, %v4491
      %v5414 = vmul.f32 %v4648, %v5275
      %v5415 = vmul.f32 %v4652, %v4492
      %v5416 = vmul.f32 %v4656, %v5276
      %v5417 = vmul.f32 %v4660, %v4493
      %v5418 = vmul.f32 %v4664, %v5277
      %v5419 = vmul.f32 %v4668, %v4494
      %v5420 = vmul.f32 %v4672, %v5278
      %v5421 = vmul.f32 %v4676, %v4495
      %v5422 = vmul.f32 %v4680, %v5279
      %v5423 = vmul.f32 %v4684, %v4496
      %v5424 = vmul.f32 %v4688, %v5280
      %v5425 = vmul.f32 %v4692, %v4497
      %v5426 = vmul.f32 %v4696, %v5281
      %v5427 = vmul.f32 %v4700, %v4498
      %v5428 = vmul.f32 %v4704, %v5282
      %v5429 = vmul.f32 %v4708, %v4499
      %v5430 = vmul.f32 %v4712, %v5283
      %v5431 = vmul.f32 %v4716, %v4500
      %v5432 = vmul.f32 %v4720, %v5284
      %v5433 = vmul.f32 %v4724, %v4501
      %v5434 = vmul.f32 %v4728, %v5285
      %v5435 = vmul.f32 %v4732, %v4502
      %v5436 = vmul.f32 %v4736, %v5286
      %v5437 = vmul.f32 %v4740, %v4503
      %v5438 = vmul.f32 %v4744, %v5287
      %v5439 = vmul.f32 %v4748, %v4504
      %v5440 = vmul.f32 %v4752, %v5288
      %v5441 = vmul.f32 %v4756, %v4505
      %v5442 = vmul.f32 %v4760, %v5289
      %v5443 = vmul.f32 %v4764, %v4506
      %v5444 = vmul.f32 %v4768, %v5290
      %v5445 = vmul.f32 %v4772, %v4507
      %v5446 = vmul.f32 %v4776, %v5291
      %v5447 = vmul.f32 %v4780, %v4508
      %v5448 = vmul.f32 %v4784, %v5292
      %v5449 = vmul.f32 %v4788, %v4509
      %v5450 = vmul.f32 %v4792, %v5293
      %v5451 = vmul.f32 %v4796, %v4510
      %v5452 = vmul.f32 %v4800, %v5294
      %v5453 = vmul.f32 %v4804, %v4511
      %v5454 = vmul.f32 %v4808, %v5295
      %v5455 = vmul.f32 %v4812, %v4512
      %v5456 = vmul.f32 %v4816, %v5296
      %v5457 = vmul.f32 %v4820, %v4513
      %v5458 = vmul.f32 %v4824, %v5297
      %v5459 = vmul.f32 %v4828, %v4514
      %v5460 = vmul.f32 %v4832, %v5298
      %v5461 = vmul.f32 %v4836, %v4515
      %v5462 = vmul.f32 %v4840, %v5299
      %v5463 = vmul.f32 %v4844, %v4516
      %v5464 = vmul.f32 %v4848, %v5300
      %v5465 = vmul.f32 %v4852, %v4517
      %v5466 = vmul.f32 %v4856, %v5301
      %v5467 = vmul.f32 %v4860, %v4518
      %v5468 = vmul.f32 %v4864, %v5302
      %v5469 = vmul.f32 %v4868, %v4519
      %v5470 = vmul.f32 %v4872, %v5303
      %v5471 = vmul.f32 %v4876, %v4520
      %v5472 = vmul.f32 %v4880, %v5304
      %v5473 = vmul.f32 %v4884, %v4521
      %v5474 = vmul.f32 %v4888, %v5305
      %v5475 = vmul.f32 %v4892, %v4522
      %v5476 = vmul.f32 %v4896, %v5306
      %v5477 = vmul.f32 %v4900, %v4523
      %v5478 = vmul.f32 %v4904, %v5307
      %v5479 = vmul.f32 %v4908, %v4524
      %v5480 = vmul.f32 %v4912, %v5308
      %v5481 = vmul.f32 %v4916, %v4525
      %v5482 = vmul.f32 %v4920, %v5309
      %v5483 = vmul.f32 %v4924, %v4526
      %v5484 = vmul.f32 %v4928, %v5310
      %v5485 = vmul.f32 %v4932, %v4527
      %v5486 = vmul.f32 %v4936, %v5311
      %v5487 = vmul.f32 %v4940, %v4528
      %v5488 = vmul.f32 %v4944, %v5312
      %v5489 = vmul.f32 %v4948, %v4529
      %v5490 = vmul.f32 %v4952, %v5313
      %v5491 = vmul.f32 %v4956, %v4530
      %v5492 = vmul.f32 %v4960, %v5314
      %v5493 = vmul.f32 %v4964, %v4531
      %v5494 = vmul.f32 %v4968, %v5315
      %v5495 = vmul.f32 %v4972, %v4532
      %v5496 = vmul.f32 %v4976, %v5316
      %v5497 = vmul.f32 %v4980, %v4533
      %v5498 = vmul.f32 %v4984, %v5317
      %v5499 = vmul.f32 %v4988, %v4534
      %v5500 = vmul.f32 %v4992, %v5318
      %v5501 = vmul.f32 %v4996, %v4535
      %v5502 = vmul.f32 %v5000, %v5319
      %v5503 = vmul.f32 %v5004, %v4536
      %v5504 = vmul.f32 %v5008, %v5320
      %v5505 = vmul.f32 %v5012, %v4537
      %v5506 = vmul.f32 %v5016, %v5321
      %v5507 = vmul.f32 %v5020, %v4538
      %v5508 = vmul.f32 %v5024, %v5322
      %v5509 = vmul.f32 %v5028, %v4539
      %v5510 = vmul.f32 %v5032, %v5323
      %v5511 = vmul.f32 %v5036, %v4540
      %v5512 = vmul.f32 %v5040, %v5324
      %v5513 = vmul.f32 %v5044, %v4541
      %v5514 = vmul.f32 %v5048, %v5325
      %v5515 = vmul.f32 %v5052, %v4542
      %v5516 = vmul.f32 %v5056, %v5326
      %v5517 = vmul.f32 %v5060, %v4543
      %v5518 = vmul.f32 %v5064, %v5327
      %v5519 = vmul.f32 %v5068, %v4544
      %v5520 = vmul.f32 %v5072, %v5328
      %v5521 = vadd.f32 %v4353, %v5393
      %v5522 = vadd.f32 %v4354, %v5394
      %v5523 = vadd.f32 %v4355, %v5395
      %v5524 = vadd.f32 %v4356, %v5396
      %v5525 = vadd.f32 %v4357, %v5397
      %v5526 = vadd.f32 %v4358, %v5398
      %v5527 = vadd.f32 %v4359, %v5399
      %v5528 = vadd.f32 %v4360, %v5400
      %v5529 = vadd.f32 %v4361, %v5401
      %v5530 = vadd.f32 %v4362, %v5402
      %v5531 = vadd.f32 %v4363, %v5403
      %v5532 = vadd.f32 %v4364, %v5404
      %v5533 = vadd.f32 %v4365, %v5405
      %v5534 = vadd.f32 %v4366, %v5406
      %v5535 = vadd.f32 %v4367, %v5407
      %v5536 = vadd.f32 %v4368, %v5408
      %v5537 = vadd.f32 %v4369, %v5409
      %v5538 = vadd.f32 %v4370, %v5410
      %v5539 = vadd.f32 %v4371, %v5411
      %v5540 = vadd.f32 %v4372, %v5412
      %v5541 = vadd.f32 %v4373, %v5413
      %v5542 = vadd.f32 %v4374, %v5414
      %v5543 = vadd.f32 %v4375, %v5415
      %v5544 = vadd.f32 %v4376, %v5416
      %v5545 = vadd.f32 %v4377, %v5417
      %v5546 = vadd.f32 %v4378, %v5418
      %v5547 = vadd.f32 %v4379, %v5419
      %v5548 = vadd.f32 %v4380, %v5420
      %v5549 = vadd.f32 %v4381, %v5421
      %v5550 = vadd.f32 %v4382, %v5422
      %v5551 = vadd.f32 %v4383, %v5423
      %v5552 = vadd.f32 %v4384, %v5424
      %v5553 = vadd.f32 %v4385, %v5425
      %v5554 = vadd.f32 %v4386, %v5426
      %v5555 = vadd.f32 %v4387, %v5427
      %v5556 = vadd.f32 %v4388, %v5428
      %v5557 = vadd.f32 %v4389, %v5429
      %v5558 = vadd.f32 %v4390, %v5430
      %v5559 = vadd.f32 %v4391, %v5431
      %v5560 = vadd.f32 %v4392, %v5432
      %v5561 = vadd.f32 %v4393, %v5433
      %v5562 = vadd.f32 %v4394, %v5434
      %v5563 = vadd.f32 %v4395, %v5435
      %v5564 = vadd.f32 %v4396, %v5436
      %v5565 = vadd.f32 %v4397, %v5437
      %v5566 = vadd.f32 %v4398, %v5438
      %v5567 = vadd.f32 %v4399, %v5439
      %v5568 = vadd.f32 %v4400, %v5440
      %v5569 = vadd.f32 %v4401, %v5441
      %v5570 = vadd.f32 %v4402, %v5442
      %v5571 = vadd.f32 %v4403, %v5443
      %v5572 = vadd.f32 %v4404, %v5444
      %v5573 = vadd.f32 %v4405, %v5445
      %v5574 = vadd.f32 %v4406, %v5446
      %v5575 = vadd.f32 %v4407, %v5447
      %v5576 = vadd.f32 %v4408, %v5448
      %v5577 = vadd.f32 %v4409, %v5449
      %v5578 = vadd.f32 %v4410, %v5450
      %v5579 = vadd.f32 %v4411, %v5451
      %v5580 = vadd.f32 %v4412, %v5452
      %v5581 = vadd.f32 %v4413, %v5453
      %v5582 = vadd.f32 %v4414, %v5454
      %v5583 = vadd.f32 %v4415, %v5455
      %v5584 = vadd.f32 %v4416, %v5456
      %v5585 = vadd.f32 %v4417, %v5457
      %v5586 = vadd.f32 %v4418, %v5458
      %v5587 = vadd.f32 %v4419, %v5459
      %v5588 = vadd.f32 %v4420, %v5460
      %v5589 = vadd.f32 %v4421, %v5461
      %v5590 = vadd.f32 %v4422, %v5462
      %v5591 = vadd.f32 %v4423, %v5463
      %v5592 = vadd.f32 %v4424, %v5464
      %v5593 = vadd.f32 %v4425, %v5465
      %v5594 = vadd.f32 %v4426, %v5466
      %v5595 = vadd.f32 %v4427, %v5467
      %v5596 = vadd.f32 %v4428, %v5468
      %v5597 = vadd.f32 %v4429, %v5469
      %v5598 = vadd.f32 %v4430, %v5470
      %v5599 = vadd.f32 %v4431, %v5471
      %v5600 = vadd.f32 %v4432, %v5472
      %v5601 = vadd.f32 %v4433, %v5473
      %v5602 = vadd.f32 %v4434, %v5474
      %v5603 = vadd.f32 %v4435, %v5475
      %v5604 = vadd.f32 %v4436, %v5476
      %v5605 = vadd.f32 %v4437, %v5477
      %v5606 = vadd.f32 %v4438, %v5478
      %v5607 = vadd.f32 %v4439, %v5479
      %v5608 = vadd.f32 %v4440, %v5480
      %v5609 = vadd.f32 %v4441, %v5481
      %v5610 = vadd.f32 %v4442, %v5482
      %v5611 = vadd.f32 %v4443, %v5483
      %v5612 = vadd.f32 %v4444, %v5484
      %v5613 = vadd.f32 %v4445, %v5485
      %v5614 = vadd.f32 %v4446, %v5486
      %v5615 = vadd.f32 %v4447, %v5487
      %v5616 = vadd.f32 %v4448, %v5488
      %v5617 = vadd.f32 %v4449, %v5489
      %v5618 = vadd.f32 %v4450, %v5490
      %v5619 = vadd.f32 %v4451, %v5491
      %v5620 = vadd.f32 %v4452, %v5492
      %v5621 = vadd.f32 %v4453, %v5493
      %v5622 = vadd.f32 %v4454, %v5494
      %v5623 = vadd.f32 %v4455, %v5495
      %v5624 = vadd.f32 %v4456, %v5496
      %v5625 = vadd.f32 %v4457, %v5497
      %v5626 = vadd.f32 %v4458, %v5498
      %v5627 = vadd.f32 %v4459, %v5499
      %v5628 = vadd.f32 %v4460, %v5500
      %v5629 = vadd.f32 %v4461, %v5501
      %v5630 = vadd.f32 %v4462, %v5502
      %v5631 = vadd.f32 %v4463, %v5503
      %v5632 = vadd.f32 %v4464, %v5504
      %v5633 = vadd.f32 %v4465, %v5505
      %v5634 = vadd.f32 %v4466, %v5506
      %v5635 = vadd.f32 %v4467, %v5507
      %v5636 = vadd.f32 %v4468, %v5508
      %v5637 = vadd.f32 %v4469, %v5509
      %v5638 = vadd.f32 %v4470, %v5510
      %v5639 = vadd.f32 %v4471, %v5511
      %v5640 = vadd.f32 %v4472, %v5512
      %v5641 = vadd.f32 %v4473, %v5513
      %v5642 = vadd.f32 %v4474, %v5514
      %v5643 = vadd.f32 %v4475, %v5515
      %v5644 = vadd.f32 %v4476, %v5516
      %v5645 = vadd.f32 %v4477, %v5517
      %v5646 = vadd.f32 %v4478, %v5518
      %v5647 = vadd.f32 %v4479, %v5519
      %v5648 = vadd.f32 %v4480, %v5520
      %v5777 = vcombine.low %v5521, %v5522
      %v5778 = vcombine.low %v5523, %v5524
      %v5779 = vcombine.low %v5525, %v5526
      %v5780 = vcombine.low %v5527, %v5528
      %v5781 = vcombine.low %v5529, %v5530
      %v5782 = vcombine.low %v5531, %v5532
      %v5783 = vcombine.low %v5533, %v5534
      %v5784 = vcombine.low %v5535, %v5536
      %v5785 = vcombine.low %v5537, %v5538
      %v5786 = vcombine.low %v5539, %v5540
      %v5787 = vcombine.low %v5541, %v5542
      %v5788 = vcombine.low %v5543, %v5544
      %v5789 = vcombine.low %v5545, %v5546
      %v5790 = vcombine.low %v5547, %v5548
      %v5791 = vcombine.low %v5549, %v5550
      %v5792 = vcombine.low %v5551, %v5552
      %v5793 = vcombine.low %v5553, %v5554
      %v5794 = vcombine.low %v5555, %v5556
      %v5795 = vcombine.low %v5557, %v5558
      %v5796 = vcombine.low %v5559, %v5560
      %v5797 = vcombine.low %v5561, %v5562
      %v5798 = vcombine.low %v5563, %v5564
      %v5799 = vcombine.low %v5565, %v5566
      %v5800 = vcombine.low %v5567, %v5568
      %v5801 = vcombine.low %v5569, %v5570
      %v5802 = vcombine.low %v5571, %v5572
      %v5803 = vcombine.low %v5573, %v5574
      %v5804 = vcombine.low %v5575, %v5576
      %v5805 = vcombine.low %v5577, %v5578
      %v5806 = vcombine.low %v5579, %v5580
      %v5807 = vcombine.low %v5581, %v5582
      %v5808 = vcombine.low %v5583, %v5584
      %v5809 = vcombine.low %v5585, %v5586
      %v5810 = vcombine.low %v5587, %v5588
      %v5811 = vcombine.low %v5589, %v5590
      %v5812 = vcombine.low %v5591, %v5592
      %v5813 = vcombine.low %v5593, %v5594
      %v5814 = vcombine.low %v5595, %v5596
      %v5815 = vcombine.low %v5597, %v5598
      %v5816 = vcombine.low %v5599, %v5600
      %v5817 = vcombine.low %v5601, %v5602
      %v5818 = vcombine.low %v5603, %v5604
      %v5819 = vcombine.low %v5605, %v5606
      %v5820 = vcombine.low %v5607, %v5608
      %v5821 = vcombine.low %v5609, %v5610
      %v5822 = vcombine.low %v5611, %v5612
      %v5823 = vcombine.low %v5613, %v5614
      %v5824 = vcombine.low %v5615, %v5616
      %v5825 = vcombine.low %v5617, %v5618
      %v5826 = vcombine.low %v5619, %v5620
      %v5827 = vcombine.low %v5621, %v5622
      %v5828 = vcombine.low %v5623, %v5624
      %v5829 = vcombine.low %v5625, %v5626
      %v5830 = vcombine.low %v5627, %v5628
      %v5831 = vcombine.low %v5629, %v5630
      %v5832 = vcombine.low %v5631, %v5632
      %v5833 = vcombine.low %v5633, %v5634
      %v5834 = vcombine.low %v5635, %v5636
      %v5835 = vcombine.low %v5637, %v5638
      %v5836 = vcombine.low %v5639, %v5640
      %v5837 = vcombine.low %v5641, %v5642
      %v5838 = vcombine.low %v5643, %v5644
      %v5839 = vcombine.low %v5645, %v5646
      %v5840 = vcombine.low %v5647, %v5648
      %5905 = vst [vmem:[%s463] sm:$0x77] %v5777
      %5906 = vst [vmem:[%s463 + $0x8] sm:$0x77] %v5778
      %5907 = vst [vmem:[%s463 + $0x10] sm:$0x77] %v5779
      %5908 = vst [vmem:[%s463 + $0x18] sm:$0x77] %v5780
      %5909 = vst [vmem:[%s463 + $0x20] sm:$0x77] %v5781
      %5910 = vst [vmem:[%s463 + $0x28] sm:$0x77] %v5782
      %5911 = vst [vmem:[%s463 + $0x30] sm:$0x77] %v5783
      %5912 = vst [vmem:[%s463 + $0x38] sm:$0x77] %v5784
      %5913 = vst [vmem:[%s463 + $0x40] sm:$0x77] %v5785
      %5914 = vst [vmem:[%s463 + $0x48] sm:$0x77] %v5786
      %5915 = vst [vmem:[%s463 + $0x50] sm:$0x77] %v5787
      %5916 = vst [vmem:[%s463 + $0x58] sm:$0x77] %v5788
      %5917 = vst [vmem:[%s463 + $0x60] sm:$0x77] %v5789
      %5918 = vst [vmem:[%s463 + $0x68] sm:$0x77] %v5790
      %5919 = vst [vmem:[%s463 + $0x70] sm:$0x77] %v5791
      %5920 = vst [vmem:[%s463 + $0x78] sm:$0x77] %v5792
      %5921 = vst [vmem:[%s463 + $0x80] sm:$0x77] %v5793
      %5922 = vst [vmem:[%s463 + $0x88] sm:$0x77] %v5794
      %5923 = vst [vmem:[%s463 + $0x90] sm:$0x77] %v5795
      %5924 = vst [vmem:[%s463 + $0x98] sm:$0x77] %v5796
      %5925 = vst [vmem:[%s463 + $0xa0] sm:$0x77] %v5797
      %5926 = vst [vmem:[%s463 + $0xa8] sm:$0x77] %v5798
      %5927 = vst [vmem:[%s463 + $0xb0] sm:$0x77] %v5799
      %5928 = vst [vmem:[%s463 + $0xb8] sm:$0x77] %v5800
      %5929 = vst [vmem:[%s463 + $0xc0] sm:$0x77] %v5801
      %5930 = vst [vmem:[%s463 + $0xc8] sm:$0x77] %v5802
      %5931 = vst [vmem:[%s463 + $0xd0] sm:$0x77] %v5803
      %5932 = vst [vmem:[%s463 + $0xd8] sm:$0x77] %v5804
      %5933 = vst [vmem:[%s463 + $0xe0] sm:$0x77] %v5805
      %5934 = vst [vmem:[%s463 + $0xe8] sm:$0x77] %v5806
      %5935 = vst [vmem:[%s463 + $0xf0] sm:$0x77] %v5807
      %5936 = vst [vmem:[%s463 + $0xf8] sm:$0x77] %v5808
      %5937 = vst [vmem:[%s463 + $0x100] sm:$0x77] %v5809
      %5938 = vst [vmem:[%s463 + $0x108] sm:$0x77] %v5810
      %5939 = vst [vmem:[%s463 + $0x110] sm:$0x77] %v5811
      %5940 = vst [vmem:[%s463 + $0x118] sm:$0x77] %v5812
      %5941 = vst [vmem:[%s463 + $0x120] sm:$0x77] %v5813
      %5942 = vst [vmem:[%s463 + $0x128] sm:$0x77] %v5814
      %5943 = vst [vmem:[%s463 + $0x130] sm:$0x77] %v5815
      %5944 = vst [vmem:[%s463 + $0x138] sm:$0x77] %v5816
      %5945 = vst [vmem:[%s463 + $0x140] sm:$0x77] %v5817
      %5946 = vst [vmem:[%s463 + $0x148] sm:$0x77] %v5818
      %5947 = vst [vmem:[%s463 + $0x150] sm:$0x77] %v5819
      %5948 = vst [vmem:[%s463 + $0x158] sm:$0x77] %v5820
      %5949 = vst [vmem:[%s463 + $0x160] sm:$0x77] %v5821
      %5950 = vst [vmem:[%s463 + $0x168] sm:$0x77] %v5822
      %5951 = vst [vmem:[%s463 + $0x170] sm:$0x77] %v5823
      %5952 = vst [vmem:[%s463 + $0x178] sm:$0x77] %v5824
      %5953 = vst [vmem:[%s463 + $0x180] sm:$0x77] %v5825
      %5954 = vst [vmem:[%s463 + $0x188] sm:$0x77] %v5826
      %5955 = vst [vmem:[%s463 + $0x190] sm:$0x77] %v5827
      %5956 = vst [vmem:[%s463 + $0x198] sm:$0x77] %v5828
      %5957 = vst [vmem:[%s463 + $0x1a0] sm:$0x77] %v5829
      %5958 = vst [vmem:[%s463 + $0x1a8] sm:$0x77] %v5830
      %5959 = vst [vmem:[%s463 + $0x1b0] sm:$0x77] %v5831
      %5960 = vst [vmem:[%s463 + $0x1b8] sm:$0x77] %v5832
      %5961 = vst [vmem:[%s463 + $0x1c0] sm:$0x77] %v5833
      %5962 = vst [vmem:[%s463 + $0x1c8] sm:$0x77] %v5834
      %5963 = vst [vmem:[%s463 + $0x1d0] sm:$0x77] %v5835
      %5964 = vst [vmem:[%s463 + $0x1d8] sm:$0x77] %v5836
      %5965 = vst [vmem:[%s463 + $0x1e0] sm:$0x77] %v5837
      %5966 = vst [vmem:[%s463 + $0x1e8] sm:$0x77] %v5838
      %5967 = vst [vmem:[%s463 + $0x1f0] sm:$0x77] %v5839
      %5968 = vst [vmem:[%s463 + $0x1f8] sm:$0x77] %v5840
      %s5969 = smul.u32 128, %s22
      %p5970 = scmp.lt.s32.totalorder %s21, 1
      %s5971 = scalar_select %p5970, %s21, 1
      %p5972 = scmp.lt.s32.totalorder %s5969, 511
      %s5973 = scalar_select %p5972, %s5969, 511
      %s5974 = smul.addr %s5971, 512
      %s5975 = sadd.s32 %s5973, %s5974
      %s5976 = smul.addr %s5975, 4
      %s5977 = scalar_lea.vmem %s6, %s5976
      // Predicated region
      $region45: #{stn_one_forward.9} parent=43 // pred_check
        %p5978 = pneg %p217
      $region46: #{stn_one_forward.9} parent=43 // pred_check_branch
        %5980 = sbr.rel (%p5978) target = $region48
      $region47: #{stn_one_forward.9} parent=43 // pred_region
        %s5981 = smul.u32 128, %s22
      $region48: #{stn_one_forward.9} parent=43 // pred_fallthru
        _
    $region44: #{stn_one_forward.9} parent=5 // pred_fallthru
      _
    %p5982 = scmp.le.s32.totalorder 2, %s12
    // Predicated region
    $region49: #{stn_one_forward.9} parent=5 // pred_check
      %p5983 = pneg %p5982
    $region50: #{stn_one_forward.9} parent=5 // pred_check_branch
      %5985 = sbr.rel (%p5983) target = $region52
    $region51: #{stn_one_forward.9} parent=5 // pred_region
      %s5986 = ssub.s32 %s12, 2
      // Predicated region
      $region53: #{stn_one_forward.9} parent=51 // pred_check
        %p5987 = pneg %p223
      $region54: #{stn_one_forward.9} parent=51 // pred_check_branch
        %5989 = sbr.rel (%p5987) target = $region56
      $region55: #{stn_one_forward.9} parent=51 // pred_region
        %s5990 = smul.u32 128, %s24
        %p5991 = scmp.lt.s32.totalorder %s23, 1
        %s5992 = scalar_select %p5991, %s23, 1
        %p5993 = scmp.lt.s32.totalorder %s5990, 511
        %s5994 = scalar_select %p5993, %s5990, 511
        %s5995 = smul.addr %s5992, 512
        %s5996 = sadd.s32 %s5994, %s5995
        %s5997 = smul.addr %s5996, 4
        %s5998 = scalar_lea.vmem %s6, %s5997
      $region56: #{stn_one_forward.9} parent=51 // pred_fallthru
        _
    $region52: #{stn_one_forward.9} parent=5 // pred_fallthru
      _
  $region6: #{stn_one_forward.9} parent=0 // loop_footer
    %s16 = sadd.s32 1, %s12
  $region7: #{stn_one_forward.9} parent=0 // loop_footer_branch
    %11 = sbr.rel target = $region3
  $region8: #{stn_one_forward.9} parent=0 // loop_exit
    _

</llo_original>
